<compile_context>
chip_gen: v7x
topology: tpu7x:2x2x1
jax: 0.10.0
libtpu: 0.0.40
codegen_flags: <defaults>
</compile_context>

<pallas_src>
import functools

import numpy as np
import jax
import jax.numpy as jnp
from jax.experimental import pallas as pl
from jax.experimental.pallas import tpu as pltpu

LN_EPS = 1e-5
_INV_SQRT2 = 0.7071067811865475
# bf16 at the MXU, f32 accumulation + f32 elementwise statistics everywhere.
MXU_DTYPE = jnp.bfloat16


# ----------------------------------------------------------------------------
# Fused Swin-block Pallas kernel
# ----------------------------------------------------------------------------
def _swin_block_kernel(xw_ref, comb_ref, g1_ref, b1_ref,
                       wqkv_ref, bqkv_ref, wproj_ref, bproj_ref,
                       g2_ref, b2_ref, w1_ref, bb1_ref, w2_ref, bb2_ref,
                       o_ref, head_cat_ref, *, wg, N, heads, head_dim):
    """One grid step = `wg` windows of one Swin block, fully fused.

    xw_ref:   (rows, C) tokens in window-partition order (also the shortcut)
    comb_ref: (cb, heads, N, N) rel-pos bias (+ shift mask); cb in {1, wg}
    head_cat_ref: (rows, C) VMEM scratch — per-head PV results concatenated
                  along lanes so the output projection is one full-width matmul
    """
    rows = wg * N
    C = heads * head_dim

    x = xw_ref[...].astype(jnp.float32)                       # (rows, C)

    # ---- norm_one (f32 statistics, biased variance like torch LayerNorm) ----
    mean = jnp.mean(x, axis=-1, keepdims=True)
    var = jnp.mean((x - mean) ** 2, axis=-1, keepdims=True)
    xn = (x - mean) * jax.lax.rsqrt(var + LN_EPS)
    xn = xn * g1_ref[0] + b1_ref[0]

    # ---- fused q/k/v: single (rows, C) x (C, 3C) MXU matmul ----
    # q columns / bias already carry the 1/sqrt(head_dim) scale (wrapper).
    qkv = jnp.dot(xn.astype(wqkv_ref.dtype), wqkv_ref[...],
                  preferred_element_type=jnp.float32) + bqkv_ref[0]   # (rows, 3C)

    comb = comb_ref[...]                                       # (cb, heads, N, N)

    # Static unrolled head loop is fine at small head counts; at production
    # head counts prefer lax.fori_loop(..., unroll=True) to bound live ranges.
    for h in range(heads):
        lo = h * head_dim                                      # static lane slices
        q3 = qkv[:, lo:lo + head_dim].reshape(wg, N, head_dim)
        k3 = qkv[:, C + lo:C + lo + head_dim].reshape(wg, N, head_dim)
        v3 = qkv[:, 2 * C + lo:2 * C + lo + head_dim].reshape(wg, N, head_dim)

        # per-window scores (wg, N, N); bf16 MXU inputs, f32 accumulation
        s = jax.lax.dot_general(q3.astype(MXU_DTYPE), k3.astype(MXU_DTYPE),
                                (((2,), (2,)), ((0,), (0,))),
                                preferred_element_type=jnp.float32)
        s = s + comb[:, h]                  # rel-pos bias (+ shift mask); bcast if cb==1

        # softmax over keys, f32; divide goes to the EUP reciprocal slot
        smax = jnp.max(s, axis=-1, keepdims=True)
        p = jnp.exp(s - smax)
        p = p * pl.reciprocal(jnp.sum(p, axis=-1, keepdims=True), approx=True)

        oh = jax.lax.dot_general(p.astype(MXU_DTYPE), v3.astype(MXU_DTYPE),
                                 (((2,), (1,)), ((0,), (0,))),
                                 preferred_element_type=jnp.float32)  # (wg, N, d)
        # stage per-head output at its static lane offset
        head_cat_ref[:, lo:lo + head_dim] = oh.reshape(rows, head_dim)

    # ---- one full-width (rows, C) x (C, C) output projection ----
    attn = jnp.dot(head_cat_ref[...].astype(wproj_ref.dtype), wproj_ref[...],
                   preferred_element_type=jnp.float32) + bproj_ref[0]

    # ---- residual (drop_path = identity) + norm_two + MLP + residual ----
    x2 = x + attn
    mean2 = jnp.mean(x2, axis=-1, keepdims=True)
    var2 = jnp.mean((x2 - mean2) ** 2, axis=-1, keepdims=True)
    xn2 = (x2 - mean2) * jax.lax.rsqrt(var2 + LN_EPS)
    xn2 = xn2 * g2_ref[0] + b2_ref[0]

    hdn = jnp.dot(xn2.astype(w1_ref.dtype), w1_ref[...],
                  preferred_element_type=jnp.float32) + bb1_ref[0]
    hdn = 0.5 * hdn * (1.0 + jax.lax.erf(hdn * _INV_SQRT2))    # exact (erf) GELU
    y = jnp.dot(hdn.astype(w2_ref.dtype), w2_ref[...],
                preferred_element_type=jnp.float32) + bb2_ref[0]
    o_ref[...] = (x2 + y).astype(o_ref.dtype)


# ----------------------------------------------------------------------------
# Pallas wrapper
# ----------------------------------------------------------------------------
def _pick_window_group(nw_per_image, total_windows, N, row_cap=512):
    """Largest windows-per-grid-step that divides the per-image window count,
    keeps the token-row block a multiple of 8 and <= row_cap, and leaves >= 2
    grid steps (keeps v7x megacore sharding and DMA double-buffering alive)."""
    best = None
    for wg in range(1, nw_per_image + 1):
        if nw_per_image % wg or (wg * N) % 8:
            continue
        if wg * N > row_cap:
            continue
        if total_windows // wg >= 2:
            best = wg
    if best is None:
        best = nw_per_image            # fallback: one image's windows per step
    return best


def swin_block_pallas(xw2d, comb, w, *, wg, N, nW, heads, head_dim):
    T, C = xw2d.shape
    rows = wg * N
    n_groups = T // rows
    hidden = w["w1"].shape[1]
    cb = comb.shape[0]

    if cb == 1:                        # non-shifted: same bias for every window
        comb_block = (1, heads, N, N)
        comb_map = lambda g: (0, 0, 0, 0)
    else:                              # shifted: per-window mask; wg divides nW
        gpi = nW // wg                 # window groups per image
        comb_block = (wg, heads, N, N)
        comb_map = lambda g: (g % gpi, 0, 0, 0)

    def const(*shape):                 # resident (constant index_map) operand
        n = len(shape)
        return pl.BlockSpec(shape, lambda g, _n=n: (0,) * _n)

    kernel = functools.partial(_swin_block_kernel, wg=wg, N=N, heads=heads,
                               head_dim=head_dim)

    # Explicit VMEM budget.  v5e/v6e have 128 MiB physical, v7x only 64 MiB:
    # clamp to the v7x-safe ceiling; at production shapes re-derive weight
    # residency / wg per chip generation.
    resident = sum(int(np.prod(a.shape)) * a.dtype.itemsize
                   for a in (comb, w["wqkv"], w["wproj"], w["w1"], w["w2"]))
    block_bytes = rows * max(3 * C, hidden) * 4
    vmem_limit = int(min(64 * 2**20,
                         max(32 * 2**20, 4 * resident + 16 * block_bytes)))

    return pl.pallas_call(
        kernel,
        out_shape=jax.ShapeDtypeStruct((T, C), xw2d.dtype),
        grid=(n_groups,),
        in_specs=[
            pl.BlockSpec((rows, C), lambda g: (g, 0)),   # tokens (window order)
            pl.BlockSpec(comb_block, comb_map),          # rel bias (+ shift mask)
            const(1, C), const(1, C),                    # norm1 gamma / beta
            const(C, 3 * C), const(1, 3 * C),            # fused qkv (q pre-scaled)
            const(C, C), const(1, C),                    # output projection
            const(1, C), const(1, C),                    # norm2 gamma / beta
            const(C, hidden), const(1, hidden),          # fc1
            const(hidden, C), const(1, C),               # fc2
        ],
        out_specs=pl.BlockSpec((rows, C), lambda g: (g, 0)),
        scratch_shapes=[pltpu.VMEM((rows, C), jnp.float32)],
        compiler_params=pltpu.CompilerParams(
            dimension_semantics=("parallel",),
            vmem_limit_bytes=vmem_limit),
    )(xw2d, comb, w["g1"], w["b1"], w["wqkv"], w["bqkv"], w["wproj"],
      w["bproj"], w["g2"], w["b2"], w["w1"], w["bb1"], w["w2"], w["bb2"])


# ----------------------------------------------------------------------------
# Static setup helpers (numpy, trace-time)
# ----------------------------------------------------------------------------
def relative_position_index(ws):
    coords = np.stack(np.meshgrid(np.arange(ws), np.arange(ws), indexing="ij"))
    coords_flat = coords.reshape(2, -1)
    rel = coords_flat[:, :, None] - coords_flat[:, None, :]
    rel = rel.transpose(1, 2, 0).astype(np.int64)
    rel[:, :, 0] += ws - 1
    rel[:, :, 1] += ws - 1
    rel[:, :, 0] *= 2 * ws - 1
    return rel.sum(-1)                                     # (N, N)


def shift_attention_mask(H, W, ws, shift):
    """Replicates the PyTorch img_mask -> attn_mask construction."""
    img_mask = np.zeros((1, H, W, 1), np.float32)
    slices = (slice(0, -ws), slice(-ws, -shift), slice(-shift, None))
    cnt = 0
    for hs in slices:
        for wsl in slices:
            img_mask[:, hs, wsl, :] = cnt
            cnt += 1
    mw = img_mask.reshape(1, H // ws, ws, W // ws, ws, 1)
    mw = mw.transpose(0, 1, 3, 2, 4, 5).reshape(-1, ws * ws)      # (nW, N)
    am = mw[:, None, :] - mw[:, :, None]                          # (nW, N, N)
    return np.where(am != 0, -100.0, 0.0).astype(np.float32)


def window_order_permutation(H, W, ws, shift):
    """perm such that x_window_order[:, j] = x_natural[:, perm[j]]
    (cyclic shift folded in).  Token order inside a window matches
    window_partition (s1, s2)."""
    idx = np.arange(H * W).reshape(H, W)
    if shift > 0:
        idx = np.roll(idx, (-shift, -shift), axis=(0, 1))
    idx = idx.reshape(H // ws, ws, W // ws, ws).transpose(0, 2, 1, 3)
    return idx.reshape(-1).astype(np.int32)


def invert_perm(p):
    inv = np.empty_like(p)
    inv[p] = np.arange(p.size, dtype=p.dtype)
    return inv


# ----------------------------------------------------------------------------
# Parameters + per-block trace-time prep
# ----------------------------------------------------------------------------
def init_block_params(key, embed_dim, num_heads, window_size, mlp_ratio):
    # Note for checkpoint porting: weights here are (in, out); torch.nn.Linear
    # stores (out, in) and would need a transpose.
    C = embed_dim
    hidden = C * mlp_ratio
    num_rel = (2 * window_size - 1) ** 2
    ks = jax.random.split(key, 6)
    f32 = jnp.float32
    return {
        "g1": jnp.ones((1, C), f32),
        "b1": jnp.zeros((1, C), f32),
        "wqkv": 0.02 * jax.random.normal(ks[0], (C, 3 * C), f32),
        "bqkv": jnp.zeros((1, 3 * C), f32),
        "wproj": 0.02 * jax.random.normal(ks[1], (C, C), f32),
        "bproj": jnp.zeros((1, C), f32),
        "rel_table": 0.02 * jax.random.normal(ks[2], (num_rel, num_heads), f32),
        "g2": jnp.ones((1, C), f32),
        "b2": jnp.zeros((1, C), f32),
        "w1": 0.02 * jax.random.normal(ks[3], (C, hidden), f32),
        "bb1": jnp.zeros((1, hidden), f32),
        "w2": 0.02 * jax.random.normal(ks[4], (hidden, C), f32),
        "bb2": jnp.zeros((1, C), f32),
    }


def prepare_block(p, *, heads, head_dim, rel_idx, shift_mask, shifted):
    C = heads * head_dim
    N = rel_idx.shape[0]
    scale = head_dim ** -0.5
    # Fold the q scale into the fused qkv weight/bias; cast MXU weights to bf16.
    col_scale = jnp.concatenate([jnp.full((C,), scale, jnp.float32),
                                 jnp.ones((2 * C,), jnp.float32)])
    w = {
        "g1": p["g1"], "b1": p["b1"], "g2": p["g2"], "b2": p["b2"],
        "wqkv": (p["wqkv"] * col_scale[None, :]).astype(MXU_DTYPE),
        "bqkv": p["bqkv"].reshape(1, 3 * C) * col_scale[None, :],
        "wproj": p["wproj"].astype(MXU_DTYPE), "bproj": p["bproj"],
        "w1": p["w1"].astype(MXU_DTYPE), "bb1": p["bb1"],
        "w2": p["w2"].astype(MXU_DTYPE), "bb2": p["bb2"],
    }
    # relative-position bias (heads, N, N), combined once with the shift mask
    rel = p["rel_table"][rel_idx.reshape(-1)].reshape(N, N, heads)
    rel = jnp.transpose(rel, (2, 0, 1)).astype(jnp.float32)
    if shifted:
        comb = rel[None] + jnp.asarray(shift_mask, jnp.float32)[:, None]  # (nW,h,N,N)
    else:
        comb = rel[None]                                                  # (1,h,N,N)
    return w, comb


# ----------------------------------------------------------------------------
# Layer forward
# ----------------------------------------------------------------------------
def basic_layer_forward(x, params_list, *, H, W, window_size, num_heads,
                        rel_idx, shift_mask):
    # TODO(synk): down_sample (PatchMerging) not provided in reference -> None path only.
    B, L, C = x.shape
    ws = window_size
    N = ws * ws
    nW = (H // ws) * (W // ws)
    head_dim = C // num_heads
    wg = _pick_window_group(nW, B * nW, N)

    shifts = [0 if i % 2 == 0 else ws // 2 for i in range(len(params_list))]
    perms = [window_order_permutation(H, W, ws, s) for s in shifts]
    invs = [invert_perm(p) for p in perms]

    xw = x
    for i, p in enumerate(params_list):
        # Single token-row permutation into this block's (shifted) window order
        # (replaces window_partition + roll + window_reverse + roll glue; LN /
        # MLP / residuals are per-token so window order is preserved throughout).
        gather = perms[i] if i == 0 else invs[i - 1][perms[i]]
        xw = jnp.take(xw, jnp.asarray(gather, jnp.int32), axis=1)
        w, comb = prepare_block(p, heads=num_heads, head_dim=head_dim,
                                rel_idx=rel_idx, shift_mask=shift_mask,
                                shifted=shifts[i] > 0)
        out2d = swin_block_pallas(xw.reshape(B * L, C), comb, w, wg=wg, N=N,
                                  nW=nW, heads=num_heads, head_dim=head_dim)
        xw = out2d.reshape(B, L, C)
    # back to natural (b, h*w, c) token order
    return jnp.take(xw, jnp.asarray(invs[-1], jnp.int32), axis=1)


# ----------------------------------------------------------------------------
if __name__ == "__main__":
    # Config: embed_dim=32, input_resolution=(8,8), depth=2, num_heads=4, window_size=4
    embed_dim = 32
    H = W = 8
    depth = 2
    num_heads = 4
    window_size = 4
    mlp_ratio = 4
    B = 2
    L = H * W

    key = jax.random.PRNGKey(0)
    key, xkey = jax.random.split(key)
    x = jax.random.normal(xkey, (B, L, embed_dim), jnp.float32)

    block_keys = jax.random.split(key, depth)
    params_list = [init_block_params(block_keys[i], embed_dim, num_heads,
                                     window_size, mlp_ratio) for i in range(depth)]

    rel_idx = relative_position_index(window_size)                     # static numpy
    shift_mask = shift_attention_mask(H, W, window_size, window_size // 2)

    fwd = jax.jit(functools.partial(basic_layer_forward, H=H, W=W,
                                    window_size=window_size, num_heads=num_heads,
                                    rel_idx=rel_idx, shift_mask=shift_mask))
    out = fwd(x, params_list)
    jax.block_until_ready(out)
    assert out.shape == (B, L, embed_dim) and bool(jnp.all(jnp.isfinite(out)))
    print("KERNEL_OK")
</pallas_src>

<mosaic_0001>
module attributes {stable_mosaic.version = 11 : i64} {
  func.func @_swin_block_kernel(%arg0: i32, %arg1: memref<64x32xf32, #tpu.memory_space<vmem>>, %arg2: memref<1x4x16x16xf32, #tpu.memory_space<vmem>>, %arg3: memref<1x32xf32, #tpu.memory_space<vmem>>, %arg4: memref<1x32xf32, #tpu.memory_space<vmem>>, %arg5: memref<32x96xbf16, #tpu.memory_space<vmem>>, %arg6: memref<1x96xf32, #tpu.memory_space<vmem>>, %arg7: memref<32x32xbf16, #tpu.memory_space<vmem>>, %arg8: memref<1x32xf32, #tpu.memory_space<vmem>>, %arg9: memref<1x32xf32, #tpu.memory_space<vmem>>, %arg10: memref<1x32xf32, #tpu.memory_space<vmem>>, %arg11: memref<32x128xbf16, #tpu.memory_space<vmem>>, %arg12: memref<1x128xf32, #tpu.memory_space<vmem>>, %arg13: memref<128x32xbf16, #tpu.memory_space<vmem>>, %arg14: memref<1x32xf32, #tpu.memory_space<vmem>>, %arg15: memref<64x32xf32, #tpu.memory_space<vmem>>, %arg16: memref<64x32xf32, #tpu.memory_space<vmem>>) attributes {dimension_semantics = [#tpu.dimension_semantics<parallel>], iteration_bounds = array<i64: 2>, scalar_prefetch = 0 : i64, scratch_operands = 1 : i64, tpu.core_type = #tpu.core_type<tc>, window_params = [{transform_indices = @transform_0, window_bounds = array<i64: 64, 32>}, {pipeline_mode = #tpu.pipeline_mode<synchronous>, transform_indices = @transform_1, window_bounds = array<i64: 1, 4, 16, 16>}, {pipeline_mode = #tpu.pipeline_mode<synchronous>, transform_indices = @transform_2, window_bounds = array<i64: 1, 32>}, {pipeline_mode = #tpu.pipeline_mode<synchronous>, transform_indices = @transform_3, window_bounds = array<i64: 1, 32>}, {pipeline_mode = #tpu.pipeline_mode<synchronous>, transform_indices = @transform_4, window_bounds = array<i64: 32, 96>}, {pipeline_mode = #tpu.pipeline_mode<synchronous>, transform_indices = @transform_5, window_bounds = array<i64: 1, 96>}, {pipeline_mode = #tpu.pipeline_mode<synchronous>, transform_indices = @transform_6, window_bounds = array<i64: 32, 32>}, {pipeline_mode = #tpu.pipeline_mode<synchronous>, transform_indices = @transform_7, window_bounds = array<i64: 1, 32>}, {pipeline_mode = #tpu.pipeline_mode<synchronous>, transform_indices = @transform_8, window_bounds = array<i64: 1, 32>}, {pipeline_mode = #tpu.pipeline_mode<synchronous>, transform_indices = @transform_9, window_bounds = array<i64: 1, 32>}, {pipeline_mode = #tpu.pipeline_mode<synchronous>, transform_indices = @transform_10, window_bounds = array<i64: 32, 128>}, {pipeline_mode = #tpu.pipeline_mode<synchronous>, transform_indices = @transform_11, window_bounds = array<i64: 1, 128>}, {pipeline_mode = #tpu.pipeline_mode<synchronous>, transform_indices = @transform_12, window_bounds = array<i64: 128, 32>}, {pipeline_mode = #tpu.pipeline_mode<synchronous>, transform_indices = @transform_13, window_bounds = array<i64: 1, 32>}, {transform_indices = @transform_14, window_bounds = array<i64: 64, 32>}]} {
    %c0 = arith.constant 0 : index
    %c0_0 = arith.constant 0 : index
    %0 = vector.load %arg1[%c0, %c0_0] : memref<64x32xf32, #tpu.memory_space<vmem>>, vector<64x32xf32>
    %cst = arith.constant dense<0.000000e+00> : vector<64xf32>
    %1 = vector.multi_reduction <add>, %0, %cst [1] : vector<64x32xf32> to vector<64xf32>
    %2 = vector.shape_cast %1 : vector<64xf32> to vector<64x1xf32>
    %cst_1 = arith.constant 3.200000e+01 : f32
    %3 = vector.broadcast %cst_1 : f32 to vector<64x1xf32>
    %4 = arith.divf %2, %3 : vector<64x1xf32>
    %5 = vector.broadcast %4 : vector<64x1xf32> to vector<64x32xf32>
    %6 = arith.subf %0, %5 : vector<64x32xf32>
    %7 = arith.mulf %6, %6 : vector<64x32xf32>
    %cst_2 = arith.constant dense<0.000000e+00> : vector<64xf32>
    %8 = vector.multi_reduction <add>, %7, %cst_2 [1] : vector<64x32xf32> to vector<64xf32>
    %9 = vector.shape_cast %8 : vector<64xf32> to vector<64x1xf32>
    %cst_3 = arith.constant 3.200000e+01 : f32
    %10 = vector.broadcast %cst_3 : f32 to vector<64x1xf32>
    %11 = arith.divf %9, %10 : vector<64x1xf32>
    %12 = vector.broadcast %4 : vector<64x1xf32> to vector<64x32xf32>
    %13 = arith.subf %0, %12 : vector<64x32xf32>
    %cst_4 = arith.constant 9.99999974E-6 : f32
    %14 = vector.broadcast %cst_4 : f32 to vector<64x1xf32>
    %15 = arith.addf %11, %14 : vector<64x1xf32>
    %16 = math.rsqrt %15 : vector<64x1xf32>
    %17 = vector.broadcast %16 : vector<64x1xf32> to vector<64x32xf32>
    %18 = arith.mulf %13, %17 : vector<64x32xf32>
    %c0_5 = arith.constant 0 : index
    %c0_6 = arith.constant 0 : index
    %19 = vector.load %arg3[%c0_5, %c0_6] : memref<1x32xf32, #tpu.memory_space<vmem>>, vector<1x32xf32>
    %20 = vector.shape_cast %19 : vector<1x32xf32> to vector<32xf32>
    %21 = vector.shape_cast %20 : vector<32xf32> to vector<1x32xf32>
    %22 = vector.broadcast %21 : vector<1x32xf32> to vector<64x32xf32>
    %23 = arith.mulf %18, %22 : vector<64x32xf32>
    %c0_7 = arith.constant 0 : index
    %c0_8 = arith.constant 0 : index
    %24 = vector.load %arg4[%c0_7, %c0_8] : memref<1x32xf32, #tpu.memory_space<vmem>>, vector<1x32xf32>
    %25 = vector.shape_cast %24 : vector<1x32xf32> to vector<32xf32>
    %26 = vector.shape_cast %25 : vector<32xf32> to vector<1x32xf32>
    %27 = vector.broadcast %26 : vector<1x32xf32> to vector<64x32xf32>
    %28 = arith.addf %23, %27 : vector<64x32xf32>
    %29 = arith.truncf %28 : vector<64x32xf32> to vector<64x32xbf16>
    %c0_9 = arith.constant 0 : index
    %c0_10 = arith.constant 0 : index
    %30 = vector.load %arg5[%c0_9, %c0_10] : memref<32x96xbf16, #tpu.memory_space<vmem>>, vector<32x96xbf16>
    %cst_11 = arith.constant dense<0.000000e+00> : vector<64x96xf32>
    %31 = tpu.matmul %29, %30, %cst_11 {dimension_numbers = #tpu.dot_dimension_numbers<[1], [0], [0], [1], [0, 0, 1, 1], [], []>} : vector<64x32xbf16>, vector<32x96xbf16>, vector<64x96xf32> -> vector<64x96xf32>
    %c0_12 = arith.constant 0 : index
    %c0_13 = arith.constant 0 : index
    %32 = vector.load %arg6[%c0_12, %c0_13] : memref<1x96xf32, #tpu.memory_space<vmem>>, vector<1x96xf32>
    %33 = vector.shape_cast %32 : vector<1x96xf32> to vector<96xf32>
    %34 = vector.shape_cast %33 : vector<96xf32> to vector<1x96xf32>
    %35 = vector.broadcast %34 : vector<1x96xf32> to vector<64x96xf32>
    %36 = arith.addf %31, %35 : vector<64x96xf32>
    %c0_14 = arith.constant 0 : index
    %c0_15 = arith.constant 0 : index
    %c0_16 = arith.constant 0 : index
    %c0_17 = arith.constant 0 : index
    %37 = vector.load %arg2[%c0_14, %c0_15, %c0_16, %c0_17] : memref<1x4x16x16xf32, #tpu.memory_space<vmem>>, vector<1x4x16x16xf32>
    %38 = vector.extract_strided_slice %36 {offsets = [0, 0], sizes = [64, 8], strides = [1, 1]} : vector<64x96xf32> to vector<64x8xf32>
    %39 = vector.shape_cast %38 : vector<64x8xf32> to vector<4x16x8xf32>
    %40 = vector.extract_strided_slice %36 {offsets = [0, 32], sizes = [64, 8], strides = [1, 1]} : vector<64x96xf32> to vector<64x8xf32>
    %41 = vector.shape_cast %40 : vector<64x8xf32> to vector<4x16x8xf32>
    %42 = vector.extract_strided_slice %36 {offsets = [0, 64], sizes = [64, 8], strides = [1, 1]} : vector<64x96xf32> to vector<64x8xf32>
    %43 = vector.shape_cast %42 : vector<64x8xf32> to vector<4x16x8xf32>
    %44 = arith.truncf %39 : vector<4x16x8xf32> to vector<4x16x8xbf16>
    %45 = arith.truncf %41 : vector<4x16x8xf32> to vector<4x16x8xbf16>
    %cst_18 = arith.constant dense<0.000000e+00> : vector<4x16x16xf32>
    %46 = tpu.matmul %44, %45, %cst_18 {dimension_numbers = #tpu.dot_dimension_numbers<[2], [2], [1], [1], [0, 0, 0, 1, 1, 1], [0], [0]>} : vector<4x16x8xbf16>, vector<4x16x8xbf16>, vector<4x16x16xf32> -> vector<4x16x16xf32>
    %47 = vector.extract_strided_slice %37 {offsets = [0, 0, 0, 0], sizes = [1, 1, 16, 16], strides = [1, 1, 1, 1]} : vector<1x4x16x16xf32> to vector<1x1x16x16xf32>
    %48 = vector.shape_cast %47 : vector<1x1x16x16xf32> to vector<1x16x16xf32>
    %49 = vector.broadcast %48 : vector<1x16x16xf32> to vector<4x16x16xf32>
    %50 = arith.addf %46, %49 : vector<4x16x16xf32>
    %cst_19 = arith.constant dense<0xFF800000> : vector<4x16xf32>
    %51 = vector.multi_reduction <maximumf>, %50, %cst_19 [2] : vector<4x16x16xf32> to vector<4x16xf32>
    %52 = vector.shape_cast %51 : vector<4x16xf32> to vector<4x16x1xf32>
    %53 = vector.broadcast %52 : vector<4x16x1xf32> to vector<4x16x16xf32>
    %54 = arith.subf %50, %53 : vector<4x16x16xf32>
    %55 = math.exp %54 : vector<4x16x16xf32>
    %cst_20 = arith.constant dense<0.000000e+00> : vector<4x16xf32>
    %56 = vector.multi_reduction <add>, %55, %cst_20 [2] : vector<4x16x16xf32> to vector<4x16xf32>
    %57 = vector.shape_cast %56 : vector<4x16xf32> to vector<4x16x1xf32>
    %58 = tpu.reciprocal %57 {approx = true} : vector<4x16x1xf32> -> vector<4x16x1xf32>
    %59 = vector.broadcast %58 : vector<4x16x1xf32> to vector<4x16x16xf32>
    %60 = arith.mulf %55, %59 : vector<4x16x16xf32>
    %61 = arith.truncf %60 : vector<4x16x16xf32> to vector<4x16x16xbf16>
    %62 = arith.truncf %43 : vector<4x16x8xf32> to vector<4x16x8xbf16>
    %cst_21 = arith.constant dense<0.000000e+00> : vector<4x16x8xf32>
    %63 = tpu.matmul %61, %62, %cst_21 {dimension_numbers = #tpu.dot_dimension_numbers<[2], [1], [1], [2], [0, 0, 0, 1, 1, 2], [0], [0]>} : vector<4x16x16xbf16>, vector<4x16x8xbf16>, vector<4x16x8xf32> -> vector<4x16x8xf32>
    %64 = vector.shape_cast %63 : vector<4x16x8xf32> to vector<64x8xf32>
    %c0_22 = arith.constant 0 : index
    %c0_23 = arith.constant 0 : index
    %65 = vector.load %arg16[%c0_22, %c0_23] : memref<64x32xf32, #tpu.memory_space<vmem>>, vector<64x8xf32>
    tpu.vector_store %arg16[%c0_22, %c0_23], %64 {strides = array<i32>} : memref<64x32xf32, #tpu.memory_space<vmem>>, vector<64x8xf32>,
    %66 = vector.extract_strided_slice %36 {offsets = [0, 8], sizes = [64, 8], strides = [1, 1]} : vector<64x96xf32> to vector<64x8xf32>
    %67 = vector.shape_cast %66 : vector<64x8xf32> to vector<4x16x8xf32>
    %68 = vector.extract_strided_slice %36 {offsets = [0, 40], sizes = [64, 8], strides = [1, 1]} : vector<64x96xf32> to vector<64x8xf32>
    %69 = vector.shape_cast %68 : vector<64x8xf32> to vector<4x16x8xf32>
    %70 = vector.extract_strided_slice %36 {offsets = [0, 72], sizes = [64, 8], strides = [1, 1]} : vector<64x96xf32> to vector<64x8xf32>
    %71 = vector.shape_cast %70 : vector<64x8xf32> to vector<4x16x8xf32>
    %72 = arith.truncf %67 : vector<4x16x8xf32> to vector<4x16x8xbf16>
    %73 = arith.truncf %69 : vector<4x16x8xf32> to vector<4x16x8xbf16>
    %cst_24 = arith.constant dense<0.000000e+00> : vector<4x16x16xf32>
    %74 = tpu.matmul %72, %73, %cst_24 {dimension_numbers = #tpu.dot_dimension_numbers<[2], [2], [1], [1], [0, 0, 0, 1, 1, 1], [0], [0]>} : vector<4x16x8xbf16>, vector<4x16x8xbf16>, vector<4x16x16xf32> -> vector<4x16x16xf32>
    %75 = vector.extract_strided_slice %37 {offsets = [0, 1, 0, 0], sizes = [1, 1, 16, 16], strides = [1, 1, 1, 1]} : vector<1x4x16x16xf32> to vector<1x1x16x16xf32>
    %76 = vector.shape_cast %75 : vector<1x1x16x16xf32> to vector<1x16x16xf32>
    %77 = vector.broadcast %76 : vector<1x16x16xf32> to vector<4x16x16xf32>
    %78 = arith.addf %74, %77 : vector<4x16x16xf32>
    %cst_25 = arith.constant dense<0xFF800000> : vector<4x16xf32>
    %79 = vector.multi_reduction <maximumf>, %78, %cst_25 [2] : vector<4x16x16xf32> to vector<4x16xf32>
    %80 = vector.shape_cast %79 : vector<4x16xf32> to vector<4x16x1xf32>
    %81 = vector.broadcast %80 : vector<4x16x1xf32> to vector<4x16x16xf32>
    %82 = arith.subf %78, %81 : vector<4x16x16xf32>
    %83 = math.exp %82 : vector<4x16x16xf32>
    %cst_26 = arith.constant dense<0.000000e+00> : vector<4x16xf32>
    %84 = vector.multi_reduction <add>, %83, %cst_26 [2] : vector<4x16x16xf32> to vector<4x16xf32>
    %85 = vector.shape_cast %84 : vector<4x16xf32> to vector<4x16x1xf32>
    %86 = tpu.reciprocal %85 {approx = true} : vector<4x16x1xf32> -> vector<4x16x1xf32>
    %87 = vector.broadcast %86 : vector<4x16x1xf32> to vector<4x16x16xf32>
    %88 = arith.mulf %83, %87 : vector<4x16x16xf32>
    %89 = arith.truncf %88 : vector<4x16x16xf32> to vector<4x16x16xbf16>
    %90 = arith.truncf %71 : vector<4x16x8xf32> to vector<4x16x8xbf16>
    %cst_27 = arith.constant dense<0.000000e+00> : vector<4x16x8xf32>
    %91 = tpu.matmul %89, %90, %cst_27 {dimension_numbers = #tpu.dot_dimension_numbers<[2], [1], [1], [2], [0, 0, 0, 1, 1, 2], [0], [0]>} : vector<4x16x16xbf16>, vector<4x16x8xbf16>, vector<4x16x8xf32> -> vector<4x16x8xf32>
    %92 = vector.shape_cast %91 : vector<4x16x8xf32> to vector<64x8xf32>
    %c0_28 = arith.constant 0 : index
    %c8 = arith.constant 8 : index
    %93 = vector.load %arg16[%c0_28, %c8] : memref<64x32xf32, #tpu.memory_space<vmem>>, vector<64x8xf32>
    tpu.vector_store %arg16[%c0_28, %c8], %92 {strides = array<i32>} : memref<64x32xf32, #tpu.memory_space<vmem>>, vector<64x8xf32>,
    %94 = vector.extract_strided_slice %36 {offsets = [0, 16], sizes = [64, 8], strides = [1, 1]} : vector<64x96xf32> to vector<64x8xf32>
    %95 = vector.shape_cast %94 : vector<64x8xf32> to vector<4x16x8xf32>
    %96 = vector.extract_strided_slice %36 {offsets = [0, 48], sizes = [64, 8], strides = [1, 1]} : vector<64x96xf32> to vector<64x8xf32>
    %97 = vector.shape_cast %96 : vector<64x8xf32> to vector<4x16x8xf32>
    %98 = vector.extract_strided_slice %36 {offsets = [0, 80], sizes = [64, 8], strides = [1, 1]} : vector<64x96xf32> to vector<64x8xf32>
    %99 = vector.shape_cast %98 : vector<64x8xf32> to vector<4x16x8xf32>
    %100 = arith.truncf %95 : vector<4x16x8xf32> to vector<4x16x8xbf16>
    %101 = arith.truncf %97 : vector<4x16x8xf32> to vector<4x16x8xbf16>
    %cst_29 = arith.constant dense<0.000000e+00> : vector<4x16x16xf32>
    %102 = tpu.matmul %100, %101, %cst_29 {dimension_numbers = #tpu.dot_dimension_numbers<[2], [2], [1], [1], [0, 0, 0, 1, 1, 1], [0], [0]>} : vector<4x16x8xbf16>, vector<4x16x8xbf16>, vector<4x16x16xf32> -> vector<4x16x16xf32>
    %103 = vector.extract_strided_slice %37 {offsets = [0, 2, 0, 0], sizes = [1, 1, 16, 16], strides = [1, 1, 1, 1]} : vector<1x4x16x16xf32> to vector<1x1x16x16xf32>
    %104 = vector.shape_cast %103 : vector<1x1x16x16xf32> to vector<1x16x16xf32>
    %105 = vector.broadcast %104 : vector<1x16x16xf32> to vector<4x16x16xf32>
    %106 = arith.addf %102, %105 : vector<4x16x16xf32>
    %cst_30 = arith.constant dense<0xFF800000> : vector<4x16xf32>
    %107 = vector.multi_reduction <maximumf>, %106, %cst_30 [2] : vector<4x16x16xf32> to vector<4x16xf32>
    %108 = vector.shape_cast %107 : vector<4x16xf32> to vector<4x16x1xf32>
    %109 = vector.broadcast %108 : vector<4x16x1xf32> to vector<4x16x16xf32>
    %110 = arith.subf %106, %109 : vector<4x16x16xf32>
    %111 = math.exp %110 : vector<4x16x16xf32>
    %cst_31 = arith.constant dense<0.000000e+00> : vector<4x16xf32>
    %112 = vector.multi_reduction <add>, %111, %cst_31 [2] : vector<4x16x16xf32> to vector<4x16xf32>
    %113 = vector.shape_cast %112 : vector<4x16xf32> to vector<4x16x1xf32>
    %114 = tpu.reciprocal %113 {approx = true} : vector<4x16x1xf32> -> vector<4x16x1xf32>
    %115 = vector.broadcast %114 : vector<4x16x1xf32> to vector<4x16x16xf32>
    %116 = arith.mulf %111, %115 : vector<4x16x16xf32>
    %117 = arith.truncf %116 : vector<4x16x16xf32> to vector<4x16x16xbf16>
    %118 = arith.truncf %99 : vector<4x16x8xf32> to vector<4x16x8xbf16>
    %cst_32 = arith.constant dense<0.000000e+00> : vector<4x16x8xf32>
    %119 = tpu.matmul %117, %118, %cst_32 {dimension_numbers = #tpu.dot_dimension_numbers<[2], [1], [1], [2], [0, 0, 0, 1, 1, 2], [0], [0]>} : vector<4x16x16xbf16>, vector<4x16x8xbf16>, vector<4x16x8xf32> -> vector<4x16x8xf32>
    %120 = vector.shape_cast %119 : vector<4x16x8xf32> to vector<64x8xf32>
    %c0_33 = arith.constant 0 : index
    %c16 = arith.constant 16 : index
    %121 = vector.load %arg16[%c0_33, %c16] : memref<64x32xf32, #tpu.memory_space<vmem>>, vector<64x8xf32>
    tpu.vector_store %arg16[%c0_33, %c16], %120 {strides = array<i32>} : memref<64x32xf32, #tpu.memory_space<vmem>>, vector<64x8xf32>,
    %122 = vector.extract_strided_slice %36 {offsets = [0, 24], sizes = [64, 8], strides = [1, 1]} : vector<64x96xf32> to vector<64x8xf32>
    %123 = vector.shape_cast %122 : vector<64x8xf32> to vector<4x16x8xf32>
    %124 = vector.extract_strided_slice %36 {offsets = [0, 56], sizes = [64, 8], strides = [1, 1]} : vector<64x96xf32> to vector<64x8xf32>
    %125 = vector.shape_cast %124 : vector<64x8xf32> to vector<4x16x8xf32>
    %126 = vector.extract_strided_slice %36 {offsets = [0, 88], sizes = [64, 8], strides = [1, 1]} : vector<64x96xf32> to vector<64x8xf32>
    %127 = vector.shape_cast %126 : vector<64x8xf32> to vector<4x16x8xf32>
    %128 = arith.truncf %123 : vector<4x16x8xf32> to vector<4x16x8xbf16>
    %129 = arith.truncf %125 : vector<4x16x8xf32> to vector<4x16x8xbf16>
    %cst_34 = arith.constant dense<0.000000e+00> : vector<4x16x16xf32>
    %130 = tpu.matmul %128, %129, %cst_34 {dimension_numbers = #tpu.dot_dimension_numbers<[2], [2], [1], [1], [0, 0, 0, 1, 1, 1], [0], [0]>} : vector<4x16x8xbf16>, vector<4x16x8xbf16>, vector<4x16x16xf32> -> vector<4x16x16xf32>
    %131 = vector.extract_strided_slice %37 {offsets = [0, 3, 0, 0], sizes = [1, 1, 16, 16], strides = [1, 1, 1, 1]} : vector<1x4x16x16xf32> to vector<1x1x16x16xf32>
    %132 = vector.shape_cast %131 : vector<1x1x16x16xf32> to vector<1x16x16xf32>
    %133 = vector.broadcast %132 : vector<1x16x16xf32> to vector<4x16x16xf32>
    %134 = arith.addf %130, %133 : vector<4x16x16xf32>
    %cst_35 = arith.constant dense<0xFF800000> : vector<4x16xf32>
    %135 = vector.multi_reduction <maximumf>, %134, %cst_35 [2] : vector<4x16x16xf32> to vector<4x16xf32>
    %136 = vector.shape_cast %135 : vector<4x16xf32> to vector<4x16x1xf32>
    %137 = vector.broadcast %136 : vector<4x16x1xf32> to vector<4x16x16xf32>
    %138 = arith.subf %134, %137 : vector<4x16x16xf32>
    %139 = math.exp %138 : vector<4x16x16xf32>
    %cst_36 = arith.constant dense<0.000000e+00> : vector<4x16xf32>
    %140 = vector.multi_reduction <add>, %139, %cst_36 [2] : vector<4x16x16xf32> to vector<4x16xf32>
    %141 = vector.shape_cast %140 : vector<4x16xf32> to vector<4x16x1xf32>
    %142 = tpu.reciprocal %141 {approx = true} : vector<4x16x1xf32> -> vector<4x16x1xf32>
    %143 = vector.broadcast %142 : vector<4x16x1xf32> to vector<4x16x16xf32>
    %144 = arith.mulf %139, %143 : vector<4x16x16xf32>
    %145 = arith.truncf %144 : vector<4x16x16xf32> to vector<4x16x16xbf16>
    %146 = arith.truncf %127 : vector<4x16x8xf32> to vector<4x16x8xbf16>
    %cst_37 = arith.constant dense<0.000000e+00> : vector<4x16x8xf32>
    %147 = tpu.matmul %145, %146, %cst_37 {dimension_numbers = #tpu.dot_dimension_numbers<[2], [1], [1], [2], [0, 0, 0, 1, 1, 2], [0], [0]>} : vector<4x16x16xbf16>, vector<4x16x8xbf16>, vector<4x16x8xf32> -> vector<4x16x8xf32>
    %148 = vector.shape_cast %147 : vector<4x16x8xf32> to vector<64x8xf32>
    %c0_38 = arith.constant 0 : index
    %c24 = arith.constant 24 : index
    %149 = vector.load %arg16[%c0_38, %c24] : memref<64x32xf32, #tpu.memory_space<vmem>>, vector<64x8xf32>
    tpu.vector_store %arg16[%c0_38, %c24], %148 {strides = array<i32>} : memref<64x32xf32, #tpu.memory_space<vmem>>, vector<64x8xf32>,
    %c0_39 = arith.constant 0 : index
    %c0_40 = arith.constant 0 : index
    %150 = vector.load %arg16[%c0_39, %c0_40] : memref<64x32xf32, #tpu.memory_space<vmem>>, vector<64x32xf32>
    %151 = arith.truncf %150 : vector<64x32xf32> to vector<64x32xbf16>
    %c0_41 = arith.constant 0 : index
    %c0_42 = arith.constant 0 : index
    %152 = vector.load %arg7[%c0_41, %c0_42] : memref<32x32xbf16, #tpu.memory_space<vmem>>, vector<32x32xbf16>
    %cst_43 = arith.constant dense<0.000000e+00> : vector<64x32xf32>
    %153 = tpu.matmul %151, %152, %cst_43 {dimension_numbers = #tpu.dot_dimension_numbers<[1], [0], [0], [1], [0, 0, 1, 1], [], []>} : vector<64x32xbf16>, vector<32x32xbf16>, vector<64x32xf32> -> vector<64x32xf32>
    %c0_44 = arith.constant 0 : index
    %c0_45 = arith.constant 0 : index
    %154 = vector.load %arg8[%c0_44, %c0_45] : memref<1x32xf32, #tpu.memory_space<vmem>>, vector<1x32xf32>
    %155 = vector.shape_cast %154 : vector<1x32xf32> to vector<32xf32>
    %156 = vector.shape_cast %155 : vector<32xf32> to vector<1x32xf32>
    %157 = vector.broadcast %156 : vector<1x32xf32> to vector<64x32xf32>
    %158 = arith.addf %153, %157 : vector<64x32xf32>
    %159 = arith.addf %0, %158 : vector<64x32xf32>
    %cst_46 = arith.constant dense<0.000000e+00> : vector<64xf32>
    %160 = vector.multi_reduction <add>, %159, %cst_46 [1] : vector<64x32xf32> to vector<64xf32>
    %161 = vector.shape_cast %160 : vector<64xf32> to vector<64x1xf32>
    %cst_47 = arith.constant 3.200000e+01 : f32
    %162 = vector.broadcast %cst_47 : f32 to vector<64x1xf32>
    %163 = arith.divf %161, %162 : vector<64x1xf32>
    %164 = vector.broadcast %163 : vector<64x1xf32> to vector<64x32xf32>
    %165 = arith.subf %159, %164 : vector<64x32xf32>
    %166 = arith.mulf %165, %165 : vector<64x32xf32>
    %cst_48 = arith.constant dense<0.000000e+00> : vector<64xf32>
    %167 = vector.multi_reduction <add>, %166, %cst_48 [1] : vector<64x32xf32> to vector<64xf32>
    %168 = vector.shape_cast %167 : vector<64xf32> to vector<64x1xf32>
    %cst_49 = arith.constant 3.200000e+01 : f32
    %169 = vector.broadcast %cst_49 : f32 to vector<64x1xf32>
    %170 = arith.divf %168, %169 : vector<64x1xf32>
    %171 = vector.broadcast %163 : vector<64x1xf32> to vector<64x32xf32>
    %172 = arith.subf %159, %171 : vector<64x32xf32>
    %cst_50 = arith.constant 9.99999974E-6 : f32
    %173 = vector.broadcast %cst_50 : f32 to vector<64x1xf32>
    %174 = arith.addf %170, %173 : vector<64x1xf32>
    %175 = math.rsqrt %174 : vector<64x1xf32>
    %176 = vector.broadcast %175 : vector<64x1xf32> to vector<64x32xf32>
    %177 = arith.mulf %172, %176 : vector<64x32xf32>
    %c0_51 = arith.constant 0 : index
    %c0_52 = arith.constant 0 : index
    %178 = vector.load %arg9[%c0_51, %c0_52] : memref<1x32xf32, #tpu.memory_space<vmem>>, vector<1x32xf32>
    %179 = vector.shape_cast %178 : vector<1x32xf32> to vector<32xf32>
    %180 = vector.shape_cast %179 : vector<32xf32> to vector<1x32xf32>
    %181 = vector.broadcast %180 : vector<1x32xf32> to vector<64x32xf32>
    %182 = arith.mulf %177, %181 : vector<64x32xf32>
    %c0_53 = arith.constant 0 : index
    %c0_54 = arith.constant 0 : index
    %183 = vector.load %arg10[%c0_53, %c0_54] : memref<1x32xf32, #tpu.memory_space<vmem>>, vector<1x32xf32>
    %184 = vector.shape_cast %183 : vector<1x32xf32> to vector<32xf32>
    %185 = vector.shape_cast %184 : vector<32xf32> to vector<1x32xf32>
    %186 = vector.broadcast %185 : vector<1x32xf32> to vector<64x32xf32>
    %187 = arith.addf %182, %186 : vector<64x32xf32>
    %188 = arith.truncf %187 : vector<64x32xf32> to vector<64x32xbf16>
    %c0_55 = arith.constant 0 : index
    %c0_56 = arith.constant 0 : index
    %189 = vector.load %arg11[%c0_55, %c0_56] : memref<32x128xbf16, #tpu.memory_space<vmem>>, vector<32x128xbf16>
    %cst_57 = arith.constant dense<0.000000e+00> : vector<64x128xf32>
    %190 = tpu.matmul %188, %189, %cst_57 {dimension_numbers = #tpu.dot_dimension_numbers<[1], [0], [0], [1], [0, 0, 1, 1], [], []>} : vector<64x32xbf16>, vector<32x128xbf16>, vector<64x128xf32> -> vector<64x128xf32>
    %c0_58 = arith.constant 0 : index
    %c0_59 = arith.constant 0 : index
    %191 = vector.load %arg12[%c0_58, %c0_59] : memref<1x128xf32, #tpu.memory_space<vmem>>, vector<1x128xf32>
    %192 = vector.shape_cast %191 : vector<1x128xf32> to vector<128xf32>
    %193 = vector.shape_cast %192 : vector<128xf32> to vector<1x128xf32>
    %194 = vector.broadcast %193 : vector<1x128xf32> to vector<64x128xf32>
    %195 = arith.addf %190, %194 : vector<64x128xf32>
    %cst_60 = arith.constant 5.000000e-01 : f32
    %196 = vector.broadcast %cst_60 : f32 to vector<64x128xf32>
    %197 = arith.mulf %196, %195 : vector<64x128xf32>
    %cst_61 = arith.constant 0.707106769 : f32
    %198 = vector.broadcast %cst_61 : f32 to vector<64x128xf32>
    %199 = arith.mulf %195, %198 : vector<64x128xf32>
    %200 = math.erf %199 : vector<64x128xf32>
    %cst_62 = arith.constant 1.000000e+00 : f32
    %201 = vector.broadcast %cst_62 : f32 to vector<64x128xf32>
    %202 = arith.addf %201, %200 : vector<64x128xf32>
    %203 = arith.mulf %197, %202 : vector<64x128xf32>
    %204 = arith.truncf %203 : vector<64x128xf32> to vector<64x128xbf16>
    %c0_63 = arith.constant 0 : index
    %c0_64 = arith.constant 0 : index
    %205 = vector.load %arg13[%c0_63, %c0_64] : memref<128x32xbf16, #tpu.memory_space<vmem>>, vector<128x32xbf16>
    %cst_65 = arith.constant dense<0.000000e+00> : vector<64x32xf32>
    %206 = tpu.matmul %204, %205, %cst_65 {dimension_numbers = #tpu.dot_dimension_numbers<[1], [0], [0], [1], [0, 0, 1, 1], [], []>} : vector<64x128xbf16>, vector<128x32xbf16>, vector<64x32xf32> -> vector<64x32xf32>
    %c0_66 = arith.constant 0 : index
    %c0_67 = arith.constant 0 : index
    %207 = vector.load %arg14[%c0_66, %c0_67] : memref<1x32xf32, #tpu.memory_space<vmem>>, vector<1x32xf32>
    %208 = vector.shape_cast %207 : vector<1x32xf32> to vector<32xf32>
    %209 = vector.shape_cast %208 : vector<32xf32> to vector<1x32xf32>
    %210 = vector.broadcast %209 : vector<1x32xf32> to vector<64x32xf32>
    %211 = arith.addf %206, %210 : vector<64x32xf32>
    %212 = arith.addf %159, %211 : vector<64x32xf32>
    %c0_68 = arith.constant 0 : index
    %c0_69 = arith.constant 0 : index
    %213 = vector.load %arg15[%c0_68, %c0_69] : memref<64x32xf32, #tpu.memory_space<vmem>>, vector<64x32xf32>
    tpu.vector_store %arg15[%c0_68, %c0_69], %212 {strides = array<i32>} : memref<64x32xf32, #tpu.memory_space<vmem>>, vector<64x32xf32>,
    return
  }
  func.func @transform_0(%arg0: i32) -> (i32, i32) {
    %c0_i32 = arith.constant 0 : i32
    %c0_i32_0 = arith.constant 0 : i32
    return %arg0, %c0_i32 : i32, i32
  }
  func.func @transform_1(%arg0: i32) -> (i32, i32, i32, i32) {
    %c0_i32 = arith.constant 0 : i32
    %c0_i32_0 = arith.constant 0 : i32
    %c0_i32_1 = arith.constant 0 : i32
    %c0_i32_2 = arith.constant 0 : i32
    %c0_i32_3 = arith.constant 0 : i32
    return %c0_i32, %c0_i32_0, %c0_i32_1, %c0_i32_2 : i32, i32, i32, i32
  }
  func.func @transform_2(%arg0: i32) -> (i32, i32) {
    %c0_i32 = arith.constant 0 : i32
    %c0_i32_0 = arith.constant 0 : i32
    %c0_i32_1 = arith.constant 0 : i32
    return %c0_i32, %c0_i32_0 : i32, i32
  }
  func.func @transform_3(%arg0: i32) -> (i32, i32) {
    %c0_i32 = arith.constant 0 : i32
    %c0_i32_0 = arith.constant 0 : i32
    %c0_i32_1 = arith.constant 0 : i32
    return %c0_i32, %c0_i32_0 : i32, i32
  }
  func.func @transform_4(%arg0: i32) -> (i32, i32) {
    %c0_i32 = arith.constant 0 : i32
    %c0_i32_0 = arith.constant 0 : i32
    %c0_i32_1 = arith.constant 0 : i32
    return %c0_i32, %c0_i32_0 : i32, i32
  }
  func.func @transform_5(%arg0: i32) -> (i32, i32) {
    %c0_i32 = arith.constant 0 : i32
    %c0_i32_0 = arith.constant 0 : i32
    %c0_i32_1 = arith.constant 0 : i32
    return %c0_i32, %c0_i32_0 : i32, i32
  }
  func.func @transform_6(%arg0: i32) -> (i32, i32) {
    %c0_i32 = arith.constant 0 : i32
    %c0_i32_0 = arith.constant 0 : i32
    %c0_i32_1 = arith.constant 0 : i32
    return %c0_i32, %c0_i32_0 : i32, i32
  }
  func.func @transform_7(%arg0: i32) -> (i32, i32) {
    %c0_i32 = arith.constant 0 : i32
    %c0_i32_0 = arith.constant 0 : i32
    %c0_i32_1 = arith.constant 0 : i32
    return %c0_i32, %c0_i32_0 : i32, i32
  }
  func.func @transform_8(%arg0: i32) -> (i32, i32) {
    %c0_i32 = arith.constant 0 : i32
    %c0_i32_0 = arith.constant 0 : i32
    %c0_i32_1 = arith.constant 0 : i32
    return %c0_i32, %c0_i32_0 : i32, i32
  }
  func.func @transform_9(%arg0: i32) -> (i32, i32) {
    %c0_i32 = arith.constant 0 : i32
    %c0_i32_0 = arith.constant 0 : i32
    %c0_i32_1 = arith.constant 0 : i32
    return %c0_i32, %c0_i32_0 : i32, i32
  }
  func.func @transform_10(%arg0: i32) -> (i32, i32) {
    %c0_i32 = arith.constant 0 : i32
    %c0_i32_0 = arith.constant 0 : i32
    %c0_i32_1 = arith.constant 0 : i32
    return %c0_i32, %c0_i32_0 : i32, i32
  }
  func.func @transform_11(%arg0: i32) -> (i32, i32) {
    %c0_i32 = arith.constant 0 : i32
    %c0_i32_0 = arith.constant 0 : i32
    %c0_i32_1 = arith.constant 0 : i32
    return %c0_i32, %c0_i32_0 : i32, i32
  }
  func.func @transform_12(%arg0: i32) -> (i32, i32) {
    %c0_i32 = arith.constant 0 : i32
    %c0_i32_0 = arith.constant 0 : i32
    %c0_i32_1 = arith.constant 0 : i32
    return %c0_i32, %c0_i32_0 : i32, i32
  }
  func.func @transform_13(%arg0: i32) -> (i32, i32) {
    %c0_i32 = arith.constant 0 : i32
    %c0_i32_0 = arith.constant 0 : i32
    %c0_i32_1 = arith.constant 0 : i32
    return %c0_i32, %c0_i32_0 : i32, i32
  }
  func.func @transform_14(%arg0: i32) -> (i32, i32) {
    %c0_i32 = arith.constant 0 : i32
    %c0_i32_0 = arith.constant 0 : i32
    return %arg0, %c0_i32 : i32, i32
  }
}

module attributes {stable_mosaic.version = 11 : i64} {
  func.func @_swin_block_kernel(%arg0: i32, %arg1: memref<64x32xf32, #tpu.memory_space<vmem>>, %arg2: memref<4x4x16x16xf32, #tpu.memory_space<vmem>>, %arg3: memref<1x32xf32, #tpu.memory_space<vmem>>, %arg4: memref<1x32xf32, #tpu.memory_space<vmem>>, %arg5: memref<32x96xbf16, #tpu.memory_space<vmem>>, %arg6: memref<1x96xf32, #tpu.memory_space<vmem>>, %arg7: memref<32x32xbf16, #tpu.memory_space<vmem>>, %arg8: memref<1x32xf32, #tpu.memory_space<vmem>>, %arg9: memref<1x32xf32, #tpu.memory_space<vmem>>, %arg10: memref<1x32xf32, #tpu.memory_space<vmem>>, %arg11: memref<32x128xbf16, #tpu.memory_space<vmem>>, %arg12: memref<1x128xf32, #tpu.memory_space<vmem>>, %arg13: memref<128x32xbf16, #tpu.memory_space<vmem>>, %arg14: memref<1x32xf32, #tpu.memory_space<vmem>>, %arg15: memref<64x32xf32, #tpu.memory_space<vmem>>, %arg16: memref<64x32xf32, #tpu.memory_space<vmem>>) attributes {dimension_semantics = [#tpu.dimension_semantics<parallel>], iteration_bounds = array<i64: 2>, scalar_prefetch = 0 : i64, scratch_operands = 1 : i64, tpu.core_type = #tpu.core_type<tc>, window_params = [{transform_indices = @transform_0, window_bounds = array<i64: 64, 32>}, {transform_indices = @transform_1, window_bounds = array<i64: 4, 4, 16, 16>}, {pipeline_mode = #tpu.pipeline_mode<synchronous>, transform_indices = @transform_2, window_bounds = array<i64: 1, 32>}, {pipeline_mode = #tpu.pipeline_mode<synchronous>, transform_indices = @transform_3, window_bounds = array<i64: 1, 32>}, {pipeline_mode = #tpu.pipeline_mode<synchronous>, transform_indices = @transform_4, window_bounds = array<i64: 32, 96>}, {pipeline_mode = #tpu.pipeline_mode<synchronous>, transform_indices = @transform_5, window_bounds = array<i64: 1, 96>}, {pipeline_mode = #tpu.pipeline_mode<synchronous>, transform_indices = @transform_6, window_bounds = array<i64: 32, 32>}, {pipeline_mode = #tpu.pipeline_mode<synchronous>, transform_indices = @transform_7, window_bounds = array<i64: 1, 32>}, {pipeline_mode = #tpu.pipeline_mode<synchronous>, transform_indices = @transform_8, window_bounds = array<i64: 1, 32>}, {pipeline_mode = #tpu.pipeline_mode<synchronous>, transform_indices = @transform_9, window_bounds = array<i64: 1, 32>}, {pipeline_mode = #tpu.pipeline_mode<synchronous>, transform_indices = @transform_10, window_bounds = array<i64: 32, 128>}, {pipeline_mode = #tpu.pipeline_mode<synchronous>, transform_indices = @transform_11, window_bounds = array<i64: 1, 128>}, {pipeline_mode = #tpu.pipeline_mode<synchronous>, transform_indices = @transform_12, window_bounds = array<i64: 128, 32>}, {pipeline_mode = #tpu.pipeline_mode<synchronous>, transform_indices = @transform_13, window_bounds = array<i64: 1, 32>}, {transform_indices = @transform_14, window_bounds = array<i64: 64, 32>}]} {
    %c0 = arith.constant 0 : index
    %c0_0 = arith.constant 0 : index
    %0 = vector.load %arg1[%c0, %c0_0] : memref<64x32xf32, #tpu.memory_space<vmem>>, vector<64x32xf32>
    %cst = arith.constant dense<0.000000e+00> : vector<64xf32>
    %1 = vector.multi_reduction <add>, %0, %cst [1] : vector<64x32xf32> to vector<64xf32>
    %2 = vector.shape_cast %1 : vector<64xf32> to vector<64x1xf32>
    %cst_1 = arith.constant 3.200000e+01 : f32
    %3 = vector.broadcast %cst_1 : f32 to vector<64x1xf32>
    %4 = arith.divf %2, %3 : vector<64x1xf32>
    %5 = vector.broadcast %4 : vector<64x1xf32> to vector<64x32xf32>
    %6 = arith.subf %0, %5 : vector<64x32xf32>
    %7 = arith.mulf %6, %6 : vector<64x32xf32>
    %cst_2 = arith.constant dense<0.000000e+00> : vector<64xf32>
    %8 = vector.multi_reduction <add>, %7, %cst_2 [1] : vector<64x32xf32> to vector<64xf32>
    %9 = vector.shape_cast %8 : vector<64xf32> to vector<64x1xf32>
    %cst_3 = arith.constant 3.200000e+01 : f32
    %10 = vector.broadcast %cst_3 : f32 to vector<64x1xf32>
    %11 = arith.divf %9, %10 : vector<64x1xf32>
    %12 = vector.broadcast %4 : vector<64x1xf32> to vector<64x32xf32>
    %13 = arith.subf %0, %12 : vector<64x32xf32>
    %cst_4 = arith.constant 9.99999974E-6 : f32
    %14 = vector.broadcast %cst_4 : f32 to vector<64x1xf32>
    %15 = arith.addf %11, %14 : vector<64x1xf32>
    %16 = math.rsqrt %15 : vector<64x1xf32>
    %17 = vector.broadcast %16 : vector<64x1xf32> to vector<64x32xf32>
    %18 = arith.mulf %13, %17 : vector<64x32xf32>
    %c0_5 = arith.constant 0 : index
    %c0_6 = arith.constant 0 : index
    %19 = vector.load %arg3[%c0_5, %c0_6] : memref<1x32xf32, #tpu.memory_space<vmem>>, vector<1x32xf32>
    %20 = vector.shape_cast %19 : vector<1x32xf32> to vector<32xf32>
    %21 = vector.shape_cast %20 : vector<32xf32> to vector<1x32xf32>
    %22 = vector.broadcast %21 : vector<1x32xf32> to vector<64x32xf32>
    %23 = arith.mulf %18, %22 : vector<64x32xf32>
    %c0_7 = arith.constant 0 : index
    %c0_8 = arith.constant 0 : index
    %24 = vector.load %arg4[%c0_7, %c0_8] : memref<1x32xf32, #tpu.memory_space<vmem>>, vector<1x32xf32>
    %25 = vector.shape_cast %24 : vector<1x32xf32> to vector<32xf32>
    %26 = vector.shape_cast %25 : vector<32xf32> to vector<1x32xf32>
    %27 = vector.broadcast %26 : vector<1x32xf32> to vector<64x32xf32>
    %28 = arith.addf %23, %27 : vector<64x32xf32>
    %29 = arith.truncf %28 : vector<64x32xf32> to vector<64x32xbf16>
    %c0_9 = arith.constant 0 : index
    %c0_10 = arith.constant 0 : index
    %30 = vector.load %arg5[%c0_9, %c0_10] : memref<32x96xbf16, #tpu.memory_space<vmem>>, vector<32x96xbf16>
    %cst_11 = arith.constant dense<0.000000e+00> : vector<64x96xf32>
    %31 = tpu.matmul %29, %30, %cst_11 {dimension_numbers = #tpu.dot_dimension_numbers<[1], [0], [0], [1], [0, 0, 1, 1], [], []>} : vector<64x32xbf16>, vector<32x96xbf16>, vector<64x96xf32> -> vector<64x96xf32>
    %c0_12 = arith.constant 0 : index
    %c0_13 = arith.constant 0 : index
    %32 = vector.load %arg6[%c0_12, %c0_13] : memref<1x96xf32, #tpu.memory_space<vmem>>, vector<1x96xf32>
    %33 = vector.shape_cast %32 : vector<1x96xf32> to vector<96xf32>
    %34 = vector.shape_cast %33 : vector<96xf32> to vector<1x96xf32>
    %35 = vector.broadcast %34 : vector<1x96xf32> to vector<64x96xf32>
    %36 = arith.addf %31, %35 : vector<64x96xf32>
    %c0_14 = arith.constant 0 : index
    %c0_15 = arith.constant 0 : index
    %c0_16 = arith.constant 0 : index
    %c0_17 = arith.constant 0 : index
    %37 = vector.load %arg2[%c0_14, %c0_15, %c0_16, %c0_17] : memref<4x4x16x16xf32, #tpu.memory_space<vmem>>, vector<4x4x16x16xf32>
    %38 = vector.extract_strided_slice %36 {offsets = [0, 0], sizes = [64, 8], strides = [1, 1]} : vector<64x96xf32> to vector<64x8xf32>
    %39 = vector.shape_cast %38 : vector<64x8xf32> to vector<4x16x8xf32>
    %40 = vector.extract_strided_slice %36 {offsets = [0, 32], sizes = [64, 8], strides = [1, 1]} : vector<64x96xf32> to vector<64x8xf32>
    %41 = vector.shape_cast %40 : vector<64x8xf32> to vector<4x16x8xf32>
    %42 = vector.extract_strided_slice %36 {offsets = [0, 64], sizes = [64, 8], strides = [1, 1]} : vector<64x96xf32> to vector<64x8xf32>
    %43 = vector.shape_cast %42 : vector<64x8xf32> to vector<4x16x8xf32>
    %44 = arith.truncf %39 : vector<4x16x8xf32> to vector<4x16x8xbf16>
    %45 = arith.truncf %41 : vector<4x16x8xf32> to vector<4x16x8xbf16>
    %cst_18 = arith.constant dense<0.000000e+00> : vector<4x16x16xf32>
    %46 = tpu.matmul %44, %45, %cst_18 {dimension_numbers = #tpu.dot_dimension_numbers<[2], [2], [1], [1], [0, 0, 0, 1, 1, 1], [0], [0]>} : vector<4x16x8xbf16>, vector<4x16x8xbf16>, vector<4x16x16xf32> -> vector<4x16x16xf32>
    %47 = vector.extract_strided_slice %37 {offsets = [0, 0, 0, 0], sizes = [4, 1, 16, 16], strides = [1, 1, 1, 1]} : vector<4x4x16x16xf32> to vector<4x1x16x16xf32>
    %48 = vector.shape_cast %47 : vector<4x1x16x16xf32> to vector<4x16x16xf32>
    %49 = arith.addf %46, %48 : vector<4x16x16xf32>
    %cst_19 = arith.constant dense<0xFF800000> : vector<4x16xf32>
    %50 = vector.multi_reduction <maximumf>, %49, %cst_19 [2] : vector<4x16x16xf32> to vector<4x16xf32>
    %51 = vector.shape_cast %50 : vector<4x16xf32> to vector<4x16x1xf32>
    %52 = vector.broadcast %51 : vector<4x16x1xf32> to vector<4x16x16xf32>
    %53 = arith.subf %49, %52 : vector<4x16x16xf32>
    %54 = math.exp %53 : vector<4x16x16xf32>
    %cst_20 = arith.constant dense<0.000000e+00> : vector<4x16xf32>
    %55 = vector.multi_reduction <add>, %54, %cst_20 [2] : vector<4x16x16xf32> to vector<4x16xf32>
    %56 = vector.shape_cast %55 : vector<4x16xf32> to vector<4x16x1xf32>
    %57 = tpu.reciprocal %56 {approx = true} : vector<4x16x1xf32> -> vector<4x16x1xf32>
    %58 = vector.broadcast %57 : vector<4x16x1xf32> to vector<4x16x16xf32>
    %59 = arith.mulf %54, %58 : vector<4x16x16xf32>
    %60 = arith.truncf %59 : vector<4x16x16xf32> to vector<4x16x16xbf16>
    %61 = arith.truncf %43 : vector<4x16x8xf32> to vector<4x16x8xbf16>
    %cst_21 = arith.constant dense<0.000000e+00> : vector<4x16x8xf32>
    %62 = tpu.matmul %60, %61, %cst_21 {dimension_numbers = #tpu.dot_dimension_numbers<[2], [1], [1], [2], [0, 0, 0, 1, 1, 2], [0], [0]>} : vector<4x16x16xbf16>, vector<4x16x8xbf16>, vector<4x16x8xf32> -> vector<4x16x8xf32>
    %63 = vector.shape_cast %62 : vector<4x16x8xf32> to vector<64x8xf32>
    %c0_22 = arith.constant 0 : index
    %c0_23 = arith.constant 0 : index
    %64 = vector.load %arg16[%c0_22, %c0_23] : memref<64x32xf32, #tpu.memory_space<vmem>>, vector<64x8xf32>
    tpu.vector_store %arg16[%c0_22, %c0_23], %63 {strides = array<i32>} : memref<64x32xf32, #tpu.memory_space<vmem>>, vector<64x8xf32>,
    %65 = vector.extract_strided_slice %36 {offsets = [0, 8], sizes = [64, 8], strides = [1, 1]} : vector<64x96xf32> to vector<64x8xf32>
    %66 = vector.shape_cast %65 : vector<64x8xf32> to vector<4x16x8xf32>
    %67 = vector.extract_strided_slice %36 {offsets = [0, 40], sizes = [64, 8], strides = [1, 1]} : vector<64x96xf32> to vector<64x8xf32>
    %68 = vector.shape_cast %67 : vector<64x8xf32> to vector<4x16x8xf32>
    %69 = vector.extract_strided_slice %36 {offsets = [0, 72], sizes = [64, 8], strides = [1, 1]} : vector<64x96xf32> to vector<64x8xf32>
    %70 = vector.shape_cast %69 : vector<64x8xf32> to vector<4x16x8xf32>
    %71 = arith.truncf %66 : vector<4x16x8xf32> to vector<4x16x8xbf16>
    %72 = arith.truncf %68 : vector<4x16x8xf32> to vector<4x16x8xbf16>
    %cst_24 = arith.constant dense<0.000000e+00> : vector<4x16x16xf32>
    %73 = tpu.matmul %71, %72, %cst_24 {dimension_numbers = #tpu.dot_dimension_numbers<[2], [2], [1], [1], [0, 0, 0, 1, 1, 1], [0], [0]>} : vector<4x16x8xbf16>, vector<4x16x8xbf16>, vector<4x16x16xf32> -> vector<4x16x16xf32>
    %74 = vector.extract_strided_slice %37 {offsets = [0, 1, 0, 0], sizes = [4, 1, 16, 16], strides = [1, 1, 1, 1]} : vector<4x4x16x16xf32> to vector<4x1x16x16xf32>
    %75 = vector.shape_cast %74 : vector<4x1x16x16xf32> to vector<4x16x16xf32>
    %76 = arith.addf %73, %75 : vector<4x16x16xf32>
    %cst_25 = arith.constant dense<0xFF800000> : vector<4x16xf32>
    %77 = vector.multi_reduction <maximumf>, %76, %cst_25 [2] : vector<4x16x16xf32> to vector<4x16xf32>
    %78 = vector.shape_cast %77 : vector<4x16xf32> to vector<4x16x1xf32>
    %79 = vector.broadcast %78 : vector<4x16x1xf32> to vector<4x16x16xf32>
    %80 = arith.subf %76, %79 : vector<4x16x16xf32>
    %81 = math.exp %80 : vector<4x16x16xf32>
    %cst_26 = arith.constant dense<0.000000e+00> : vector<4x16xf32>
    %82 = vector.multi_reduction <add>, %81, %cst_26 [2] : vector<4x16x16xf32> to vector<4x16xf32>
    %83 = vector.shape_cast %82 : vector<4x16xf32> to vector<4x16x1xf32>
    %84 = tpu.reciprocal %83 {approx = true} : vector<4x16x1xf32> -> vector<4x16x1xf32>
    %85 = vector.broadcast %84 : vector<4x16x1xf32> to vector<4x16x16xf32>
    %86 = arith.mulf %81, %85 : vector<4x16x16xf32>
    %87 = arith.truncf %86 : vector<4x16x16xf32> to vector<4x16x16xbf16>
    %88 = arith.truncf %70 : vector<4x16x8xf32> to vector<4x16x8xbf16>
    %cst_27 = arith.constant dense<0.000000e+00> : vector<4x16x8xf32>
    %89 = tpu.matmul %87, %88, %cst_27 {dimension_numbers = #tpu.dot_dimension_numbers<[2], [1], [1], [2], [0, 0, 0, 1, 1, 2], [0], [0]>} : vector<4x16x16xbf16>, vector<4x16x8xbf16>, vector<4x16x8xf32> -> vector<4x16x8xf32>
    %90 = vector.shape_cast %89 : vector<4x16x8xf32> to vector<64x8xf32>
    %c0_28 = arith.constant 0 : index
    %c8 = arith.constant 8 : index
    %91 = vector.load %arg16[%c0_28, %c8] : memref<64x32xf32, #tpu.memory_space<vmem>>, vector<64x8xf32>
    tpu.vector_store %arg16[%c0_28, %c8], %90 {strides = array<i32>} : memref<64x32xf32, #tpu.memory_space<vmem>>, vector<64x8xf32>,
    %92 = vector.extract_strided_slice %36 {offsets = [0, 16], sizes = [64, 8], strides = [1, 1]} : vector<64x96xf32> to vector<64x8xf32>
    %93 = vector.shape_cast %92 : vector<64x8xf32> to vector<4x16x8xf32>
    %94 = vector.extract_strided_slice %36 {offsets = [0, 48], sizes = [64, 8], strides = [1, 1]} : vector<64x96xf32> to vector<64x8xf32>
    %95 = vector.shape_cast %94 : vector<64x8xf32> to vector<4x16x8xf32>
    %96 = vector.extract_strided_slice %36 {offsets = [0, 80], sizes = [64, 8], strides = [1, 1]} : vector<64x96xf32> to vector<64x8xf32>
    %97 = vector.shape_cast %96 : vector<64x8xf32> to vector<4x16x8xf32>
    %98 = arith.truncf %93 : vector<4x16x8xf32> to vector<4x16x8xbf16>
    %99 = arith.truncf %95 : vector<4x16x8xf32> to vector<4x16x8xbf16>
    %cst_29 = arith.constant dense<0.000000e+00> : vector<4x16x16xf32>
    %100 = tpu.matmul %98, %99, %cst_29 {dimension_numbers = #tpu.dot_dimension_numbers<[2], [2], [1], [1], [0, 0, 0, 1, 1, 1], [0], [0]>} : vector<4x16x8xbf16>, vector<4x16x8xbf16>, vector<4x16x16xf32> -> vector<4x16x16xf32>
    %101 = vector.extract_strided_slice %37 {offsets = [0, 2, 0, 0], sizes = [4, 1, 16, 16], strides = [1, 1, 1, 1]} : vector<4x4x16x16xf32> to vector<4x1x16x16xf32>
    %102 = vector.shape_cast %101 : vector<4x1x16x16xf32> to vector<4x16x16xf32>
    %103 = arith.addf %100, %102 : vector<4x16x16xf32>
    %cst_30 = arith.constant dense<0xFF800000> : vector<4x16xf32>
    %104 = vector.multi_reduction <maximumf>, %103, %cst_30 [2] : vector<4x16x16xf32> to vector<4x16xf32>
    %105 = vector.shape_cast %104 : vector<4x16xf32> to vector<4x16x1xf32>
    %106 = vector.broadcast %105 : vector<4x16x1xf32> to vector<4x16x16xf32>
    %107 = arith.subf %103, %106 : vector<4x16x16xf32>
    %108 = math.exp %107 : vector<4x16x16xf32>
    %cst_31 = arith.constant dense<0.000000e+00> : vector<4x16xf32>
    %109 = vector.multi_reduction <add>, %108, %cst_31 [2] : vector<4x16x16xf32> to vector<4x16xf32>
    %110 = vector.shape_cast %109 : vector<4x16xf32> to vector<4x16x1xf32>
    %111 = tpu.reciprocal %110 {approx = true} : vector<4x16x1xf32> -> vector<4x16x1xf32>
    %112 = vector.broadcast %111 : vector<4x16x1xf32> to vector<4x16x16xf32>
    %113 = arith.mulf %108, %112 : vector<4x16x16xf32>
    %114 = arith.truncf %113 : vector<4x16x16xf32> to vector<4x16x16xbf16>
    %115 = arith.truncf %97 : vector<4x16x8xf32> to vector<4x16x8xbf16>
    %cst_32 = arith.constant dense<0.000000e+00> : vector<4x16x8xf32>
    %116 = tpu.matmul %114, %115, %cst_32 {dimension_numbers = #tpu.dot_dimension_numbers<[2], [1], [1], [2], [0, 0, 0, 1, 1, 2], [0], [0]>} : vector<4x16x16xbf16>, vector<4x16x8xbf16>, vector<4x16x8xf32> -> vector<4x16x8xf32>
    %117 = vector.shape_cast %116 : vector<4x16x8xf32> to vector<64x8xf32>
    %c0_33 = arith.constant 0 : index
    %c16 = arith.constant 16 : index
    %118 = vector.load %arg16[%c0_33, %c16] : memref<64x32xf32, #tpu.memory_space<vmem>>, vector<64x8xf32>
    tpu.vector_store %arg16[%c0_33, %c16], %117 {strides = array<i32>} : memref<64x32xf32, #tpu.memory_space<vmem>>, vector<64x8xf32>,
    %119 = vector.extract_strided_slice %36 {offsets = [0, 24], sizes = [64, 8], strides = [1, 1]} : vector<64x96xf32> to vector<64x8xf32>
    %120 = vector.shape_cast %119 : vector<64x8xf32> to vector<4x16x8xf32>
    %121 = vector.extract_strided_slice %36 {offsets = [0, 56], sizes = [64, 8], strides = [1, 1]} : vector<64x96xf32> to vector<64x8xf32>
    %122 = vector.shape_cast %121 : vector<64x8xf32> to vector<4x16x8xf32>
    %123 = vector.extract_strided_slice %36 {offsets = [0, 88], sizes = [64, 8], strides = [1, 1]} : vector<64x96xf32> to vector<64x8xf32>
    %124 = vector.shape_cast %123 : vector<64x8xf32> to vector<4x16x8xf32>
    %125 = arith.truncf %120 : vector<4x16x8xf32> to vector<4x16x8xbf16>
    %126 = arith.truncf %122 : vector<4x16x8xf32> to vector<4x16x8xbf16>
    %cst_34 = arith.constant dense<0.000000e+00> : vector<4x16x16xf32>
    %127 = tpu.matmul %125, %126, %cst_34 {dimension_numbers = #tpu.dot_dimension_numbers<[2], [2], [1], [1], [0, 0, 0, 1, 1, 1], [0], [0]>} : vector<4x16x8xbf16>, vector<4x16x8xbf16>, vector<4x16x16xf32> -> vector<4x16x16xf32>
    %128 = vector.extract_strided_slice %37 {offsets = [0, 3, 0, 0], sizes = [4, 1, 16, 16], strides = [1, 1, 1, 1]} : vector<4x4x16x16xf32> to vector<4x1x16x16xf32>
    %129 = vector.shape_cast %128 : vector<4x1x16x16xf32> to vector<4x16x16xf32>
    %130 = arith.addf %127, %129 : vector<4x16x16xf32>
    %cst_35 = arith.constant dense<0xFF800000> : vector<4x16xf32>
    %131 = vector.multi_reduction <maximumf>, %130, %cst_35 [2] : vector<4x16x16xf32> to vector<4x16xf32>
    %132 = vector.shape_cast %131 : vector<4x16xf32> to vector<4x16x1xf32>
    %133 = vector.broadcast %132 : vector<4x16x1xf32> to vector<4x16x16xf32>
    %134 = arith.subf %130, %133 : vector<4x16x16xf32>
    %135 = math.exp %134 : vector<4x16x16xf32>
    %cst_36 = arith.constant dense<0.000000e+00> : vector<4x16xf32>
    %136 = vector.multi_reduction <add>, %135, %cst_36 [2] : vector<4x16x16xf32> to vector<4x16xf32>
    %137 = vector.shape_cast %136 : vector<4x16xf32> to vector<4x16x1xf32>
    %138 = tpu.reciprocal %137 {approx = true} : vector<4x16x1xf32> -> vector<4x16x1xf32>
    %139 = vector.broadcast %138 : vector<4x16x1xf32> to vector<4x16x16xf32>
    %140 = arith.mulf %135, %139 : vector<4x16x16xf32>
    %141 = arith.truncf %140 : vector<4x16x16xf32> to vector<4x16x16xbf16>
    %142 = arith.truncf %124 : vector<4x16x8xf32> to vector<4x16x8xbf16>
    %cst_37 = arith.constant dense<0.000000e+00> : vector<4x16x8xf32>
    %143 = tpu.matmul %141, %142, %cst_37 {dimension_numbers = #tpu.dot_dimension_numbers<[2], [1], [1], [2], [0, 0, 0, 1, 1, 2], [0], [0]>} : vector<4x16x16xbf16>, vector<4x16x8xbf16>, vector<4x16x8xf32> -> vector<4x16x8xf32>
    %144 = vector.shape_cast %143 : vector<4x16x8xf32> to vector<64x8xf32>
    %c0_38 = arith.constant 0 : index
    %c24 = arith.constant 24 : index
    %145 = vector.load %arg16[%c0_38, %c24] : memref<64x32xf32, #tpu.memory_space<vmem>>, vector<64x8xf32>
    tpu.vector_store %arg16[%c0_38, %c24], %144 {strides = array<i32>} : memref<64x32xf32, #tpu.memory_space<vmem>>, vector<64x8xf32>,
    %c0_39 = arith.constant 0 : index
    %c0_40 = arith.constant 0 : index
    %146 = vector.load %arg16[%c0_39, %c0_40] : memref<64x32xf32, #tpu.memory_space<vmem>>, vector<64x32xf32>
    %147 = arith.truncf %146 : vector<64x32xf32> to vector<64x32xbf16>
    %c0_41 = arith.constant 0 : index
    %c0_42 = arith.constant 0 : index
    %148 = vector.load %arg7[%c0_41, %c0_42] : memref<32x32xbf16, #tpu.memory_space<vmem>>, vector<32x32xbf16>
    %cst_43 = arith.constant dense<0.000000e+00> : vector<64x32xf32>
    %149 = tpu.matmul %147, %148, %cst_43 {dimension_numbers = #tpu.dot_dimension_numbers<[1], [0], [0], [1], [0, 0, 1, 1], [], []>} : vector<64x32xbf16>, vector<32x32xbf16>, vector<64x32xf32> -> vector<64x32xf32>
    %c0_44 = arith.constant 0 : index
    %c0_45 = arith.constant 0 : index
    %150 = vector.load %arg8[%c0_44, %c0_45] : memref<1x32xf32, #tpu.memory_space<vmem>>, vector<1x32xf32>
    %151 = vector.shape_cast %150 : vector<1x32xf32> to vector<32xf32>
    %152 = vector.shape_cast %151 : vector<32xf32> to vector<1x32xf32>
    %153 = vector.broadcast %152 : vector<1x32xf32> to vector<64x32xf32>
    %154 = arith.addf %149, %153 : vector<64x32xf32>
    %155 = arith.addf %0, %154 : vector<64x32xf32>
    %cst_46 = arith.constant dense<0.000000e+00> : vector<64xf32>
    %156 = vector.multi_reduction <add>, %155, %cst_46 [1] : vector<64x32xf32> to vector<64xf32>
    %157 = vector.shape_cast %156 : vector<64xf32> to vector<64x1xf32>
    %cst_47 = arith.constant 3.200000e+01 : f32
    %158 = vector.broadcast %cst_47 : f32 to vector<64x1xf32>
    %159 = arith.divf %157, %158 : vector<64x1xf32>
    %160 = vector.broadcast %159 : vector<64x1xf32> to vector<64x32xf32>
    %161 = arith.subf %155, %160 : vector<64x32xf32>
    %162 = arith.mulf %161, %161 : vector<64x32xf32>
    %cst_48 = arith.constant dense<0.000000e+00> : vector<64xf32>
    %163 = vector.multi_reduction <add>, %162, %cst_48 [1] : vector<64x32xf32> to vector<64xf32>
    %164 = vector.shape_cast %163 : vector<64xf32> to vector<64x1xf32>
    %cst_49 = arith.constant 3.200000e+01 : f32
    %165 = vector.broadcast %cst_49 : f32 to vector<64x1xf32>
    %166 = arith.divf %164, %165 : vector<64x1xf32>
    %167 = vector.broadcast %159 : vector<64x1xf32> to vector<64x32xf32>
    %168 = arith.subf %155, %167 : vector<64x32xf32>
    %cst_50 = arith.constant 9.99999974E-6 : f32
    %169 = vector.broadcast %cst_50 : f32 to vector<64x1xf32>
    %170 = arith.addf %166, %169 : vector<64x1xf32>
    %171 = math.rsqrt %170 : vector<64x1xf32>
    %172 = vector.broadcast %171 : vector<64x1xf32> to vector<64x32xf32>
    %173 = arith.mulf %168, %172 : vector<64x32xf32>
    %c0_51 = arith.constant 0 : index
    %c0_52 = arith.constant 0 : index
    %174 = vector.load %arg9[%c0_51, %c0_52] : memref<1x32xf32, #tpu.memory_space<vmem>>, vector<1x32xf32>
    %175 = vector.shape_cast %174 : vector<1x32xf32> to vector<32xf32>
    %176 = vector.shape_cast %175 : vector<32xf32> to vector<1x32xf32>
    %177 = vector.broadcast %176 : vector<1x32xf32> to vector<64x32xf32>
    %178 = arith.mulf %173, %177 : vector<64x32xf32>
    %c0_53 = arith.constant 0 : index
    %c0_54 = arith.constant 0 : index
    %179 = vector.load %arg10[%c0_53, %c0_54] : memref<1x32xf32, #tpu.memory_space<vmem>>, vector<1x32xf32>
    %180 = vector.shape_cast %179 : vector<1x32xf32> to vector<32xf32>
    %181 = vector.shape_cast %180 : vector<32xf32> to vector<1x32xf32>
    %182 = vector.broadcast %181 : vector<1x32xf32> to vector<64x32xf32>
    %183 = arith.addf %178, %182 : vector<64x32xf32>
    %184 = arith.truncf %183 : vector<64x32xf32> to vector<64x32xbf16>
    %c0_55 = arith.constant 0 : index
    %c0_56 = arith.constant 0 : index
    %185 = vector.load %arg11[%c0_55, %c0_56] : memref<32x128xbf16, #tpu.memory_space<vmem>>, vector<32x128xbf16>
    %cst_57 = arith.constant dense<0.000000e+00> : vector<64x128xf32>
    %186 = tpu.matmul %184, %185, %cst_57 {dimension_numbers = #tpu.dot_dimension_numbers<[1], [0], [0], [1], [0, 0, 1, 1], [], []>} : vector<64x32xbf16>, vector<32x128xbf16>, vector<64x128xf32> -> vector<64x128xf32>
    %c0_58 = arith.constant 0 : index
    %c0_59 = arith.constant 0 : index
    %187 = vector.load %arg12[%c0_58, %c0_59] : memref<1x128xf32, #tpu.memory_space<vmem>>, vector<1x128xf32>
    %188 = vector.shape_cast %187 : vector<1x128xf32> to vector<128xf32>
    %189 = vector.shape_cast %188 : vector<128xf32> to vector<1x128xf32>
    %190 = vector.broadcast %189 : vector<1x128xf32> to vector<64x128xf32>
    %191 = arith.addf %186, %190 : vector<64x128xf32>
    %cst_60 = arith.constant 5.000000e-01 : f32
    %192 = vector.broadcast %cst_60 : f32 to vector<64x128xf32>
    %193 = arith.mulf %192, %191 : vector<64x128xf32>
    %cst_61 = arith.constant 0.707106769 : f32
    %194 = vector.broadcast %cst_61 : f32 to vector<64x128xf32>
    %195 = arith.mulf %191, %194 : vector<64x128xf32>
    %196 = math.erf %195 : vector<64x128xf32>
    %cst_62 = arith.constant 1.000000e+00 : f32
    %197 = vector.broadcast %cst_62 : f32 to vector<64x128xf32>
    %198 = arith.addf %197, %196 : vector<64x128xf32>
    %199 = arith.mulf %193, %198 : vector<64x128xf32>
    %200 = arith.truncf %199 : vector<64x128xf32> to vector<64x128xbf16>
    %c0_63 = arith.constant 0 : index
    %c0_64 = arith.constant 0 : index
    %201 = vector.load %arg13[%c0_63, %c0_64] : memref<128x32xbf16, #tpu.memory_space<vmem>>, vector<128x32xbf16>
    %cst_65 = arith.constant dense<0.000000e+00> : vector<64x32xf32>
    %202 = tpu.matmul %200, %201, %cst_65 {dimension_numbers = #tpu.dot_dimension_numbers<[1], [0], [0], [1], [0, 0, 1, 1], [], []>} : vector<64x128xbf16>, vector<128x32xbf16>, vector<64x32xf32> -> vector<64x32xf32>
    %c0_66 = arith.constant 0 : index
    %c0_67 = arith.constant 0 : index
    %203 = vector.load %arg14[%c0_66, %c0_67] : memref<1x32xf32, #tpu.memory_space<vmem>>, vector<1x32xf32>
    %204 = vector.shape_cast %203 : vector<1x32xf32> to vector<32xf32>
    %205 = vector.shape_cast %204 : vector<32xf32> to vector<1x32xf32>
    %206 = vector.broadcast %205 : vector<1x32xf32> to vector<64x32xf32>
    %207 = arith.addf %202, %206 : vector<64x32xf32>
    %208 = arith.addf %155, %207 : vector<64x32xf32>
    %c0_68 = arith.constant 0 : index
    %c0_69 = arith.constant 0 : index
    %209 = vector.load %arg15[%c0_68, %c0_69] : memref<64x32xf32, #tpu.memory_space<vmem>>, vector<64x32xf32>
    tpu.vector_store %arg15[%c0_68, %c0_69], %208 {strides = array<i32>} : memref<64x32xf32, #tpu.memory_space<vmem>>, vector<64x32xf32>,
    return
  }
  func.func @transform_0(%arg0: i32) -> (i32, i32) {
    %c0_i32 = arith.constant 0 : i32
    %c0_i32_0 = arith.constant 0 : i32
    return %arg0, %c0_i32 : i32, i32
  }
  func.func @transform_1(%arg0: i32) -> (i32, i32, i32, i32) {
    %c1_i32 = arith.constant 1 : i32
    %c0_i32 = arith.constant 0 : i32
    %0 = arith.cmpi eq, %c1_i32, %c0_i32 : i32
    %c1_i32_0 = arith.constant 1 : i32
    %1 = arith.select %0, %c1_i32_0, %c1_i32 : i32
    %2 = arith.remsi %arg0, %1 : i32
    %c0_i32_1 = arith.constant 0 : i32
    %3 = arith.cmpi ne, %2, %c0_i32_1 : i32
    %c0_i32_2 = arith.constant 0 : i32
    %4 = arith.cmpi slt, %2, %c0_i32_2 : i32
    %c0_i32_3 = arith.constant 0 : i32
    %5 = arith.cmpi slt, %1, %c0_i32_3 : i32
    %6 = arith.xori %4, %5 : i1
    %7 = arith.andi %6, %3 : i1
    %8 = arith.addi %2, %1 : i32
    %9 = arith.select %7, %8, %2 : i32
    %c0_i32_4 = arith.constant 0 : i32
    %c0_i32_5 = arith.constant 0 : i32
    %c0_i32_6 = arith.constant 0 : i32
    %c0_i32_7 = arith.constant 0 : i32
    return %9, %c0_i32_4, %c0_i32_5, %c0_i32_6 : i32, i32, i32, i32
  }
  func.func @transform_2(%arg0: i32) -> (i32, i32) {
    %c0_i32 = arith.constant 0 : i32
    %c0_i32_0 = arith.constant 0 : i32
    %c0_i32_1 = arith.constant 0 : i32
    return %c0_i32, %c0_i32_0 : i32, i32
  }
  func.func @transform_3(%arg0: i32) -> (i32, i32) {
    %c0_i32 = arith.constant 0 : i32
    %c0_i32_0 = arith.constant 0 : i32
    %c0_i32_1 = arith.constant 0 : i32
    return %c0_i32, %c0_i32_0 : i32, i32
  }
  func.func @transform_4(%arg0: i32) -> (i32, i32) {
    %c0_i32 = arith.constant 0 : i32
    %c0_i32_0 = arith.constant 0 : i32
    %c0_i32_1 = arith.constant 0 : i32
    return %c0_i32, %c0_i32_0 : i32, i32
  }
  func.func @transform_5(%arg0: i32) -> (i32, i32) {
    %c0_i32 = arith.constant 0 : i32
    %c0_i32_0 = arith.constant 0 : i32
    %c0_i32_1 = arith.constant 0 : i32
    return %c0_i32, %c0_i32_0 : i32, i32
  }
  func.func @transform_6(%arg0: i32) -> (i32, i32) {
    %c0_i32 = arith.constant 0 : i32
    %c0_i32_0 = arith.constant 0 : i32
    %c0_i32_1 = arith.constant 0 : i32
    return %c0_i32, %c0_i32_0 : i32, i32
  }
  func.func @transform_7(%arg0: i32) -> (i32, i32) {
    %c0_i32 = arith.constant 0 : i32
    %c0_i32_0 = arith.constant 0 : i32
    %c0_i32_1 = arith.constant 0 : i32
    return %c0_i32, %c0_i32_0 : i32, i32
  }
  func.func @transform_8(%arg0: i32) -> (i32, i32) {
    %c0_i32 = arith.constant 0 : i32
    %c0_i32_0 = arith.constant 0 : i32
    %c0_i32_1 = arith.constant 0 : i32
    return %c0_i32, %c0_i32_0 : i32, i32
  }
  func.func @transform_9(%arg0: i32) -> (i32, i32) {
    %c0_i32 = arith.constant 0 : i32
    %c0_i32_0 = arith.constant 0 : i32
    %c0_i32_1 = arith.constant 0 : i32
    return %c0_i32, %c0_i32_0 : i32, i32
  }
  func.func @transform_10(%arg0: i32) -> (i32, i32) {
    %c0_i32 = arith.constant 0 : i32
    %c0_i32_0 = arith.constant 0 : i32
    %c0_i32_1 = arith.constant 0 : i32
    return %c0_i32, %c0_i32_0 : i32, i32
  }
  func.func @transform_11(%arg0: i32) -> (i32, i32) {
    %c0_i32 = arith.constant 0 : i32
    %c0_i32_0 = arith.constant 0 : i32
    %c0_i32_1 = arith.constant 0 : i32
    return %c0_i32, %c0_i32_0 : i32, i32
  }
  func.func @transform_12(%arg0: i32) -> (i32, i32) {
    %c0_i32 = arith.constant 0 : i32
    %c0_i32_0 = arith.constant 0 : i32
    %c0_i32_1 = arith.constant 0 : i32
    return %c0_i32, %c0_i32_0 : i32, i32
  }
  func.func @transform_13(%arg0: i32) -> (i32, i32) {
    %c0_i32 = arith.constant 0 : i32
    %c0_i32_0 = arith.constant 0 : i32
    %c0_i32_1 = arith.constant 0 : i32
    return %c0_i32, %c0_i32_0 : i32, i32
  }
  func.func @transform_14(%arg0: i32) -> (i32, i32) {
    %c0_i32 = arith.constant 0 : i32
    %c0_i32_0 = arith.constant 0 : i32
    return %arg0, %c0_i32 : i32, i32
  }
}

</mosaic_0001>

<llo_original>
// kernel: basic_layer_forward.2
$region0: #{basic_layer_forward.2}
  #allocation0 [shape = 'u32[]', space=smem, size = 0x4, offset = 0x4, fixed_abs, tag = 'smem constant byte address 0x4 - core index']
  #allocation1 [shape = 'u32[144,128]{1,0:T(1,128)}', space=vmem, size = 0x12000, scoped, tag = 'internal scratch']
  #allocation2 [shape = 'f32[64,32]{1,0:T(8,128)}', space=vmem, size = 0x8000, scoped, tag = 'scratch operand']
  %s0 = inlined_call_operand.vmem [shape: f32[128,32], index: 0, kind: input, shape index: {}]
  %s1 = inlined_call_operand.vmem [shape: f32[1,4,16,16], index: 1, kind: input, shape index: {}]
  %s2 = inlined_call_operand.vmem [shape: f32[1,32], index: 2, kind: input, shape index: {}]
  %s3 = inlined_call_operand.vmem [shape: f32[1,32], index: 3, kind: input, shape index: {}]
  %s4 = inlined_call_operand.vmem [shape: bf16[32,96], index: 4, kind: input, shape index: {}]
  %s5 = inlined_call_operand.vmem [shape: f32[1,96], index: 5, kind: input, shape index: {}]
  %s6 = inlined_call_operand.vmem [shape: bf16[32,32], index: 6, kind: input, shape index: {}]
  %s7 = inlined_call_operand.vmem [shape: f32[1,32], index: 7, kind: input, shape index: {}]
  %s8 = inlined_call_operand.vmem [shape: f32[1,32], index: 8, kind: input, shape index: {}]
  %s9 = inlined_call_operand.vmem [shape: f32[1,32], index: 9, kind: input, shape index: {}]
  %s10 = inlined_call_operand.vmem [shape: bf16[32,128], index: 10, kind: input, shape index: {}]
  %s11 = inlined_call_operand.vmem [shape: f32[1,128], index: 11, kind: input, shape index: {}]
  %s12 = inlined_call_operand.vmem [shape: bf16[128,32], index: 12, kind: input, shape index: {}]
  %s13 = inlined_call_operand.vmem [shape: f32[1,32], index: 13, kind: input, shape index: {}]
  %s14 = inlined_call_operand.vmem [shape: f32[128,32], index: 14, kind: output, shape index: {}]
  %s15 = sld [smem:[#allocation0]]
  $region89: #{basic_layer_forward.2} parent=0
    _
  %s17 = ssub.s32 1, %s15
  %s18 = scalar_select 0, %s17, %s15
  loop: start=0, step=1, limit=4
  $region2: #{basic_layer_forward.2} parent=0 // loop_pre_header
    _
  $region3: #{basic_layer_forward.2} parent=0 // loop_header
    %s20 = sphi 0, %s24
    %p21 = scmp.ge.s32.totalorder %s20, 4
    %s30 = sphi 0, %s32
    %s33 = sphi 0, %s30
    %s34 = sphi 0, %s33
    %s50 = sphi 0, %s34
    %s54 = sphi 0, %s54
    %s56 = sphi 0, %s54
    %s57 = sphi 0, %s56
    %s71 = sphi 0, %s57
    %s75 = sphi 0, %s75
    %s77 = sphi 0, %s75
    %s78 = sphi 0, %s77
    %s92 = sphi 0, %s78
    %s96 = sphi 0, %s96
    %s98 = sphi 0, %s96
    %s99 = sphi 0, %s98
    %s113 = sphi 0, %s99
    %s117 = sphi 0, %s117
    %s119 = sphi 0, %s117
    %s120 = sphi 0, %s119
    %s134 = sphi 0, %s120
    %s138 = sphi 0, %s138
    %s140 = sphi 0, %s138
    %s141 = sphi 0, %s140
    %s155 = sphi 0, %s141
    %s159 = sphi 0, %s159
    %s161 = sphi 0, %s159
    %s162 = sphi 0, %s161
    %s176 = sphi 0, %s162
    %s180 = sphi 0, %s180
    %s182 = sphi 0, %s180
    %s183 = sphi 0, %s182
    %s197 = sphi 0, %s183
    %s201 = sphi 0, %s201
    %s203 = sphi 0, %s201
    %s204 = sphi 0, %s203
    %s218 = sphi 0, %s204
    %s222 = sphi 0, %s222
    %s224 = sphi 0, %s222
    %s225 = sphi 0, %s224
    %s239 = sphi 0, %s225
    %s243 = sphi 0, %s243
    %s245 = sphi 0, %s243
    %s246 = sphi 0, %s245
    %s260 = sphi 0, %s246
    %s264 = sphi 0, %s264
    %s266 = sphi 0, %s264
    %s267 = sphi 0, %s266
    %s281 = sphi 0, %s267
    %s285 = sphi 0, %s285
    %s287 = sphi 0, %s285
    %s288 = sphi 0, %s287
    %s302 = sphi 0, %s288
    %s306 = sphi 0, %s306
    %s308 = sphi 0, %s306
    %s309 = sphi 0, %s308
    %s323 = sphi 0, %s309
    %s329 = sphi 0, %s331
    %s332 = sphi 0, %s329
    %s333 = sphi 0, %s332
    %s349 = sphi 0, %s333
  $region4: #{basic_layer_forward.2} parent=0 // loop_header_branch
    %23 = sbr.rel (%p21) target = $region8
  $region5: #{basic_layer_forward.2} parent=0 // loop_body
    %s25 = ssub.s32 %s20, 1
    %s26 = ssub.s32 %s20, 2
    %s27 = sadd.s32 %s20, 1
    %s28 = ssub.s32 %s20, %s27
    %p29 = scmp.eq.s32.totalorder %s28, 0
    %s31 = sadd.s32 %s30, 1
    %s32 = scalar_select %p29, %s30, %s31
    %p35 = pneg %p29
    %p36 = scmp.eq.s32.totalorder %s20, 1
    %p37 = por %p35, %p36
    %p38 = scmp.ne.s32.totalorder %s30, %s33
    %p39 = scmp.eq.s32.totalorder %s20, 0
    %p40 = por %p38, %p39
    %p41 = scmp.ne.s32.totalorder %s30, %s33
    %p42 = scmp.eq.s32.totalorder %s25, 1
    %p43 = por %p41, %p42
    %p44 = scmp.ne.s32.totalorder %s33, %s34
    %p45 = scmp.eq.s32.totalorder %s25, 0
    %p46 = por %p44, %p45
    %p47 = scmp.ne.s32.totalorder %s33, %s34
    %p48 = scmp.eq.s32.totalorder %s26, 1
    %p49 = por %p47, %p48
    %p51 = scmp.ne.s32.totalorder %s34, %s50
    %p52 = scmp.eq.s32.totalorder %s26, 0
    %p53 = por %p51, %p52
    %s55 = sadd.s32 %s54, 1
    %p58 = scmp.eq.s32.totalorder %s20, 1
    %p59 = scmp.ne.s32.totalorder %s54, %s56
    %p60 = scmp.eq.s32.totalorder %s20, 0
    %p61 = por %p59, %p60
    %p62 = scmp.ne.s32.totalorder %s54, %s56
    %p63 = scmp.eq.s32.totalorder %s25, 1
    %p64 = por %p62, %p63
    %p65 = scmp.ne.s32.totalorder %s56, %s57
    %p66 = scmp.eq.s32.totalorder %s25, 0
    %p67 = por %p65, %p66
    %p68 = scmp.ne.s32.totalorder %s56, %s57
    %p69 = scmp.eq.s32.totalorder %s26, 1
    %p70 = por %p68, %p69
    %p72 = scmp.ne.s32.totalorder %s57, %s71
    %p73 = scmp.eq.s32.totalorder %s26, 0
    %p74 = por %p72, %p73
    %s76 = sadd.s32 %s75, 1
    %p79 = scmp.eq.s32.totalorder %s20, 1
    %p80 = scmp.ne.s32.totalorder %s75, %s77
    %p81 = scmp.eq.s32.totalorder %s20, 0
    %p82 = por %p80, %p81
    %p83 = scmp.ne.s32.totalorder %s75, %s77
    %p84 = scmp.eq.s32.totalorder %s25, 1
    %p85 = por %p83, %p84
    %p86 = scmp.ne.s32.totalorder %s77, %s78
    %p87 = scmp.eq.s32.totalorder %s25, 0
    %p88 = por %p86, %p87
    %p89 = scmp.ne.s32.totalorder %s77, %s78
    %p90 = scmp.eq.s32.totalorder %s26, 1
    %p91 = por %p89, %p90
    %p93 = scmp.ne.s32.totalorder %s78, %s92
    %p94 = scmp.eq.s32.totalorder %s26, 0
    %p95 = por %p93, %p94
    %s97 = sadd.s32 %s96, 1
    %p100 = scmp.eq.s32.totalorder %s20, 1
    %p101 = scmp.ne.s32.totalorder %s96, %s98
    %p102 = scmp.eq.s32.totalorder %s20, 0
    %p103 = por %p101, %p102
    %p104 = scmp.ne.s32.totalorder %s96, %s98
    %p105 = scmp.eq.s32.totalorder %s25, 1
    %p106 = por %p104, %p105
    %p107 = scmp.ne.s32.totalorder %s98, %s99
    %p108 = scmp.eq.s32.totalorder %s25, 0
    %p109 = por %p107, %p108
    %p110 = scmp.ne.s32.totalorder %s98, %s99
    %p111 = scmp.eq.s32.totalorder %s26, 1
    %p112 = por %p110, %p111
    %p114 = scmp.ne.s32.totalorder %s99, %s113
    %p115 = scmp.eq.s32.totalorder %s26, 0
    %p116 = por %p114, %p115
    %s118 = sadd.s32 %s117, 1
    %p121 = scmp.eq.s32.totalorder %s20, 1
    %p122 = scmp.ne.s32.totalorder %s117, %s119
    %p123 = scmp.eq.s32.totalorder %s20, 0
    %p124 = por %p122, %p123
    %p125 = scmp.ne.s32.totalorder %s117, %s119
    %p126 = scmp.eq.s32.totalorder %s25, 1
    %p127 = por %p125, %p126
    %p128 = scmp.ne.s32.totalorder %s119, %s120
    %p129 = scmp.eq.s32.totalorder %s25, 0
    %p130 = por %p128, %p129
    %p131 = scmp.ne.s32.totalorder %s119, %s120
    %p132 = scmp.eq.s32.totalorder %s26, 1
    %p133 = por %p131, %p132
    %p135 = scmp.ne.s32.totalorder %s120, %s134
    %p136 = scmp.eq.s32.totalorder %s26, 0
    %p137 = por %p135, %p136
    %s139 = sadd.s32 %s138, 1
    %p142 = scmp.eq.s32.totalorder %s20, 1
    %p143 = scmp.ne.s32.totalorder %s138, %s140
    %p144 = scmp.eq.s32.totalorder %s20, 0
    %p145 = por %p143, %p144
    %p146 = scmp.ne.s32.totalorder %s138, %s140
    %p147 = scmp.eq.s32.totalorder %s25, 1
    %p148 = por %p146, %p147
    %p149 = scmp.ne.s32.totalorder %s140, %s141
    %p150 = scmp.eq.s32.totalorder %s25, 0
    %p151 = por %p149, %p150
    %p152 = scmp.ne.s32.totalorder %s140, %s141
    %p153 = scmp.eq.s32.totalorder %s26, 1
    %p154 = por %p152, %p153
    %p156 = scmp.ne.s32.totalorder %s141, %s155
    %p157 = scmp.eq.s32.totalorder %s26, 0
    %p158 = por %p156, %p157
    %s160 = sadd.s32 %s159, 1
    %p163 = scmp.eq.s32.totalorder %s20, 1
    %p164 = scmp.ne.s32.totalorder %s159, %s161
    %p165 = scmp.eq.s32.totalorder %s20, 0
    %p166 = por %p164, %p165
    %p167 = scmp.ne.s32.totalorder %s159, %s161
    %p168 = scmp.eq.s32.totalorder %s25, 1
    %p169 = por %p167, %p168
    %p170 = scmp.ne.s32.totalorder %s161, %s162
    %p171 = scmp.eq.s32.totalorder %s25, 0
    %p172 = por %p170, %p171
    %p173 = scmp.ne.s32.totalorder %s161, %s162
    %p174 = scmp.eq.s32.totalorder %s26, 1
    %p175 = por %p173, %p174
    %p177 = scmp.ne.s32.totalorder %s162, %s176
    %p178 = scmp.eq.s32.totalorder %s26, 0
    %p179 = por %p177, %p178
    %s181 = sadd.s32 %s180, 1
    %p184 = scmp.eq.s32.totalorder %s20, 1
    %p185 = scmp.ne.s32.totalorder %s180, %s182
    %p186 = scmp.eq.s32.totalorder %s20, 0
    %p187 = por %p185, %p186
    %p188 = scmp.ne.s32.totalorder %s180, %s182
    %p189 = scmp.eq.s32.totalorder %s25, 1
    %p190 = por %p188, %p189
    %p191 = scmp.ne.s32.totalorder %s182, %s183
    %p192 = scmp.eq.s32.totalorder %s25, 0
    %p193 = por %p191, %p192
    %p194 = scmp.ne.s32.totalorder %s182, %s183
    %p195 = scmp.eq.s32.totalorder %s26, 1
    %p196 = por %p194, %p195
    %p198 = scmp.ne.s32.totalorder %s183, %s197
    %p199 = scmp.eq.s32.totalorder %s26, 0
    %p200 = por %p198, %p199
    %s202 = sadd.s32 %s201, 1
    %p205 = scmp.eq.s32.totalorder %s20, 1
    %p206 = scmp.ne.s32.totalorder %s201, %s203
    %p207 = scmp.eq.s32.totalorder %s20, 0
    %p208 = por %p206, %p207
    %p209 = scmp.ne.s32.totalorder %s201, %s203
    %p210 = scmp.eq.s32.totalorder %s25, 1
    %p211 = por %p209, %p210
    %p212 = scmp.ne.s32.totalorder %s203, %s204
    %p213 = scmp.eq.s32.totalorder %s25, 0
    %p214 = por %p212, %p213
    %p215 = scmp.ne.s32.totalorder %s203, %s204
    %p216 = scmp.eq.s32.totalorder %s26, 1
    %p217 = por %p215, %p216
    %p219 = scmp.ne.s32.totalorder %s204, %s218
    %p220 = scmp.eq.s32.totalorder %s26, 0
    %p221 = por %p219, %p220
    %s223 = sadd.s32 %s222, 1
    %p226 = scmp.eq.s32.totalorder %s20, 1
    %p227 = scmp.ne.s32.totalorder %s222, %s224
    %p228 = scmp.eq.s32.totalorder %s20, 0
    %p229 = por %p227, %p228
    %p230 = scmp.ne.s32.totalorder %s222, %s224
    %p231 = scmp.eq.s32.totalorder %s25, 1
    %p232 = por %p230, %p231
    %p233 = scmp.ne.s32.totalorder %s224, %s225
    %p234 = scmp.eq.s32.totalorder %s25, 0
    %p235 = por %p233, %p234
    %p236 = scmp.ne.s32.totalorder %s224, %s225
    %p237 = scmp.eq.s32.totalorder %s26, 1
    %p238 = por %p236, %p237
    %p240 = scmp.ne.s32.totalorder %s225, %s239
    %p241 = scmp.eq.s32.totalorder %s26, 0
    %p242 = por %p240, %p241
    %s244 = sadd.s32 %s243, 1
    %p247 = scmp.eq.s32.totalorder %s20, 1
    %p248 = scmp.ne.s32.totalorder %s243, %s245
    %p249 = scmp.eq.s32.totalorder %s20, 0
    %p250 = por %p248, %p249
    %p251 = scmp.ne.s32.totalorder %s243, %s245
    %p252 = scmp.eq.s32.totalorder %s25, 1
    %p253 = por %p251, %p252
    %p254 = scmp.ne.s32.totalorder %s245, %s246
    %p255 = scmp.eq.s32.totalorder %s25, 0
    %p256 = por %p254, %p255
    %p257 = scmp.ne.s32.totalorder %s245, %s246
    %p258 = scmp.eq.s32.totalorder %s26, 1
    %p259 = por %p257, %p258
    %p261 = scmp.ne.s32.totalorder %s246, %s260
    %p262 = scmp.eq.s32.totalorder %s26, 0
    %p263 = por %p261, %p262
    %s265 = sadd.s32 %s264, 1
    %p268 = scmp.eq.s32.totalorder %s20, 1
    %p269 = scmp.ne.s32.totalorder %s264, %s266
    %p270 = scmp.eq.s32.totalorder %s20, 0
    %p271 = por %p269, %p270
    %p272 = scmp.ne.s32.totalorder %s264, %s266
    %p273 = scmp.eq.s32.totalorder %s25, 1
    %p274 = por %p272, %p273
    %p275 = scmp.ne.s32.totalorder %s266, %s267
    %p276 = scmp.eq.s32.totalorder %s25, 0
    %p277 = por %p275, %p276
    %p278 = scmp.ne.s32.totalorder %s266, %s267
    %p279 = scmp.eq.s32.totalorder %s26, 1
    %p280 = por %p278, %p279
    %p282 = scmp.ne.s32.totalorder %s267, %s281
    %p283 = scmp.eq.s32.totalorder %s26, 0
    %p284 = por %p282, %p283
    %s286 = sadd.s32 %s285, 1
    %p289 = scmp.eq.s32.totalorder %s20, 1
    %p290 = scmp.ne.s32.totalorder %s285, %s287
    %p291 = scmp.eq.s32.totalorder %s20, 0
    %p292 = por %p290, %p291
    %p293 = scmp.ne.s32.totalorder %s285, %s287
    %p294 = scmp.eq.s32.totalorder %s25, 1
    %p295 = por %p293, %p294
    %p296 = scmp.ne.s32.totalorder %s287, %s288
    %p297 = scmp.eq.s32.totalorder %s25, 0
    %p298 = por %p296, %p297
    %p299 = scmp.ne.s32.totalorder %s287, %s288
    %p300 = scmp.eq.s32.totalorder %s26, 1
    %p301 = por %p299, %p300
    %p303 = scmp.ne.s32.totalorder %s288, %s302
    %p304 = scmp.eq.s32.totalorder %s26, 0
    %p305 = por %p303, %p304
    %s307 = sadd.s32 %s306, 1
    %p310 = scmp.eq.s32.totalorder %s20, 1
    %p311 = scmp.ne.s32.totalorder %s306, %s308
    %p312 = scmp.eq.s32.totalorder %s20, 0
    %p313 = por %p311, %p312
    %p314 = scmp.ne.s32.totalorder %s306, %s308
    %p315 = scmp.eq.s32.totalorder %s25, 1
    %p316 = por %p314, %p315
    %p317 = scmp.ne.s32.totalorder %s308, %s309
    %p318 = scmp.eq.s32.totalorder %s25, 0
    %p319 = por %p317, %p318
    %p320 = scmp.ne.s32.totalorder %s308, %s309
    %p321 = scmp.eq.s32.totalorder %s26, 1
    %p322 = por %p320, %p321
    %p324 = scmp.ne.s32.totalorder %s309, %s323
    %p325 = scmp.eq.s32.totalorder %s26, 0
    %p326 = por %p324, %p325
    %s327 = ssub.s32 %s20, %s27
    %p328 = scmp.eq.s32.totalorder %s327, 0
    %s330 = sadd.s32 %s329, 1
    %s331 = scalar_select %p328, %s329, %s330
    %p334 = pneg %p328
    %p335 = scmp.eq.s32.totalorder %s20, 1
    %p336 = por %p334, %p335
    %p337 = scmp.ne.s32.totalorder %s329, %s332
    %p338 = scmp.eq.s32.totalorder %s20, 0
    %p339 = por %p337, %p338
    %p340 = scmp.ne.s32.totalorder %s329, %s332
    %p341 = scmp.eq.s32.totalorder %s25, 1
    %p342 = por %p340, %p341
    %p343 = scmp.ne.s32.totalorder %s332, %s333
    %p344 = scmp.eq.s32.totalorder %s25, 0
    %p345 = por %p343, %p344
    %p346 = scmp.ne.s32.totalorder %s332, %s333
    %p347 = scmp.eq.s32.totalorder %s26, 1
    %p348 = por %p346, %p347
    %p350 = scmp.ne.s32.totalorder %s333, %s349
    %p351 = scmp.eq.s32.totalorder %s26, 0
    %p352 = por %p350, %p351
    %p353 = scmp.le.s32.totalorder 1, %s20
    %p354 = scmp.lt.s32.totalorder %s20, 3
    %p355 = pnand %p353, %p354
    %p356 = pneg %p355
    // Predicated region
    $region9: #{basic_layer_forward.2} parent=5 // pred_check
      _
    $region10: #{basic_layer_forward.2} parent=5 // pred_check_branch
      %358 = sbr.rel (%p355) target = $region12
    $region11: #{basic_layer_forward.2} parent=5 // pred_region
      %s359 = ssub.s32 %s20, 1
      // Predicated region
      $region13: #{basic_layer_forward.2} parent=11 // pred_check
        %p360 = pneg %p67
      $region14: #{basic_layer_forward.2} parent=11 // pred_check_branch
        %362 = sbr.rel (%p360) target = $region16
      $region15: #{basic_layer_forward.2} parent=11 // pred_region
        _
      $region16: #{basic_layer_forward.2} parent=11 // pred_fallthru
        _
      // Predicated region
      $region17: #{basic_layer_forward.2} parent=11 // pred_check
        %p363 = pneg %p88
      $region18: #{basic_layer_forward.2} parent=11 // pred_check_branch
        %365 = sbr.rel (%p363) target = $region20
      $region19: #{basic_layer_forward.2} parent=11 // pred_region
        _
      $region20: #{basic_layer_forward.2} parent=11 // pred_fallthru
        _
      // Predicated region
      $region21: #{basic_layer_forward.2} parent=11 // pred_check
        %p366 = pneg %p109
      $region22: #{basic_layer_forward.2} parent=11 // pred_check_branch
        %368 = sbr.rel (%p366) target = $region24
      $region23: #{basic_layer_forward.2} parent=11 // pred_region
        _
      $region24: #{basic_layer_forward.2} parent=11 // pred_fallthru
        _
      // Predicated region
      $region25: #{basic_layer_forward.2} parent=11 // pred_check
        %p369 = pneg %p130
      $region26: #{basic_layer_forward.2} parent=11 // pred_check_branch
        %371 = sbr.rel (%p369) target = $region28
      $region27: #{basic_layer_forward.2} parent=11 // pred_region
        _
      $region28: #{basic_layer_forward.2} parent=11 // pred_fallthru
        _
      // Predicated region
      $region29: #{basic_layer_forward.2} parent=11 // pred_check
        %p372 = pneg %p151
      $region30: #{basic_layer_forward.2} parent=11 // pred_check_branch
        %374 = sbr.rel (%p372) target = $region32
      $region31: #{basic_layer_forward.2} parent=11 // pred_region
        _
      $region32: #{basic_layer_forward.2} parent=11 // pred_fallthru
        _
      // Predicated region
      $region33: #{basic_layer_forward.2} parent=11 // pred_check
        %p375 = pneg %p172
      $region34: #{basic_layer_forward.2} parent=11 // pred_check_branch
        %377 = sbr.rel (%p375) target = $region36
      $region35: #{basic_layer_forward.2} parent=11 // pred_region
        _
      $region36: #{basic_layer_forward.2} parent=11 // pred_fallthru
        _
      // Predicated region
      $region37: #{basic_layer_forward.2} parent=11 // pred_check
        %p378 = pneg %p193
      $region38: #{basic_layer_forward.2} parent=11 // pred_check_branch
        %380 = sbr.rel (%p378) target = $region40
      $region39: #{basic_layer_forward.2} parent=11 // pred_region
        _
      $region40: #{basic_layer_forward.2} parent=11 // pred_fallthru
        _
      // Predicated region
      $region41: #{basic_layer_forward.2} parent=11 // pred_check
        %p381 = pneg %p214
      $region42: #{basic_layer_forward.2} parent=11 // pred_check_branch
        %383 = sbr.rel (%p381) target = $region44
      $region43: #{basic_layer_forward.2} parent=11 // pred_region
        _
      $region44: #{basic_layer_forward.2} parent=11 // pred_fallthru
        _
      // Predicated region
      $region45: #{basic_layer_forward.2} parent=11 // pred_check
        %p384 = pneg %p235
      $region46: #{basic_layer_forward.2} parent=11 // pred_check_branch
        %386 = sbr.rel (%p384) target = $region48
      $region47: #{basic_layer_forward.2} parent=11 // pred_region
        _
      $region48: #{basic_layer_forward.2} parent=11 // pred_fallthru
        _
      // Predicated region
      $region49: #{basic_layer_forward.2} parent=11 // pred_check
        %p387 = pneg %p256
      $region50: #{basic_layer_forward.2} parent=11 // pred_check_branch
        %389 = sbr.rel (%p387) target = $region52
      $region51: #{basic_layer_forward.2} parent=11 // pred_region
        _
      $region52: #{basic_layer_forward.2} parent=11 // pred_fallthru
        _
      // Predicated region
      $region53: #{basic_layer_forward.2} parent=11 // pred_check
        %p390 = pneg %p277
      $region54: #{basic_layer_forward.2} parent=11 // pred_check_branch
        %392 = sbr.rel (%p390) target = $region56
      $region55: #{basic_layer_forward.2} parent=11 // pred_region
        _
      $region56: #{basic_layer_forward.2} parent=11 // pred_fallthru
        _
      // Predicated region
      $region57: #{basic_layer_forward.2} parent=11 // pred_check
        %p393 = pneg %p298
      $region58: #{basic_layer_forward.2} parent=11 // pred_check_branch
        %395 = sbr.rel (%p393) target = $region60
      $region59: #{basic_layer_forward.2} parent=11 // pred_region
        _
      $region60: #{basic_layer_forward.2} parent=11 // pred_fallthru
        _
      // Predicated region
      $region61: #{basic_layer_forward.2} parent=11 // pred_check
        %p396 = pneg %p319
      $region62: #{basic_layer_forward.2} parent=11 // pred_check_branch
        %398 = sbr.rel (%p396) target = $region64
      $region63: #{basic_layer_forward.2} parent=11 // pred_region
        _
      $region64: #{basic_layer_forward.2} parent=11 // pred_fallthru
        _
    $region12: #{basic_layer_forward.2} parent=5 // pred_fallthru
      _
    %p399 = scmp.lt.s32.totalorder %s20, 2
    // Predicated region
    $region65: #{basic_layer_forward.2} parent=5 // pred_check
      %p400 = pneg %p399
    $region66: #{basic_layer_forward.2} parent=5 // pred_check_branch
      %402 = sbr.rel (%p400) target = $region68
    $region67: #{basic_layer_forward.2} parent=5 // pred_region
      // Predicated region
      $region69: #{basic_layer_forward.2} parent=67 // pred_check
        %p403 = pneg %p40
      $region70: #{basic_layer_forward.2} parent=67 // pred_check_branch
        %405 = sbr.rel (%p403) target = $region72
      $region71: #{basic_layer_forward.2} parent=67 // pred_region
        %s406 = smul.u32 8, %s20
        %p407 = scmp.lt.s32.totalorder %s406, 15
        %s408 = scalar_select %p407, %s406, 15
        %s409 = smul.addr %s408, 8
        %s410 = scalar_lea.vmem %s0, %s409
        %s411 = smul.u32 8, %s20
      $region72: #{basic_layer_forward.2} parent=67 // pred_fallthru
        _
    $region68: #{basic_layer_forward.2} parent=5 // pred_fallthru
      _
    %p412 = scmp.le.s32.totalorder 1, %s20
    %p413 = scmp.lt.s32.totalorder %s20, 3
    %p414 = pnand %p412, %p413
    %p415 = pneg %p414
    // Predicated region
    $region73: #{basic_layer_forward.2} parent=5 // pred_check
      _
    $region74: #{basic_layer_forward.2} parent=5 // pred_check_branch
      %417 = sbr.rel (%p414) target = $region76
    $region75: #{basic_layer_forward.2} parent=5 // pred_region
      %s418 = ssub.s32 %s20, 1
      %s419 = smul.u32 8, %s25
      %p420 = scmp.lt.s32.totalorder %s419, 15
      %s421 = scalar_select %p420, %s419, 15
      %s422 = smul.addr %s421, 8
      %s423 = scalar_lea.vmem %s0, %s422
      %p424 = pneg %p46
      %p425 = pneg %p43
      %p426 = pneg %p67
      %p427 = pneg %p64
      %p428 = pneg %p88
      %p429 = pneg %p85
      %p430 = pneg %p109
      %p431 = pneg %p106
      %p432 = pneg %p130
      %p433 = pneg %p127
      %p434 = pneg %p151
      %p435 = pneg %p148
      %p436 = pneg %p172
      %p437 = pneg %p169
      %p438 = pneg %p193
      %p439 = pneg %p190
      %p440 = pneg %p214
      %p441 = pneg %p211
      %p442 = pneg %p235
      %p443 = pneg %p232
      %p444 = pneg %p256
      %p445 = pneg %p253
      %p446 = pneg %p277
      %p447 = pneg %p274
      %p448 = pneg %p298
      %p449 = pneg %p295
      %p450 = pneg %p319
      %p451 = pneg %p316
      %p452 = pneg %p345
      %p453 = pneg %p342
      %s454 = smul.u32 8, %s25
      %p455 = scmp.lt.s32.totalorder %s454, 15
      %s456 = scalar_select %p455, %s454, 15
      %s457 = smul.addr %s456, 8
      %s458 = scalar_lea.vmem %s14, %s457
      %s459 = smul.u32 8, %s25
      %p460 = scmp.lt.s32.totalorder %s459, 15
      %s461 = scalar_select %p460, %s459, 15
      %s462 = smul.addr %s461, 8
      %s463 = scalar_lea.vmem %s0, %s462
      %s464 = smul.u32 8, %s25
      %s465 = smul.u32 8, %s25
      %p466 = scmp.lt.s32.totalorder %s465, 15
      %s467 = scalar_select %p466, %s465, 15
      %s468 = smul.addr %s467, 8
      %s469 = scalar_lea.vmem %s14, %s468
      %s470 = smul.u32 8, %s25
      %v472 = vld [vmem:[%s463] sm:$0xff]
      %v473 = vld [vmem:[%s463 + $0x8] sm:$0xff]
      %v474 = vld [vmem:[%s463 + $0x10] sm:$0xff]
      %v475 = vld [vmem:[%s463 + $0x18] sm:$0xff]
      %v476 = vld [vmem:[%s463 + $0x20] sm:$0xff]
      %v477 = vld [vmem:[%s463 + $0x28] sm:$0xff]
      %v478 = vld [vmem:[%s463 + $0x30] sm:$0xff]
      %v479 = vld [vmem:[%s463 + $0x38] sm:$0xff]
      %vm480 = vcmask 261120
      %v481 = vsel %vm480, %v472, 0.0
      %482 = vadd.xlane.f32.xlu0 %v481
      %v483 = vpop.xlane.xlu0 %482
      %v484 = vsel %vm480, %v473, 0.0
      %485 = vadd.xlane.f32.xlu0 %v484
      %v486 = vpop.xlane.xlu0 %485
      %v487 = vsel %vm480, %v474, 0.0
      %488 = vadd.xlane.f32.xlu0 %v487
      %v489 = vpop.xlane.xlu0 %488
      %v490 = vsel %vm480, %v475, 0.0
      %491 = vadd.xlane.f32.xlu0 %v490
      %v492 = vpop.xlane.xlu0 %491
      %v493 = vsel %vm480, %v476, 0.0
      %494 = vadd.xlane.f32.xlu0 %v493
      %v495 = vpop.xlane.xlu0 %494
      %v496 = vsel %vm480, %v477, 0.0
      %497 = vadd.xlane.f32.xlu0 %v496
      %v498 = vpop.xlane.xlu0 %497
      %v499 = vsel %vm480, %v478, 0.0
      %500 = vadd.xlane.f32.xlu0 %v499
      %v501 = vpop.xlane.xlu0 %500
      %v502 = vsel %vm480, %v479, 0.0
      %503 = vadd.xlane.f32.xlu0 %v502
      %v504 = vpop.xlane.xlu0 %503
      %v505 = vrcp.pop 32.0
      %v506 = vmul.f32 %v483, %v505
      %v507 = vmul.f32 %v486, %v505
      %v508 = vmul.f32 %v489, %v505
      %v509 = vmul.f32 %v492, %v505
      %v510 = vmul.f32 %v495, %v505
      %v511 = vmul.f32 %v498, %v505
      %v512 = vmul.f32 %v501, %v505
      %v513 = vmul.f32 %v504, %v505
      %v514 = vsub.f32 %v472, %v506
      %v515 = vsub.f32 %v473, %v507
      %v516 = vsub.f32 %v474, %v508
      %v517 = vsub.f32 %v475, %v509
      %v518 = vsub.f32 %v476, %v510
      %v519 = vsub.f32 %v477, %v511
      %v520 = vsub.f32 %v478, %v512
      %v521 = vsub.f32 %v479, %v513
      %v522 = vmul.f32 %v514, %v514
      %v523 = vmul.f32 %v515, %v515
      %v524 = vmul.f32 %v516, %v516
      %v525 = vmul.f32 %v517, %v517
      %v526 = vmul.f32 %v518, %v518
      %v527 = vmul.f32 %v519, %v519
      %v528 = vmul.f32 %v520, %v520
      %v529 = vmul.f32 %v521, %v521
      %v530 = vsel %vm480, %v522, 0.0
      %531 = vadd.xlane.f32.xlu0 %v530
      %v532 = vpop.xlane.xlu0 %531
      %v533 = vsel %vm480, %v523, 0.0
      %534 = vadd.xlane.f32.xlu0 %v533
      %v535 = vpop.xlane.xlu0 %534
      %v536 = vsel %vm480, %v524, 0.0
      %537 = vadd.xlane.f32.xlu0 %v536
      %v538 = vpop.xlane.xlu0 %537
      %v539 = vsel %vm480, %v525, 0.0
      %540 = vadd.xlane.f32.xlu0 %v539
      %v541 = vpop.xlane.xlu0 %540
      %v542 = vsel %vm480, %v526, 0.0
      %543 = vadd.xlane.f32.xlu0 %v542
      %v544 = vpop.xlane.xlu0 %543
      %v545 = vsel %vm480, %v527, 0.0
      %546 = vadd.xlane.f32.xlu0 %v545
      %v547 = vpop.xlane.xlu0 %546
      %v548 = vsel %vm480, %v528, 0.0
      %549 = vadd.xlane.f32.xlu0 %v548
      %v550 = vpop.xlane.xlu0 %549
      %v551 = vsel %vm480, %v529, 0.0
      %552 = vadd.xlane.f32.xlu0 %v551
      %v553 = vpop.xlane.xlu0 %552
      %v554 = vmul.f32 %v532, %v505
      %v555 = vmul.f32 %v535, %v505
      %v556 = vmul.f32 %v538, %v505
      %v557 = vmul.f32 %v541, %v505
      %v558 = vmul.f32 %v544, %v505
      %v559 = vmul.f32 %v547, %v505
      %v560 = vmul.f32 %v550, %v505
      %v561 = vmul.f32 %v553, %v505
      %v562 = vadd.f32 %v554, 1e-05
      %v563 = vadd.f32 %v555, 1e-05
      %v564 = vadd.f32 %v556, 1e-05
      %v565 = vadd.f32 %v557, 1e-05
      %v566 = vadd.f32 %v558, 1e-05
      %v567 = vadd.f32 %v559, 1e-05
      %v568 = vadd.f32 %v560, 1e-05
      %v569 = vadd.f32 %v561, 1e-05
      %v570 = vrsqrt.pop %v562
      %v571 = vrsqrt.pop %v563
      %v572 = vrsqrt.pop %v564
      %v573 = vrsqrt.pop %v565
      %v574 = vrsqrt.pop %v566
      %v575 = vrsqrt.pop %v567
      %v576 = vrsqrt.pop %v568
      %v577 = vrsqrt.pop %v569
      %v578 = vmul.f32 %v514, %v570
      %v579 = vmul.f32 %v515, %v571
      %v580 = vmul.f32 %v516, %v572
      %v581 = vmul.f32 %v517, %v573
      %v582 = vmul.f32 %v518, %v574
      %v583 = vmul.f32 %v519, %v575
      %v584 = vmul.f32 %v520, %v576
      %v585 = vmul.f32 %v521, %v577
      %v586 = vld [vmem:[%s2] sm:$0x1]
      %v588 = vlaneseq
      %v589 = vshrl.u32 %v588, 7
      %v590 = vsub.s32 0, %v589
      %v591 = vrot.slane %v586, %v590
      %v593 = vmul.f32 %v578, %v591
      %v594 = vmul.f32 %v579, %v591
      %v595 = vmul.f32 %v580, %v591
      %v596 = vmul.f32 %v581, %v591
      %v597 = vmul.f32 %v582, %v591
      %v598 = vmul.f32 %v583, %v591
      %v599 = vmul.f32 %v584, %v591
      %v600 = vmul.f32 %v585, %v591
      %v601 = vld [vmem:[%s3] sm:$0x1]
      %v603 = vlaneseq
      %v604 = vshrl.u32 %v603, 7
      %v605 = vsub.s32 0, %v604
      %v606 = vrot.slane %v601, %v605
      %v608 = vadd.f32 %v593, %v606
      %v609 = vadd.f32 %v594, %v606
      %v610 = vadd.f32 %v595, %v606
      %v611 = vadd.f32 %v596, %v606
      %v612 = vadd.f32 %v597, %v606
      %v613 = vadd.f32 %v598, %v606
      %v614 = vadd.f32 %v599, %v606
      %v615 = vadd.f32 %v600, %v606
      %v616 = vpack.c.bf16 %v609, %v608
      %v617 = vpack.c.bf16 %v611, %v610
      %v618 = vpack.c.bf16 %v613, %v612
      %v619 = vpack.c.bf16 %v615, %v614
      %v620 = vld [vmem:[%s4] sm:$0xf]
      %v621 = vld [vmem:[%s4 + $0x4] sm:$0xf]
      %v622 = vld [vmem:[%s4 + $0x8] sm:$0xf]
      %v623 = vld [vmem:[%s4 + $0xc] sm:$0xf]
      %v624 = vld [vmem:[%s5] sm:$0x1]
      %v626 = vlaneseq
      %v627 = vshrl.u32 %v626, 7
      %v628 = vsub.s32 0, %v627
      %v629 = vrot.slane %v624, %v628
      %v635 = vunpack.c.l.b16 %v620
      %v636 = vunpack.c.l.b16 %v621
      %v637 = vunpack.c.l.b16 %v622
      %v638 = vunpack.c.l.b16 %v623
      %v639 = vpack.c.b16 %v636, %v635
      %v640 = vpack.c.b16 %v638, %v637
      %v644 = vsel %vm480, %v616, 0
      %v647 = vsel %vm480, %v617, 0
      %v650 = vsel %vm480, %v618, 0
      %v653 = vsel %vm480, %v619, 0
      %655 = vmatprep.subr.bf16.mxu0 0
      %656 = vmatpush1.bf16.msra.mxu0 %v639
      %657 = vmatprep.subr.bf16.mxu0 0
      %658 = vmatpush1.bf16.msra.mxu0 %v640
      %659 = vmatprep.subr.bf16.mxu0 0
      %660 = vmatpush1.bf16.msra.mxu0 0
      %661 = vmatprep.subr.bf16.mxu0 0
      %662 = vmatpush1.bf16.msra.mxu0 0
      %663 = vmatprep.subr.bf16.mxu0 0
      %664 = vmatpush1.bf16.msra.mxu0 0
      %665 = vmatprep.subr.bf16.mxu0 0
      %666 = vmatpush1.bf16.msra.mxu0 0
      %667 = vmatprep.subr.bf16.mxu0 0
      %668 = vmatpush1.bf16.msra.mxu0 0
      %669 = vmatprep.subr.bf16.mxu0 0
      %670 = vmatpush1.bf16.msra.mxu0 0
      %671 = vmatprep.subr.bf16.mxu0 0
      %672 = vmatpush1.bf16.msra.mxu0 0
      %673 = vmatprep.subr.bf16.mxu0 0
      %674 = vmatpush1.bf16.msra.mxu0 0
      %675 = vmatprep.subr.bf16.mxu0 0
      %676 = vmatpush1.bf16.msra.mxu0 0
      %677 = vmatprep.subr.bf16.mxu0 0
      %678 = vmatpush1.bf16.msra.mxu0 0
      %679 = vmatprep.subr.bf16.mxu0 0
      %680 = vmatpush1.bf16.msra.mxu0 0
      %681 = vmatprep.subr.bf16.mxu0 0
      %682 = vmatpush1.bf16.msra.mxu0 0
      %683 = vmatprep.subr.bf16.mxu0 0
      %684 = vmatpush1.bf16.msra.mxu0 0
      %685 = vmatprep.subr.bf16.mxu0 0
      %686 = vmatpush1.bf16.msra.mxu0 0
      %687 = vmatprep.mubr.bf16.mxu0 0
      %688 = vmatmul.mubr.bf16.gmra.mrb[0].mxu0 %v644
      %v689 = vpop.f32.mrb[0].mxu0
      %v690 = vadd.f32 %v629, %v689
      %v691 = vpop.f32.mrb[0].mxu0
      %v692 = vpop.f32.mrb[0].mxu0
      %v693 = vadd.f32 %v629, %v692
      %v694 = vpop.f32.mrb[0].mxu0
      %695 = vmatprep.mubr.bf16.mxu0 0
      %696 = vmatmul.mubr.bf16.gmra.mrb[0].mxu0 %v647
      %v697 = vpop.f32.mrb[0].mxu0
      %v698 = vadd.f32 %v629, %v697
      %v699 = vpop.f32.mrb[0].mxu0
      %v700 = vpop.f32.mrb[0].mxu0
      %v701 = vadd.f32 %v629, %v700
      %v702 = vpop.f32.mrb[0].mxu0
      %703 = vmatprep.mubr.bf16.mxu0 0
      %704 = vmatmul.mubr.bf16.gmra.mrb[0].mxu0 %v650
      %v705 = vpop.f32.mrb[0].mxu0
      %v706 = vadd.f32 %v629, %v705
      %v707 = vpop.f32.mrb[0].mxu0
      %v708 = vpop.f32.mrb[0].mxu0
      %v709 = vadd.f32 %v629, %v708
      %v710 = vpop.f32.mrb[0].mxu0
      %711 = vmatprep.mubr.bf16.mxu0 0
      %712 = vmatmul.mubr.bf16.gmra.mrb[0].mxu0 %v653
      %v713 = vpop.f32.mrb[0].mxu0
      %v714 = vadd.f32 %v629, %v713
      %v715 = vpop.f32.mrb[0].mxu0
      %v716 = vpop.f32.mrb[0].mxu0
      %v717 = vadd.f32 %v629, %v716
      %v718 = vpop.f32.mrb[0].mxu0
      %719 = vdwg.mxu0
      %v720 = vld [vmem:[%s1] sm:$0xff]
      %v721 = vld [vmem:[%s1 + $0x8] sm:$0xff]
      %v722 = vld [vmem:[%s1 + $0x10] sm:$0xff]
      %v723 = vld [vmem:[%s1 + $0x18] sm:$0xff]
      %v724 = vld [vmem:[%s1 + $0x20] sm:$0xff]
      %v725 = vld [vmem:[%s1 + $0x28] sm:$0xff]
      %v726 = vld [vmem:[%s1 + $0x30] sm:$0xff]
      %v727 = vld [vmem:[%s1 + $0x38] sm:$0xff]
      %v728 = vpack.c.bf16 %v693, %v690
      %v729 = vpack.c.bf16 %v701, %v698
      %v730 = vpack.c.bf16 %v709, %v706
      %v731 = vpack.c.bf16 %v717, %v714
      %733 = vrot.lane.b32.xlu0 %v728, 96
      %v734 = vpop.permute.xlu0 %733
      %vm735 = vcmask 64512
      %v737 = vsel %vm735, %v728, 0
      %v740 = vsel %vm735, %v734, 0
      %742 = vmatprep.subr.bf16.mxu0 0
      %743 = vmatpush1.bf16.xpose.msra.mxu0 %v740
      %744 = vmatprep.subr.bf16.mxu0 0
      %745 = vmatpush1.bf16.xpose.msra.mxu0 0
      %746 = vmatprep.subr.bf16.mxu0 0
      %747 = vmatpush1.bf16.xpose.msra.mxu0 0
      %748 = vmatprep.subr.bf16.mxu0 0
      %749 = vmatpush1.bf16.xpose.msra.mxu0 0
      %750 = vmatprep.subr.bf16.mxu0 0
      %751 = vmatpush1.bf16.xpose.msra.mxu0 0
      %752 = vmatprep.subr.bf16.mxu0 0
      %753 = vmatpush1.bf16.xpose.msra.mxu0 0
      %754 = vmatprep.subr.bf16.mxu0 0
      %755 = vmatpush1.bf16.xpose.msra.mxu0 0
      %756 = vmatprep.subr.bf16.mxu0 0
      %757 = vmatpush1.bf16.xpose.msra.mxu0 0
      %758 = vmatprep.subr.bf16.mxu0 0
      %759 = vmatpush1.bf16.xpose.msra.mxu0 0
      %760 = vmatprep.subr.bf16.mxu0 0
      %761 = vmatpush1.bf16.xpose.msra.mxu0 0
      %762 = vmatprep.subr.bf16.mxu0 0
      %763 = vmatpush1.bf16.xpose.msra.mxu0 0
      %764 = vmatprep.subr.bf16.mxu0 0
      %765 = vmatpush1.bf16.xpose.msra.mxu0 0
      %766 = vmatprep.subr.bf16.mxu0 0
      %767 = vmatpush1.bf16.xpose.msra.mxu0 0
      %768 = vmatprep.subr.bf16.mxu0 0
      %769 = vmatpush1.bf16.xpose.msra.mxu0 0
      %770 = vmatprep.subr.bf16.mxu0 0
      %771 = vmatpush1.bf16.xpose.msra.mxu0 0
      %772 = vmatprep.subr.bf16.mxu0 0
      %773 = vmatpush1.bf16.xpose.msra.mxu0 0
      %774 = vmatprep.mubr.bf16.mxu0 0
      %775 = vmatmul.mubr.bf16.gmra.mrb[0].mxu0 %v737
      %v776 = vpop.f32.mrb[0].mxu0
      %v777 = vadd.f32 %v720, %v776
      %v778 = vpop.f32.mrb[0].mxu0
      %v779 = vpop.f32.mrb[0].mxu0
      %v780 = vadd.f32 %v721, %v779
      %v781 = vpop.f32.mrb[0].mxu0
      %782 = vdwg.mxu0
      %784 = vrot.lane.b32.xlu0 %v729, 96
      %v785 = vpop.permute.xlu0 %784
      %v787 = vsel %vm735, %v729, 0
      %v790 = vsel %vm735, %v785, 0
      %792 = vmatprep.subr.bf16.mxu0 0
      %793 = vmatpush1.bf16.xpose.msra.mxu0 %v790
      %794 = vmatprep.subr.bf16.mxu0 0
      %795 = vmatpush1.bf16.xpose.msra.mxu0 0
      %796 = vmatprep.subr.bf16.mxu0 0
      %797 = vmatpush1.bf16.xpose.msra.mxu0 0
      %798 = vmatprep.subr.bf16.mxu0 0
      %799 = vmatpush1.bf16.xpose.msra.mxu0 0
      %800 = vmatprep.subr.bf16.mxu0 0
      %801 = vmatpush1.bf16.xpose.msra.mxu0 0
      %802 = vmatprep.subr.bf16.mxu0 0
      %803 = vmatpush1.bf16.xpose.msra.mxu0 0
      %804 = vmatprep.subr.bf16.mxu0 0
      %805 = vmatpush1.bf16.xpose.msra.mxu0 0
      %806 = vmatprep.subr.bf16.mxu0 0
      %807 = vmatpush1.bf16.xpose.msra.mxu0 0
      %808 = vmatprep.subr.bf16.mxu0 0
      %809 = vmatpush1.bf16.xpose.msra.mxu0 0
      %810 = vmatprep.subr.bf16.mxu0 0
      %811 = vmatpush1.bf16.xpose.msra.mxu0 0
      %812 = vmatprep.subr.bf16.mxu0 0
      %813 = vmatpush1.bf16.xpose.msra.mxu0 0
      %814 = vmatprep.subr.bf16.mxu0 0
      %815 = vmatpush1.bf16.xpose.msra.mxu0 0
      %816 = vmatprep.subr.bf16.mxu0 0
      %817 = vmatpush1.bf16.xpose.msra.mxu0 0
      %818 = vmatprep.subr.bf16.mxu0 0
      %819 = vmatpush1.bf16.xpose.msra.mxu0 0
      %820 = vmatprep.subr.bf16.mxu0 0
      %821 = vmatpush1.bf16.xpose.msra.mxu0 0
      %822 = vmatprep.subr.bf16.mxu0 0
      %823 = vmatpush1.bf16.xpose.msra.mxu0 0
      %824 = vmatprep.mubr.bf16.mxu0 0
      %825 = vmatmul.mubr.bf16.gmra.mrb[0].mxu0 %v787
      %v826 = vpop.f32.mrb[0].mxu0
      %v827 = vadd.f32 %v720, %v826
      %v828 = vpop.f32.mrb[0].mxu0
      %v829 = vpop.f32.mrb[0].mxu0
      %v830 = vadd.f32 %v721, %v829
      %v831 = vpop.f32.mrb[0].mxu0
      %832 = vdwg.mxu0
      %834 = vrot.lane.b32.xlu0 %v730, 96
      %v835 = vpop.permute.xlu0 %834
      %v837 = vsel %vm735, %v730, 0
      %v840 = vsel %vm735, %v835, 0
      %842 = vmatprep.subr.bf16.mxu0 0
      %843 = vmatpush1.bf16.xpose.msra.mxu0 %v840
      %844 = vmatprep.subr.bf16.mxu0 0
      %845 = vmatpush1.bf16.xpose.msra.mxu0 0
      %846 = vmatprep.subr.bf16.mxu0 0
      %847 = vmatpush1.bf16.xpose.msra.mxu0 0
      %848 = vmatprep.subr.bf16.mxu0 0
      %849 = vmatpush1.bf16.xpose.msra.mxu0 0
      %850 = vmatprep.subr.bf16.mxu0 0
      %851 = vmatpush1.bf16.xpose.msra.mxu0 0
      %852 = vmatprep.subr.bf16.mxu0 0
      %853 = vmatpush1.bf16.xpose.msra.mxu0 0
      %854 = vmatprep.subr.bf16.mxu0 0
      %855 = vmatpush1.bf16.xpose.msra.mxu0 0
      %856 = vmatprep.subr.bf16.mxu0 0
      %857 = vmatpush1.bf16.xpose.msra.mxu0 0
      %858 = vmatprep.subr.bf16.mxu0 0
      %859 = vmatpush1.bf16.xpose.msra.mxu0 0
      %860 = vmatprep.subr.bf16.mxu0 0
      %861 = vmatpush1.bf16.xpose.msra.mxu0 0
      %862 = vmatprep.subr.bf16.mxu0 0
      %863 = vmatpush1.bf16.xpose.msra.mxu0 0
      %864 = vmatprep.subr.bf16.mxu0 0
      %865 = vmatpush1.bf16.xpose.msra.mxu0 0
      %866 = vmatprep.subr.bf16.mxu0 0
      %867 = vmatpush1.bf16.xpose.msra.mxu0 0
      %868 = vmatprep.subr.bf16.mxu0 0
      %869 = vmatpush1.bf16.xpose.msra.mxu0 0
      %870 = vmatprep.subr.bf16.mxu0 0
      %871 = vmatpush1.bf16.xpose.msra.mxu0 0
      %872 = vmatprep.subr.bf16.mxu0 0
      %873 = vmatpush1.bf16.xpose.msra.mxu0 0
      %874 = vmatprep.mubr.bf16.mxu0 0
      %875 = vmatmul.mubr.bf16.gmra.mrb[0].mxu0 %v837
      %v876 = vpop.f32.mrb[0].mxu0
      %v877 = vadd.f32 %v720, %v876
      %v878 = vpop.f32.mrb[0].mxu0
      %v879 = vpop.f32.mrb[0].mxu0
      %v880 = vadd.f32 %v721, %v879
      %v881 = vpop.f32.mrb[0].mxu0
      %882 = vdwg.mxu0
      %884 = vrot.lane.b32.xlu0 %v731, 96
      %v885 = vpop.permute.xlu0 %884
      %v887 = vsel %vm735, %v731, 0
      %v890 = vsel %vm735, %v885, 0
      %892 = vmatprep.subr.bf16.mxu0 0
      %893 = vmatpush1.bf16.xpose.msra.mxu0 %v890
      %894 = vmatprep.subr.bf16.mxu0 0
      %895 = vmatpush1.bf16.xpose.msra.mxu0 0
      %896 = vmatprep.subr.bf16.mxu0 0
      %897 = vmatpush1.bf16.xpose.msra.mxu0 0
      %898 = vmatprep.subr.bf16.mxu0 0
      %899 = vmatpush1.bf16.xpose.msra.mxu0 0
      %900 = vmatprep.subr.bf16.mxu0 0
      %901 = vmatpush1.bf16.xpose.msra.mxu0 0
      %902 = vmatprep.subr.bf16.mxu0 0
      %903 = vmatpush1.bf16.xpose.msra.mxu0 0
      %904 = vmatprep.subr.bf16.mxu0 0
      %905 = vmatpush1.bf16.xpose.msra.mxu0 0
      %906 = vmatprep.subr.bf16.mxu0 0
      %907 = vmatpush1.bf16.xpose.msra.mxu0 0
      %908 = vmatprep.subr.bf16.mxu0 0
      %909 = vmatpush1.bf16.xpose.msra.mxu0 0
      %910 = vmatprep.subr.bf16.mxu0 0
      %911 = vmatpush1.bf16.xpose.msra.mxu0 0
      %912 = vmatprep.subr.bf16.mxu0 0
      %913 = vmatpush1.bf16.xpose.msra.mxu0 0
      %914 = vmatprep.subr.bf16.mxu0 0
      %915 = vmatpush1.bf16.xpose.msra.mxu0 0
      %916 = vmatprep.subr.bf16.mxu0 0
      %917 = vmatpush1.bf16.xpose.msra.mxu0 0
      %918 = vmatprep.subr.bf16.mxu0 0
      %919 = vmatpush1.bf16.xpose.msra.mxu0 0
      %920 = vmatprep.subr.bf16.mxu0 0
      %921 = vmatpush1.bf16.xpose.msra.mxu0 0
      %922 = vmatprep.subr.bf16.mxu0 0
      %923 = vmatpush1.bf16.xpose.msra.mxu0 0
      %924 = vmatprep.mubr.bf16.mxu0 0
      %925 = vmatmul.mubr.bf16.gmra.mrb[0].mxu0 %v887
      %v926 = vpop.f32.mrb[0].mxu0
      %v927 = vadd.f32 %v720, %v926
      %v928 = vpop.f32.mrb[0].mxu0
      %v929 = vpop.f32.mrb[0].mxu0
      %v930 = vadd.f32 %v721, %v929
      %v931 = vpop.f32.mrb[0].mxu0
      %932 = vdwg.mxu0
      %vm933 = vcmask 130048
      %v934 = vsel %vm933, %v777, -inf
      %935 = vmax.xlane.f32.xlu0 %v934
      %v936 = vpop.xlane.xlu0 %935
      %v937 = vsel %vm933, %v780, -inf
      %938 = vmax.xlane.f32.xlu0 %v937
      %v939 = vpop.xlane.xlu0 %938
      %v940 = vsel %vm933, %v827, -inf
      %941 = vmax.xlane.f32.xlu0 %v940
      %v942 = vpop.xlane.xlu0 %941
      %v943 = vsel %vm933, %v830, -inf
      %944 = vmax.xlane.f32.xlu0 %v943
      %v945 = vpop.xlane.xlu0 %944
      %v946 = vsel %vm933, %v877, -inf
      %947 = vmax.xlane.f32.xlu0 %v946
      %v948 = vpop.xlane.xlu0 %947
      %v949 = vsel %vm933, %v880, -inf
      %950 = vmax.xlane.f32.xlu0 %v949
      %v951 = vpop.xlane.xlu0 %950
      %v952 = vsel %vm933, %v927, -inf
      %953 = vmax.xlane.f32.xlu0 %v952
      %v954 = vpop.xlane.xlu0 %953
      %v955 = vsel %vm933, %v930, -inf
      %956 = vmax.xlane.f32.xlu0 %v955
      %v957 = vpop.xlane.xlu0 %956
      %v958 = vsub.f32 %v777, %v936
      %v959 = vsub.f32 %v780, %v939
      %v960 = vsub.f32 %v827, %v942
      %v961 = vsub.f32 %v830, %v945
      %v962 = vsub.f32 %v877, %v948
      %v963 = vsub.f32 %v880, %v951
      %v964 = vsub.f32 %v927, %v954
      %v965 = vsub.f32 %v930, %v957
      %v966 = vmul.f32 %v958, 1.442695
      %v967 = vpow.pop %v966
      %v968 = vmul.f32 %v959, 1.442695
      %v969 = vpow.pop %v968
      %v970 = vmul.f32 %v960, 1.442695
      %v971 = vpow.pop %v970
      %v972 = vmul.f32 %v961, 1.442695
      %v973 = vpow.pop %v972
      %v974 = vmul.f32 %v962, 1.442695
      %v975 = vpow.pop %v974
      %v976 = vmul.f32 %v963, 1.442695
      %v977 = vpow.pop %v976
      %v978 = vmul.f32 %v964, 1.442695
      %v979 = vpow.pop %v978
      %v980 = vmul.f32 %v965, 1.442695
      %v981 = vpow.pop %v980
      %v982 = vsel %vm933, %v967, 0.0
      %983 = vadd.xlane.f32.xlu0 %v982
      %v984 = vpop.xlane.xlu0 %983
      %v985 = vsel %vm933, %v969, 0.0
      %986 = vadd.xlane.f32.xlu0 %v985
      %v987 = vpop.xlane.xlu0 %986
      %v988 = vsel %vm933, %v971, 0.0
      %989 = vadd.xlane.f32.xlu0 %v988
      %v990 = vpop.xlane.xlu0 %989
      %v991 = vsel %vm933, %v973, 0.0
      %992 = vadd.xlane.f32.xlu0 %v991
      %v993 = vpop.xlane.xlu0 %992
      %v994 = vsel %vm933, %v975, 0.0
      %995 = vadd.xlane.f32.xlu0 %v994
      %v996 = vpop.xlane.xlu0 %995
      %v997 = vsel %vm933, %v977, 0.0
      %998 = vadd.xlane.f32.xlu0 %v997
      %v999 = vpop.xlane.xlu0 %998
      %v1000 = vsel %vm933, %v979, 0.0
      %1001 = vadd.xlane.f32.xlu0 %v1000
      %v1002 = vpop.xlane.xlu0 %1001
      %v1003 = vsel %vm933, %v981, 0.0
      %1004 = vadd.xlane.f32.xlu0 %v1003
      %v1005 = vpop.xlane.xlu0 %1004
      %v1006 = vrcp.pop %v984
      %v1007 = vrcp.pop %v987
      %v1008 = vrcp.pop %v990
      %v1009 = vrcp.pop %v993
      %v1010 = vrcp.pop %v996
      %v1011 = vrcp.pop %v999
      %v1012 = vrcp.pop %v1002
      %v1013 = vrcp.pop %v1005
      %v1014 = vmul.f32 %v967, %v1006
      %v1015 = vmul.f32 %v969, %v1007
      %v1016 = vmul.f32 %v971, %v1008
      %v1017 = vmul.f32 %v973, %v1009
      %v1018 = vmul.f32 %v975, %v1010
      %v1019 = vmul.f32 %v977, %v1011
      %v1020 = vmul.f32 %v979, %v1012
      %v1021 = vmul.f32 %v981, %v1013
      %v1022 = vpack.c.bf16 %v1015, %v1014
      %v1023 = vpack.c.bf16 %v1017, %v1016
      %v1024 = vpack.c.bf16 %v1019, %v1018
      %v1025 = vpack.c.bf16 %v1021, %v1020
      %1026 = vrot.lane.b32.xlu0 %v728, 64
      %v1027 = vpop.permute.xlu0 %1026
      %v1030 = vsel %vm933, %v1022, 0
      %1032 = vmatprep.subr.bf16.mxu0 0
      %1033 = vmatpush1.bf16.msra.mxu0 %v1027
      %1034 = vmatprep.subr.bf16.mxu0 0
      %1035 = vmatpush1.bf16.msra.mxu0 0
      %1036 = vmatprep.subr.bf16.mxu0 0
      %1037 = vmatpush1.bf16.msra.mxu0 0
      %1038 = vmatprep.subr.bf16.mxu0 0
      %1039 = vmatpush1.bf16.msra.mxu0 0
      %1040 = vmatprep.subr.bf16.mxu0 0
      %1041 = vmatpush1.bf16.msra.mxu0 0
      %1042 = vmatprep.subr.bf16.mxu0 0
      %1043 = vmatpush1.bf16.msra.mxu0 0
      %1044 = vmatprep.subr.bf16.mxu0 0
      %1045 = vmatpush1.bf16.msra.mxu0 0
      %1046 = vmatprep.subr.bf16.mxu0 0
      %1047 = vmatpush1.bf16.msra.mxu0 0
      %1048 = vmatprep.subr.bf16.mxu0 0
      %1049 = vmatpush1.bf16.msra.mxu0 0
      %1050 = vmatprep.subr.bf16.mxu0 0
      %1051 = vmatpush1.bf16.msra.mxu0 0
      %1052 = vmatprep.subr.bf16.mxu0 0
      %1053 = vmatpush1.bf16.msra.mxu0 0
      %1054 = vmatprep.subr.bf16.mxu0 0
      %1055 = vmatpush1.bf16.msra.mxu0 0
      %1056 = vmatprep.subr.bf16.mxu0 0
      %1057 = vmatpush1.bf16.msra.mxu0 0
      %1058 = vmatprep.subr.bf16.mxu0 0
      %1059 = vmatpush1.bf16.msra.mxu0 0
      %1060 = vmatprep.subr.bf16.mxu0 0
      %1061 = vmatpush1.bf16.msra.mxu0 0
      %1062 = vmatprep.subr.bf16.mxu0 0
      %1063 = vmatpush1.bf16.msra.mxu0 0
      %1064 = vmatprep.mubr.bf16.mxu0 0
      %1065 = vmatmul.mubr.bf16.gmra.mrb[0].mxu0 %v1030
      %v1066 = vpop.f32.mrb[0].mxu0
      %v1067 = vadd.f32 0.0, %v1066
      %v1068 = vpop.f32.mrb[0].mxu0
      %v1069 = vpop.f32.mrb[0].mxu0
      %v1070 = vadd.f32 0.0, %v1069
      %v1071 = vpop.f32.mrb[0].mxu0
      %1072 = vdwg.mxu0
      %1073 = vrot.lane.b32.xlu0 %v729, 64
      %v1074 = vpop.permute.xlu0 %1073
      %v1077 = vsel %vm933, %v1023, 0
      %1079 = vmatprep.subr.bf16.mxu0 0
      %1080 = vmatpush1.bf16.msra.mxu0 %v1074
      %1081 = vmatprep.subr.bf16.mxu0 0
      %1082 = vmatpush1.bf16.msra.mxu0 0
      %1083 = vmatprep.subr.bf16.mxu0 0
      %1084 = vmatpush1.bf16.msra.mxu0 0
      %1085 = vmatprep.subr.bf16.mxu0 0
      %1086 = vmatpush1.bf16.msra.mxu0 0
      %1087 = vmatprep.subr.bf16.mxu0 0
      %1088 = vmatpush1.bf16.msra.mxu0 0
      %1089 = vmatprep.subr.bf16.mxu0 0
      %1090 = vmatpush1.bf16.msra.mxu0 0
      %1091 = vmatprep.subr.bf16.mxu0 0
      %1092 = vmatpush1.bf16.msra.mxu0 0
      %1093 = vmatprep.subr.bf16.mxu0 0
      %1094 = vmatpush1.bf16.msra.mxu0 0
      %1095 = vmatprep.subr.bf16.mxu0 0
      %1096 = vmatpush1.bf16.msra.mxu0 0
      %1097 = vmatprep.subr.bf16.mxu0 0
      %1098 = vmatpush1.bf16.msra.mxu0 0
      %1099 = vmatprep.subr.bf16.mxu0 0
      %1100 = vmatpush1.bf16.msra.mxu0 0
      %1101 = vmatprep.subr.bf16.mxu0 0
      %1102 = vmatpush1.bf16.msra.mxu0 0
      %1103 = vmatprep.subr.bf16.mxu0 0
      %1104 = vmatpush1.bf16.msra.mxu0 0
      %1105 = vmatprep.subr.bf16.mxu0 0
      %1106 = vmatpush1.bf16.msra.mxu0 0
      %1107 = vmatprep.subr.bf16.mxu0 0
      %1108 = vmatpush1.bf16.msra.mxu0 0
      %1109 = vmatprep.subr.bf16.mxu0 0
      %1110 = vmatpush1.bf16.msra.mxu0 0
      %1111 = vmatprep.mubr.bf16.mxu0 0
      %1112 = vmatmul.mubr.bf16.gmra.mrb[0].mxu0 %v1077
      %v1113 = vpop.f32.mrb[0].mxu0
      %v1114 = vadd.f32 0.0, %v1113
      %v1115 = vpop.f32.mrb[0].mxu0
      %v1116 = vpop.f32.mrb[0].mxu0
      %v1117 = vadd.f32 0.0, %v1116
      %v1118 = vpop.f32.mrb[0].mxu0
      %1119 = vdwg.mxu0
      %1120 = vrot.lane.b32.xlu0 %v730, 64
      %v1121 = vpop.permute.xlu0 %1120
      %v1124 = vsel %vm933, %v1024, 0
      %1126 = vmatprep.subr.bf16.mxu0 0
      %1127 = vmatpush1.bf16.msra.mxu0 %v1121
      %1128 = vmatprep.subr.bf16.mxu0 0
      %1129 = vmatpush1.bf16.msra.mxu0 0
      %1130 = vmatprep.subr.bf16.mxu0 0
      %1131 = vmatpush1.bf16.msra.mxu0 0
      %1132 = vmatprep.subr.bf16.mxu0 0
      %1133 = vmatpush1.bf16.msra.mxu0 0
      %1134 = vmatprep.subr.bf16.mxu0 0
      %1135 = vmatpush1.bf16.msra.mxu0 0
      %1136 = vmatprep.subr.bf16.mxu0 0
      %1137 = vmatpush1.bf16.msra.mxu0 0
      %1138 = vmatprep.subr.bf16.mxu0 0
      %1139 = vmatpush1.bf16.msra.mxu0 0
      %1140 = vmatprep.subr.bf16.mxu0 0
      %1141 = vmatpush1.bf16.msra.mxu0 0
      %1142 = vmatprep.subr.bf16.mxu0 0
      %1143 = vmatpush1.bf16.msra.mxu0 0
      %1144 = vmatprep.subr.bf16.mxu0 0
      %1145 = vmatpush1.bf16.msra.mxu0 0
      %1146 = vmatprep.subr.bf16.mxu0 0
      %1147 = vmatpush1.bf16.msra.mxu0 0
      %1148 = vmatprep.subr.bf16.mxu0 0
      %1149 = vmatpush1.bf16.msra.mxu0 0
      %1150 = vmatprep.subr.bf16.mxu0 0
      %1151 = vmatpush1.bf16.msra.mxu0 0
      %1152 = vmatprep.subr.bf16.mxu0 0
      %1153 = vmatpush1.bf16.msra.mxu0 0
      %1154 = vmatprep.subr.bf16.mxu0 0
      %1155 = vmatpush1.bf16.msra.mxu0 0
      %1156 = vmatprep.subr.bf16.mxu0 0
      %1157 = vmatpush1.bf16.msra.mxu0 0
      %1158 = vmatprep.mubr.bf16.mxu0 0
      %1159 = vmatmul.mubr.bf16.gmra.mrb[0].mxu0 %v1124
      %v1160 = vpop.f32.mrb[0].mxu0
      %v1161 = vadd.f32 0.0, %v1160
      %v1162 = vpop.f32.mrb[0].mxu0
      %v1163 = vpop.f32.mrb[0].mxu0
      %v1164 = vadd.f32 0.0, %v1163
      %v1165 = vpop.f32.mrb[0].mxu0
      %1166 = vdwg.mxu0
      %1167 = vrot.lane.b32.xlu0 %v731, 64
      %v1168 = vpop.permute.xlu0 %1167
      %v1171 = vsel %vm933, %v1025, 0
      %1173 = vmatprep.subr.bf16.mxu0 0
      %1174 = vmatpush1.bf16.msra.mxu0 %v1168
      %1175 = vmatprep.subr.bf16.mxu0 0
      %1176 = vmatpush1.bf16.msra.mxu0 0
      %1177 = vmatprep.subr.bf16.mxu0 0
      %1178 = vmatpush1.bf16.msra.mxu0 0
      %1179 = vmatprep.subr.bf16.mxu0 0
      %1180 = vmatpush1.bf16.msra.mxu0 0
      %1181 = vmatprep.subr.bf16.mxu0 0
      %1182 = vmatpush1.bf16.msra.mxu0 0
      %1183 = vmatprep.subr.bf16.mxu0 0
      %1184 = vmatpush1.bf16.msra.mxu0 0
      %1185 = vmatprep.subr.bf16.mxu0 0
      %1186 = vmatpush1.bf16.msra.mxu0 0
      %1187 = vmatprep.subr.bf16.mxu0 0
      %1188 = vmatpush1.bf16.msra.mxu0 0
      %1189 = vmatprep.subr.bf16.mxu0 0
      %1190 = vmatpush1.bf16.msra.mxu0 0
      %1191 = vmatprep.subr.bf16.mxu0 0
      %1192 = vmatpush1.bf16.msra.mxu0 0
      %1193 = vmatprep.subr.bf16.mxu0 0
      %1194 = vmatpush1.bf16.msra.mxu0 0
      %1195 = vmatprep.subr.bf16.mxu0 0
      %1196 = vmatpush1.bf16.msra.mxu0 0
      %1197 = vmatprep.subr.bf16.mxu0 0
      %1198 = vmatpush1.bf16.msra.mxu0 0
      %1199 = vmatprep.subr.bf16.mxu0 0
      %1200 = vmatpush1.bf16.msra.mxu0 0
      %1201 = vmatprep.subr.bf16.mxu0 0
      %1202 = vmatpush1.bf16.msra.mxu0 0
      %1203 = vmatprep.subr.bf16.mxu0 0
      %1204 = vmatpush1.bf16.msra.mxu0 0
      %1205 = vmatprep.mubr.bf16.mxu0 0
      %1206 = vmatmul.mubr.bf16.gmra.mrb[0].mxu0 %v1171
      %v1207 = vpop.f32.mrb[0].mxu0
      %v1208 = vadd.f32 0.0, %v1207
      %v1209 = vpop.f32.mrb[0].mxu0
      %v1210 = vpop.f32.mrb[0].mxu0
      %v1211 = vadd.f32 0.0, %v1210
      %v1212 = vpop.f32.mrb[0].mxu0
      %1213 = vdwg.mxu0
      %1214 = vst.msk [vmem:[#allocation2] sm:$0xff] %vm735, %v1067
      %1215 = vst.msk [vmem:[#allocation2 + $0x8] sm:$0xff] %vm735, %v1070
      %1216 = vst.msk [vmem:[#allocation2 + $0x10] sm:$0xff] %vm735, %v1114
      %1217 = vst.msk [vmem:[#allocation2 + $0x18] sm:$0xff] %vm735, %v1117
      %1218 = vst.msk [vmem:[#allocation2 + $0x20] sm:$0xff] %vm735, %v1161
      %1219 = vst.msk [vmem:[#allocation2 + $0x28] sm:$0xff] %vm735, %v1164
      %1220 = vst.msk [vmem:[#allocation2 + $0x30] sm:$0xff] %vm735, %v1208
      %1221 = vst.msk [vmem:[#allocation2 + $0x38] sm:$0xff] %vm735, %v1211
      %1222 = vrot.lane.b32.xlu0 %v728, 120
      %v1223 = vpop.permute.xlu0 %1222
      %1224 = vrot.lane.b32.xlu0 %v728, 88
      %v1225 = vpop.permute.xlu0 %1224
      %v1227 = vsel %vm735, %v1223, 0
      %v1230 = vsel %vm735, %v1225, 0
      %1232 = vmatprep.subr.bf16.mxu0 0
      %1233 = vmatpush1.bf16.xpose.msra.mxu0 %v1230
      %1234 = vmatprep.subr.bf16.mxu0 0
      %1235 = vmatpush1.bf16.xpose.msra.mxu0 0
      %1236 = vmatprep.subr.bf16.mxu0 0
      %1237 = vmatpush1.bf16.xpose.msra.mxu0 0
      %1238 = vmatprep.subr.bf16.mxu0 0
      %1239 = vmatpush1.bf16.xpose.msra.mxu0 0
      %1240 = vmatprep.subr.bf16.mxu0 0
      %1241 = vmatpush1.bf16.xpose.msra.mxu0 0
      %1242 = vmatprep.subr.bf16.mxu0 0
      %1243 = vmatpush1.bf16.xpose.msra.mxu0 0
      %1244 = vmatprep.subr.bf16.mxu0 0
      %1245 = vmatpush1.bf16.xpose.msra.mxu0 0
      %1246 = vmatprep.subr.bf16.mxu0 0
      %1247 = vmatpush1.bf16.xpose.msra.mxu0 0
      %1248 = vmatprep.subr.bf16.mxu0 0
      %1249 = vmatpush1.bf16.xpose.msra.mxu0 0
      %1250 = vmatprep.subr.bf16.mxu0 0
      %1251 = vmatpush1.bf16.xpose.msra.mxu0 0
      %1252 = vmatprep.subr.bf16.mxu0 0
      %1253 = vmatpush1.bf16.xpose.msra.mxu0 0
      %1254 = vmatprep.subr.bf16.mxu0 0
      %1255 = vmatpush1.bf16.xpose.msra.mxu0 0
      %1256 = vmatprep.subr.bf16.mxu0 0
      %1257 = vmatpush1.bf16.xpose.msra.mxu0 0
      %1258 = vmatprep.subr.bf16.mxu0 0
      %1259 = vmatpush1.bf16.xpose.msra.mxu0 0
      %1260 = vmatprep.subr.bf16.mxu0 0
      %1261 = vmatpush1.bf16.xpose.msra.mxu0 0
      %1262 = vmatprep.subr.bf16.mxu0 0
      %1263 = vmatpush1.bf16.xpose.msra.mxu0 0
      %1264 = vmatprep.mubr.bf16.mxu0 0
      %1265 = vmatmul.mubr.bf16.gmra.mrb[0].mxu0 %v1227
      %v1266 = vpop.f32.mrb[0].mxu0
      %v1267 = vadd.f32 %v722, %v1266
      %v1268 = vpop.f32.mrb[0].mxu0
      %v1269 = vpop.f32.mrb[0].mxu0
      %v1270 = vadd.f32 %v723, %v1269
      %v1271 = vpop.f32.mrb[0].mxu0
      %1272 = vdwg.mxu0
      %1273 = vrot.lane.b32.xlu0 %v729, 120
      %v1274 = vpop.permute.xlu0 %1273
      %1275 = vrot.lane.b32.xlu0 %v729, 88
      %v1276 = vpop.permute.xlu0 %1275
      %v1278 = vsel %vm735, %v1274, 0
      %v1281 = vsel %vm735, %v1276, 0
      %1283 = vmatprep.subr.bf16.mxu0 0
      %1284 = vmatpush1.bf16.xpose.msra.mxu0 %v1281
      %1285 = vmatprep.subr.bf16.mxu0 0
      %1286 = vmatpush1.bf16.xpose.msra.mxu0 0
      %1287 = vmatprep.subr.bf16.mxu0 0
      %1288 = vmatpush1.bf16.xpose.msra.mxu0 0
      %1289 = vmatprep.subr.bf16.mxu0 0
      %1290 = vmatpush1.bf16.xpose.msra.mxu0 0
      %1291 = vmatprep.subr.bf16.mxu0 0
      %1292 = vmatpush1.bf16.xpose.msra.mxu0 0
      %1293 = vmatprep.subr.bf16.mxu0 0
      %1294 = vmatpush1.bf16.xpose.msra.mxu0 0
      %1295 = vmatprep.subr.bf16.mxu0 0
      %1296 = vmatpush1.bf16.xpose.msra.mxu0 0
      %1297 = vmatprep.subr.bf16.mxu0 0
      %1298 = vmatpush1.bf16.xpose.msra.mxu0 0
      %1299 = vmatprep.subr.bf16.mxu0 0
      %1300 = vmatpush1.bf16.xpose.msra.mxu0 0
      %1301 = vmatprep.subr.bf16.mxu0 0
      %1302 = vmatpush1.bf16.xpose.msra.mxu0 0
      %1303 = vmatprep.subr.bf16.mxu0 0
      %1304 = vmatpush1.bf16.xpose.msra.mxu0 0
      %1305 = vmatprep.subr.bf16.mxu0 0
      %1306 = vmatpush1.bf16.xpose.msra.mxu0 0
      %1307 = vmatprep.subr.bf16.mxu0 0
      %1308 = vmatpush1.bf16.xpose.msra.mxu0 0
      %1309 = vmatprep.subr.bf16.mxu0 0
      %1310 = vmatpush1.bf16.xpose.msra.mxu0 0
      %1311 = vmatprep.subr.bf16.mxu0 0
      %1312 = vmatpush1.bf16.xpose.msra.mxu0 0
      %1313 = vmatprep.subr.bf16.mxu0 0
      %1314 = vmatpush1.bf16.xpose.msra.mxu0 0
      %1315 = vmatprep.mubr.bf16.mxu0 0
      %1316 = vmatmul.mubr.bf16.gmra.mrb[0].mxu0 %v1278
      %v1317 = vpop.f32.mrb[0].mxu0
      %v1318 = vadd.f32 %v722, %v1317
      %v1319 = vpop.f32.mrb[0].mxu0
      %v1320 = vpop.f32.mrb[0].mxu0
      %v1321 = vadd.f32 %v723, %v1320
      %v1322 = vpop.f32.mrb[0].mxu0
      %1323 = vdwg.mxu0
      %1324 = vrot.lane.b32.xlu0 %v730, 120
      %v1325 = vpop.permute.xlu0 %1324
      %1326 = vrot.lane.b32.xlu0 %v730, 88
      %v1327 = vpop.permute.xlu0 %1326
      %v1329 = vsel %vm735, %v1325, 0
      %v1332 = vsel %vm735, %v1327, 0
      %1334 = vmatprep.subr.bf16.mxu0 0
      %1335 = vmatpush1.bf16.xpose.msra.mxu0 %v1332
      %1336 = vmatprep.subr.bf16.mxu0 0
      %1337 = vmatpush1.bf16.xpose.msra.mxu0 0
      %1338 = vmatprep.subr.bf16.mxu0 0
      %1339 = vmatpush1.bf16.xpose.msra.mxu0 0
      %1340 = vmatprep.subr.bf16.mxu0 0
      %1341 = vmatpush1.bf16.xpose.msra.mxu0 0
      %1342 = vmatprep.subr.bf16.mxu0 0
      %1343 = vmatpush1.bf16.xpose.msra.mxu0 0
      %1344 = vmatprep.subr.bf16.mxu0 0
      %1345 = vmatpush1.bf16.xpose.msra.mxu0 0
      %1346 = vmatprep.subr.bf16.mxu0 0
      %1347 = vmatpush1.bf16.xpose.msra.mxu0 0
      %1348 = vmatprep.subr.bf16.mxu0 0
      %1349 = vmatpush1.bf16.xpose.msra.mxu0 0
      %1350 = vmatprep.subr.bf16.mxu0 0
      %1351 = vmatpush1.bf16.xpose.msra.mxu0 0
      %1352 = vmatprep.subr.bf16.mxu0 0
      %1353 = vmatpush1.bf16.xpose.msra.mxu0 0
      %1354 = vmatprep.subr.bf16.mxu0 0
      %1355 = vmatpush1.bf16.xpose.msra.mxu0 0
      %1356 = vmatprep.subr.bf16.mxu0 0
      %1357 = vmatpush1.bf16.xpose.msra.mxu0 0
      %1358 = vmatprep.subr.bf16.mxu0 0
      %1359 = vmatpush1.bf16.xpose.msra.mxu0 0
      %1360 = vmatprep.subr.bf16.mxu0 0
      %1361 = vmatpush1.bf16.xpose.msra.mxu0 0
      %1362 = vmatprep.subr.bf16.mxu0 0
      %1363 = vmatpush1.bf16.xpose.msra.mxu0 0
      %1364 = vmatprep.subr.bf16.mxu0 0
      %1365 = vmatpush1.bf16.xpose.msra.mxu0 0
      %1366 = vmatprep.mubr.bf16.mxu0 0
      %1367 = vmatmul.mubr.bf16.gmra.mrb[0].mxu0 %v1329
      %v1368 = vpop.f32.mrb[0].mxu0
      %v1369 = vadd.f32 %v722, %v1368
      %v1370 = vpop.f32.mrb[0].mxu0
      %v1371 = vpop.f32.mrb[0].mxu0
      %v1372 = vadd.f32 %v723, %v1371
      %v1373 = vpop.f32.mrb[0].mxu0
      %1374 = vdwg.mxu0
      %1375 = vrot.lane.b32.xlu0 %v731, 120
      %v1376 = vpop.permute.xlu0 %1375
      %1377 = vrot.lane.b32.xlu0 %v731, 88
      %v1378 = vpop.permute.xlu0 %1377
      %v1380 = vsel %vm735, %v1376, 0
      %v1383 = vsel %vm735, %v1378, 0
      %1385 = vmatprep.subr.bf16.mxu0 0
      %1386 = vmatpush1.bf16.xpose.msra.mxu0 %v1383
      %1387 = vmatprep.subr.bf16.mxu0 0
      %1388 = vmatpush1.bf16.xpose.msra.mxu0 0
      %1389 = vmatprep.subr.bf16.mxu0 0
      %1390 = vmatpush1.bf16.xpose.msra.mxu0 0
      %1391 = vmatprep.subr.bf16.mxu0 0
      %1392 = vmatpush1.bf16.xpose.msra.mxu0 0
      %1393 = vmatprep.subr.bf16.mxu0 0
      %1394 = vmatpush1.bf16.xpose.msra.mxu0 0
      %1395 = vmatprep.subr.bf16.mxu0 0
      %1396 = vmatpush1.bf16.xpose.msra.mxu0 0
      %1397 = vmatprep.subr.bf16.mxu0 0
      %1398 = vmatpush1.bf16.xpose.msra.mxu0 0
      %1399 = vmatprep.subr.bf16.mxu0 0
      %1400 = vmatpush1.bf16.xpose.msra.mxu0 0
      %1401 = vmatprep.subr.bf16.mxu0 0
      %1402 = vmatpush1.bf16.xpose.msra.mxu0 0
      %1403 = vmatprep.subr.bf16.mxu0 0
      %1404 = vmatpush1.bf16.xpose.msra.mxu0 0
      %1405 = vmatprep.subr.bf16.mxu0 0
      %1406 = vmatpush1.bf16.xpose.msra.mxu0 0
      %1407 = vmatprep.subr.bf16.mxu0 0
      %1408 = vmatpush1.bf16.xpose.msra.mxu0 0
      %1409 = vmatprep.subr.bf16.mxu0 0
      %1410 = vmatpush1.bf16.xpose.msra.mxu0 0
      %1411 = vmatprep.subr.bf16.mxu0 0
      %1412 = vmatpush1.bf16.xpose.msra.mxu0 0
      %1413 = vmatprep.subr.bf16.mxu0 0
      %1414 = vmatpush1.bf16.xpose.msra.mxu0 0
      %1415 = vmatprep.subr.bf16.mxu0 0
      %1416 = vmatpush1.bf16.xpose.msra.mxu0 0
      %1417 = vmatprep.mubr.bf16.mxu0 0
      %1418 = vmatmul.mubr.bf16.gmra.mrb[0].mxu0 %v1380
      %v1419 = vpop.f32.mrb[0].mxu0
      %v1420 = vadd.f32 %v722, %v1419
      %v1421 = vpop.f32.mrb[0].mxu0
      %v1422 = vpop.f32.mrb[0].mxu0
      %v1423 = vadd.f32 %v723, %v1422
      %v1424 = vpop.f32.mrb[0].mxu0
      %1425 = vdwg.mxu0
      %v1426 = vsel %vm933, %v1267, -inf
      %1427 = vmax.xlane.f32.xlu0 %v1426
      %v1428 = vpop.xlane.xlu0 %1427
      %v1429 = vsel %vm933, %v1270, -inf
      %1430 = vmax.xlane.f32.xlu0 %v1429
      %v1431 = vpop.xlane.xlu0 %1430
      %v1432 = vsel %vm933, %v1318, -inf
      %1433 = vmax.xlane.f32.xlu0 %v1432
      %v1434 = vpop.xlane.xlu0 %1433
      %v1435 = vsel %vm933, %v1321, -inf
      %1436 = vmax.xlane.f32.xlu0 %v1435
      %v1437 = vpop.xlane.xlu0 %1436
      %v1438 = vsel %vm933, %v1369, -inf
      %1439 = vmax.xlane.f32.xlu0 %v1438
      %v1440 = vpop.xlane.xlu0 %1439
      %v1441 = vsel %vm933, %v1372, -inf
      %1442 = vmax.xlane.f32.xlu0 %v1441
      %v1443 = vpop.xlane.xlu0 %1442
      %v1444 = vsel %vm933, %v1420, -inf
      %1445 = vmax.xlane.f32.xlu0 %v1444
      %v1446 = vpop.xlane.xlu0 %1445
      %v1447 = vsel %vm933, %v1423, -inf
      %1448 = vmax.xlane.f32.xlu0 %v1447
      %v1449 = vpop.xlane.xlu0 %1448
      %v1450 = vsub.f32 %v1267, %v1428
      %v1451 = vsub.f32 %v1270, %v1431
      %v1452 = vsub.f32 %v1318, %v1434
      %v1453 = vsub.f32 %v1321, %v1437
      %v1454 = vsub.f32 %v1369, %v1440
      %v1455 = vsub.f32 %v1372, %v1443
      %v1456 = vsub.f32 %v1420, %v1446
      %v1457 = vsub.f32 %v1423, %v1449
      %v1458 = vmul.f32 %v1450, 1.442695
      %v1459 = vpow.pop %v1458
      %v1460 = vmul.f32 %v1451, 1.442695
      %v1461 = vpow.pop %v1460
      %v1462 = vmul.f32 %v1452, 1.442695
      %v1463 = vpow.pop %v1462
      %v1464 = vmul.f32 %v1453, 1.442695
      %v1465 = vpow.pop %v1464
      %v1466 = vmul.f32 %v1454, 1.442695
      %v1467 = vpow.pop %v1466
      %v1468 = vmul.f32 %v1455, 1.442695
      %v1469 = vpow.pop %v1468
      %v1470 = vmul.f32 %v1456, 1.442695
      %v1471 = vpow.pop %v1470
      %v1472 = vmul.f32 %v1457, 1.442695
      %v1473 = vpow.pop %v1472
      %v1474 = vsel %vm933, %v1459, 0.0
      %1475 = vadd.xlane.f32.xlu0 %v1474
      %v1476 = vpop.xlane.xlu0 %1475
      %v1477 = vsel %vm933, %v1461, 0.0
      %1478 = vadd.xlane.f32.xlu0 %v1477
      %v1479 = vpop.xlane.xlu0 %1478
      %v1480 = vsel %vm933, %v1463, 0.0
      %1481 = vadd.xlane.f32.xlu0 %v1480
      %v1482 = vpop.xlane.xlu0 %1481
      %v1483 = vsel %vm933, %v1465, 0.0
      %1484 = vadd.xlane.f32.xlu0 %v1483
      %v1485 = vpop.xlane.xlu0 %1484
      %v1486 = vsel %vm933, %v1467, 0.0
      %1487 = vadd.xlane.f32.xlu0 %v1486
      %v1488 = vpop.xlane.xlu0 %1487
      %v1489 = vsel %vm933, %v1469, 0.0
      %1490 = vadd.xlane.f32.xlu0 %v1489
      %v1491 = vpop.xlane.xlu0 %1490
      %v1492 = vsel %vm933, %v1471, 0.0
      %1493 = vadd.xlane.f32.xlu0 %v1492
      %v1494 = vpop.xlane.xlu0 %1493
      %v1495 = vsel %vm933, %v1473, 0.0
      %1496 = vadd.xlane.f32.xlu0 %v1495
      %v1497 = vpop.xlane.xlu0 %1496
      %v1498 = vrcp.pop %v1476
      %v1499 = vrcp.pop %v1479
      %v1500 = vrcp.pop %v1482
      %v1501 = vrcp.pop %v1485
      %v1502 = vrcp.pop %v1488
      %v1503 = vrcp.pop %v1491
      %v1504 = vrcp.pop %v1494
      %v1505 = vrcp.pop %v1497
      %v1506 = vmul.f32 %v1459, %v1498
      %v1507 = vmul.f32 %v1461, %v1499
      %v1508 = vmul.f32 %v1463, %v1500
      %v1509 = vmul.f32 %v1465, %v1501
      %v1510 = vmul.f32 %v1467, %v1502
      %v1511 = vmul.f32 %v1469, %v1503
      %v1512 = vmul.f32 %v1471, %v1504
      %v1513 = vmul.f32 %v1473, %v1505
      %v1514 = vpack.c.bf16 %v1507, %v1506
      %v1515 = vpack.c.bf16 %v1509, %v1508
      %v1516 = vpack.c.bf16 %v1511, %v1510
      %v1517 = vpack.c.bf16 %v1513, %v1512
      %1518 = vrot.lane.b32.xlu0 %v728, 56
      %v1519 = vpop.permute.xlu0 %1518
      %v1522 = vsel %vm933, %v1514, 0
      %1524 = vmatprep.subr.bf16.mxu0 0
      %1525 = vmatpush1.bf16.msra.mxu0 %v1519
      %1526 = vmatprep.subr.bf16.mxu0 0
      %1527 = vmatpush1.bf16.msra.mxu0 0
      %1528 = vmatprep.subr.bf16.mxu0 0
      %1529 = vmatpush1.bf16.msra.mxu0 0
      %1530 = vmatprep.subr.bf16.mxu0 0
      %1531 = vmatpush1.bf16.msra.mxu0 0
      %1532 = vmatprep.subr.bf16.mxu0 0
      %1533 = vmatpush1.bf16.msra.mxu0 0
      %1534 = vmatprep.subr.bf16.mxu0 0
      %1535 = vmatpush1.bf16.msra.mxu0 0
      %1536 = vmatprep.subr.bf16.mxu0 0
      %1537 = vmatpush1.bf16.msra.mxu0 0
      %1538 = vmatprep.subr.bf16.mxu0 0
      %1539 = vmatpush1.bf16.msra.mxu0 0
      %1540 = vmatprep.subr.bf16.mxu0 0
      %1541 = vmatpush1.bf16.msra.mxu0 0
      %1542 = vmatprep.subr.bf16.mxu0 0
      %1543 = vmatpush1.bf16.msra.mxu0 0
      %1544 = vmatprep.subr.bf16.mxu0 0
      %1545 = vmatpush1.bf16.msra.mxu0 0
      %1546 = vmatprep.subr.bf16.mxu0 0
      %1547 = vmatpush1.bf16.msra.mxu0 0
      %1548 = vmatprep.subr.bf16.mxu0 0
      %1549 = vmatpush1.bf16.msra.mxu0 0
      %1550 = vmatprep.subr.bf16.mxu0 0
      %1551 = vmatpush1.bf16.msra.mxu0 0
      %1552 = vmatprep.subr.bf16.mxu0 0
      %1553 = vmatpush1.bf16.msra.mxu0 0
      %1554 = vmatprep.subr.bf16.mxu0 0
      %1555 = vmatpush1.bf16.msra.mxu0 0
      %1556 = vmatprep.mubr.bf16.mxu0 0
      %1557 = vmatmul.mubr.bf16.gmra.mrb[0].mxu0 %v1522
      %v1558 = vpop.f32.mrb[0].mxu0
      %v1559 = vadd.f32 0.0, %v1558
      %v1560 = vpop.f32.mrb[0].mxu0
      %v1561 = vpop.f32.mrb[0].mxu0
      %v1562 = vadd.f32 0.0, %v1561
      %v1563 = vpop.f32.mrb[0].mxu0
      %1564 = vdwg.mxu0
      %1565 = vrot.lane.b32.xlu0 %v729, 56
      %v1566 = vpop.permute.xlu0 %1565
      %v1569 = vsel %vm933, %v1515, 0
      %1571 = vmatprep.subr.bf16.mxu0 0
      %1572 = vmatpush1.bf16.msra.mxu0 %v1566
      %1573 = vmatprep.subr.bf16.mxu0 0
      %1574 = vmatpush1.bf16.msra.mxu0 0
      %1575 = vmatprep.subr.bf16.mxu0 0
      %1576 = vmatpush1.bf16.msra.mxu0 0
      %1577 = vmatprep.subr.bf16.mxu0 0
      %1578 = vmatpush1.bf16.msra.mxu0 0
      %1579 = vmatprep.subr.bf16.mxu0 0
      %1580 = vmatpush1.bf16.msra.mxu0 0
      %1581 = vmatprep.subr.bf16.mxu0 0
      %1582 = vmatpush1.bf16.msra.mxu0 0
      %1583 = vmatprep.subr.bf16.mxu0 0
      %1584 = vmatpush1.bf16.msra.mxu0 0
      %1585 = vmatprep.subr.bf16.mxu0 0
      %1586 = vmatpush1.bf16.msra.mxu0 0
      %1587 = vmatprep.subr.bf16.mxu0 0
      %1588 = vmatpush1.bf16.msra.mxu0 0
      %1589 = vmatprep.subr.bf16.mxu0 0
      %1590 = vmatpush1.bf16.msra.mxu0 0
      %1591 = vmatprep.subr.bf16.mxu0 0
      %1592 = vmatpush1.bf16.msra.mxu0 0
      %1593 = vmatprep.subr.bf16.mxu0 0
      %1594 = vmatpush1.bf16.msra.mxu0 0
      %1595 = vmatprep.subr.bf16.mxu0 0
      %1596 = vmatpush1.bf16.msra.mxu0 0
      %1597 = vmatprep.subr.bf16.mxu0 0
      %1598 = vmatpush1.bf16.msra.mxu0 0
      %1599 = vmatprep.subr.bf16.mxu0 0
      %1600 = vmatpush1.bf16.msra.mxu0 0
      %1601 = vmatprep.subr.bf16.mxu0 0
      %1602 = vmatpush1.bf16.msra.mxu0 0
      %1603 = vmatprep.mubr.bf16.mxu0 0
      %1604 = vmatmul.mubr.bf16.gmra.mrb[0].mxu0 %v1569
      %v1605 = vpop.f32.mrb[0].mxu0
      %v1606 = vadd.f32 0.0, %v1605
      %v1607 = vpop.f32.mrb[0].mxu0
      %v1608 = vpop.f32.mrb[0].mxu0
      %v1609 = vadd.f32 0.0, %v1608
      %v1610 = vpop.f32.mrb[0].mxu0
      %1611 = vdwg.mxu0
      %1612 = vrot.lane.b32.xlu0 %v730, 56
      %v1613 = vpop.permute.xlu0 %1612
      %v1616 = vsel %vm933, %v1516, 0
      %1618 = vmatprep.subr.bf16.mxu0 0
      %1619 = vmatpush1.bf16.msra.mxu0 %v1613
      %1620 = vmatprep.subr.bf16.mxu0 0
      %1621 = vmatpush1.bf16.msra.mxu0 0
      %1622 = vmatprep.subr.bf16.mxu0 0
      %1623 = vmatpush1.bf16.msra.mxu0 0
      %1624 = vmatprep.subr.bf16.mxu0 0
      %1625 = vmatpush1.bf16.msra.mxu0 0
      %1626 = vmatprep.subr.bf16.mxu0 0
      %1627 = vmatpush1.bf16.msra.mxu0 0
      %1628 = vmatprep.subr.bf16.mxu0 0
      %1629 = vmatpush1.bf16.msra.mxu0 0
      %1630 = vmatprep.subr.bf16.mxu0 0
      %1631 = vmatpush1.bf16.msra.mxu0 0
      %1632 = vmatprep.subr.bf16.mxu0 0
      %1633 = vmatpush1.bf16.msra.mxu0 0
      %1634 = vmatprep.subr.bf16.mxu0 0
      %1635 = vmatpush1.bf16.msra.mxu0 0
      %1636 = vmatprep.subr.bf16.mxu0 0
      %1637 = vmatpush1.bf16.msra.mxu0 0
      %1638 = vmatprep.subr.bf16.mxu0 0
      %1639 = vmatpush1.bf16.msra.mxu0 0
      %1640 = vmatprep.subr.bf16.mxu0 0
      %1641 = vmatpush1.bf16.msra.mxu0 0
      %1642 = vmatprep.subr.bf16.mxu0 0
      %1643 = vmatpush1.bf16.msra.mxu0 0
      %1644 = vmatprep.subr.bf16.mxu0 0
      %1645 = vmatpush1.bf16.msra.mxu0 0
      %1646 = vmatprep.subr.bf16.mxu0 0
      %1647 = vmatpush1.bf16.msra.mxu0 0
      %1648 = vmatprep.subr.bf16.mxu0 0
      %1649 = vmatpush1.bf16.msra.mxu0 0
      %1650 = vmatprep.mubr.bf16.mxu0 0
      %1651 = vmatmul.mubr.bf16.gmra.mrb[0].mxu0 %v1616
      %v1652 = vpop.f32.mrb[0].mxu0
      %v1653 = vadd.f32 0.0, %v1652
      %v1654 = vpop.f32.mrb[0].mxu0
      %v1655 = vpop.f32.mrb[0].mxu0
      %v1656 = vadd.f32 0.0, %v1655
      %v1657 = vpop.f32.mrb[0].mxu0
      %1658 = vdwg.mxu0
      %1659 = vrot.lane.b32.xlu0 %v731, 56
      %v1660 = vpop.permute.xlu0 %1659
      %v1663 = vsel %vm933, %v1517, 0
      %1665 = vmatprep.subr.bf16.mxu0 0
      %1666 = vmatpush1.bf16.msra.mxu0 %v1660
      %1667 = vmatprep.subr.bf16.mxu0 0
      %1668 = vmatpush1.bf16.msra.mxu0 0
      %1669 = vmatprep.subr.bf16.mxu0 0
      %1670 = vmatpush1.bf16.msra.mxu0 0
      %1671 = vmatprep.subr.bf16.mxu0 0
      %1672 = vmatpush1.bf16.msra.mxu0 0
      %1673 = vmatprep.subr.bf16.mxu0 0
      %1674 = vmatpush1.bf16.msra.mxu0 0
      %1675 = vmatprep.subr.bf16.mxu0 0
      %1676 = vmatpush1.bf16.msra.mxu0 0
      %1677 = vmatprep.subr.bf16.mxu0 0
      %1678 = vmatpush1.bf16.msra.mxu0 0
      %1679 = vmatprep.subr.bf16.mxu0 0
      %1680 = vmatpush1.bf16.msra.mxu0 0
      %1681 = vmatprep.subr.bf16.mxu0 0
      %1682 = vmatpush1.bf16.msra.mxu0 0
      %1683 = vmatprep.subr.bf16.mxu0 0
      %1684 = vmatpush1.bf16.msra.mxu0 0
      %1685 = vmatprep.subr.bf16.mxu0 0
      %1686 = vmatpush1.bf16.msra.mxu0 0
      %1687 = vmatprep.subr.bf16.mxu0 0
      %1688 = vmatpush1.bf16.msra.mxu0 0
      %1689 = vmatprep.subr.bf16.mxu0 0
      %1690 = vmatpush1.bf16.msra.mxu0 0
      %1691 = vmatprep.subr.bf16.mxu0 0
      %1692 = vmatpush1.bf16.msra.mxu0 0
      %1693 = vmatprep.subr.bf16.mxu0 0
      %1694 = vmatpush1.bf16.msra.mxu0 0
      %1695 = vmatprep.subr.bf16.mxu0 0
      %1696 = vmatpush1.bf16.msra.mxu0 0
      %1697 = vmatprep.mubr.bf16.mxu0 0
      %1698 = vmatmul.mubr.bf16.gmra.mrb[0].mxu0 %v1663
      %v1699 = vpop.f32.mrb[0].mxu0
      %v1700 = vadd.f32 0.0, %v1699
      %v1701 = vpop.f32.mrb[0].mxu0
      %v1702 = vpop.f32.mrb[0].mxu0
      %v1703 = vadd.f32 0.0, %v1702
      %v1704 = vpop.f32.mrb[0].mxu0
      %1705 = vdwg.mxu0
      %1714 = vrot.lane.b32.xlu0 %v1559, 8
      %v1715 = vpop.permute.xlu0 %1714
      %1716 = vrot.lane.b32.xlu0 %v1562, 8
      %v1717 = vpop.permute.xlu0 %1716
      %1718 = vrot.lane.b32.xlu0 %v1606, 8
      %v1719 = vpop.permute.xlu0 %1718
      %1720 = vrot.lane.b32.xlu0 %v1609, 8
      %v1721 = vpop.permute.xlu0 %1720
      %1722 = vrot.lane.b32.xlu0 %v1653, 8
      %v1723 = vpop.permute.xlu0 %1722
      %1724 = vrot.lane.b32.xlu0 %v1656, 8
      %v1725 = vpop.permute.xlu0 %1724
      %1726 = vrot.lane.b32.xlu0 %v1700, 8
      %v1727 = vpop.permute.xlu0 %1726
      %1728 = vrot.lane.b32.xlu0 %v1703, 8
      %v1729 = vpop.permute.xlu0 %1728
      %vm1738 = vcmask 130112
      %1739 = vst.msk [vmem:[#allocation2] sm:$0xff] %vm1738, %v1715
      %1740 = vst.msk [vmem:[#allocation2 + $0x8] sm:$0xff] %vm1738, %v1717
      %1741 = vst.msk [vmem:[#allocation2 + $0x10] sm:$0xff] %vm1738, %v1719
      %1742 = vst.msk [vmem:[#allocation2 + $0x18] sm:$0xff] %vm1738, %v1721
      %1743 = vst.msk [vmem:[#allocation2 + $0x20] sm:$0xff] %vm1738, %v1723
      %1744 = vst.msk [vmem:[#allocation2 + $0x28] sm:$0xff] %vm1738, %v1725
      %1745 = vst.msk [vmem:[#allocation2 + $0x30] sm:$0xff] %vm1738, %v1727
      %1746 = vst.msk [vmem:[#allocation2 + $0x38] sm:$0xff] %vm1738, %v1729
      %1747 = vrot.lane.b32.xlu0 %v728, 112
      %v1748 = vpop.permute.xlu0 %1747
      %1749 = vrot.lane.b32.xlu0 %v728, 80
      %v1750 = vpop.permute.xlu0 %1749
      %v1752 = vsel %vm735, %v1748, 0
      %v1755 = vsel %vm735, %v1750, 0
      %1757 = vmatprep.subr.bf16.mxu0 0
      %1758 = vmatpush1.bf16.xpose.msra.mxu0 %v1755
      %1759 = vmatprep.subr.bf16.mxu0 0
      %1760 = vmatpush1.bf16.xpose.msra.mxu0 0
      %1761 = vmatprep.subr.bf16.mxu0 0
      %1762 = vmatpush1.bf16.xpose.msra.mxu0 0
      %1763 = vmatprep.subr.bf16.mxu0 0
      %1764 = vmatpush1.bf16.xpose.msra.mxu0 0
      %1765 = vmatprep.subr.bf16.mxu0 0
      %1766 = vmatpush1.bf16.xpose.msra.mxu0 0
      %1767 = vmatprep.subr.bf16.mxu0 0
      %1768 = vmatpush1.bf16.xpose.msra.mxu0 0
      %1769 = vmatprep.subr.bf16.mxu0 0
      %1770 = vmatpush1.bf16.xpose.msra.mxu0 0
      %1771 = vmatprep.subr.bf16.mxu0 0
      %1772 = vmatpush1.bf16.xpose.msra.mxu0 0
      %1773 = vmatprep.subr.bf16.mxu0 0
      %1774 = vmatpush1.bf16.xpose.msra.mxu0 0
      %1775 = vmatprep.subr.bf16.mxu0 0
      %1776 = vmatpush1.bf16.xpose.msra.mxu0 0
      %1777 = vmatprep.subr.bf16.mxu0 0
      %1778 = vmatpush1.bf16.xpose.msra.mxu0 0
      %1779 = vmatprep.subr.bf16.mxu0 0
      %1780 = vmatpush1.bf16.xpose.msra.mxu0 0
      %1781 = vmatprep.subr.bf16.mxu0 0
      %1782 = vmatpush1.bf16.xpose.msra.mxu0 0
      %1783 = vmatprep.subr.bf16.mxu0 0
      %1784 = vmatpush1.bf16.xpose.msra.mxu0 0
      %1785 = vmatprep.subr.bf16.mxu0 0
      %1786 = vmatpush1.bf16.xpose.msra.mxu0 0
      %1787 = vmatprep.subr.bf16.mxu0 0
      %1788 = vmatpush1.bf16.xpose.msra.mxu0 0
      %1789 = vmatprep.mubr.bf16.mxu0 0
      %1790 = vmatmul.mubr.bf16.gmra.mrb[0].mxu0 %v1752
      %v1791 = vpop.f32.mrb[0].mxu0
      %v1792 = vadd.f32 %v724, %v1791
      %v1793 = vpop.f32.mrb[0].mxu0
      %v1794 = vpop.f32.mrb[0].mxu0
      %v1795 = vadd.f32 %v725, %v1794
      %v1796 = vpop.f32.mrb[0].mxu0
      %1797 = vdwg.mxu0
      %1798 = vrot.lane.b32.xlu0 %v729, 112
      %v1799 = vpop.permute.xlu0 %1798
      %1800 = vrot.lane.b32.xlu0 %v729, 80
      %v1801 = vpop.permute.xlu0 %1800
      %v1803 = vsel %vm735, %v1799, 0
      %v1806 = vsel %vm735, %v1801, 0
      %1808 = vmatprep.subr.bf16.mxu0 0
      %1809 = vmatpush1.bf16.xpose.msra.mxu0 %v1806
      %1810 = vmatprep.subr.bf16.mxu0 0
      %1811 = vmatpush1.bf16.xpose.msra.mxu0 0
      %1812 = vmatprep.subr.bf16.mxu0 0
      %1813 = vmatpush1.bf16.xpose.msra.mxu0 0
      %1814 = vmatprep.subr.bf16.mxu0 0
      %1815 = vmatpush1.bf16.xpose.msra.mxu0 0
      %1816 = vmatprep.subr.bf16.mxu0 0
      %1817 = vmatpush1.bf16.xpose.msra.mxu0 0
      %1818 = vmatprep.subr.bf16.mxu0 0
      %1819 = vmatpush1.bf16.xpose.msra.mxu0 0
      %1820 = vmatprep.subr.bf16.mxu0 0
      %1821 = vmatpush1.bf16.xpose.msra.mxu0 0
      %1822 = vmatprep.subr.bf16.mxu0 0
      %1823 = vmatpush1.bf16.xpose.msra.mxu0 0
      %1824 = vmatprep.subr.bf16.mxu0 0
      %1825 = vmatpush1.bf16.xpose.msra.mxu0 0
      %1826 = vmatprep.subr.bf16.mxu0 0
      %1827 = vmatpush1.bf16.xpose.msra.mxu0 0
      %1828 = vmatprep.subr.bf16.mxu0 0
      %1829 = vmatpush1.bf16.xpose.msra.mxu0 0
      %1830 = vmatprep.subr.bf16.mxu0 0
      %1831 = vmatpush1.bf16.xpose.msra.mxu0 0
      %1832 = vmatprep.subr.bf16.mxu0 0
      %1833 = vmatpush1.bf16.xpose.msra.mxu0 0
      %1834 = vmatprep.subr.bf16.mxu0 0
      %1835 = vmatpush1.bf16.xpose.msra.mxu0 0
      %1836 = vmatprep.subr.bf16.mxu0 0
      %1837 = vmatpush1.bf16.xpose.msra.mxu0 0
      %1838 = vmatprep.subr.bf16.mxu0 0
      %1839 = vmatpush1.bf16.xpose.msra.mxu0 0
      %1840 = vmatprep.mubr.bf16.mxu0 0
      %1841 = vmatmul.mubr.bf16.gmra.mrb[0].mxu0 %v1803
      %v1842 = vpop.f32.mrb[0].mxu0
      %v1843 = vadd.f32 %v724, %v1842
      %v1844 = vpop.f32.mrb[0].mxu0
      %v1845 = vpop.f32.mrb[0].mxu0
      %v1846 = vadd.f32 %v725, %v1845
      %v1847 = vpop.f32.mrb[0].mxu0
      %1848 = vdwg.mxu0
      %1849 = vrot.lane.b32.xlu0 %v730, 112
      %v1850 = vpop.permute.xlu0 %1849
      %1851 = vrot.lane.b32.xlu0 %v730, 80
      %v1852 = vpop.permute.xlu0 %1851
      %v1854 = vsel %vm735, %v1850, 0
      %v1857 = vsel %vm735, %v1852, 0
      %1859 = vmatprep.subr.bf16.mxu0 0
      %1860 = vmatpush1.bf16.xpose.msra.mxu0 %v1857
      %1861 = vmatprep.subr.bf16.mxu0 0
      %1862 = vmatpush1.bf16.xpose.msra.mxu0 0
      %1863 = vmatprep.subr.bf16.mxu0 0
      %1864 = vmatpush1.bf16.xpose.msra.mxu0 0
      %1865 = vmatprep.subr.bf16.mxu0 0
      %1866 = vmatpush1.bf16.xpose.msra.mxu0 0
      %1867 = vmatprep.subr.bf16.mxu0 0
      %1868 = vmatpush1.bf16.xpose.msra.mxu0 0
      %1869 = vmatprep.subr.bf16.mxu0 0
      %1870 = vmatpush1.bf16.xpose.msra.mxu0 0
      %1871 = vmatprep.subr.bf16.mxu0 0
      %1872 = vmatpush1.bf16.xpose.msra.mxu0 0
      %1873 = vmatprep.subr.bf16.mxu0 0
      %1874 = vmatpush1.bf16.xpose.msra.mxu0 0
      %1875 = vmatprep.subr.bf16.mxu0 0
      %1876 = vmatpush1.bf16.xpose.msra.mxu0 0
      %1877 = vmatprep.subr.bf16.mxu0 0
      %1878 = vmatpush1.bf16.xpose.msra.mxu0 0
      %1879 = vmatprep.subr.bf16.mxu0 0
      %1880 = vmatpush1.bf16.xpose.msra.mxu0 0
      %1881 = vmatprep.subr.bf16.mxu0 0
      %1882 = vmatpush1.bf16.xpose.msra.mxu0 0
      %1883 = vmatprep.subr.bf16.mxu0 0
      %1884 = vmatpush1.bf16.xpose.msra.mxu0 0
      %1885 = vmatprep.subr.bf16.mxu0 0
      %1886 = vmatpush1.bf16.xpose.msra.mxu0 0
      %1887 = vmatprep.subr.bf16.mxu0 0
      %1888 = vmatpush1.bf16.xpose.msra.mxu0 0
      %1889 = vmatprep.subr.bf16.mxu0 0
      %1890 = vmatpush1.bf16.xpose.msra.mxu0 0
      %1891 = vmatprep.mubr.bf16.mxu0 0
      %1892 = vmatmul.mubr.bf16.gmra.mrb[0].mxu0 %v1854
      %v1893 = vpop.f32.mrb[0].mxu0
      %v1894 = vadd.f32 %v724, %v1893
      %v1895 = vpop.f32.mrb[0].mxu0
      %v1896 = vpop.f32.mrb[0].mxu0
      %v1897 = vadd.f32 %v725, %v1896
      %v1898 = vpop.f32.mrb[0].mxu0
      %1899 = vdwg.mxu0
      %1900 = vrot.lane.b32.xlu0 %v731, 112
      %v1901 = vpop.permute.xlu0 %1900
      %1902 = vrot.lane.b32.xlu0 %v731, 80
      %v1903 = vpop.permute.xlu0 %1902
      %v1905 = vsel %vm735, %v1901, 0
      %v1908 = vsel %vm735, %v1903, 0
      %1910 = vmatprep.subr.bf16.mxu0 0
      %1911 = vmatpush1.bf16.xpose.msra.mxu0 %v1908
      %1912 = vmatprep.subr.bf16.mxu0 0
      %1913 = vmatpush1.bf16.xpose.msra.mxu0 0
      %1914 = vmatprep.subr.bf16.mxu0 0
      %1915 = vmatpush1.bf16.xpose.msra.mxu0 0
      %1916 = vmatprep.subr.bf16.mxu0 0
      %1917 = vmatpush1.bf16.xpose.msra.mxu0 0
      %1918 = vmatprep.subr.bf16.mxu0 0
      %1919 = vmatpush1.bf16.xpose.msra.mxu0 0
      %1920 = vmatprep.subr.bf16.mxu0 0
      %1921 = vmatpush1.bf16.xpose.msra.mxu0 0
      %1922 = vmatprep.subr.bf16.mxu0 0
      %1923 = vmatpush1.bf16.xpose.msra.mxu0 0
      %1924 = vmatprep.subr.bf16.mxu0 0
      %1925 = vmatpush1.bf16.xpose.msra.mxu0 0
      %1926 = vmatprep.subr.bf16.mxu0 0
      %1927 = vmatpush1.bf16.xpose.msra.mxu0 0
      %1928 = vmatprep.subr.bf16.mxu0 0
      %1929 = vmatpush1.bf16.xpose.msra.mxu0 0
      %1930 = vmatprep.subr.bf16.mxu0 0
      %1931 = vmatpush1.bf16.xpose.msra.mxu0 0
      %1932 = vmatprep.subr.bf16.mxu0 0
      %1933 = vmatpush1.bf16.xpose.msra.mxu0 0
      %1934 = vmatprep.subr.bf16.mxu0 0
      %1935 = vmatpush1.bf16.xpose.msra.mxu0 0
      %1936 = vmatprep.subr.bf16.mxu0 0
      %1937 = vmatpush1.bf16.xpose.msra.mxu0 0
      %1938 = vmatprep.subr.bf16.mxu0 0
      %1939 = vmatpush1.bf16.xpose.msra.mxu0 0
      %1940 = vmatprep.subr.bf16.mxu0 0
      %1941 = vmatpush1.bf16.xpose.msra.mxu0 0
      %1942 = vmatprep.mubr.bf16.mxu0 0
      %1943 = vmatmul.mubr.bf16.gmra.mrb[0].mxu0 %v1905
      %v1944 = vpop.f32.mrb[0].mxu0
      %v1945 = vadd.f32 %v724, %v1944
      %v1946 = vpop.f32.mrb[0].mxu0
      %v1947 = vpop.f32.mrb[0].mxu0
      %v1948 = vadd.f32 %v725, %v1947
      %v1949 = vpop.f32.mrb[0].mxu0
      %1950 = vdwg.mxu0
      %v1951 = vsel %vm933, %v1792, -inf
      %1952 = vmax.xlane.f32.xlu0 %v1951
      %v1953 = vpop.xlane.xlu0 %1952
      %v1954 = vsel %vm933, %v1795, -inf
      %1955 = vmax.xlane.f32.xlu0 %v1954
      %v1956 = vpop.xlane.xlu0 %1955
      %v1957 = vsel %vm933, %v1843, -inf
      %1958 = vmax.xlane.f32.xlu0 %v1957
      %v1959 = vpop.xlane.xlu0 %1958
      %v1960 = vsel %vm933, %v1846, -inf
      %1961 = vmax.xlane.f32.xlu0 %v1960
      %v1962 = vpop.xlane.xlu0 %1961
      %v1963 = vsel %vm933, %v1894, -inf
      %1964 = vmax.xlane.f32.xlu0 %v1963
      %v1965 = vpop.xlane.xlu0 %1964
      %v1966 = vsel %vm933, %v1897, -inf
      %1967 = vmax.xlane.f32.xlu0 %v1966
      %v1968 = vpop.xlane.xlu0 %1967
      %v1969 = vsel %vm933, %v1945, -inf
      %1970 = vmax.xlane.f32.xlu0 %v1969
      %v1971 = vpop.xlane.xlu0 %1970
      %v1972 = vsel %vm933, %v1948, -inf
      %1973 = vmax.xlane.f32.xlu0 %v1972
      %v1974 = vpop.xlane.xlu0 %1973
      %v1975 = vsub.f32 %v1792, %v1953
      %v1976 = vsub.f32 %v1795, %v1956
      %v1977 = vsub.f32 %v1843, %v1959
      %v1978 = vsub.f32 %v1846, %v1962
      %v1979 = vsub.f32 %v1894, %v1965
      %v1980 = vsub.f32 %v1897, %v1968
      %v1981 = vsub.f32 %v1945, %v1971
      %v1982 = vsub.f32 %v1948, %v1974
      %v1983 = vmul.f32 %v1975, 1.442695
      %v1984 = vpow.pop %v1983
      %v1985 = vmul.f32 %v1976, 1.442695
      %v1986 = vpow.pop %v1985
      %v1987 = vmul.f32 %v1977, 1.442695
      %v1988 = vpow.pop %v1987
      %v1989 = vmul.f32 %v1978, 1.442695
      %v1990 = vpow.pop %v1989
      %v1991 = vmul.f32 %v1979, 1.442695
      %v1992 = vpow.pop %v1991
      %v1993 = vmul.f32 %v1980, 1.442695
      %v1994 = vpow.pop %v1993
      %v1995 = vmul.f32 %v1981, 1.442695
      %v1996 = vpow.pop %v1995
      %v1997 = vmul.f32 %v1982, 1.442695
      %v1998 = vpow.pop %v1997
      %v1999 = vsel %vm933, %v1984, 0.0
      %2000 = vadd.xlane.f32.xlu0 %v1999
      %v2001 = vpop.xlane.xlu0 %2000
      %v2002 = vsel %vm933, %v1986, 0.0
      %2003 = vadd.xlane.f32.xlu0 %v2002
      %v2004 = vpop.xlane.xlu0 %2003
      %v2005 = vsel %vm933, %v1988, 0.0
      %2006 = vadd.xlane.f32.xlu0 %v2005
      %v2007 = vpop.xlane.xlu0 %2006
      %v2008 = vsel %vm933, %v1990, 0.0
      %2009 = vadd.xlane.f32.xlu0 %v2008
      %v2010 = vpop.xlane.xlu0 %2009
      %v2011 = vsel %vm933, %v1992, 0.0
      %2012 = vadd.xlane.f32.xlu0 %v2011
      %v2013 = vpop.xlane.xlu0 %2012
      %v2014 = vsel %vm933, %v1994, 0.0
      %2015 = vadd.xlane.f32.xlu0 %v2014
      %v2016 = vpop.xlane.xlu0 %2015
      %v2017 = vsel %vm933, %v1996, 0.0
      %2018 = vadd.xlane.f32.xlu0 %v2017
      %v2019 = vpop.xlane.xlu0 %2018
      %v2020 = vsel %vm933, %v1998, 0.0
      %2021 = vadd.xlane.f32.xlu0 %v2020
      %v2022 = vpop.xlane.xlu0 %2021
      %v2023 = vrcp.pop %v2001
      %v2024 = vrcp.pop %v2004
      %v2025 = vrcp.pop %v2007
      %v2026 = vrcp.pop %v2010
      %v2027 = vrcp.pop %v2013
      %v2028 = vrcp.pop %v2016
      %v2029 = vrcp.pop %v2019
      %v2030 = vrcp.pop %v2022
      %v2031 = vmul.f32 %v1984, %v2023
      %v2032 = vmul.f32 %v1986, %v2024
      %v2033 = vmul.f32 %v1988, %v2025
      %v2034 = vmul.f32 %v1990, %v2026
      %v2035 = vmul.f32 %v1992, %v2027
      %v2036 = vmul.f32 %v1994, %v2028
      %v2037 = vmul.f32 %v1996, %v2029
      %v2038 = vmul.f32 %v1998, %v2030
      %v2039 = vpack.c.bf16 %v2032, %v2031
      %v2040 = vpack.c.bf16 %v2034, %v2033
      %v2041 = vpack.c.bf16 %v2036, %v2035
      %v2042 = vpack.c.bf16 %v2038, %v2037
      %2043 = vrot.lane.b32.xlu0 %v728, 48
      %v2044 = vpop.permute.xlu0 %2043
      %v2047 = vsel %vm933, %v2039, 0
      %2049 = vmatprep.subr.bf16.mxu0 0
      %2050 = vmatpush1.bf16.msra.mxu0 %v2044
      %2051 = vmatprep.subr.bf16.mxu0 0
      %2052 = vmatpush1.bf16.msra.mxu0 0
      %2053 = vmatprep.subr.bf16.mxu0 0
      %2054 = vmatpush1.bf16.msra.mxu0 0
      %2055 = vmatprep.subr.bf16.mxu0 0
      %2056 = vmatpush1.bf16.msra.mxu0 0
      %2057 = vmatprep.subr.bf16.mxu0 0
      %2058 = vmatpush1.bf16.msra.mxu0 0
      %2059 = vmatprep.subr.bf16.mxu0 0
      %2060 = vmatpush1.bf16.msra.mxu0 0
      %2061 = vmatprep.subr.bf16.mxu0 0
      %2062 = vmatpush1.bf16.msra.mxu0 0
      %2063 = vmatprep.subr.bf16.mxu0 0
      %2064 = vmatpush1.bf16.msra.mxu0 0
      %2065 = vmatprep.subr.bf16.mxu0 0
      %2066 = vmatpush1.bf16.msra.mxu0 0
      %2067 = vmatprep.subr.bf16.mxu0 0
      %2068 = vmatpush1.bf16.msra.mxu0 0
      %2069 = vmatprep.subr.bf16.mxu0 0
      %2070 = vmatpush1.bf16.msra.mxu0 0
      %2071 = vmatprep.subr.bf16.mxu0 0
      %2072 = vmatpush1.bf16.msra.mxu0 0
      %2073 = vmatprep.subr.bf16.mxu0 0
      %2074 = vmatpush1.bf16.msra.mxu0 0
      %2075 = vmatprep.subr.bf16.mxu0 0
      %2076 = vmatpush1.bf16.msra.mxu0 0
      %2077 = vmatprep.subr.bf16.mxu0 0
      %2078 = vmatpush1.bf16.msra.mxu0 0
      %2079 = vmatprep.subr.bf16.mxu0 0
      %2080 = vmatpush1.bf16.msra.mxu0 0
      %2081 = vmatprep.mubr.bf16.mxu0 0
      %2082 = vmatmul.mubr.bf16.gmra.mrb[0].mxu0 %v2047
      %v2083 = vpop.f32.mrb[0].mxu0
      %v2084 = vadd.f32 0.0, %v2083
      %v2085 = vpop.f32.mrb[0].mxu0
      %v2086 = vpop.f32.mrb[0].mxu0
      %v2087 = vadd.f32 0.0, %v2086
      %v2088 = vpop.f32.mrb[0].mxu0
      %2089 = vdwg.mxu0
      %2090 = vrot.lane.b32.xlu0 %v729, 48
      %v2091 = vpop.permute.xlu0 %2090
      %v2094 = vsel %vm933, %v2040, 0
      %2096 = vmatprep.subr.bf16.mxu0 0
      %2097 = vmatpush1.bf16.msra.mxu0 %v2091
      %2098 = vmatprep.subr.bf16.mxu0 0
      %2099 = vmatpush1.bf16.msra.mxu0 0
      %2100 = vmatprep.subr.bf16.mxu0 0
      %2101 = vmatpush1.bf16.msra.mxu0 0
      %2102 = vmatprep.subr.bf16.mxu0 0
      %2103 = vmatpush1.bf16.msra.mxu0 0
      %2104 = vmatprep.subr.bf16.mxu0 0
      %2105 = vmatpush1.bf16.msra.mxu0 0
      %2106 = vmatprep.subr.bf16.mxu0 0
      %2107 = vmatpush1.bf16.msra.mxu0 0
      %2108 = vmatprep.subr.bf16.mxu0 0
      %2109 = vmatpush1.bf16.msra.mxu0 0
      %2110 = vmatprep.subr.bf16.mxu0 0
      %2111 = vmatpush1.bf16.msra.mxu0 0
      %2112 = vmatprep.subr.bf16.mxu0 0
      %2113 = vmatpush1.bf16.msra.mxu0 0
      %2114 = vmatprep.subr.bf16.mxu0 0
      %2115 = vmatpush1.bf16.msra.mxu0 0
      %2116 = vmatprep.subr.bf16.mxu0 0
      %2117 = vmatpush1.bf16.msra.mxu0 0
      %2118 = vmatprep.subr.bf16.mxu0 0
      %2119 = vmatpush1.bf16.msra.mxu0 0
      %2120 = vmatprep.subr.bf16.mxu0 0
      %2121 = vmatpush1.bf16.msra.mxu0 0
      %2122 = vmatprep.subr.bf16.mxu0 0
      %2123 = vmatpush1.bf16.msra.mxu0 0
      %2124 = vmatprep.subr.bf16.mxu0 0
      %2125 = vmatpush1.bf16.msra.mxu0 0
      %2126 = vmatprep.subr.bf16.mxu0 0
      %2127 = vmatpush1.bf16.msra.mxu0 0
      %2128 = vmatprep.mubr.bf16.mxu0 0
      %2129 = vmatmul.mubr.bf16.gmra.mrb[0].mxu0 %v2094
      %v2130 = vpop.f32.mrb[0].mxu0
      %v2131 = vadd.f32 0.0, %v2130
      %v2132 = vpop.f32.mrb[0].mxu0
      %v2133 = vpop.f32.mrb[0].mxu0
      %v2134 = vadd.f32 0.0, %v2133
      %v2135 = vpop.f32.mrb[0].mxu0
      %2136 = vdwg.mxu0
      %2137 = vrot.lane.b32.xlu0 %v730, 48
      %v2138 = vpop.permute.xlu0 %2137
      %v2141 = vsel %vm933, %v2041, 0
      %2143 = vmatprep.subr.bf16.mxu0 0
      %2144 = vmatpush1.bf16.msra.mxu0 %v2138
      %2145 = vmatprep.subr.bf16.mxu0 0
      %2146 = vmatpush1.bf16.msra.mxu0 0
      %2147 = vmatprep.subr.bf16.mxu0 0
      %2148 = vmatpush1.bf16.msra.mxu0 0
      %2149 = vmatprep.subr.bf16.mxu0 0
      %2150 = vmatpush1.bf16.msra.mxu0 0
      %2151 = vmatprep.subr.bf16.mxu0 0
      %2152 = vmatpush1.bf16.msra.mxu0 0
      %2153 = vmatprep.subr.bf16.mxu0 0
      %2154 = vmatpush1.bf16.msra.mxu0 0
      %2155 = vmatprep.subr.bf16.mxu0 0
      %2156 = vmatpush1.bf16.msra.mxu0 0
      %2157 = vmatprep.subr.bf16.mxu0 0
      %2158 = vmatpush1.bf16.msra.mxu0 0
      %2159 = vmatprep.subr.bf16.mxu0 0
      %2160 = vmatpush1.bf16.msra.mxu0 0
      %2161 = vmatprep.subr.bf16.mxu0 0
      %2162 = vmatpush1.bf16.msra.mxu0 0
      %2163 = vmatprep.subr.bf16.mxu0 0
      %2164 = vmatpush1.bf16.msra.mxu0 0
      %2165 = vmatprep.subr.bf16.mxu0 0
      %2166 = vmatpush1.bf16.msra.mxu0 0
      %2167 = vmatprep.subr.bf16.mxu0 0
      %2168 = vmatpush1.bf16.msra.mxu0 0
      %2169 = vmatprep.subr.bf16.mxu0 0
      %2170 = vmatpush1.bf16.msra.mxu0 0
      %2171 = vmatprep.subr.bf16.mxu0 0
      %2172 = vmatpush1.bf16.msra.mxu0 0
      %2173 = vmatprep.subr.bf16.mxu0 0
      %2174 = vmatpush1.bf16.msra.mxu0 0
      %2175 = vmatprep.mubr.bf16.mxu0 0
      %2176 = vmatmul.mubr.bf16.gmra.mrb[0].mxu0 %v2141
      %v2177 = vpop.f32.mrb[0].mxu0
      %v2178 = vadd.f32 0.0, %v2177
      %v2179 = vpop.f32.mrb[0].mxu0
      %v2180 = vpop.f32.mrb[0].mxu0
      %v2181 = vadd.f32 0.0, %v2180
      %v2182 = vpop.f32.mrb[0].mxu0
      %2183 = vdwg.mxu0
      %2184 = vrot.lane.b32.xlu0 %v731, 48
      %v2185 = vpop.permute.xlu0 %2184
      %v2188 = vsel %vm933, %v2042, 0
      %2190 = vmatprep.subr.bf16.mxu0 0
      %2191 = vmatpush1.bf16.msra.mxu0 %v2185
      %2192 = vmatprep.subr.bf16.mxu0 0
      %2193 = vmatpush1.bf16.msra.mxu0 0
      %2194 = vmatprep.subr.bf16.mxu0 0
      %2195 = vmatpush1.bf16.msra.mxu0 0
      %2196 = vmatprep.subr.bf16.mxu0 0
      %2197 = vmatpush1.bf16.msra.mxu0 0
      %2198 = vmatprep.subr.bf16.mxu0 0
      %2199 = vmatpush1.bf16.msra.mxu0 0
      %2200 = vmatprep.subr.bf16.mxu0 0
      %2201 = vmatpush1.bf16.msra.mxu0 0
      %2202 = vmatprep.subr.bf16.mxu0 0
      %2203 = vmatpush1.bf16.msra.mxu0 0
      %2204 = vmatprep.subr.bf16.mxu0 0
      %2205 = vmatpush1.bf16.msra.mxu0 0
      %2206 = vmatprep.subr.bf16.mxu0 0
      %2207 = vmatpush1.bf16.msra.mxu0 0
      %2208 = vmatprep.subr.bf16.mxu0 0
      %2209 = vmatpush1.bf16.msra.mxu0 0
      %2210 = vmatprep.subr.bf16.mxu0 0
      %2211 = vmatpush1.bf16.msra.mxu0 0
      %2212 = vmatprep.subr.bf16.mxu0 0
      %2213 = vmatpush1.bf16.msra.mxu0 0
      %2214 = vmatprep.subr.bf16.mxu0 0
      %2215 = vmatpush1.bf16.msra.mxu0 0
      %2216 = vmatprep.subr.bf16.mxu0 0
      %2217 = vmatpush1.bf16.msra.mxu0 0
      %2218 = vmatprep.subr.bf16.mxu0 0
      %2219 = vmatpush1.bf16.msra.mxu0 0
      %2220 = vmatprep.subr.bf16.mxu0 0
      %2221 = vmatpush1.bf16.msra.mxu0 0
      %2222 = vmatprep.mubr.bf16.mxu0 0
      %2223 = vmatmul.mubr.bf16.gmra.mrb[0].mxu0 %v2188
      %v2224 = vpop.f32.mrb[0].mxu0
      %v2225 = vadd.f32 0.0, %v2224
      %v2226 = vpop.f32.mrb[0].mxu0
      %v2227 = vpop.f32.mrb[0].mxu0
      %v2228 = vadd.f32 0.0, %v2227
      %v2229 = vpop.f32.mrb[0].mxu0
      %2230 = vdwg.mxu0
      %2239 = vrot.lane.b32.xlu0 %v2084, 16
      %v2240 = vpop.permute.xlu0 %2239
      %2241 = vrot.lane.b32.xlu0 %v2087, 16
      %v2242 = vpop.permute.xlu0 %2241
      %2243 = vrot.lane.b32.xlu0 %v2131, 16
      %v2244 = vpop.permute.xlu0 %2243
      %2245 = vrot.lane.b32.xlu0 %v2134, 16
      %v2246 = vpop.permute.xlu0 %2245
      %2247 = vrot.lane.b32.xlu0 %v2178, 16
      %v2248 = vpop.permute.xlu0 %2247
      %2249 = vrot.lane.b32.xlu0 %v2181, 16
      %v2250 = vpop.permute.xlu0 %2249
      %2251 = vrot.lane.b32.xlu0 %v2225, 16
      %v2252 = vpop.permute.xlu0 %2251
      %2253 = vrot.lane.b32.xlu0 %v2228, 16
      %v2254 = vpop.permute.xlu0 %2253
      %vm2263 = vcmask 195712
      %2264 = vst.msk [vmem:[#allocation2] sm:$0xff] %vm2263, %v2240
      %2265 = vst.msk [vmem:[#allocation2 + $0x8] sm:$0xff] %vm2263, %v2242
      %2266 = vst.msk [vmem:[#allocation2 + $0x10] sm:$0xff] %vm2263, %v2244
      %2267 = vst.msk [vmem:[#allocation2 + $0x18] sm:$0xff] %vm2263, %v2246
      %2268 = vst.msk [vmem:[#allocation2 + $0x20] sm:$0xff] %vm2263, %v2248
      %2269 = vst.msk [vmem:[#allocation2 + $0x28] sm:$0xff] %vm2263, %v2250
      %2270 = vst.msk [vmem:[#allocation2 + $0x30] sm:$0xff] %vm2263, %v2252
      %2271 = vst.msk [vmem:[#allocation2 + $0x38] sm:$0xff] %vm2263, %v2254
      %2272 = vrot.lane.b32.xlu0 %v728, 104
      %v2273 = vpop.permute.xlu0 %2272
      %2274 = vrot.lane.b32.xlu0 %v728, 72
      %v2275 = vpop.permute.xlu0 %2274
      %v2277 = vsel %vm735, %v2273, 0
      %v2280 = vsel %vm735, %v2275, 0
      %2282 = vmatprep.subr.bf16.mxu0 0
      %2283 = vmatpush1.bf16.xpose.msra.mxu0 %v2280
      %2284 = vmatprep.subr.bf16.mxu0 0
      %2285 = vmatpush1.bf16.xpose.msra.mxu0 0
      %2286 = vmatprep.subr.bf16.mxu0 0
      %2287 = vmatpush1.bf16.xpose.msra.mxu0 0
      %2288 = vmatprep.subr.bf16.mxu0 0
      %2289 = vmatpush1.bf16.xpose.msra.mxu0 0
      %2290 = vmatprep.subr.bf16.mxu0 0
      %2291 = vmatpush1.bf16.xpose.msra.mxu0 0
      %2292 = vmatprep.subr.bf16.mxu0 0
      %2293 = vmatpush1.bf16.xpose.msra.mxu0 0
      %2294 = vmatprep.subr.bf16.mxu0 0
      %2295 = vmatpush1.bf16.xpose.msra.mxu0 0
      %2296 = vmatprep.subr.bf16.mxu0 0
      %2297 = vmatpush1.bf16.xpose.msra.mxu0 0
      %2298 = vmatprep.subr.bf16.mxu0 0
      %2299 = vmatpush1.bf16.xpose.msra.mxu0 0
      %2300 = vmatprep.subr.bf16.mxu0 0
      %2301 = vmatpush1.bf16.xpose.msra.mxu0 0
      %2302 = vmatprep.subr.bf16.mxu0 0
      %2303 = vmatpush1.bf16.xpose.msra.mxu0 0
      %2304 = vmatprep.subr.bf16.mxu0 0
      %2305 = vmatpush1.bf16.xpose.msra.mxu0 0
      %2306 = vmatprep.subr.bf16.mxu0 0
      %2307 = vmatpush1.bf16.xpose.msra.mxu0 0
      %2308 = vmatprep.subr.bf16.mxu0 0
      %2309 = vmatpush1.bf16.xpose.msra.mxu0 0
      %2310 = vmatprep.subr.bf16.mxu0 0
      %2311 = vmatpush1.bf16.xpose.msra.mxu0 0
      %2312 = vmatprep.subr.bf16.mxu0 0
      %2313 = vmatpush1.bf16.xpose.msra.mxu0 0
      %2314 = vmatprep.mubr.bf16.mxu0 0
      %2315 = vmatmul.mubr.bf16.gmra.mrb[0].mxu0 %v2277
      %v2316 = vpop.f32.mrb[0].mxu0
      %v2317 = vadd.f32 %v726, %v2316
      %v2318 = vpop.f32.mrb[0].mxu0
      %v2319 = vpop.f32.mrb[0].mxu0
      %v2320 = vadd.f32 %v727, %v2319
      %v2321 = vpop.f32.mrb[0].mxu0
      %2322 = vdwg.mxu0
      %2323 = vrot.lane.b32.xlu0 %v729, 104
      %v2324 = vpop.permute.xlu0 %2323
      %2325 = vrot.lane.b32.xlu0 %v729, 72
      %v2326 = vpop.permute.xlu0 %2325
      %v2328 = vsel %vm735, %v2324, 0
      %v2331 = vsel %vm735, %v2326, 0
      %2333 = vmatprep.subr.bf16.mxu0 0
      %2334 = vmatpush1.bf16.xpose.msra.mxu0 %v2331
      %2335 = vmatprep.subr.bf16.mxu0 0
      %2336 = vmatpush1.bf16.xpose.msra.mxu0 0
      %2337 = vmatprep.subr.bf16.mxu0 0
      %2338 = vmatpush1.bf16.xpose.msra.mxu0 0
      %2339 = vmatprep.subr.bf16.mxu0 0
      %2340 = vmatpush1.bf16.xpose.msra.mxu0 0
      %2341 = vmatprep.subr.bf16.mxu0 0
      %2342 = vmatpush1.bf16.xpose.msra.mxu0 0
      %2343 = vmatprep.subr.bf16.mxu0 0
      %2344 = vmatpush1.bf16.xpose.msra.mxu0 0
      %2345 = vmatprep.subr.bf16.mxu0 0
      %2346 = vmatpush1.bf16.xpose.msra.mxu0 0
      %2347 = vmatprep.subr.bf16.mxu0 0
      %2348 = vmatpush1.bf16.xpose.msra.mxu0 0
      %2349 = vmatprep.subr.bf16.mxu0 0
      %2350 = vmatpush1.bf16.xpose.msra.mxu0 0
      %2351 = vmatprep.subr.bf16.mxu0 0
      %2352 = vmatpush1.bf16.xpose.msra.mxu0 0
      %2353 = vmatprep.subr.bf16.mxu0 0
      %2354 = vmatpush1.bf16.xpose.msra.mxu0 0
      %2355 = vmatprep.subr.bf16.mxu0 0
      %2356 = vmatpush1.bf16.xpose.msra.mxu0 0
      %2357 = vmatprep.subr.bf16.mxu0 0
      %2358 = vmatpush1.bf16.xpose.msra.mxu0 0
      %2359 = vmatprep.subr.bf16.mxu0 0
      %2360 = vmatpush1.bf16.xpose.msra.mxu0 0
      %2361 = vmatprep.subr.bf16.mxu0 0
      %2362 = vmatpush1.bf16.xpose.msra.mxu0 0
      %2363 = vmatprep.subr.bf16.mxu0 0
      %2364 = vmatpush1.bf16.xpose.msra.mxu0 0
      %2365 = vmatprep.mubr.bf16.mxu0 0
      %2366 = vmatmul.mubr.bf16.gmra.mrb[0].mxu0 %v2328
      %v2367 = vpop.f32.mrb[0].mxu0
      %v2368 = vadd.f32 %v726, %v2367
      %v2369 = vpop.f32.mrb[0].mxu0
      %v2370 = vpop.f32.mrb[0].mxu0
      %v2371 = vadd.f32 %v727, %v2370
      %v2372 = vpop.f32.mrb[0].mxu0
      %2373 = vdwg.mxu0
      %2374 = vrot.lane.b32.xlu0 %v730, 104
      %v2375 = vpop.permute.xlu0 %2374
      %2376 = vrot.lane.b32.xlu0 %v730, 72
      %v2377 = vpop.permute.xlu0 %2376
      %v2379 = vsel %vm735, %v2375, 0
      %v2382 = vsel %vm735, %v2377, 0
      %2384 = vmatprep.subr.bf16.mxu0 0
      %2385 = vmatpush1.bf16.xpose.msra.mxu0 %v2382
      %2386 = vmatprep.subr.bf16.mxu0 0
      %2387 = vmatpush1.bf16.xpose.msra.mxu0 0
      %2388 = vmatprep.subr.bf16.mxu0 0
      %2389 = vmatpush1.bf16.xpose.msra.mxu0 0
      %2390 = vmatprep.subr.bf16.mxu0 0
      %2391 = vmatpush1.bf16.xpose.msra.mxu0 0
      %2392 = vmatprep.subr.bf16.mxu0 0
      %2393 = vmatpush1.bf16.xpose.msra.mxu0 0
      %2394 = vmatprep.subr.bf16.mxu0 0
      %2395 = vmatpush1.bf16.xpose.msra.mxu0 0
      %2396 = vmatprep.subr.bf16.mxu0 0
      %2397 = vmatpush1.bf16.xpose.msra.mxu0 0
      %2398 = vmatprep.subr.bf16.mxu0 0
      %2399 = vmatpush1.bf16.xpose.msra.mxu0 0
      %2400 = vmatprep.subr.bf16.mxu0 0
      %2401 = vmatpush1.bf16.xpose.msra.mxu0 0
      %2402 = vmatprep.subr.bf16.mxu0 0
      %2403 = vmatpush1.bf16.xpose.msra.mxu0 0
      %2404 = vmatprep.subr.bf16.mxu0 0
      %2405 = vmatpush1.bf16.xpose.msra.mxu0 0
      %2406 = vmatprep.subr.bf16.mxu0 0
      %2407 = vmatpush1.bf16.xpose.msra.mxu0 0
      %2408 = vmatprep.subr.bf16.mxu0 0
      %2409 = vmatpush1.bf16.xpose.msra.mxu0 0
      %2410 = vmatprep.subr.bf16.mxu0 0
      %2411 = vmatpush1.bf16.xpose.msra.mxu0 0
      %2412 = vmatprep.subr.bf16.mxu0 0
      %2413 = vmatpush1.bf16.xpose.msra.mxu0 0
      %2414 = vmatprep.subr.bf16.mxu0 0
      %2415 = vmatpush1.bf16.xpose.msra.mxu0 0
      %2416 = vmatprep.mubr.bf16.mxu0 0
      %2417 = vmatmul.mubr.bf16.gmra.mrb[0].mxu0 %v2379
      %v2418 = vpop.f32.mrb[0].mxu0
      %v2419 = vadd.f32 %v726, %v2418
      %v2420 = vpop.f32.mrb[0].mxu0
      %v2421 = vpop.f32.mrb[0].mxu0
      %v2422 = vadd.f32 %v727, %v2421
      %v2423 = vpop.f32.mrb[0].mxu0
      %2424 = vdwg.mxu0
      %2425 = vrot.lane.b32.xlu0 %v731, 104
      %v2426 = vpop.permute.xlu0 %2425
      %2427 = vrot.lane.b32.xlu0 %v731, 72
      %v2428 = vpop.permute.xlu0 %2427
      %v2430 = vsel %vm735, %v2426, 0
      %v2433 = vsel %vm735, %v2428, 0
      %2435 = vmatprep.subr.bf16.mxu0 0
      %2436 = vmatpush1.bf16.xpose.msra.mxu0 %v2433
      %2437 = vmatprep.subr.bf16.mxu0 0
      %2438 = vmatpush1.bf16.xpose.msra.mxu0 0
      %2439 = vmatprep.subr.bf16.mxu0 0
      %2440 = vmatpush1.bf16.xpose.msra.mxu0 0
      %2441 = vmatprep.subr.bf16.mxu0 0
      %2442 = vmatpush1.bf16.xpose.msra.mxu0 0
      %2443 = vmatprep.subr.bf16.mxu0 0
      %2444 = vmatpush1.bf16.xpose.msra.mxu0 0
      %2445 = vmatprep.subr.bf16.mxu0 0
      %2446 = vmatpush1.bf16.xpose.msra.mxu0 0
      %2447 = vmatprep.subr.bf16.mxu0 0
      %2448 = vmatpush1.bf16.xpose.msra.mxu0 0
      %2449 = vmatprep.subr.bf16.mxu0 0
      %2450 = vmatpush1.bf16.xpose.msra.mxu0 0
      %2451 = vmatprep.subr.bf16.mxu0 0
      %2452 = vmatpush1.bf16.xpose.msra.mxu0 0
      %2453 = vmatprep.subr.bf16.mxu0 0
      %2454 = vmatpush1.bf16.xpose.msra.mxu0 0
      %2455 = vmatprep.subr.bf16.mxu0 0
      %2456 = vmatpush1.bf16.xpose.msra.mxu0 0
      %2457 = vmatprep.subr.bf16.mxu0 0
      %2458 = vmatpush1.bf16.xpose.msra.mxu0 0
      %2459 = vmatprep.subr.bf16.mxu0 0
      %2460 = vmatpush1.bf16.xpose.msra.mxu0 0
      %2461 = vmatprep.subr.bf16.mxu0 0
      %2462 = vmatpush1.bf16.xpose.msra.mxu0 0
      %2463 = vmatprep.subr.bf16.mxu0 0
      %2464 = vmatpush1.bf16.xpose.msra.mxu0 0
      %2465 = vmatprep.subr.bf16.mxu0 0
      %2466 = vmatpush1.bf16.xpose.msra.mxu0 0
      %2467 = vmatprep.mubr.bf16.mxu0 0
      %2468 = vmatmul.mubr.bf16.gmra.mrb[0].mxu0 %v2430
      %v2469 = vpop.f32.mrb[0].mxu0
      %v2470 = vadd.f32 %v726, %v2469
      %v2471 = vpop.f32.mrb[0].mxu0
      %v2472 = vpop.f32.mrb[0].mxu0
      %v2473 = vadd.f32 %v727, %v2472
      %v2474 = vpop.f32.mrb[0].mxu0
      %2475 = vdwg.mxu0
      %v2476 = vsel %vm933, %v2317, -inf
      %2477 = vmax.xlane.f32.xlu0 %v2476
      %v2478 = vpop.xlane.xlu0 %2477
      %v2479 = vsel %vm933, %v2320, -inf
      %2480 = vmax.xlane.f32.xlu0 %v2479
      %v2481 = vpop.xlane.xlu0 %2480
      %v2482 = vsel %vm933, %v2368, -inf
      %2483 = vmax.xlane.f32.xlu0 %v2482
      %v2484 = vpop.xlane.xlu0 %2483
      %v2485 = vsel %vm933, %v2371, -inf
      %2486 = vmax.xlane.f32.xlu0 %v2485
      %v2487 = vpop.xlane.xlu0 %2486
      %v2488 = vsel %vm933, %v2419, -inf
      %2489 = vmax.xlane.f32.xlu0 %v2488
      %v2490 = vpop.xlane.xlu0 %2489
      %v2491 = vsel %vm933, %v2422, -inf
      %2492 = vmax.xlane.f32.xlu0 %v2491
      %v2493 = vpop.xlane.xlu0 %2492
      %v2494 = vsel %vm933, %v2470, -inf
      %2495 = vmax.xlane.f32.xlu0 %v2494
      %v2496 = vpop.xlane.xlu0 %2495
      %v2497 = vsel %vm933, %v2473, -inf
      %2498 = vmax.xlane.f32.xlu0 %v2497
      %v2499 = vpop.xlane.xlu0 %2498
      %v2500 = vsub.f32 %v2317, %v2478
      %v2501 = vsub.f32 %v2320, %v2481
      %v2502 = vsub.f32 %v2368, %v2484
      %v2503 = vsub.f32 %v2371, %v2487
      %v2504 = vsub.f32 %v2419, %v2490
      %v2505 = vsub.f32 %v2422, %v2493
      %v2506 = vsub.f32 %v2470, %v2496
      %v2507 = vsub.f32 %v2473, %v2499
      %v2508 = vmul.f32 %v2500, 1.442695
      %v2509 = vpow.pop %v2508
      %v2510 = vmul.f32 %v2501, 1.442695
      %v2511 = vpow.pop %v2510
      %v2512 = vmul.f32 %v2502, 1.442695
      %v2513 = vpow.pop %v2512
      %v2514 = vmul.f32 %v2503, 1.442695
      %v2515 = vpow.pop %v2514
      %v2516 = vmul.f32 %v2504, 1.442695
      %v2517 = vpow.pop %v2516
      %v2518 = vmul.f32 %v2505, 1.442695
      %v2519 = vpow.pop %v2518
      %v2520 = vmul.f32 %v2506, 1.442695
      %v2521 = vpow.pop %v2520
      %v2522 = vmul.f32 %v2507, 1.442695
      %v2523 = vpow.pop %v2522
      %v2524 = vsel %vm933, %v2509, 0.0
      %2525 = vadd.xlane.f32.xlu0 %v2524
      %v2526 = vpop.xlane.xlu0 %2525
      %v2527 = vsel %vm933, %v2511, 0.0
      %2528 = vadd.xlane.f32.xlu0 %v2527
      %v2529 = vpop.xlane.xlu0 %2528
      %v2530 = vsel %vm933, %v2513, 0.0
      %2531 = vadd.xlane.f32.xlu0 %v2530
      %v2532 = vpop.xlane.xlu0 %2531
      %v2533 = vsel %vm933, %v2515, 0.0
      %2534 = vadd.xlane.f32.xlu0 %v2533
      %v2535 = vpop.xlane.xlu0 %2534
      %v2536 = vsel %vm933, %v2517, 0.0
      %2537 = vadd.xlane.f32.xlu0 %v2536
      %v2538 = vpop.xlane.xlu0 %2537
      %v2539 = vsel %vm933, %v2519, 0.0
      %2540 = vadd.xlane.f32.xlu0 %v2539
      %v2541 = vpop.xlane.xlu0 %2540
      %v2542 = vsel %vm933, %v2521, 0.0
      %2543 = vadd.xlane.f32.xlu0 %v2542
      %v2544 = vpop.xlane.xlu0 %2543
      %v2545 = vsel %vm933, %v2523, 0.0
      %2546 = vadd.xlane.f32.xlu0 %v2545
      %v2547 = vpop.xlane.xlu0 %2546
      %v2548 = vrcp.pop %v2526
      %v2549 = vrcp.pop %v2529
      %v2550 = vrcp.pop %v2532
      %v2551 = vrcp.pop %v2535
      %v2552 = vrcp.pop %v2538
      %v2553 = vrcp.pop %v2541
      %v2554 = vrcp.pop %v2544
      %v2555 = vrcp.pop %v2547
      %v2556 = vmul.f32 %v2509, %v2548
      %v2557 = vmul.f32 %v2511, %v2549
      %v2558 = vmul.f32 %v2513, %v2550
      %v2559 = vmul.f32 %v2515, %v2551
      %v2560 = vmul.f32 %v2517, %v2552
      %v2561 = vmul.f32 %v2519, %v2553
      %v2562 = vmul.f32 %v2521, %v2554
      %v2563 = vmul.f32 %v2523, %v2555
      %v2564 = vpack.c.bf16 %v2557, %v2556
      %v2565 = vpack.c.bf16 %v2559, %v2558
      %v2566 = vpack.c.bf16 %v2561, %v2560
      %v2567 = vpack.c.bf16 %v2563, %v2562
      %2568 = vrot.lane.b32.xlu0 %v728, 40
      %v2569 = vpop.permute.xlu0 %2568
      %v2572 = vsel %vm933, %v2564, 0
      %2574 = vmatprep.subr.bf16.mxu0 0
      %2575 = vmatpush1.bf16.msra.mxu0 %v2569
      %2576 = vmatprep.subr.bf16.mxu0 0
      %2577 = vmatpush1.bf16.msra.mxu0 0
      %2578 = vmatprep.subr.bf16.mxu0 0
      %2579 = vmatpush1.bf16.msra.mxu0 0
      %2580 = vmatprep.subr.bf16.mxu0 0
      %2581 = vmatpush1.bf16.msra.mxu0 0
      %2582 = vmatprep.subr.bf16.mxu0 0
      %2583 = vmatpush1.bf16.msra.mxu0 0
      %2584 = vmatprep.subr.bf16.mxu0 0
      %2585 = vmatpush1.bf16.msra.mxu0 0
      %2586 = vmatprep.subr.bf16.mxu0 0
      %2587 = vmatpush1.bf16.msra.mxu0 0
      %2588 = vmatprep.subr.bf16.mxu0 0
      %2589 = vmatpush1.bf16.msra.mxu0 0
      %2590 = vmatprep.subr.bf16.mxu0 0
      %2591 = vmatpush1.bf16.msra.mxu0 0
      %2592 = vmatprep.subr.bf16.mxu0 0
      %2593 = vmatpush1.bf16.msra.mxu0 0
      %2594 = vmatprep.subr.bf16.mxu0 0
      %2595 = vmatpush1.bf16.msra.mxu0 0
      %2596 = vmatprep.subr.bf16.mxu0 0
      %2597 = vmatpush1.bf16.msra.mxu0 0
      %2598 = vmatprep.subr.bf16.mxu0 0
      %2599 = vmatpush1.bf16.msra.mxu0 0
      %2600 = vmatprep.subr.bf16.mxu0 0
      %2601 = vmatpush1.bf16.msra.mxu0 0
      %2602 = vmatprep.subr.bf16.mxu0 0
      %2603 = vmatpush1.bf16.msra.mxu0 0
      %2604 = vmatprep.subr.bf16.mxu0 0
      %2605 = vmatpush1.bf16.msra.mxu0 0
      %2606 = vmatprep.mubr.bf16.mxu0 0
      %2607 = vmatmul.mubr.bf16.gmra.mrb[0].mxu0 %v2572
      %v2608 = vpop.f32.mrb[0].mxu0
      %v2609 = vadd.f32 0.0, %v2608
      %v2610 = vpop.f32.mrb[0].mxu0
      %v2611 = vpop.f32.mrb[0].mxu0
      %v2612 = vadd.f32 0.0, %v2611
      %v2613 = vpop.f32.mrb[0].mxu0
      %2614 = vdwg.mxu0
      %2615 = vrot.lane.b32.xlu0 %v729, 40
      %v2616 = vpop.permute.xlu0 %2615
      %v2619 = vsel %vm933, %v2565, 0
      %2621 = vmatprep.subr.bf16.mxu0 0
      %2622 = vmatpush1.bf16.msra.mxu0 %v2616
      %2623 = vmatprep.subr.bf16.mxu0 0
      %2624 = vmatpush1.bf16.msra.mxu0 0
      %2625 = vmatprep.subr.bf16.mxu0 0
      %2626 = vmatpush1.bf16.msra.mxu0 0
      %2627 = vmatprep.subr.bf16.mxu0 0
      %2628 = vmatpush1.bf16.msra.mxu0 0
      %2629 = vmatprep.subr.bf16.mxu0 0
      %2630 = vmatpush1.bf16.msra.mxu0 0
      %2631 = vmatprep.subr.bf16.mxu0 0
      %2632 = vmatpush1.bf16.msra.mxu0 0
      %2633 = vmatprep.subr.bf16.mxu0 0
      %2634 = vmatpush1.bf16.msra.mxu0 0
      %2635 = vmatprep.subr.bf16.mxu0 0
      %2636 = vmatpush1.bf16.msra.mxu0 0
      %2637 = vmatprep.subr.bf16.mxu0 0
      %2638 = vmatpush1.bf16.msra.mxu0 0
      %2639 = vmatprep.subr.bf16.mxu0 0
      %2640 = vmatpush1.bf16.msra.mxu0 0
      %2641 = vmatprep.subr.bf16.mxu0 0
      %2642 = vmatpush1.bf16.msra.mxu0 0
      %2643 = vmatprep.subr.bf16.mxu0 0
      %2644 = vmatpush1.bf16.msra.mxu0 0
      %2645 = vmatprep.subr.bf16.mxu0 0
      %2646 = vmatpush1.bf16.msra.mxu0 0
      %2647 = vmatprep.subr.bf16.mxu0 0
      %2648 = vmatpush1.bf16.msra.mxu0 0
      %2649 = vmatprep.subr.bf16.mxu0 0
      %2650 = vmatpush1.bf16.msra.mxu0 0
      %2651 = vmatprep.subr.bf16.mxu0 0
      %2652 = vmatpush1.bf16.msra.mxu0 0
      %2653 = vmatprep.mubr.bf16.mxu0 0
      %2654 = vmatmul.mubr.bf16.gmra.mrb[0].mxu0 %v2619
      %v2655 = vpop.f32.mrb[0].mxu0
      %v2656 = vadd.f32 0.0, %v2655
      %v2657 = vpop.f32.mrb[0].mxu0
      %v2658 = vpop.f32.mrb[0].mxu0
      %v2659 = vadd.f32 0.0, %v2658
      %v2660 = vpop.f32.mrb[0].mxu0
      %2661 = vdwg.mxu0
      %2662 = vrot.lane.b32.xlu0 %v730, 40
      %v2663 = vpop.permute.xlu0 %2662
      %v2666 = vsel %vm933, %v2566, 0
      %2668 = vmatprep.subr.bf16.mxu0 0
      %2669 = vmatpush1.bf16.msra.mxu0 %v2663
      %2670 = vmatprep.subr.bf16.mxu0 0
      %2671 = vmatpush1.bf16.msra.mxu0 0
      %2672 = vmatprep.subr.bf16.mxu0 0
      %2673 = vmatpush1.bf16.msra.mxu0 0
      %2674 = vmatprep.subr.bf16.mxu0 0
      %2675 = vmatpush1.bf16.msra.mxu0 0
      %2676 = vmatprep.subr.bf16.mxu0 0
      %2677 = vmatpush1.bf16.msra.mxu0 0
      %2678 = vmatprep.subr.bf16.mxu0 0
      %2679 = vmatpush1.bf16.msra.mxu0 0
      %2680 = vmatprep.subr.bf16.mxu0 0
      %2681 = vmatpush1.bf16.msra.mxu0 0
      %2682 = vmatprep.subr.bf16.mxu0 0
      %2683 = vmatpush1.bf16.msra.mxu0 0
      %2684 = vmatprep.subr.bf16.mxu0 0
      %2685 = vmatpush1.bf16.msra.mxu0 0
      %2686 = vmatprep.subr.bf16.mxu0 0
      %2687 = vmatpush1.bf16.msra.mxu0 0
      %2688 = vmatprep.subr.bf16.mxu0 0
      %2689 = vmatpush1.bf16.msra.mxu0 0
      %2690 = vmatprep.subr.bf16.mxu0 0
      %2691 = vmatpush1.bf16.msra.mxu0 0
      %2692 = vmatprep.subr.bf16.mxu0 0
      %2693 = vmatpush1.bf16.msra.mxu0 0
      %2694 = vmatprep.subr.bf16.mxu0 0
      %2695 = vmatpush1.bf16.msra.mxu0 0
      %2696 = vmatprep.subr.bf16.mxu0 0
      %2697 = vmatpush1.bf16.msra.mxu0 0
      %2698 = vmatprep.subr.bf16.mxu0 0
      %2699 = vmatpush1.bf16.msra.mxu0 0
      %2700 = vmatprep.mubr.bf16.mxu0 0
      %2701 = vmatmul.mubr.bf16.gmra.mrb[0].mxu0 %v2666
      %v2702 = vpop.f32.mrb[0].mxu0
      %v2703 = vadd.f32 0.0, %v2702
      %v2704 = vpop.f32.mrb[0].mxu0
      %v2705 = vpop.f32.mrb[0].mxu0
      %v2706 = vadd.f32 0.0, %v2705
      %v2707 = vpop.f32.mrb[0].mxu0
      %2708 = vdwg.mxu0
      %2709 = vrot.lane.b32.xlu0 %v731, 40
      %v2710 = vpop.permute.xlu0 %2709
      %v2713 = vsel %vm933, %v2567, 0
      %2715 = vmatprep.subr.bf16.mxu0 0
      %2716 = vmatpush1.bf16.msra.mxu0 %v2710
      %2717 = vmatprep.subr.bf16.mxu0 0
      %2718 = vmatpush1.bf16.msra.mxu0 0
      %2719 = vmatprep.subr.bf16.mxu0 0
      %2720 = vmatpush1.bf16.msra.mxu0 0
      %2721 = vmatprep.subr.bf16.mxu0 0
      %2722 = vmatpush1.bf16.msra.mxu0 0
      %2723 = vmatprep.subr.bf16.mxu0 0
      %2724 = vmatpush1.bf16.msra.mxu0 0
      %2725 = vmatprep.subr.bf16.mxu0 0
      %2726 = vmatpush1.bf16.msra.mxu0 0
      %2727 = vmatprep.subr.bf16.mxu0 0
      %2728 = vmatpush1.bf16.msra.mxu0 0
      %2729 = vmatprep.subr.bf16.mxu0 0
      %2730 = vmatpush1.bf16.msra.mxu0 0
      %2731 = vmatprep.subr.bf16.mxu0 0
      %2732 = vmatpush1.bf16.msra.mxu0 0
      %2733 = vmatprep.subr.bf16.mxu0 0
      %2734 = vmatpush1.bf16.msra.mxu0 0
      %2735 = vmatprep.subr.bf16.mxu0 0
      %2736 = vmatpush1.bf16.msra.mxu0 0
      %2737 = vmatprep.subr.bf16.mxu0 0
      %2738 = vmatpush1.bf16.msra.mxu0 0
      %2739 = vmatprep.subr.bf16.mxu0 0
      %2740 = vmatpush1.bf16.msra.mxu0 0
      %2741 = vmatprep.subr.bf16.mxu0 0
      %2742 = vmatpush1.bf16.msra.mxu0 0
      %2743 = vmatprep.subr.bf16.mxu0 0
      %2744 = vmatpush1.bf16.msra.mxu0 0
      %2745 = vmatprep.subr.bf16.mxu0 0
      %2746 = vmatpush1.bf16.msra.mxu0 0
      %2747 = vmatprep.mubr.bf16.mxu0 0
      %2748 = vmatmul.mubr.bf16.gmra.mrb[0].mxu0 %v2713
      %v2749 = vpop.f32.mrb[0].mxu0
      %v2750 = vadd.f32 0.0, %v2749
      %v2751 = vpop.f32.mrb[0].mxu0
      %v2752 = vpop.f32.mrb[0].mxu0
      %v2753 = vadd.f32 0.0, %v2752
      %v2754 = vpop.f32.mrb[0].mxu0
      %2755 = vdwg.mxu0
      %2764 = vrot.lane.b32.xlu0 %v2609, 24
      %v2765 = vpop.permute.xlu0 %2764
      %2766 = vrot.lane.b32.xlu0 %v2612, 24
      %v2767 = vpop.permute.xlu0 %2766
      %2768 = vrot.lane.b32.xlu0 %v2656, 24
      %v2769 = vpop.permute.xlu0 %2768
      %2770 = vrot.lane.b32.xlu0 %v2659, 24
      %v2771 = vpop.permute.xlu0 %2770
      %2772 = vrot.lane.b32.xlu0 %v2703, 24
      %v2773 = vpop.permute.xlu0 %2772
      %2774 = vrot.lane.b32.xlu0 %v2706, 24
      %v2775 = vpop.permute.xlu0 %2774
      %2776 = vrot.lane.b32.xlu0 %v2750, 24
      %v2777 = vpop.permute.xlu0 %2776
      %2778 = vrot.lane.b32.xlu0 %v2753, 24
      %v2779 = vpop.permute.xlu0 %2778
      %vm2788 = vcmask 261312
      %2789 = vst.msk [vmem:[#allocation2] sm:$0xff] %vm2788, %v2765
      %2790 = vst.msk [vmem:[#allocation2 + $0x8] sm:$0xff] %vm2788, %v2767
      %2791 = vst.msk [vmem:[#allocation2 + $0x10] sm:$0xff] %vm2788, %v2769
      %2792 = vst.msk [vmem:[#allocation2 + $0x18] sm:$0xff] %vm2788, %v2771
      %2793 = vst.msk [vmem:[#allocation2 + $0x20] sm:$0xff] %vm2788, %v2773
      %2794 = vst.msk [vmem:[#allocation2 + $0x28] sm:$0xff] %vm2788, %v2775
      %2795 = vst.msk [vmem:[#allocation2 + $0x30] sm:$0xff] %vm2788, %v2777
      %2796 = vst.msk [vmem:[#allocation2 + $0x38] sm:$0xff] %vm2788, %v2779
      %v2797 = vld [vmem:[#allocation2] sm:$0xff]
      %v2798 = vld [vmem:[#allocation2 + $0x8] sm:$0xff]
      %v2799 = vld [vmem:[#allocation2 + $0x10] sm:$0xff]
      %v2800 = vld [vmem:[#allocation2 + $0x18] sm:$0xff]
      %v2801 = vld [vmem:[#allocation2 + $0x20] sm:$0xff]
      %v2802 = vld [vmem:[#allocation2 + $0x28] sm:$0xff]
      %v2803 = vld [vmem:[#allocation2 + $0x30] sm:$0xff]
      %v2804 = vld [vmem:[#allocation2 + $0x38] sm:$0xff]
      %v2805 = vpack.c.bf16 %v2798, %v2797
      %v2806 = vpack.c.bf16 %v2800, %v2799
      %v2807 = vpack.c.bf16 %v2802, %v2801
      %v2808 = vpack.c.bf16 %v2804, %v2803
      %v2809 = vld [vmem:[%s6] sm:$0xf]
      %v2810 = vld [vmem:[%s6 + $0x4] sm:$0xf]
      %v2811 = vld [vmem:[%s6 + $0x8] sm:$0xf]
      %v2812 = vld [vmem:[%s6 + $0xc] sm:$0xf]
      %v2813 = vld [vmem:[%s7] sm:$0x1]
      %v2815 = vlaneseq
      %v2816 = vshrl.u32 %v2815, 7
      %v2817 = vsub.s32 0, %v2816
      %v2818 = vrot.slane %v2813, %v2817
      %v2824 = vunpack.c.l.b16 %v2809
      %v2825 = vunpack.c.l.b16 %v2810
      %v2826 = vunpack.c.l.b16 %v2811
      %v2827 = vunpack.c.l.b16 %v2812
      %v2828 = vpack.c.b16 %v2825, %v2824
      %v2829 = vpack.c.b16 %v2827, %v2826
      %v2833 = vsel %vm480, %v2805, 0
      %v2836 = vsel %vm480, %v2806, 0
      %v2839 = vsel %vm480, %v2807, 0
      %v2842 = vsel %vm480, %v2808, 0
      %2844 = vmatprep.subr.bf16.mxu0 0
      %2845 = vmatpush1.bf16.msra.mxu0 %v2828
      %2846 = vmatprep.subr.bf16.mxu0 0
      %2847 = vmatpush1.bf16.msra.mxu0 %v2829
      %2848 = vmatprep.subr.bf16.mxu0 0
      %2849 = vmatpush1.bf16.msra.mxu0 0
      %2850 = vmatprep.subr.bf16.mxu0 0
      %2851 = vmatpush1.bf16.msra.mxu0 0
      %2852 = vmatprep.subr.bf16.mxu0 0
      %2853 = vmatpush1.bf16.msra.mxu0 0
      %2854 = vmatprep.subr.bf16.mxu0 0
      %2855 = vmatpush1.bf16.msra.mxu0 0
      %2856 = vmatprep.subr.bf16.mxu0 0
      %2857 = vmatpush1.bf16.msra.mxu0 0
      %2858 = vmatprep.subr.bf16.mxu0 0
      %2859 = vmatpush1.bf16.msra.mxu0 0
      %2860 = vmatprep.subr.bf16.mxu0 0
      %2861 = vmatpush1.bf16.msra.mxu0 0
      %2862 = vmatprep.subr.bf16.mxu0 0
      %2863 = vmatpush1.bf16.msra.mxu0 0
      %2864 = vmatprep.subr.bf16.mxu0 0
      %2865 = vmatpush1.bf16.msra.mxu0 0
      %2866 = vmatprep.subr.bf16.mxu0 0
      %2867 = vmatpush1.bf16.msra.mxu0 0
      %2868 = vmatprep.subr.bf16.mxu0 0
      %2869 = vmatpush1.bf16.msra.mxu0 0
      %2870 = vmatprep.subr.bf16.mxu0 0
      %2871 = vmatpush1.bf16.msra.mxu0 0
      %2872 = vmatprep.subr.bf16.mxu0 0
      %2873 = vmatpush1.bf16.msra.mxu0 0
      %2874 = vmatprep.subr.bf16.mxu0 0
      %2875 = vmatpush1.bf16.msra.mxu0 0
      %2876 = vmatprep.mubr.bf16.mxu0 0
      %2877 = vmatmul.mubr.bf16.gmra.mrb[0].mxu0 %v2833
      %v2878 = vpop.f32.mrb[0].mxu0
      %v2879 = vadd.f32 %v2818, %v2878
      %v2880 = vpop.f32.mrb[0].mxu0
      %v2881 = vpop.f32.mrb[0].mxu0
      %v2882 = vadd.f32 %v2818, %v2881
      %v2883 = vpop.f32.mrb[0].mxu0
      %2884 = vmatprep.mubr.bf16.mxu0 0
      %2885 = vmatmul.mubr.bf16.gmra.mrb[0].mxu0 %v2836
      %v2886 = vpop.f32.mrb[0].mxu0
      %v2887 = vadd.f32 %v2818, %v2886
      %v2888 = vpop.f32.mrb[0].mxu0
      %v2889 = vpop.f32.mrb[0].mxu0
      %v2890 = vadd.f32 %v2818, %v2889
      %v2891 = vpop.f32.mrb[0].mxu0
      %2892 = vmatprep.mubr.bf16.mxu0 0
      %2893 = vmatmul.mubr.bf16.gmra.mrb[0].mxu0 %v2839
      %v2894 = vpop.f32.mrb[0].mxu0
      %v2895 = vadd.f32 %v2818, %v2894
      %v2896 = vpop.f32.mrb[0].mxu0
      %v2897 = vpop.f32.mrb[0].mxu0
      %v2898 = vadd.f32 %v2818, %v2897
      %v2899 = vpop.f32.mrb[0].mxu0
      %2900 = vmatprep.mubr.bf16.mxu0 0
      %2901 = vmatmul.mubr.bf16.gmra.mrb[0].mxu0 %v2842
      %v2902 = vpop.f32.mrb[0].mxu0
      %v2903 = vadd.f32 %v2818, %v2902
      %v2904 = vpop.f32.mrb[0].mxu0
      %v2905 = vpop.f32.mrb[0].mxu0
      %v2906 = vadd.f32 %v2818, %v2905
      %v2907 = vpop.f32.mrb[0].mxu0
      %2908 = vdwg.mxu0
      %v2909 = vadd.f32 %v472, %v2879
      %v2910 = vadd.f32 %v473, %v2882
      %v2911 = vadd.f32 %v474, %v2887
      %v2912 = vadd.f32 %v475, %v2890
      %v2913 = vadd.f32 %v476, %v2895
      %v2914 = vadd.f32 %v477, %v2898
      %v2915 = vadd.f32 %v478, %v2903
      %v2916 = vadd.f32 %v479, %v2906
      %v2917 = vsel %vm480, %v2909, 0.0
      %2918 = vadd.xlane.f32.xlu0 %v2917
      %v2919 = vpop.xlane.xlu0 %2918
      %v2920 = vsel %vm480, %v2910, 0.0
      %2921 = vadd.xlane.f32.xlu0 %v2920
      %v2922 = vpop.xlane.xlu0 %2921
      %v2923 = vsel %vm480, %v2911, 0.0
      %2924 = vadd.xlane.f32.xlu0 %v2923
      %v2925 = vpop.xlane.xlu0 %2924
      %v2926 = vsel %vm480, %v2912, 0.0
      %2927 = vadd.xlane.f32.xlu0 %v2926
      %v2928 = vpop.xlane.xlu0 %2927
      %v2929 = vsel %vm480, %v2913, 0.0
      %2930 = vadd.xlane.f32.xlu0 %v2929
      %v2931 = vpop.xlane.xlu0 %2930
      %v2932 = vsel %vm480, %v2914, 0.0
      %2933 = vadd.xlane.f32.xlu0 %v2932
      %v2934 = vpop.xlane.xlu0 %2933
      %v2935 = vsel %vm480, %v2915, 0.0
      %2936 = vadd.xlane.f32.xlu0 %v2935
      %v2937 = vpop.xlane.xlu0 %2936
      %v2938 = vsel %vm480, %v2916, 0.0
      %2939 = vadd.xlane.f32.xlu0 %v2938
      %v2940 = vpop.xlane.xlu0 %2939
      %v2941 = vmul.f32 %v2919, %v505
      %v2942 = vmul.f32 %v2922, %v505
      %v2943 = vmul.f32 %v2925, %v505
      %v2944 = vmul.f32 %v2928, %v505
      %v2945 = vmul.f32 %v2931, %v505
      %v2946 = vmul.f32 %v2934, %v505
      %v2947 = vmul.f32 %v2937, %v505
      %v2948 = vmul.f32 %v2940, %v505
      %v2949 = vsub.f32 %v2909, %v2941
      %v2950 = vsub.f32 %v2910, %v2942
      %v2951 = vsub.f32 %v2911, %v2943
      %v2952 = vsub.f32 %v2912, %v2944
      %v2953 = vsub.f32 %v2913, %v2945
      %v2954 = vsub.f32 %v2914, %v2946
      %v2955 = vsub.f32 %v2915, %v2947
      %v2956 = vsub.f32 %v2916, %v2948
      %v2957 = vmul.f32 %v2949, %v2949
      %v2958 = vmul.f32 %v2950, %v2950
      %v2959 = vmul.f32 %v2951, %v2951
      %v2960 = vmul.f32 %v2952, %v2952
      %v2961 = vmul.f32 %v2953, %v2953
      %v2962 = vmul.f32 %v2954, %v2954
      %v2963 = vmul.f32 %v2955, %v2955
      %v2964 = vmul.f32 %v2956, %v2956
      %v2965 = vsel %vm480, %v2957, 0.0
      %2966 = vadd.xlane.f32.xlu0 %v2965
      %v2967 = vpop.xlane.xlu0 %2966
      %v2968 = vsel %vm480, %v2958, 0.0
      %2969 = vadd.xlane.f32.xlu0 %v2968
      %v2970 = vpop.xlane.xlu0 %2969
      %v2971 = vsel %vm480, %v2959, 0.0
      %2972 = vadd.xlane.f32.xlu0 %v2971
      %v2973 = vpop.xlane.xlu0 %2972
      %v2974 = vsel %vm480, %v2960, 0.0
      %2975 = vadd.xlane.f32.xlu0 %v2974
      %v2976 = vpop.xlane.xlu0 %2975
      %v2977 = vsel %vm480, %v2961, 0.0
      %2978 = vadd.xlane.f32.xlu0 %v2977
      %v2979 = vpop.xlane.xlu0 %2978
      %v2980 = vsel %vm480, %v2962, 0.0
      %2981 = vadd.xlane.f32.xlu0 %v2980
      %v2982 = vpop.xlane.xlu0 %2981
      %v2983 = vsel %vm480, %v2963, 0.0
      %2984 = vadd.xlane.f32.xlu0 %v2983
      %v2985 = vpop.xlane.xlu0 %2984
      %v2986 = vsel %vm480, %v2964, 0.0
      %2987 = vadd.xlane.f32.xlu0 %v2986
      %v2988 = vpop.xlane.xlu0 %2987
      %v2989 = vmul.f32 %v2967, %v505
      %v2990 = vmul.f32 %v2970, %v505
      %v2991 = vmul.f32 %v2973, %v505
      %v2992 = vmul.f32 %v2976, %v505
      %v2993 = vmul.f32 %v2979, %v505
      %v2994 = vmul.f32 %v2982, %v505
      %v2995 = vmul.f32 %v2985, %v505
      %v2996 = vmul.f32 %v2988, %v505
      %v2997 = vadd.f32 %v2989, 1e-05
      %v2998 = vadd.f32 %v2990, 1e-05
      %v2999 = vadd.f32 %v2991, 1e-05
      %v3000 = vadd.f32 %v2992, 1e-05
      %v3001 = vadd.f32 %v2993, 1e-05
      %v3002 = vadd.f32 %v2994, 1e-05
      %v3003 = vadd.f32 %v2995, 1e-05
      %v3004 = vadd.f32 %v2996, 1e-05
      %v3005 = vrsqrt.pop %v2997
      %v3006 = vrsqrt.pop %v2998
      %v3007 = vrsqrt.pop %v2999
      %v3008 = vrsqrt.pop %v3000
      %v3009 = vrsqrt.pop %v3001
      %v3010 = vrsqrt.pop %v3002
      %v3011 = vrsqrt.pop %v3003
      %v3012 = vrsqrt.pop %v3004
      %v3013 = vmul.f32 %v2949, %v3005
      %v3014 = vmul.f32 %v2950, %v3006
      %v3015 = vmul.f32 %v2951, %v3007
      %v3016 = vmul.f32 %v2952, %v3008
      %v3017 = vmul.f32 %v2953, %v3009
      %v3018 = vmul.f32 %v2954, %v3010
      %v3019 = vmul.f32 %v2955, %v3011
      %v3020 = vmul.f32 %v2956, %v3012
      %v3021 = vld [vmem:[%s8] sm:$0x1]
      %v3023 = vlaneseq
      %v3024 = vshrl.u32 %v3023, 7
      %v3025 = vsub.s32 0, %v3024
      %v3026 = vrot.slane %v3021, %v3025
      %v3028 = vmul.f32 %v3013, %v3026
      %v3029 = vmul.f32 %v3014, %v3026
      %v3030 = vmul.f32 %v3015, %v3026
      %v3031 = vmul.f32 %v3016, %v3026
      %v3032 = vmul.f32 %v3017, %v3026
      %v3033 = vmul.f32 %v3018, %v3026
      %v3034 = vmul.f32 %v3019, %v3026
      %v3035 = vmul.f32 %v3020, %v3026
      %v3036 = vld [vmem:[%s9] sm:$0x1]
      %v3038 = vlaneseq
      %v3039 = vshrl.u32 %v3038, 7
      %v3040 = vsub.s32 0, %v3039
      %v3041 = vrot.slane %v3036, %v3040
      %v3043 = vadd.f32 %v3028, %v3041
      %v3044 = vadd.f32 %v3029, %v3041
      %v3045 = vadd.f32 %v3030, %v3041
      %v3046 = vadd.f32 %v3031, %v3041
      %v3047 = vadd.f32 %v3032, %v3041
      %v3048 = vadd.f32 %v3033, %v3041
      %v3049 = vadd.f32 %v3034, %v3041
      %v3050 = vadd.f32 %v3035, %v3041
      %v3051 = vpack.c.bf16 %v3044, %v3043
      %v3052 = vpack.c.bf16 %v3046, %v3045
      %v3053 = vpack.c.bf16 %v3048, %v3047
      %v3054 = vpack.c.bf16 %v3050, %v3049
      %v3055 = vld [vmem:[%s10] sm:$0xf]
      %v3056 = vld [vmem:[%s10 + $0x4] sm:$0xf]
      %v3057 = vld [vmem:[%s10 + $0x8] sm:$0xf]
      %v3058 = vld [vmem:[%s10 + $0xc] sm:$0xf]
      %v3059 = vld [vmem:[%s11] sm:$0x1]
      %v3061 = vlaneseq
      %v3062 = vshrl.u32 %v3061, 7
      %v3063 = vsub.s32 0, %v3062
      %v3064 = vrot.slane %v3059, %v3063
      %v3070 = vunpack.c.l.b16 %v3055
      %v3071 = vunpack.c.l.b16 %v3056
      %v3072 = vunpack.c.l.b16 %v3057
      %v3073 = vunpack.c.l.b16 %v3058
      %v3074 = vpack.c.b16 %v3071, %v3070
      %v3075 = vpack.c.b16 %v3073, %v3072
      %v3079 = vsel %vm480, %v3051, 0
      %v3082 = vsel %vm480, %v3052, 0
      %v3085 = vsel %vm480, %v3053, 0
      %v3088 = vsel %vm480, %v3054, 0
      %3090 = vmatprep.subr.bf16.mxu0 0
      %3091 = vmatpush1.bf16.msra.mxu0 %v3074
      %3092 = vmatprep.subr.bf16.mxu0 0
      %3093 = vmatpush1.bf16.msra.mxu0 %v3075
      %3094 = vmatprep.subr.bf16.mxu0 0
      %3095 = vmatpush1.bf16.msra.mxu0 0
      %3096 = vmatprep.subr.bf16.mxu0 0
      %3097 = vmatpush1.bf16.msra.mxu0 0
      %3098 = vmatprep.subr.bf16.mxu0 0
      %3099 = vmatpush1.bf16.msra.mxu0 0
      %3100 = vmatprep.subr.bf16.mxu0 0
      %3101 = vmatpush1.bf16.msra.mxu0 0
      %3102 = vmatprep.subr.bf16.mxu0 0
      %3103 = vmatpush1.bf16.msra.mxu0 0
      %3104 = vmatprep.subr.bf16.mxu0 0
      %3105 = vmatpush1.bf16.msra.mxu0 0
      %3106 = vmatprep.subr.bf16.mxu0 0
      %3107 = vmatpush1.bf16.msra.mxu0 0
      %3108 = vmatprep.subr.bf16.mxu0 0
      %3109 = vmatpush1.bf16.msra.mxu0 0
      %3110 = vmatprep.subr.bf16.mxu0 0
      %3111 = vmatpush1.bf16.msra.mxu0 0
      %3112 = vmatprep.subr.bf16.mxu0 0
      %3113 = vmatpush1.bf16.msra.mxu0 0
      %3114 = vmatprep.subr.bf16.mxu0 0
      %3115 = vmatpush1.bf16.msra.mxu0 0
      %3116 = vmatprep.subr.bf16.mxu0 0
      %3117 = vmatpush1.bf16.msra.mxu0 0
      %3118 = vmatprep.subr.bf16.mxu0 0
      %3119 = vmatpush1.bf16.msra.mxu0 0
      %3120 = vmatprep.subr.bf16.mxu0 0
      %3121 = vmatpush1.bf16.msra.mxu0 0
      %3122 = vmatprep.mubr.bf16.mxu0 0
      %3123 = vmatmul.mubr.bf16.gmra.mrb[0].mxu0 %v3079
      %v3124 = vpop.f32.mrb[0].mxu0
      %v3125 = vadd.f32 %v3064, %v3124
      %v3126 = vpop.f32.mrb[0].mxu0
      %v3127 = vpop.f32.mrb[0].mxu0
      %v3128 = vadd.f32 %v3064, %v3127
      %v3129 = vpop.f32.mrb[0].mxu0
      %3130 = vmatprep.mubr.bf16.mxu0 0
      %3131 = vmatmul.mubr.bf16.gmra.mrb[0].mxu0 %v3082
      %v3132 = vpop.f32.mrb[0].mxu0
      %v3133 = vadd.f32 %v3064, %v3132
      %v3134 = vpop.f32.mrb[0].mxu0
      %v3135 = vpop.f32.mrb[0].mxu0
      %v3136 = vadd.f32 %v3064, %v3135
      %v3137 = vpop.f32.mrb[0].mxu0
      %3138 = vmatprep.mubr.bf16.mxu0 0
      %3139 = vmatmul.mubr.bf16.gmra.mrb[0].mxu0 %v3085
      %v3140 = vpop.f32.mrb[0].mxu0
      %v3141 = vadd.f32 %v3064, %v3140
      %v3142 = vpop.f32.mrb[0].mxu0
      %v3143 = vpop.f32.mrb[0].mxu0
      %v3144 = vadd.f32 %v3064, %v3143
      %v3145 = vpop.f32.mrb[0].mxu0
      %3146 = vmatprep.mubr.bf16.mxu0 0
      %3147 = vmatmul.mubr.bf16.gmra.mrb[0].mxu0 %v3088
      %v3148 = vpop.f32.mrb[0].mxu0
      %v3149 = vadd.f32 %v3064, %v3148
      %v3150 = vpop.f32.mrb[0].mxu0
      %v3151 = vpop.f32.mrb[0].mxu0
      %v3152 = vadd.f32 %v3064, %v3151
      %v3153 = vpop.f32.mrb[0].mxu0
      %3154 = vdwg.mxu0
      %v3155 = vmul.f32 %v3125, 0.5
      %v3156 = vmul.f32 %v3128, 0.5
      %v3157 = vmul.f32 %v3133, 0.5
      %v3158 = vmul.f32 %v3136, 0.5
      %v3159 = vmul.f32 %v3141, 0.5
      %v3160 = vmul.f32 %v3144, 0.5
      %v3161 = vmul.f32 %v3149, 0.5
      %v3162 = vmul.f32 %v3152, 0.5
      %v3163 = vmul.f32 %v3125, 0.70710677
      %v3164 = vmul.f32 %v3128, 0.70710677
      %v3165 = vmul.f32 %v3133, 0.70710677
      %v3166 = vmul.f32 %v3136, 0.70710677
      %v3167 = vmul.f32 %v3141, 0.70710677
      %v3168 = vmul.f32 %v3144, 0.70710677
      %v3169 = vmul.f32 %v3149, 0.70710677
      %v3170 = vmul.f32 %v3152, 0.70710677
      %v3171 = verf.f32.pop %v3163
      %v3172 = verf.f32.pop %v3164
      %v3173 = verf.f32.pop %v3165
      %v3174 = verf.f32.pop %v3166
      %v3175 = verf.f32.pop %v3167
      %v3176 = verf.f32.pop %v3168
      %v3177 = verf.f32.pop %v3169
      %v3178 = verf.f32.pop %v3170
      %v3179 = vadd.f32 %v3171, 1.0
      %v3180 = vadd.f32 %v3172, 1.0
      %v3181 = vadd.f32 %v3173, 1.0
      %v3182 = vadd.f32 %v3174, 1.0
      %v3183 = vadd.f32 %v3175, 1.0
      %v3184 = vadd.f32 %v3176, 1.0
      %v3185 = vadd.f32 %v3177, 1.0
      %v3186 = vadd.f32 %v3178, 1.0
      %v3187 = vmul.f32 %v3155, %v3179
      %v3188 = vmul.f32 %v3156, %v3180
      %v3189 = vmul.f32 %v3157, %v3181
      %v3190 = vmul.f32 %v3158, %v3182
      %v3191 = vmul.f32 %v3159, %v3183
      %v3192 = vmul.f32 %v3160, %v3184
      %v3193 = vmul.f32 %v3161, %v3185
      %v3194 = vmul.f32 %v3162, %v3186
      %v3195 = vpack.c.bf16 %v3188, %v3187
      %v3196 = vpack.c.bf16 %v3190, %v3189
      %v3197 = vpack.c.bf16 %v3192, %v3191
      %v3198 = vpack.c.bf16 %v3194, %v3193
      %v3199 = vld [vmem:[%s12] sm:$0xf]
      %v3200 = vld [vmem:[%s12 + $0x4] sm:$0xf]
      %v3201 = vld [vmem:[%s12 + $0x8] sm:$0xf]
      %v3202 = vld [vmem:[%s12 + $0xc] sm:$0xf]
      %v3203 = vld [vmem:[%s12 + $0x10] sm:$0xf]
      %v3204 = vld [vmem:[%s12 + $0x14] sm:$0xf]
      %v3205 = vld [vmem:[%s12 + $0x18] sm:$0xf]
      %v3206 = vld [vmem:[%s12 + $0x1c] sm:$0xf]
      %v3207 = vld [vmem:[%s12 + $0x20] sm:$0xf]
      %v3208 = vld [vmem:[%s12 + $0x24] sm:$0xf]
      %v3209 = vld [vmem:[%s12 + $0x28] sm:$0xf]
      %v3210 = vld [vmem:[%s12 + $0x2c] sm:$0xf]
      %v3211 = vld [vmem:[%s12 + $0x30] sm:$0xf]
      %v3212 = vld [vmem:[%s12 + $0x34] sm:$0xf]
      %v3213 = vld [vmem:[%s12 + $0x38] sm:$0xf]
      %v3214 = vld [vmem:[%s12 + $0x3c] sm:$0xf]
      %v3215 = vld [vmem:[%s13] sm:$0x1]
      %v3217 = vlaneseq
      %v3218 = vshrl.u32 %v3217, 7
      %v3219 = vsub.s32 0, %v3218
      %v3220 = vrot.slane %v3215, %v3219
      %v3238 = vunpack.c.l.b16 %v3199
      %v3239 = vunpack.c.l.b16 %v3200
      %v3240 = vunpack.c.l.b16 %v3201
      %v3241 = vunpack.c.l.b16 %v3202
      %v3242 = vunpack.c.l.b16 %v3203
      %v3243 = vunpack.c.l.b16 %v3204
      %v3244 = vunpack.c.l.b16 %v3205
      %v3245 = vunpack.c.l.b16 %v3206
      %v3246 = vunpack.c.l.b16 %v3207
      %v3247 = vunpack.c.l.b16 %v3208
      %v3248 = vunpack.c.l.b16 %v3209
      %v3249 = vunpack.c.l.b16 %v3210
      %v3250 = vunpack.c.l.b16 %v3211
      %v3251 = vunpack.c.l.b16 %v3212
      %v3252 = vunpack.c.l.b16 %v3213
      %v3253 = vunpack.c.l.b16 %v3214
      %v3254 = vpack.c.b16 %v3239, %v3238
      %v3255 = vpack.c.b16 %v3241, %v3240
      %v3256 = vpack.c.b16 %v3243, %v3242
      %v3257 = vpack.c.b16 %v3245, %v3244
      %v3258 = vpack.c.b16 %v3247, %v3246
      %v3259 = vpack.c.b16 %v3249, %v3248
      %v3260 = vpack.c.b16 %v3251, %v3250
      %v3261 = vpack.c.b16 %v3253, %v3252
      %3270 = vmatprep.subr.bf16.mxu0 0
      %3271 = vmatpush1.bf16.msra.mxu0 %v3254
      %3272 = vmatprep.subr.bf16.mxu0 0
      %3273 = vmatpush1.bf16.msra.mxu0 %v3255
      %3274 = vmatprep.subr.bf16.mxu0 0
      %3275 = vmatpush1.bf16.msra.mxu0 %v3256
      %3276 = vmatprep.subr.bf16.mxu0 0
      %3277 = vmatpush1.bf16.msra.mxu0 %v3257
      %3278 = vmatprep.subr.bf16.mxu0 0
      %3279 = vmatpush1.bf16.msra.mxu0 %v3258
      %3280 = vmatprep.subr.bf16.mxu0 0
      %3281 = vmatpush1.bf16.msra.mxu0 %v3259
      %3282 = vmatprep.subr.bf16.mxu0 0
      %3283 = vmatpush1.bf16.msra.mxu0 %v3260
      %3284 = vmatprep.subr.bf16.mxu0 0
      %3285 = vmatpush1.bf16.msra.mxu0 %v3261
      %3286 = vmatprep.subr.bf16.mxu0 0
      %3287 = vmatpush1.bf16.msra.mxu0 0
      %3288 = vmatprep.subr.bf16.mxu0 0
      %3289 = vmatpush1.bf16.msra.mxu0 0
      %3290 = vmatprep.subr.bf16.mxu0 0
      %3291 = vmatpush1.bf16.msra.mxu0 0
      %3292 = vmatprep.subr.bf16.mxu0 0
      %3293 = vmatpush1.bf16.msra.mxu0 0
      %3294 = vmatprep.subr.bf16.mxu0 0
      %3295 = vmatpush1.bf16.msra.mxu0 0
      %3296 = vmatprep.subr.bf16.mxu0 0
      %3297 = vmatpush1.bf16.msra.mxu0 0
      %3298 = vmatprep.subr.bf16.mxu0 0
      %3299 = vmatpush1.bf16.msra.mxu0 0
      %3300 = vmatprep.subr.bf16.mxu0 0
      %3301 = vmatpush1.bf16.msra.mxu0 0
      %3302 = vmatprep.mubr.bf16.mxu0 0
      %3303 = vmatmul.mubr.bf16.gmra.mrb[0].mxu0 %v3195
      %v3304 = vpop.f32.mrb[0].mxu0
      %v3305 = vadd.f32 %v3220, %v3304
      %v3306 = vpop.f32.mrb[0].mxu0
      %v3307 = vpop.f32.mrb[0].mxu0
      %v3308 = vadd.f32 %v3220, %v3307
      %v3309 = vpop.f32.mrb[0].mxu0
      %3310 = vmatprep.mubr.bf16.mxu0 0
      %3311 = vmatmul.mubr.bf16.gmra.mrb[0].mxu0 %v3196
      %v3312 = vpop.f32.mrb[0].mxu0
      %v3313 = vadd.f32 %v3220, %v3312
      %v3314 = vpop.f32.mrb[0].mxu0
      %v3315 = vpop.f32.mrb[0].mxu0
      %v3316 = vadd.f32 %v3220, %v3315
      %v3317 = vpop.f32.mrb[0].mxu0
      %3318 = vmatprep.mubr.bf16.mxu0 0
      %3319 = vmatmul.mubr.bf16.gmra.mrb[0].mxu0 %v3197
      %v3320 = vpop.f32.mrb[0].mxu0
      %v3321 = vadd.f32 %v3220, %v3320
      %v3322 = vpop.f32.mrb[0].mxu0
      %v3323 = vpop.f32.mrb[0].mxu0
      %v3324 = vadd.f32 %v3220, %v3323
      %v3325 = vpop.f32.mrb[0].mxu0
      %3326 = vmatprep.mubr.bf16.mxu0 0
      %3327 = vmatmul.mubr.bf16.gmra.mrb[0].mxu0 %v3198
      %v3328 = vpop.f32.mrb[0].mxu0
      %v3329 = vadd.f32 %v3220, %v3328
      %v3330 = vpop.f32.mrb[0].mxu0
      %v3331 = vpop.f32.mrb[0].mxu0
      %v3332 = vadd.f32 %v3220, %v3331
      %v3333 = vpop.f32.mrb[0].mxu0
      %3334 = vdwg.mxu0
      %v3335 = vadd.f32 %v2909, %v3305
      %v3336 = vadd.f32 %v2910, %v3308
      %v3337 = vadd.f32 %v2911, %v3313
      %v3338 = vadd.f32 %v2912, %v3316
      %v3339 = vadd.f32 %v2913, %v3321
      %v3340 = vadd.f32 %v2914, %v3324
      %v3341 = vadd.f32 %v2915, %v3329
      %v3342 = vadd.f32 %v2916, %v3332
      %3343 = vst.msk [vmem:[%s469] sm:$0xff] %vm480, %v3335
      %3344 = vst.msk [vmem:[%s469 + $0x8] sm:$0xff] %vm480, %v3336
      %3345 = vst.msk [vmem:[%s469 + $0x10] sm:$0xff] %vm480, %v3337
      %3346 = vst.msk [vmem:[%s469 + $0x18] sm:$0xff] %vm480, %v3338
      %3347 = vst.msk [vmem:[%s469 + $0x20] sm:$0xff] %vm480, %v3339
      %3348 = vst.msk [vmem:[%s469 + $0x28] sm:$0xff] %vm480, %v3340
      %3349 = vst.msk [vmem:[%s469 + $0x30] sm:$0xff] %vm480, %v3341
      %3350 = vst.msk [vmem:[%s469 + $0x38] sm:$0xff] %vm480, %v3342
      %s3351 = smul.u32 8, %s25
      %p3352 = scmp.lt.s32.totalorder %s3351, 15
      %s3353 = scalar_select %p3352, %s3351, 15
      %s3354 = smul.addr %s3353, 8
      %s3355 = scalar_lea.vmem %s14, %s3354
      // Predicated region
      $region77: #{basic_layer_forward.2} parent=75 // pred_check
        %p3356 = pneg %p342
      $region78: #{basic_layer_forward.2} parent=75 // pred_check_branch
        %3358 = sbr.rel (%p3356) target = $region80
      $region79: #{basic_layer_forward.2} parent=75 // pred_region
        %s3359 = smul.u32 8, %s25
      $region80: #{basic_layer_forward.2} parent=75 // pred_fallthru
        _
    $region76: #{basic_layer_forward.2} parent=5 // pred_fallthru
      _
    %p3360 = scmp.le.s32.totalorder 2, %s20
    // Predicated region
    $region81: #{basic_layer_forward.2} parent=5 // pred_check
      %p3361 = pneg %p3360
    $region82: #{basic_layer_forward.2} parent=5 // pred_check_branch
      %3363 = sbr.rel (%p3361) target = $region84
    $region83: #{basic_layer_forward.2} parent=5 // pred_region
      %s3364 = ssub.s32 %s20, 2
      // Predicated region
      $region85: #{basic_layer_forward.2} parent=83 // pred_check
        %p3365 = pneg %p348
      $region86: #{basic_layer_forward.2} parent=83 // pred_check_branch
        %3367 = sbr.rel (%p3365) target = $region88
      $region87: #{basic_layer_forward.2} parent=83 // pred_region
        %s3368 = smul.u32 8, %s26
        %p3369 = scmp.lt.s32.totalorder %s3368, 15
        %s3370 = scalar_select %p3369, %s3368, 15
        %s3371 = smul.addr %s3370, 8
        %s3372 = scalar_lea.vmem %s14, %s3371
      $region88: #{basic_layer_forward.2} parent=83 // pred_fallthru
        _
    $region84: #{basic_layer_forward.2} parent=5 // pred_fallthru
      _
  $region6: #{basic_layer_forward.2} parent=0 // loop_footer
    %s24 = sadd.s32 1, %s20
  $region7: #{basic_layer_forward.2} parent=0 // loop_footer_branch
    %19 = sbr.rel target = $region3
  $region8: #{basic_layer_forward.2} parent=0 // loop_exit
    _

// kernel: basic_layer_forward.3
$region0: #{basic_layer_forward.3}
  #allocation0 [shape = 'u32[]', space=smem, size = 0x4, offset = 0x4, fixed_abs, tag = 'smem constant byte address 0x4 - core index']
  #allocation1 [shape = 'u32[144,128]{1,0:T(1,128)}', space=vmem, size = 0x12000, scoped, tag = 'internal scratch']
  #allocation2 [shape = 'f32[64,32]{1,0:T(8,128)}', space=vmem, size = 0x8000, scoped, tag = 'scratch operand']
  %s0 = inlined_call_operand.vmem [shape: f32[128,32], index: 0, kind: input, shape index: {}]
  %s1 = inlined_call_operand.vmem [shape: f32[4,4,16,16], index: 1, kind: input, shape index: {}]
  %s2 = inlined_call_operand.vmem [shape: f32[1,32], index: 2, kind: input, shape index: {}]
  %s3 = inlined_call_operand.vmem [shape: f32[1,32], index: 3, kind: input, shape index: {}]
  %s4 = inlined_call_operand.vmem [shape: bf16[32,96], index: 4, kind: input, shape index: {}]
  %s5 = inlined_call_operand.vmem [shape: f32[1,96], index: 5, kind: input, shape index: {}]
  %s6 = inlined_call_operand.vmem [shape: bf16[32,32], index: 6, kind: input, shape index: {}]
  %s7 = inlined_call_operand.vmem [shape: f32[1,32], index: 7, kind: input, shape index: {}]
  %s8 = inlined_call_operand.vmem [shape: f32[1,32], index: 8, kind: input, shape index: {}]
  %s9 = inlined_call_operand.vmem [shape: f32[1,32], index: 9, kind: input, shape index: {}]
  %s10 = inlined_call_operand.vmem [shape: bf16[32,128], index: 10, kind: input, shape index: {}]
  %s11 = inlined_call_operand.vmem [shape: f32[1,128], index: 11, kind: input, shape index: {}]
  %s12 = inlined_call_operand.vmem [shape: bf16[128,32], index: 12, kind: input, shape index: {}]
  %s13 = inlined_call_operand.vmem [shape: f32[1,32], index: 13, kind: input, shape index: {}]
  %s14 = inlined_call_operand.vmem [shape: f32[128,32], index: 14, kind: output, shape index: {}]
  %s15 = sld [smem:[#allocation0]]
  $region89: #{basic_layer_forward.3} parent=0
    _
  %s17 = ssub.s32 1, %s15
  %s18 = scalar_select 0, %s17, %s15
  loop: start=0, step=1, limit=4
  $region2: #{basic_layer_forward.3} parent=0 // loop_pre_header
    _
  $region3: #{basic_layer_forward.3} parent=0 // loop_header
    %s20 = sphi 0, %s24
    %p21 = scmp.ge.s32.totalorder %s20, 4
    %s30 = sphi 0, %s32
    %s33 = sphi 0, %s30
    %s34 = sphi 0, %s33
    %s50 = sphi 0, %s34
    %s54 = sphi 0, %s54
    %s56 = sphi 0, %s54
    %s57 = sphi 0, %s56
    %s71 = sphi 0, %s57
    %s75 = sphi 0, %s75
    %s77 = sphi 0, %s75
    %s78 = sphi 0, %s77
    %s92 = sphi 0, %s78
    %s96 = sphi 0, %s96
    %s98 = sphi 0, %s96
    %s99 = sphi 0, %s98
    %s113 = sphi 0, %s99
    %s117 = sphi 0, %s117
    %s119 = sphi 0, %s117
    %s120 = sphi 0, %s119
    %s134 = sphi 0, %s120
    %s138 = sphi 0, %s138
    %s140 = sphi 0, %s138
    %s141 = sphi 0, %s140
    %s155 = sphi 0, %s141
    %s159 = sphi 0, %s159
    %s161 = sphi 0, %s159
    %s162 = sphi 0, %s161
    %s176 = sphi 0, %s162
    %s180 = sphi 0, %s180
    %s182 = sphi 0, %s180
    %s183 = sphi 0, %s182
    %s197 = sphi 0, %s183
    %s201 = sphi 0, %s201
    %s203 = sphi 0, %s201
    %s204 = sphi 0, %s203
    %s218 = sphi 0, %s204
    %s222 = sphi 0, %s222
    %s224 = sphi 0, %s222
    %s225 = sphi 0, %s224
    %s239 = sphi 0, %s225
    %s243 = sphi 0, %s243
    %s245 = sphi 0, %s243
    %s246 = sphi 0, %s245
    %s260 = sphi 0, %s246
    %s264 = sphi 0, %s264
    %s266 = sphi 0, %s264
    %s267 = sphi 0, %s266
    %s281 = sphi 0, %s267
    %s285 = sphi 0, %s285
    %s287 = sphi 0, %s285
    %s288 = sphi 0, %s287
    %s302 = sphi 0, %s288
    %s306 = sphi 0, %s306
    %s308 = sphi 0, %s306
    %s309 = sphi 0, %s308
    %s323 = sphi 0, %s309
    %s329 = sphi 0, %s331
    %s332 = sphi 0, %s329
    %s333 = sphi 0, %s332
    %s349 = sphi 0, %s333
  $region4: #{basic_layer_forward.3} parent=0 // loop_header_branch
    %23 = sbr.rel (%p21) target = $region8
  $region5: #{basic_layer_forward.3} parent=0 // loop_body
    %s25 = ssub.s32 %s20, 1
    %s26 = ssub.s32 %s20, 2
    %s27 = sadd.s32 %s20, 1
    %s28 = ssub.s32 %s20, %s27
    %p29 = scmp.eq.s32.totalorder %s28, 0
    %s31 = sadd.s32 %s30, 1
    %s32 = scalar_select %p29, %s30, %s31
    %p35 = pneg %p29
    %p36 = scmp.eq.s32.totalorder %s20, 1
    %p37 = por %p35, %p36
    %p38 = scmp.ne.s32.totalorder %s30, %s33
    %p39 = scmp.eq.s32.totalorder %s20, 0
    %p40 = por %p38, %p39
    %p41 = scmp.ne.s32.totalorder %s30, %s33
    %p42 = scmp.eq.s32.totalorder %s25, 1
    %p43 = por %p41, %p42
    %p44 = scmp.ne.s32.totalorder %s33, %s34
    %p45 = scmp.eq.s32.totalorder %s25, 0
    %p46 = por %p44, %p45
    %p47 = scmp.ne.s32.totalorder %s33, %s34
    %p48 = scmp.eq.s32.totalorder %s26, 1
    %p49 = por %p47, %p48
    %p51 = scmp.ne.s32.totalorder %s34, %s50
    %p52 = scmp.eq.s32.totalorder %s26, 0
    %p53 = por %p51, %p52
    %s55 = sadd.s32 %s54, 1
    %p58 = scmp.eq.s32.totalorder %s20, 1
    %p59 = scmp.ne.s32.totalorder %s54, %s56
    %p60 = scmp.eq.s32.totalorder %s20, 0
    %p61 = por %p59, %p60
    %p62 = scmp.ne.s32.totalorder %s54, %s56
    %p63 = scmp.eq.s32.totalorder %s25, 1
    %p64 = por %p62, %p63
    %p65 = scmp.ne.s32.totalorder %s56, %s57
    %p66 = scmp.eq.s32.totalorder %s25, 0
    %p67 = por %p65, %p66
    %p68 = scmp.ne.s32.totalorder %s56, %s57
    %p69 = scmp.eq.s32.totalorder %s26, 1
    %p70 = por %p68, %p69
    %p72 = scmp.ne.s32.totalorder %s57, %s71
    %p73 = scmp.eq.s32.totalorder %s26, 0
    %p74 = por %p72, %p73
    %s76 = sadd.s32 %s75, 1
    %p79 = scmp.eq.s32.totalorder %s20, 1
    %p80 = scmp.ne.s32.totalorder %s75, %s77
    %p81 = scmp.eq.s32.totalorder %s20, 0
    %p82 = por %p80, %p81
    %p83 = scmp.ne.s32.totalorder %s75, %s77
    %p84 = scmp.eq.s32.totalorder %s25, 1
    %p85 = por %p83, %p84
    %p86 = scmp.ne.s32.totalorder %s77, %s78
    %p87 = scmp.eq.s32.totalorder %s25, 0
    %p88 = por %p86, %p87
    %p89 = scmp.ne.s32.totalorder %s77, %s78
    %p90 = scmp.eq.s32.totalorder %s26, 1
    %p91 = por %p89, %p90
    %p93 = scmp.ne.s32.totalorder %s78, %s92
    %p94 = scmp.eq.s32.totalorder %s26, 0
    %p95 = por %p93, %p94
    %s97 = sadd.s32 %s96, 1
    %p100 = scmp.eq.s32.totalorder %s20, 1
    %p101 = scmp.ne.s32.totalorder %s96, %s98
    %p102 = scmp.eq.s32.totalorder %s20, 0
    %p103 = por %p101, %p102
    %p104 = scmp.ne.s32.totalorder %s96, %s98
    %p105 = scmp.eq.s32.totalorder %s25, 1
    %p106 = por %p104, %p105
    %p107 = scmp.ne.s32.totalorder %s98, %s99
    %p108 = scmp.eq.s32.totalorder %s25, 0
    %p109 = por %p107, %p108
    %p110 = scmp.ne.s32.totalorder %s98, %s99
    %p111 = scmp.eq.s32.totalorder %s26, 1
    %p112 = por %p110, %p111
    %p114 = scmp.ne.s32.totalorder %s99, %s113
    %p115 = scmp.eq.s32.totalorder %s26, 0
    %p116 = por %p114, %p115
    %s118 = sadd.s32 %s117, 1
    %p121 = scmp.eq.s32.totalorder %s20, 1
    %p122 = scmp.ne.s32.totalorder %s117, %s119
    %p123 = scmp.eq.s32.totalorder %s20, 0
    %p124 = por %p122, %p123
    %p125 = scmp.ne.s32.totalorder %s117, %s119
    %p126 = scmp.eq.s32.totalorder %s25, 1
    %p127 = por %p125, %p126
    %p128 = scmp.ne.s32.totalorder %s119, %s120
    %p129 = scmp.eq.s32.totalorder %s25, 0
    %p130 = por %p128, %p129
    %p131 = scmp.ne.s32.totalorder %s119, %s120
    %p132 = scmp.eq.s32.totalorder %s26, 1
    %p133 = por %p131, %p132
    %p135 = scmp.ne.s32.totalorder %s120, %s134
    %p136 = scmp.eq.s32.totalorder %s26, 0
    %p137 = por %p135, %p136
    %s139 = sadd.s32 %s138, 1
    %p142 = scmp.eq.s32.totalorder %s20, 1
    %p143 = scmp.ne.s32.totalorder %s138, %s140
    %p144 = scmp.eq.s32.totalorder %s20, 0
    %p145 = por %p143, %p144
    %p146 = scmp.ne.s32.totalorder %s138, %s140
    %p147 = scmp.eq.s32.totalorder %s25, 1
    %p148 = por %p146, %p147
    %p149 = scmp.ne.s32.totalorder %s140, %s141
    %p150 = scmp.eq.s32.totalorder %s25, 0
    %p151 = por %p149, %p150
    %p152 = scmp.ne.s32.totalorder %s140, %s141
    %p153 = scmp.eq.s32.totalorder %s26, 1
    %p154 = por %p152, %p153
    %p156 = scmp.ne.s32.totalorder %s141, %s155
    %p157 = scmp.eq.s32.totalorder %s26, 0
    %p158 = por %p156, %p157
    %s160 = sadd.s32 %s159, 1
    %p163 = scmp.eq.s32.totalorder %s20, 1
    %p164 = scmp.ne.s32.totalorder %s159, %s161
    %p165 = scmp.eq.s32.totalorder %s20, 0
    %p166 = por %p164, %p165
    %p167 = scmp.ne.s32.totalorder %s159, %s161
    %p168 = scmp.eq.s32.totalorder %s25, 1
    %p169 = por %p167, %p168
    %p170 = scmp.ne.s32.totalorder %s161, %s162
    %p171 = scmp.eq.s32.totalorder %s25, 0
    %p172 = por %p170, %p171
    %p173 = scmp.ne.s32.totalorder %s161, %s162
    %p174 = scmp.eq.s32.totalorder %s26, 1
    %p175 = por %p173, %p174
    %p177 = scmp.ne.s32.totalorder %s162, %s176
    %p178 = scmp.eq.s32.totalorder %s26, 0
    %p179 = por %p177, %p178
    %s181 = sadd.s32 %s180, 1
    %p184 = scmp.eq.s32.totalorder %s20, 1
    %p185 = scmp.ne.s32.totalorder %s180, %s182
    %p186 = scmp.eq.s32.totalorder %s20, 0
    %p187 = por %p185, %p186
    %p188 = scmp.ne.s32.totalorder %s180, %s182
    %p189 = scmp.eq.s32.totalorder %s25, 1
    %p190 = por %p188, %p189
    %p191 = scmp.ne.s32.totalorder %s182, %s183
    %p192 = scmp.eq.s32.totalorder %s25, 0
    %p193 = por %p191, %p192
    %p194 = scmp.ne.s32.totalorder %s182, %s183
    %p195 = scmp.eq.s32.totalorder %s26, 1
    %p196 = por %p194, %p195
    %p198 = scmp.ne.s32.totalorder %s183, %s197
    %p199 = scmp.eq.s32.totalorder %s26, 0
    %p200 = por %p198, %p199
    %s202 = sadd.s32 %s201, 1
    %p205 = scmp.eq.s32.totalorder %s20, 1
    %p206 = scmp.ne.s32.totalorder %s201, %s203
    %p207 = scmp.eq.s32.totalorder %s20, 0
    %p208 = por %p206, %p207
    %p209 = scmp.ne.s32.totalorder %s201, %s203
    %p210 = scmp.eq.s32.totalorder %s25, 1
    %p211 = por %p209, %p210
    %p212 = scmp.ne.s32.totalorder %s203, %s204
    %p213 = scmp.eq.s32.totalorder %s25, 0
    %p214 = por %p212, %p213
    %p215 = scmp.ne.s32.totalorder %s203, %s204
    %p216 = scmp.eq.s32.totalorder %s26, 1
    %p217 = por %p215, %p216
    %p219 = scmp.ne.s32.totalorder %s204, %s218
    %p220 = scmp.eq.s32.totalorder %s26, 0
    %p221 = por %p219, %p220
    %s223 = sadd.s32 %s222, 1
    %p226 = scmp.eq.s32.totalorder %s20, 1
    %p227 = scmp.ne.s32.totalorder %s222, %s224
    %p228 = scmp.eq.s32.totalorder %s20, 0
    %p229 = por %p227, %p228
    %p230 = scmp.ne.s32.totalorder %s222, %s224
    %p231 = scmp.eq.s32.totalorder %s25, 1
    %p232 = por %p230, %p231
    %p233 = scmp.ne.s32.totalorder %s224, %s225
    %p234 = scmp.eq.s32.totalorder %s25, 0
    %p235 = por %p233, %p234
    %p236 = scmp.ne.s32.totalorder %s224, %s225
    %p237 = scmp.eq.s32.totalorder %s26, 1
    %p238 = por %p236, %p237
    %p240 = scmp.ne.s32.totalorder %s225, %s239
    %p241 = scmp.eq.s32.totalorder %s26, 0
    %p242 = por %p240, %p241
    %s244 = sadd.s32 %s243, 1
    %p247 = scmp.eq.s32.totalorder %s20, 1
    %p248 = scmp.ne.s32.totalorder %s243, %s245
    %p249 = scmp.eq.s32.totalorder %s20, 0
    %p250 = por %p248, %p249
    %p251 = scmp.ne.s32.totalorder %s243, %s245
    %p252 = scmp.eq.s32.totalorder %s25, 1
    %p253 = por %p251, %p252
    %p254 = scmp.ne.s32.totalorder %s245, %s246
    %p255 = scmp.eq.s32.totalorder %s25, 0
    %p256 = por %p254, %p255
    %p257 = scmp.ne.s32.totalorder %s245, %s246
    %p258 = scmp.eq.s32.totalorder %s26, 1
    %p259 = por %p257, %p258
    %p261 = scmp.ne.s32.totalorder %s246, %s260
    %p262 = scmp.eq.s32.totalorder %s26, 0
    %p263 = por %p261, %p262
    %s265 = sadd.s32 %s264, 1
    %p268 = scmp.eq.s32.totalorder %s20, 1
    %p269 = scmp.ne.s32.totalorder %s264, %s266
    %p270 = scmp.eq.s32.totalorder %s20, 0
    %p271 = por %p269, %p270
    %p272 = scmp.ne.s32.totalorder %s264, %s266
    %p273 = scmp.eq.s32.totalorder %s25, 1
    %p274 = por %p272, %p273
    %p275 = scmp.ne.s32.totalorder %s266, %s267
    %p276 = scmp.eq.s32.totalorder %s25, 0
    %p277 = por %p275, %p276
    %p278 = scmp.ne.s32.totalorder %s266, %s267
    %p279 = scmp.eq.s32.totalorder %s26, 1
    %p280 = por %p278, %p279
    %p282 = scmp.ne.s32.totalorder %s267, %s281
    %p283 = scmp.eq.s32.totalorder %s26, 0
    %p284 = por %p282, %p283
    %s286 = sadd.s32 %s285, 1
    %p289 = scmp.eq.s32.totalorder %s20, 1
    %p290 = scmp.ne.s32.totalorder %s285, %s287
    %p291 = scmp.eq.s32.totalorder %s20, 0
    %p292 = por %p290, %p291
    %p293 = scmp.ne.s32.totalorder %s285, %s287
    %p294 = scmp.eq.s32.totalorder %s25, 1
    %p295 = por %p293, %p294
    %p296 = scmp.ne.s32.totalorder %s287, %s288
    %p297 = scmp.eq.s32.totalorder %s25, 0
    %p298 = por %p296, %p297
    %p299 = scmp.ne.s32.totalorder %s287, %s288
    %p300 = scmp.eq.s32.totalorder %s26, 1
    %p301 = por %p299, %p300
    %p303 = scmp.ne.s32.totalorder %s288, %s302
    %p304 = scmp.eq.s32.totalorder %s26, 0
    %p305 = por %p303, %p304
    %s307 = sadd.s32 %s306, 1
    %p310 = scmp.eq.s32.totalorder %s20, 1
    %p311 = scmp.ne.s32.totalorder %s306, %s308
    %p312 = scmp.eq.s32.totalorder %s20, 0
    %p313 = por %p311, %p312
    %p314 = scmp.ne.s32.totalorder %s306, %s308
    %p315 = scmp.eq.s32.totalorder %s25, 1
    %p316 = por %p314, %p315
    %p317 = scmp.ne.s32.totalorder %s308, %s309
    %p318 = scmp.eq.s32.totalorder %s25, 0
    %p319 = por %p317, %p318
    %p320 = scmp.ne.s32.totalorder %s308, %s309
    %p321 = scmp.eq.s32.totalorder %s26, 1
    %p322 = por %p320, %p321
    %p324 = scmp.ne.s32.totalorder %s309, %s323
    %p325 = scmp.eq.s32.totalorder %s26, 0
    %p326 = por %p324, %p325
    %s327 = ssub.s32 %s20, %s27
    %p328 = scmp.eq.s32.totalorder %s327, 0
    %s330 = sadd.s32 %s329, 1
    %s331 = scalar_select %p328, %s329, %s330
    %p334 = pneg %p328
    %p335 = scmp.eq.s32.totalorder %s20, 1
    %p336 = por %p334, %p335
    %p337 = scmp.ne.s32.totalorder %s329, %s332
    %p338 = scmp.eq.s32.totalorder %s20, 0
    %p339 = por %p337, %p338
    %p340 = scmp.ne.s32.totalorder %s329, %s332
    %p341 = scmp.eq.s32.totalorder %s25, 1
    %p342 = por %p340, %p341
    %p343 = scmp.ne.s32.totalorder %s332, %s333
    %p344 = scmp.eq.s32.totalorder %s25, 0
    %p345 = por %p343, %p344
    %p346 = scmp.ne.s32.totalorder %s332, %s333
    %p347 = scmp.eq.s32.totalorder %s26, 1
    %p348 = por %p346, %p347
    %p350 = scmp.ne.s32.totalorder %s333, %s349
    %p351 = scmp.eq.s32.totalorder %s26, 0
    %p352 = por %p350, %p351
    %p353 = scmp.le.s32.totalorder 1, %s20
    %p354 = scmp.lt.s32.totalorder %s20, 3
    %p355 = pnand %p353, %p354
    %p356 = pneg %p355
    // Predicated region
    $region9: #{basic_layer_forward.3} parent=5 // pred_check
      _
    $region10: #{basic_layer_forward.3} parent=5 // pred_check_branch
      %358 = sbr.rel (%p355) target = $region12
    $region11: #{basic_layer_forward.3} parent=5 // pred_region
      %s359 = ssub.s32 %s20, 1
      // Predicated region
      $region13: #{basic_layer_forward.3} parent=11 // pred_check
        %p360 = pneg %p67
      $region14: #{basic_layer_forward.3} parent=11 // pred_check_branch
        %362 = sbr.rel (%p360) target = $region16
      $region15: #{basic_layer_forward.3} parent=11 // pred_region
        _
      $region16: #{basic_layer_forward.3} parent=11 // pred_fallthru
        _
      // Predicated region
      $region17: #{basic_layer_forward.3} parent=11 // pred_check
        %p363 = pneg %p88
      $region18: #{basic_layer_forward.3} parent=11 // pred_check_branch
        %365 = sbr.rel (%p363) target = $region20
      $region19: #{basic_layer_forward.3} parent=11 // pred_region
        _
      $region20: #{basic_layer_forward.3} parent=11 // pred_fallthru
        _
      // Predicated region
      $region21: #{basic_layer_forward.3} parent=11 // pred_check
        %p366 = pneg %p109
      $region22: #{basic_layer_forward.3} parent=11 // pred_check_branch
        %368 = sbr.rel (%p366) target = $region24
      $region23: #{basic_layer_forward.3} parent=11 // pred_region
        _
      $region24: #{basic_layer_forward.3} parent=11 // pred_fallthru
        _
      // Predicated region
      $region25: #{basic_layer_forward.3} parent=11 // pred_check
        %p369 = pneg %p130
      $region26: #{basic_layer_forward.3} parent=11 // pred_check_branch
        %371 = sbr.rel (%p369) target = $region28
      $region27: #{basic_layer_forward.3} parent=11 // pred_region
        _
      $region28: #{basic_layer_forward.3} parent=11 // pred_fallthru
        _
      // Predicated region
      $region29: #{basic_layer_forward.3} parent=11 // pred_check
        %p372 = pneg %p151
      $region30: #{basic_layer_forward.3} parent=11 // pred_check_branch
        %374 = sbr.rel (%p372) target = $region32
      $region31: #{basic_layer_forward.3} parent=11 // pred_region
        _
      $region32: #{basic_layer_forward.3} parent=11 // pred_fallthru
        _
      // Predicated region
      $region33: #{basic_layer_forward.3} parent=11 // pred_check
        %p375 = pneg %p172
      $region34: #{basic_layer_forward.3} parent=11 // pred_check_branch
        %377 = sbr.rel (%p375) target = $region36
      $region35: #{basic_layer_forward.3} parent=11 // pred_region
        _
      $region36: #{basic_layer_forward.3} parent=11 // pred_fallthru
        _
      // Predicated region
      $region37: #{basic_layer_forward.3} parent=11 // pred_check
        %p378 = pneg %p193
      $region38: #{basic_layer_forward.3} parent=11 // pred_check_branch
        %380 = sbr.rel (%p378) target = $region40
      $region39: #{basic_layer_forward.3} parent=11 // pred_region
        _
      $region40: #{basic_layer_forward.3} parent=11 // pred_fallthru
        _
      // Predicated region
      $region41: #{basic_layer_forward.3} parent=11 // pred_check
        %p381 = pneg %p214
      $region42: #{basic_layer_forward.3} parent=11 // pred_check_branch
        %383 = sbr.rel (%p381) target = $region44
      $region43: #{basic_layer_forward.3} parent=11 // pred_region
        _
      $region44: #{basic_layer_forward.3} parent=11 // pred_fallthru
        _
      // Predicated region
      $region45: #{basic_layer_forward.3} parent=11 // pred_check
        %p384 = pneg %p235
      $region46: #{basic_layer_forward.3} parent=11 // pred_check_branch
        %386 = sbr.rel (%p384) target = $region48
      $region47: #{basic_layer_forward.3} parent=11 // pred_region
        _
      $region48: #{basic_layer_forward.3} parent=11 // pred_fallthru
        _
      // Predicated region
      $region49: #{basic_layer_forward.3} parent=11 // pred_check
        %p387 = pneg %p256
      $region50: #{basic_layer_forward.3} parent=11 // pred_check_branch
        %389 = sbr.rel (%p387) target = $region52
      $region51: #{basic_layer_forward.3} parent=11 // pred_region
        _
      $region52: #{basic_layer_forward.3} parent=11 // pred_fallthru
        _
      // Predicated region
      $region53: #{basic_layer_forward.3} parent=11 // pred_check
        %p390 = pneg %p277
      $region54: #{basic_layer_forward.3} parent=11 // pred_check_branch
        %392 = sbr.rel (%p390) target = $region56
      $region55: #{basic_layer_forward.3} parent=11 // pred_region
        _
      $region56: #{basic_layer_forward.3} parent=11 // pred_fallthru
        _
      // Predicated region
      $region57: #{basic_layer_forward.3} parent=11 // pred_check
        %p393 = pneg %p298
      $region58: #{basic_layer_forward.3} parent=11 // pred_check_branch
        %395 = sbr.rel (%p393) target = $region60
      $region59: #{basic_layer_forward.3} parent=11 // pred_region
        _
      $region60: #{basic_layer_forward.3} parent=11 // pred_fallthru
        _
      // Predicated region
      $region61: #{basic_layer_forward.3} parent=11 // pred_check
        %p396 = pneg %p319
      $region62: #{basic_layer_forward.3} parent=11 // pred_check_branch
        %398 = sbr.rel (%p396) target = $region64
      $region63: #{basic_layer_forward.3} parent=11 // pred_region
        _
      $region64: #{basic_layer_forward.3} parent=11 // pred_fallthru
        _
    $region12: #{basic_layer_forward.3} parent=5 // pred_fallthru
      _
    %p399 = scmp.lt.s32.totalorder %s20, 2
    // Predicated region
    $region65: #{basic_layer_forward.3} parent=5 // pred_check
      %p400 = pneg %p399
    $region66: #{basic_layer_forward.3} parent=5 // pred_check_branch
      %402 = sbr.rel (%p400) target = $region68
    $region67: #{basic_layer_forward.3} parent=5 // pred_region
      // Predicated region
      $region69: #{basic_layer_forward.3} parent=67 // pred_check
        %p403 = pneg %p40
      $region70: #{basic_layer_forward.3} parent=67 // pred_check_branch
        %405 = sbr.rel (%p403) target = $region72
      $region71: #{basic_layer_forward.3} parent=67 // pred_region
        %s406 = smul.u32 8, %s20
        %p407 = scmp.lt.s32.totalorder %s406, 15
        %s408 = scalar_select %p407, %s406, 15
        %s409 = smul.addr %s408, 8
        %s410 = scalar_lea.vmem %s0, %s409
        %s411 = smul.u32 8, %s20
      $region72: #{basic_layer_forward.3} parent=67 // pred_fallthru
        _
    $region68: #{basic_layer_forward.3} parent=5 // pred_fallthru
      _
    %p412 = scmp.le.s32.totalorder 1, %s20
    %p413 = scmp.lt.s32.totalorder %s20, 3
    %p414 = pnand %p412, %p413
    %p415 = pneg %p414
    // Predicated region
    $region73: #{basic_layer_forward.3} parent=5 // pred_check
      _
    $region74: #{basic_layer_forward.3} parent=5 // pred_check_branch
      %417 = sbr.rel (%p414) target = $region76
    $region75: #{basic_layer_forward.3} parent=5 // pred_region
      %s418 = ssub.s32 %s20, 1
      %s419 = smul.u32 8, %s25
      %p420 = scmp.lt.s32.totalorder %s419, 15
      %s421 = scalar_select %p420, %s419, 15
      %s422 = smul.addr %s421, 8
      %s423 = scalar_lea.vmem %s0, %s422
      %p424 = pneg %p46
      %p425 = pneg %p43
      %p426 = pneg %p67
      %p427 = pneg %p64
      %p428 = pneg %p88
      %p429 = pneg %p85
      %p430 = pneg %p109
      %p431 = pneg %p106
      %p432 = pneg %p130
      %p433 = pneg %p127
      %p434 = pneg %p151
      %p435 = pneg %p148
      %p436 = pneg %p172
      %p437 = pneg %p169
      %p438 = pneg %p193
      %p439 = pneg %p190
      %p440 = pneg %p214
      %p441 = pneg %p211
      %p442 = pneg %p235
      %p443 = pneg %p232
      %p444 = pneg %p256
      %p445 = pneg %p253
      %p446 = pneg %p277
      %p447 = pneg %p274
      %p448 = pneg %p298
      %p449 = pneg %p295
      %p450 = pneg %p319
      %p451 = pneg %p316
      %p452 = pneg %p345
      %p453 = pneg %p342
      %s454 = smul.u32 8, %s25
      %p455 = scmp.lt.s32.totalorder %s454, 15
      %s456 = scalar_select %p455, %s454, 15
      %s457 = smul.addr %s456, 8
      %s458 = scalar_lea.vmem %s14, %s457
      %s459 = smul.u32 8, %s25
      %p460 = scmp.lt.s32.totalorder %s459, 15
      %s461 = scalar_select %p460, %s459, 15
      %s462 = smul.addr %s461, 8
      %s463 = scalar_lea.vmem %s0, %s462
      %s464 = smul.u32 8, %s25
      %s465 = smul.u32 8, %s25
      %p466 = scmp.lt.s32.totalorder %s465, 15
      %s467 = scalar_select %p466, %s465, 15
      %s468 = smul.addr %s467, 8
      %s469 = scalar_lea.vmem %s14, %s468
      %s470 = smul.u32 8, %s25
      %v472 = vld [vmem:[%s463] sm:$0xff]
      %v473 = vld [vmem:[%s463 + $0x8] sm:$0xff]
      %v474 = vld [vmem:[%s463 + $0x10] sm:$0xff]
      %v475 = vld [vmem:[%s463 + $0x18] sm:$0xff]
      %v476 = vld [vmem:[%s463 + $0x20] sm:$0xff]
      %v477 = vld [vmem:[%s463 + $0x28] sm:$0xff]
      %v478 = vld [vmem:[%s463 + $0x30] sm:$0xff]
      %v479 = vld [vmem:[%s463 + $0x38] sm:$0xff]
      %vm480 = vcmask 261120
      %v481 = vsel %vm480, %v472, 0.0
      %482 = vadd.xlane.f32.xlu0 %v481
      %v483 = vpop.xlane.xlu0 %482
      %v484 = vsel %vm480, %v473, 0.0
      %485 = vadd.xlane.f32.xlu0 %v484
      %v486 = vpop.xlane.xlu0 %485
      %v487 = vsel %vm480, %v474, 0.0
      %488 = vadd.xlane.f32.xlu0 %v487
      %v489 = vpop.xlane.xlu0 %488
      %v490 = vsel %vm480, %v475, 0.0
      %491 = vadd.xlane.f32.xlu0 %v490
      %v492 = vpop.xlane.xlu0 %491
      %v493 = vsel %vm480, %v476, 0.0
      %494 = vadd.xlane.f32.xlu0 %v493
      %v495 = vpop.xlane.xlu0 %494
      %v496 = vsel %vm480, %v477, 0.0
      %497 = vadd.xlane.f32.xlu0 %v496
      %v498 = vpop.xlane.xlu0 %497
      %v499 = vsel %vm480, %v478, 0.0
      %500 = vadd.xlane.f32.xlu0 %v499
      %v501 = vpop.xlane.xlu0 %500
      %v502 = vsel %vm480, %v479, 0.0
      %503 = vadd.xlane.f32.xlu0 %v502
      %v504 = vpop.xlane.xlu0 %503
      %v505 = vrcp.pop 32.0
      %v506 = vmul.f32 %v483, %v505
      %v507 = vmul.f32 %v486, %v505
      %v508 = vmul.f32 %v489, %v505
      %v509 = vmul.f32 %v492, %v505
      %v510 = vmul.f32 %v495, %v505
      %v511 = vmul.f32 %v498, %v505
      %v512 = vmul.f32 %v501, %v505
      %v513 = vmul.f32 %v504, %v505
      %v514 = vsub.f32 %v472, %v506
      %v515 = vsub.f32 %v473, %v507
      %v516 = vsub.f32 %v474, %v508
      %v517 = vsub.f32 %v475, %v509
      %v518 = vsub.f32 %v476, %v510
      %v519 = vsub.f32 %v477, %v511
      %v520 = vsub.f32 %v478, %v512
      %v521 = vsub.f32 %v479, %v513
      %v522 = vmul.f32 %v514, %v514
      %v523 = vmul.f32 %v515, %v515
      %v524 = vmul.f32 %v516, %v516
      %v525 = vmul.f32 %v517, %v517
      %v526 = vmul.f32 %v518, %v518
      %v527 = vmul.f32 %v519, %v519
      %v528 = vmul.f32 %v520, %v520
      %v529 = vmul.f32 %v521, %v521
      %v530 = vsel %vm480, %v522, 0.0
      %531 = vadd.xlane.f32.xlu0 %v530
      %v532 = vpop.xlane.xlu0 %531
      %v533 = vsel %vm480, %v523, 0.0
      %534 = vadd.xlane.f32.xlu0 %v533
      %v535 = vpop.xlane.xlu0 %534
      %v536 = vsel %vm480, %v524, 0.0
      %537 = vadd.xlane.f32.xlu0 %v536
      %v538 = vpop.xlane.xlu0 %537
      %v539 = vsel %vm480, %v525, 0.0
      %540 = vadd.xlane.f32.xlu0 %v539
      %v541 = vpop.xlane.xlu0 %540
      %v542 = vsel %vm480, %v526, 0.0
      %543 = vadd.xlane.f32.xlu0 %v542
      %v544 = vpop.xlane.xlu0 %543
      %v545 = vsel %vm480, %v527, 0.0
      %546 = vadd.xlane.f32.xlu0 %v545
      %v547 = vpop.xlane.xlu0 %546
      %v548 = vsel %vm480, %v528, 0.0
      %549 = vadd.xlane.f32.xlu0 %v548
      %v550 = vpop.xlane.xlu0 %549
      %v551 = vsel %vm480, %v529, 0.0
      %552 = vadd.xlane.f32.xlu0 %v551
      %v553 = vpop.xlane.xlu0 %552
      %v554 = vmul.f32 %v532, %v505
      %v555 = vmul.f32 %v535, %v505
      %v556 = vmul.f32 %v538, %v505
      %v557 = vmul.f32 %v541, %v505
      %v558 = vmul.f32 %v544, %v505
      %v559 = vmul.f32 %v547, %v505
      %v560 = vmul.f32 %v550, %v505
      %v561 = vmul.f32 %v553, %v505
      %v562 = vadd.f32 %v554, 1e-05
      %v563 = vadd.f32 %v555, 1e-05
      %v564 = vadd.f32 %v556, 1e-05
      %v565 = vadd.f32 %v557, 1e-05
      %v566 = vadd.f32 %v558, 1e-05
      %v567 = vadd.f32 %v559, 1e-05
      %v568 = vadd.f32 %v560, 1e-05
      %v569 = vadd.f32 %v561, 1e-05
      %v570 = vrsqrt.pop %v562
      %v571 = vrsqrt.pop %v563
      %v572 = vrsqrt.pop %v564
      %v573 = vrsqrt.pop %v565
      %v574 = vrsqrt.pop %v566
      %v575 = vrsqrt.pop %v567
      %v576 = vrsqrt.pop %v568
      %v577 = vrsqrt.pop %v569
      %v578 = vmul.f32 %v514, %v570
      %v579 = vmul.f32 %v515, %v571
      %v580 = vmul.f32 %v516, %v572
      %v581 = vmul.f32 %v517, %v573
      %v582 = vmul.f32 %v518, %v574
      %v583 = vmul.f32 %v519, %v575
      %v584 = vmul.f32 %v520, %v576
      %v585 = vmul.f32 %v521, %v577
      %v586 = vld [vmem:[%s2] sm:$0x1]
      %v588 = vlaneseq
      %v589 = vshrl.u32 %v588, 7
      %v590 = vsub.s32 0, %v589
      %v591 = vrot.slane %v586, %v590
      %v593 = vmul.f32 %v578, %v591
      %v594 = vmul.f32 %v579, %v591
      %v595 = vmul.f32 %v580, %v591
      %v596 = vmul.f32 %v581, %v591
      %v597 = vmul.f32 %v582, %v591
      %v598 = vmul.f32 %v583, %v591
      %v599 = vmul.f32 %v584, %v591
      %v600 = vmul.f32 %v585, %v591
      %v601 = vld [vmem:[%s3] sm:$0x1]
      %v603 = vlaneseq
      %v604 = vshrl.u32 %v603, 7
      %v605 = vsub.s32 0, %v604
      %v606 = vrot.slane %v601, %v605
      %v608 = vadd.f32 %v593, %v606
      %v609 = vadd.f32 %v594, %v606
      %v610 = vadd.f32 %v595, %v606
      %v611 = vadd.f32 %v596, %v606
      %v612 = vadd.f32 %v597, %v606
      %v613 = vadd.f32 %v598, %v606
      %v614 = vadd.f32 %v599, %v606
      %v615 = vadd.f32 %v600, %v606
      %v616 = vpack.c.bf16 %v609, %v608
      %v617 = vpack.c.bf16 %v611, %v610
      %v618 = vpack.c.bf16 %v613, %v612
      %v619 = vpack.c.bf16 %v615, %v614
      %v620 = vld [vmem:[%s4] sm:$0xf]
      %v621 = vld [vmem:[%s4 + $0x4] sm:$0xf]
      %v622 = vld [vmem:[%s4 + $0x8] sm:$0xf]
      %v623 = vld [vmem:[%s4 + $0xc] sm:$0xf]
      %v624 = vld [vmem:[%s5] sm:$0x1]
      %v626 = vlaneseq
      %v627 = vshrl.u32 %v626, 7
      %v628 = vsub.s32 0, %v627
      %v629 = vrot.slane %v624, %v628
      %v635 = vunpack.c.l.b16 %v620
      %v636 = vunpack.c.l.b16 %v621
      %v637 = vunpack.c.l.b16 %v622
      %v638 = vunpack.c.l.b16 %v623
      %v639 = vpack.c.b16 %v636, %v635
      %v640 = vpack.c.b16 %v638, %v637
      %v644 = vsel %vm480, %v616, 0
      %v647 = vsel %vm480, %v617, 0
      %v650 = vsel %vm480, %v618, 0
      %v653 = vsel %vm480, %v619, 0
      %655 = vmatprep.subr.bf16.mxu0 0
      %656 = vmatpush1.bf16.msra.mxu0 %v639
      %657 = vmatprep.subr.bf16.mxu0 0
      %658 = vmatpush1.bf16.msra.mxu0 %v640
      %659 = vmatprep.subr.bf16.mxu0 0
      %660 = vmatpush1.bf16.msra.mxu0 0
      %661 = vmatprep.subr.bf16.mxu0 0
      %662 = vmatpush1.bf16.msra.mxu0 0
      %663 = vmatprep.subr.bf16.mxu0 0
      %664 = vmatpush1.bf16.msra.mxu0 0
      %665 = vmatprep.subr.bf16.mxu0 0
      %666 = vmatpush1.bf16.msra.mxu0 0
      %667 = vmatprep.subr.bf16.mxu0 0
      %668 = vmatpush1.bf16.msra.mxu0 0
      %669 = vmatprep.subr.bf16.mxu0 0
      %670 = vmatpush1.bf16.msra.mxu0 0
      %671 = vmatprep.subr.bf16.mxu0 0
      %672 = vmatpush1.bf16.msra.mxu0 0
      %673 = vmatprep.subr.bf16.mxu0 0
      %674 = vmatpush1.bf16.msra.mxu0 0
      %675 = vmatprep.subr.bf16.mxu0 0
      %676 = vmatpush1.bf16.msra.mxu0 0
      %677 = vmatprep.subr.bf16.mxu0 0
      %678 = vmatpush1.bf16.msra.mxu0 0
      %679 = vmatprep.subr.bf16.mxu0 0
      %680 = vmatpush1.bf16.msra.mxu0 0
      %681 = vmatprep.subr.bf16.mxu0 0
      %682 = vmatpush1.bf16.msra.mxu0 0
      %683 = vmatprep.subr.bf16.mxu0 0
      %684 = vmatpush1.bf16.msra.mxu0 0
      %685 = vmatprep.subr.bf16.mxu0 0
      %686 = vmatpush1.bf16.msra.mxu0 0
      %687 = vmatprep.mubr.bf16.mxu0 0
      %688 = vmatmul.mubr.bf16.gmra.mrb[0].mxu0 %v644
      %v689 = vpop.f32.mrb[0].mxu0
      %v690 = vadd.f32 %v629, %v689
      %v691 = vpop.f32.mrb[0].mxu0
      %v692 = vpop.f32.mrb[0].mxu0
      %v693 = vadd.f32 %v629, %v692
      %v694 = vpop.f32.mrb[0].mxu0
      %695 = vmatprep.mubr.bf16.mxu0 0
      %696 = vmatmul.mubr.bf16.gmra.mrb[0].mxu0 %v647
      %v697 = vpop.f32.mrb[0].mxu0
      %v698 = vadd.f32 %v629, %v697
      %v699 = vpop.f32.mrb[0].mxu0
      %v700 = vpop.f32.mrb[0].mxu0
      %v701 = vadd.f32 %v629, %v700
      %v702 = vpop.f32.mrb[0].mxu0
      %703 = vmatprep.mubr.bf16.mxu0 0
      %704 = vmatmul.mubr.bf16.gmra.mrb[0].mxu0 %v650
      %v705 = vpop.f32.mrb[0].mxu0
      %v706 = vadd.f32 %v629, %v705
      %v707 = vpop.f32.mrb[0].mxu0
      %v708 = vpop.f32.mrb[0].mxu0
      %v709 = vadd.f32 %v629, %v708
      %v710 = vpop.f32.mrb[0].mxu0
      %711 = vmatprep.mubr.bf16.mxu0 0
      %712 = vmatmul.mubr.bf16.gmra.mrb[0].mxu0 %v653
      %v713 = vpop.f32.mrb[0].mxu0
      %v714 = vadd.f32 %v629, %v713
      %v715 = vpop.f32.mrb[0].mxu0
      %v716 = vpop.f32.mrb[0].mxu0
      %v717 = vadd.f32 %v629, %v716
      %v718 = vpop.f32.mrb[0].mxu0
      %719 = vdwg.mxu0
      %v720 = vld [vmem:[%s1] sm:$0xff]
      %v721 = vld [vmem:[%s1 + $0x8] sm:$0xff]
      %v722 = vld [vmem:[%s1 + $0x10] sm:$0xff]
      %v723 = vld [vmem:[%s1 + $0x18] sm:$0xff]
      %v724 = vld [vmem:[%s1 + $0x20] sm:$0xff]
      %v725 = vld [vmem:[%s1 + $0x28] sm:$0xff]
      %v726 = vld [vmem:[%s1 + $0x30] sm:$0xff]
      %v727 = vld [vmem:[%s1 + $0x38] sm:$0xff]
      %v728 = vld [vmem:[%s1 + $0x40] sm:$0xff]
      %v729 = vld [vmem:[%s1 + $0x48] sm:$0xff]
      %v730 = vld [vmem:[%s1 + $0x50] sm:$0xff]
      %v731 = vld [vmem:[%s1 + $0x58] sm:$0xff]
      %v732 = vld [vmem:[%s1 + $0x60] sm:$0xff]
      %v733 = vld [vmem:[%s1 + $0x68] sm:$0xff]
      %v734 = vld [vmem:[%s1 + $0x70] sm:$0xff]
      %v735 = vld [vmem:[%s1 + $0x78] sm:$0xff]
      %v736 = vld [vmem:[%s1 + $0x80] sm:$0xff]
      %v737 = vld [vmem:[%s1 + $0x88] sm:$0xff]
      %v738 = vld [vmem:[%s1 + $0x90] sm:$0xff]
      %v739 = vld [vmem:[%s1 + $0x98] sm:$0xff]
      %v740 = vld [vmem:[%s1 + $0xa0] sm:$0xff]
      %v741 = vld [vmem:[%s1 + $0xa8] sm:$0xff]
      %v742 = vld [vmem:[%s1 + $0xb0] sm:$0xff]
      %v743 = vld [vmem:[%s1 + $0xb8] sm:$0xff]
      %v744 = vld [vmem:[%s1 + $0xc0] sm:$0xff]
      %v745 = vld [vmem:[%s1 + $0xc8] sm:$0xff]
      %v746 = vld [vmem:[%s1 + $0xd0] sm:$0xff]
      %v747 = vld [vmem:[%s1 + $0xd8] sm:$0xff]
      %v748 = vld [vmem:[%s1 + $0xe0] sm:$0xff]
      %v749 = vld [vmem:[%s1 + $0xe8] sm:$0xff]
      %v750 = vld [vmem:[%s1 + $0xf0] sm:$0xff]
      %v751 = vld [vmem:[%s1 + $0xf8] sm:$0xff]
      %v752 = vpack.c.bf16 %v693, %v690
      %v753 = vpack.c.bf16 %v701, %v698
      %v754 = vpack.c.bf16 %v709, %v706
      %v755 = vpack.c.bf16 %v717, %v714
      %757 = vrot.lane.b32.xlu0 %v752, 96
      %v758 = vpop.permute.xlu0 %757
      %vm759 = vcmask 64512
      %v761 = vsel %vm759, %v752, 0
      %v764 = vsel %vm759, %v758, 0
      %766 = vmatprep.subr.bf16.mxu0 0
      %767 = vmatpush1.bf16.xpose.msra.mxu0 %v764
      %768 = vmatprep.subr.bf16.mxu0 0
      %769 = vmatpush1.bf16.xpose.msra.mxu0 0
      %770 = vmatprep.subr.bf16.mxu0 0
      %771 = vmatpush1.bf16.xpose.msra.mxu0 0
      %772 = vmatprep.subr.bf16.mxu0 0
      %773 = vmatpush1.bf16.xpose.msra.mxu0 0
      %774 = vmatprep.subr.bf16.mxu0 0
      %775 = vmatpush1.bf16.xpose.msra.mxu0 0
      %776 = vmatprep.subr.bf16.mxu0 0
      %777 = vmatpush1.bf16.xpose.msra.mxu0 0
      %778 = vmatprep.subr.bf16.mxu0 0
      %779 = vmatpush1.bf16.xpose.msra.mxu0 0
      %780 = vmatprep.subr.bf16.mxu0 0
      %781 = vmatpush1.bf16.xpose.msra.mxu0 0
      %782 = vmatprep.subr.bf16.mxu0 0
      %783 = vmatpush1.bf16.xpose.msra.mxu0 0
      %784 = vmatprep.subr.bf16.mxu0 0
      %785 = vmatpush1.bf16.xpose.msra.mxu0 0
      %786 = vmatprep.subr.bf16.mxu0 0
      %787 = vmatpush1.bf16.xpose.msra.mxu0 0
      %788 = vmatprep.subr.bf16.mxu0 0
      %789 = vmatpush1.bf16.xpose.msra.mxu0 0
      %790 = vmatprep.subr.bf16.mxu0 0
      %791 = vmatpush1.bf16.xpose.msra.mxu0 0
      %792 = vmatprep.subr.bf16.mxu0 0
      %793 = vmatpush1.bf16.xpose.msra.mxu0 0
      %794 = vmatprep.subr.bf16.mxu0 0
      %795 = vmatpush1.bf16.xpose.msra.mxu0 0
      %796 = vmatprep.subr.bf16.mxu0 0
      %797 = vmatpush1.bf16.xpose.msra.mxu0 0
      %798 = vmatprep.mubr.bf16.mxu0 0
      %799 = vmatmul.mubr.bf16.gmra.mrb[0].mxu0 %v761
      %v800 = vpop.f32.mrb[0].mxu0
      %v801 = vadd.f32 %v720, %v800
      %v802 = vpop.f32.mrb[0].mxu0
      %v803 = vpop.f32.mrb[0].mxu0
      %v804 = vadd.f32 %v721, %v803
      %v805 = vpop.f32.mrb[0].mxu0
      %806 = vdwg.mxu0
      %808 = vrot.lane.b32.xlu0 %v753, 96
      %v809 = vpop.permute.xlu0 %808
      %v811 = vsel %vm759, %v753, 0
      %v814 = vsel %vm759, %v809, 0
      %816 = vmatprep.subr.bf16.mxu0 0
      %817 = vmatpush1.bf16.xpose.msra.mxu0 %v814
      %818 = vmatprep.subr.bf16.mxu0 0
      %819 = vmatpush1.bf16.xpose.msra.mxu0 0
      %820 = vmatprep.subr.bf16.mxu0 0
      %821 = vmatpush1.bf16.xpose.msra.mxu0 0
      %822 = vmatprep.subr.bf16.mxu0 0
      %823 = vmatpush1.bf16.xpose.msra.mxu0 0
      %824 = vmatprep.subr.bf16.mxu0 0
      %825 = vmatpush1.bf16.xpose.msra.mxu0 0
      %826 = vmatprep.subr.bf16.mxu0 0
      %827 = vmatpush1.bf16.xpose.msra.mxu0 0
      %828 = vmatprep.subr.bf16.mxu0 0
      %829 = vmatpush1.bf16.xpose.msra.mxu0 0
      %830 = vmatprep.subr.bf16.mxu0 0
      %831 = vmatpush1.bf16.xpose.msra.mxu0 0
      %832 = vmatprep.subr.bf16.mxu0 0
      %833 = vmatpush1.bf16.xpose.msra.mxu0 0
      %834 = vmatprep.subr.bf16.mxu0 0
      %835 = vmatpush1.bf16.xpose.msra.mxu0 0
      %836 = vmatprep.subr.bf16.mxu0 0
      %837 = vmatpush1.bf16.xpose.msra.mxu0 0
      %838 = vmatprep.subr.bf16.mxu0 0
      %839 = vmatpush1.bf16.xpose.msra.mxu0 0
      %840 = vmatprep.subr.bf16.mxu0 0
      %841 = vmatpush1.bf16.xpose.msra.mxu0 0
      %842 = vmatprep.subr.bf16.mxu0 0
      %843 = vmatpush1.bf16.xpose.msra.mxu0 0
      %844 = vmatprep.subr.bf16.mxu0 0
      %845 = vmatpush1.bf16.xpose.msra.mxu0 0
      %846 = vmatprep.subr.bf16.mxu0 0
      %847 = vmatpush1.bf16.xpose.msra.mxu0 0
      %848 = vmatprep.mubr.bf16.mxu0 0
      %849 = vmatmul.mubr.bf16.gmra.mrb[0].mxu0 %v811
      %v850 = vpop.f32.mrb[0].mxu0
      %v851 = vadd.f32 %v728, %v850
      %v852 = vpop.f32.mrb[0].mxu0
      %v853 = vpop.f32.mrb[0].mxu0
      %v854 = vadd.f32 %v729, %v853
      %v855 = vpop.f32.mrb[0].mxu0
      %856 = vdwg.mxu0
      %858 = vrot.lane.b32.xlu0 %v754, 96
      %v859 = vpop.permute.xlu0 %858
      %v861 = vsel %vm759, %v754, 0
      %v864 = vsel %vm759, %v859, 0
      %866 = vmatprep.subr.bf16.mxu0 0
      %867 = vmatpush1.bf16.xpose.msra.mxu0 %v864
      %868 = vmatprep.subr.bf16.mxu0 0
      %869 = vmatpush1.bf16.xpose.msra.mxu0 0
      %870 = vmatprep.subr.bf16.mxu0 0
      %871 = vmatpush1.bf16.xpose.msra.mxu0 0
      %872 = vmatprep.subr.bf16.mxu0 0
      %873 = vmatpush1.bf16.xpose.msra.mxu0 0
      %874 = vmatprep.subr.bf16.mxu0 0
      %875 = vmatpush1.bf16.xpose.msra.mxu0 0
      %876 = vmatprep.subr.bf16.mxu0 0
      %877 = vmatpush1.bf16.xpose.msra.mxu0 0
      %878 = vmatprep.subr.bf16.mxu0 0
      %879 = vmatpush1.bf16.xpose.msra.mxu0 0
      %880 = vmatprep.subr.bf16.mxu0 0
      %881 = vmatpush1.bf16.xpose.msra.mxu0 0
      %882 = vmatprep.subr.bf16.mxu0 0
      %883 = vmatpush1.bf16.xpose.msra.mxu0 0
      %884 = vmatprep.subr.bf16.mxu0 0
      %885 = vmatpush1.bf16.xpose.msra.mxu0 0
      %886 = vmatprep.subr.bf16.mxu0 0
      %887 = vmatpush1.bf16.xpose.msra.mxu0 0
      %888 = vmatprep.subr.bf16.mxu0 0
      %889 = vmatpush1.bf16.xpose.msra.mxu0 0
      %890 = vmatprep.subr.bf16.mxu0 0
      %891 = vmatpush1.bf16.xpose.msra.mxu0 0
      %892 = vmatprep.subr.bf16.mxu0 0
      %893 = vmatpush1.bf16.xpose.msra.mxu0 0
      %894 = vmatprep.subr.bf16.mxu0 0
      %895 = vmatpush1.bf16.xpose.msra.mxu0 0
      %896 = vmatprep.subr.bf16.mxu0 0
      %897 = vmatpush1.bf16.xpose.msra.mxu0 0
      %898 = vmatprep.mubr.bf16.mxu0 0
      %899 = vmatmul.mubr.bf16.gmra.mrb[0].mxu0 %v861
      %v900 = vpop.f32.mrb[0].mxu0
      %v901 = vadd.f32 %v736, %v900
      %v902 = vpop.f32.mrb[0].mxu0
      %v903 = vpop.f32.mrb[0].mxu0
      %v904 = vadd.f32 %v737, %v903
      %v905 = vpop.f32.mrb[0].mxu0
      %906 = vdwg.mxu0
      %908 = vrot.lane.b32.xlu0 %v755, 96
      %v909 = vpop.permute.xlu0 %908
      %v911 = vsel %vm759, %v755, 0
      %v914 = vsel %vm759, %v909, 0
      %916 = vmatprep.subr.bf16.mxu0 0
      %917 = vmatpush1.bf16.xpose.msra.mxu0 %v914
      %918 = vmatprep.subr.bf16.mxu0 0
      %919 = vmatpush1.bf16.xpose.msra.mxu0 0
      %920 = vmatprep.subr.bf16.mxu0 0
      %921 = vmatpush1.bf16.xpose.msra.mxu0 0
      %922 = vmatprep.subr.bf16.mxu0 0
      %923 = vmatpush1.bf16.xpose.msra.mxu0 0
      %924 = vmatprep.subr.bf16.mxu0 0
      %925 = vmatpush1.bf16.xpose.msra.mxu0 0
      %926 = vmatprep.subr.bf16.mxu0 0
      %927 = vmatpush1.bf16.xpose.msra.mxu0 0
      %928 = vmatprep.subr.bf16.mxu0 0
      %929 = vmatpush1.bf16.xpose.msra.mxu0 0
      %930 = vmatprep.subr.bf16.mxu0 0
      %931 = vmatpush1.bf16.xpose.msra.mxu0 0
      %932 = vmatprep.subr.bf16.mxu0 0
      %933 = vmatpush1.bf16.xpose.msra.mxu0 0
      %934 = vmatprep.subr.bf16.mxu0 0
      %935 = vmatpush1.bf16.xpose.msra.mxu0 0
      %936 = vmatprep.subr.bf16.mxu0 0
      %937 = vmatpush1.bf16.xpose.msra.mxu0 0
      %938 = vmatprep.subr.bf16.mxu0 0
      %939 = vmatpush1.bf16.xpose.msra.mxu0 0
      %940 = vmatprep.subr.bf16.mxu0 0
      %941 = vmatpush1.bf16.xpose.msra.mxu0 0
      %942 = vmatprep.subr.bf16.mxu0 0
      %943 = vmatpush1.bf16.xpose.msra.mxu0 0
      %944 = vmatprep.subr.bf16.mxu0 0
      %945 = vmatpush1.bf16.xpose.msra.mxu0 0
      %946 = vmatprep.subr.bf16.mxu0 0
      %947 = vmatpush1.bf16.xpose.msra.mxu0 0
      %948 = vmatprep.mubr.bf16.mxu0 0
      %949 = vmatmul.mubr.bf16.gmra.mrb[0].mxu0 %v911
      %v950 = vpop.f32.mrb[0].mxu0
      %v951 = vadd.f32 %v744, %v950
      %v952 = vpop.f32.mrb[0].mxu0
      %v953 = vpop.f32.mrb[0].mxu0
      %v954 = vadd.f32 %v745, %v953
      %v955 = vpop.f32.mrb[0].mxu0
      %956 = vdwg.mxu0
      %vm957 = vcmask 130048
      %v958 = vsel %vm957, %v801, -inf
      %959 = vmax.xlane.f32.xlu0 %v958
      %v960 = vpop.xlane.xlu0 %959
      %v961 = vsel %vm957, %v804, -inf
      %962 = vmax.xlane.f32.xlu0 %v961
      %v963 = vpop.xlane.xlu0 %962
      %v964 = vsel %vm957, %v851, -inf
      %965 = vmax.xlane.f32.xlu0 %v964
      %v966 = vpop.xlane.xlu0 %965
      %v967 = vsel %vm957, %v854, -inf
      %968 = vmax.xlane.f32.xlu0 %v967
      %v969 = vpop.xlane.xlu0 %968
      %v970 = vsel %vm957, %v901, -inf
      %971 = vmax.xlane.f32.xlu0 %v970
      %v972 = vpop.xlane.xlu0 %971
      %v973 = vsel %vm957, %v904, -inf
      %974 = vmax.xlane.f32.xlu0 %v973
      %v975 = vpop.xlane.xlu0 %974
      %v976 = vsel %vm957, %v951, -inf
      %977 = vmax.xlane.f32.xlu0 %v976
      %v978 = vpop.xlane.xlu0 %977
      %v979 = vsel %vm957, %v954, -inf
      %980 = vmax.xlane.f32.xlu0 %v979
      %v981 = vpop.xlane.xlu0 %980
      %v982 = vsub.f32 %v801, %v960
      %v983 = vsub.f32 %v804, %v963
      %v984 = vsub.f32 %v851, %v966
      %v985 = vsub.f32 %v854, %v969
      %v986 = vsub.f32 %v901, %v972
      %v987 = vsub.f32 %v904, %v975
      %v988 = vsub.f32 %v951, %v978
      %v989 = vsub.f32 %v954, %v981
      %v990 = vmul.f32 %v982, 1.442695
      %v991 = vpow.pop %v990
      %v992 = vmul.f32 %v983, 1.442695
      %v993 = vpow.pop %v992
      %v994 = vmul.f32 %v984, 1.442695
      %v995 = vpow.pop %v994
      %v996 = vmul.f32 %v985, 1.442695
      %v997 = vpow.pop %v996
      %v998 = vmul.f32 %v986, 1.442695
      %v999 = vpow.pop %v998
      %v1000 = vmul.f32 %v987, 1.442695
      %v1001 = vpow.pop %v1000
      %v1002 = vmul.f32 %v988, 1.442695
      %v1003 = vpow.pop %v1002
      %v1004 = vmul.f32 %v989, 1.442695
      %v1005 = vpow.pop %v1004
      %v1006 = vsel %vm957, %v991, 0.0
      %1007 = vadd.xlane.f32.xlu0 %v1006
      %v1008 = vpop.xlane.xlu0 %1007
      %v1009 = vsel %vm957, %v993, 0.0
      %1010 = vadd.xlane.f32.xlu0 %v1009
      %v1011 = vpop.xlane.xlu0 %1010
      %v1012 = vsel %vm957, %v995, 0.0
      %1013 = vadd.xlane.f32.xlu0 %v1012
      %v1014 = vpop.xlane.xlu0 %1013
      %v1015 = vsel %vm957, %v997, 0.0
      %1016 = vadd.xlane.f32.xlu0 %v1015
      %v1017 = vpop.xlane.xlu0 %1016
      %v1018 = vsel %vm957, %v999, 0.0
      %1019 = vadd.xlane.f32.xlu0 %v1018
      %v1020 = vpop.xlane.xlu0 %1019
      %v1021 = vsel %vm957, %v1001, 0.0
      %1022 = vadd.xlane.f32.xlu0 %v1021
      %v1023 = vpop.xlane.xlu0 %1022
      %v1024 = vsel %vm957, %v1003, 0.0
      %1025 = vadd.xlane.f32.xlu0 %v1024
      %v1026 = vpop.xlane.xlu0 %1025
      %v1027 = vsel %vm957, %v1005, 0.0
      %1028 = vadd.xlane.f32.xlu0 %v1027
      %v1029 = vpop.xlane.xlu0 %1028
      %v1030 = vrcp.pop %v1008
      %v1031 = vrcp.pop %v1011
      %v1032 = vrcp.pop %v1014
      %v1033 = vrcp.pop %v1017
      %v1034 = vrcp.pop %v1020
      %v1035 = vrcp.pop %v1023
      %v1036 = vrcp.pop %v1026
      %v1037 = vrcp.pop %v1029
      %v1038 = vmul.f32 %v991, %v1030
      %v1039 = vmul.f32 %v993, %v1031
      %v1040 = vmul.f32 %v995, %v1032
      %v1041 = vmul.f32 %v997, %v1033
      %v1042 = vmul.f32 %v999, %v1034
      %v1043 = vmul.f32 %v1001, %v1035
      %v1044 = vmul.f32 %v1003, %v1036
      %v1045 = vmul.f32 %v1005, %v1037
      %v1046 = vpack.c.bf16 %v1039, %v1038
      %v1047 = vpack.c.bf16 %v1041, %v1040
      %v1048 = vpack.c.bf16 %v1043, %v1042
      %v1049 = vpack.c.bf16 %v1045, %v1044
      %1050 = vrot.lane.b32.xlu0 %v752, 64
      %v1051 = vpop.permute.xlu0 %1050
      %v1054 = vsel %vm957, %v1046, 0
      %1056 = vmatprep.subr.bf16.mxu0 0
      %1057 = vmatpush1.bf16.msra.mxu0 %v1051
      %1058 = vmatprep.subr.bf16.mxu0 0
      %1059 = vmatpush1.bf16.msra.mxu0 0
      %1060 = vmatprep.subr.bf16.mxu0 0
      %1061 = vmatpush1.bf16.msra.mxu0 0
      %1062 = vmatprep.subr.bf16.mxu0 0
      %1063 = vmatpush1.bf16.msra.mxu0 0
      %1064 = vmatprep.subr.bf16.mxu0 0
      %1065 = vmatpush1.bf16.msra.mxu0 0
      %1066 = vmatprep.subr.bf16.mxu0 0
      %1067 = vmatpush1.bf16.msra.mxu0 0
      %1068 = vmatprep.subr.bf16.mxu0 0
      %1069 = vmatpush1.bf16.msra.mxu0 0
      %1070 = vmatprep.subr.bf16.mxu0 0
      %1071 = vmatpush1.bf16.msra.mxu0 0
      %1072 = vmatprep.subr.bf16.mxu0 0
      %1073 = vmatpush1.bf16.msra.mxu0 0
      %1074 = vmatprep.subr.bf16.mxu0 0
      %1075 = vmatpush1.bf16.msra.mxu0 0
      %1076 = vmatprep.subr.bf16.mxu0 0
      %1077 = vmatpush1.bf16.msra.mxu0 0
      %1078 = vmatprep.subr.bf16.mxu0 0
      %1079 = vmatpush1.bf16.msra.mxu0 0
      %1080 = vmatprep.subr.bf16.mxu0 0
      %1081 = vmatpush1.bf16.msra.mxu0 0
      %1082 = vmatprep.subr.bf16.mxu0 0
      %1083 = vmatpush1.bf16.msra.mxu0 0
      %1084 = vmatprep.subr.bf16.mxu0 0
      %1085 = vmatpush1.bf16.msra.mxu0 0
      %1086 = vmatprep.subr.bf16.mxu0 0
      %1087 = vmatpush1.bf16.msra.mxu0 0
      %1088 = vmatprep.mubr.bf16.mxu0 0
      %1089 = vmatmul.mubr.bf16.gmra.mrb[0].mxu0 %v1054
      %v1090 = vpop.f32.mrb[0].mxu0
      %v1091 = vadd.f32 0.0, %v1090
      %v1092 = vpop.f32.mrb[0].mxu0
      %v1093 = vpop.f32.mrb[0].mxu0
      %v1094 = vadd.f32 0.0, %v1093
      %v1095 = vpop.f32.mrb[0].mxu0
      %1096 = vdwg.mxu0
      %1097 = vrot.lane.b32.xlu0 %v753, 64
      %v1098 = vpop.permute.xlu0 %1097
      %v1101 = vsel %vm957, %v1047, 0
      %1103 = vmatprep.subr.bf16.mxu0 0
      %1104 = vmatpush1.bf16.msra.mxu0 %v1098
      %1105 = vmatprep.subr.bf16.mxu0 0
      %1106 = vmatpush1.bf16.msra.mxu0 0
      %1107 = vmatprep.subr.bf16.mxu0 0
      %1108 = vmatpush1.bf16.msra.mxu0 0
      %1109 = vmatprep.subr.bf16.mxu0 0
      %1110 = vmatpush1.bf16.msra.mxu0 0
      %1111 = vmatprep.subr.bf16.mxu0 0
      %1112 = vmatpush1.bf16.msra.mxu0 0
      %1113 = vmatprep.subr.bf16.mxu0 0
      %1114 = vmatpush1.bf16.msra.mxu0 0
      %1115 = vmatprep.subr.bf16.mxu0 0
      %1116 = vmatpush1.bf16.msra.mxu0 0
      %1117 = vmatprep.subr.bf16.mxu0 0
      %1118 = vmatpush1.bf16.msra.mxu0 0
      %1119 = vmatprep.subr.bf16.mxu0 0
      %1120 = vmatpush1.bf16.msra.mxu0 0
      %1121 = vmatprep.subr.bf16.mxu0 0
      %1122 = vmatpush1.bf16.msra.mxu0 0
      %1123 = vmatprep.subr.bf16.mxu0 0
      %1124 = vmatpush1.bf16.msra.mxu0 0
      %1125 = vmatprep.subr.bf16.mxu0 0
      %1126 = vmatpush1.bf16.msra.mxu0 0
      %1127 = vmatprep.subr.bf16.mxu0 0
      %1128 = vmatpush1.bf16.msra.mxu0 0
      %1129 = vmatprep.subr.bf16.mxu0 0
      %1130 = vmatpush1.bf16.msra.mxu0 0
      %1131 = vmatprep.subr.bf16.mxu0 0
      %1132 = vmatpush1.bf16.msra.mxu0 0
      %1133 = vmatprep.subr.bf16.mxu0 0
      %1134 = vmatpush1.bf16.msra.mxu0 0
      %1135 = vmatprep.mubr.bf16.mxu0 0
      %1136 = vmatmul.mubr.bf16.gmra.mrb[0].mxu0 %v1101
      %v1137 = vpop.f32.mrb[0].mxu0
      %v1138 = vadd.f32 0.0, %v1137
      %v1139 = vpop.f32.mrb[0].mxu0
      %v1140 = vpop.f32.mrb[0].mxu0
      %v1141 = vadd.f32 0.0, %v1140
      %v1142 = vpop.f32.mrb[0].mxu0
      %1143 = vdwg.mxu0
      %1144 = vrot.lane.b32.xlu0 %v754, 64
      %v1145 = vpop.permute.xlu0 %1144
      %v1148 = vsel %vm957, %v1048, 0
      %1150 = vmatprep.subr.bf16.mxu0 0
      %1151 = vmatpush1.bf16.msra.mxu0 %v1145
      %1152 = vmatprep.subr.bf16.mxu0 0
      %1153 = vmatpush1.bf16.msra.mxu0 0
      %1154 = vmatprep.subr.bf16.mxu0 0
      %1155 = vmatpush1.bf16.msra.mxu0 0
      %1156 = vmatprep.subr.bf16.mxu0 0
      %1157 = vmatpush1.bf16.msra.mxu0 0
      %1158 = vmatprep.subr.bf16.mxu0 0
      %1159 = vmatpush1.bf16.msra.mxu0 0
      %1160 = vmatprep.subr.bf16.mxu0 0
      %1161 = vmatpush1.bf16.msra.mxu0 0
      %1162 = vmatprep.subr.bf16.mxu0 0
      %1163 = vmatpush1.bf16.msra.mxu0 0
      %1164 = vmatprep.subr.bf16.mxu0 0
      %1165 = vmatpush1.bf16.msra.mxu0 0
      %1166 = vmatprep.subr.bf16.mxu0 0
      %1167 = vmatpush1.bf16.msra.mxu0 0
      %1168 = vmatprep.subr.bf16.mxu0 0
      %1169 = vmatpush1.bf16.msra.mxu0 0
      %1170 = vmatprep.subr.bf16.mxu0 0
      %1171 = vmatpush1.bf16.msra.mxu0 0
      %1172 = vmatprep.subr.bf16.mxu0 0
      %1173 = vmatpush1.bf16.msra.mxu0 0
      %1174 = vmatprep.subr.bf16.mxu0 0
      %1175 = vmatpush1.bf16.msra.mxu0 0
      %1176 = vmatprep.subr.bf16.mxu0 0
      %1177 = vmatpush1.bf16.msra.mxu0 0
      %1178 = vmatprep.subr.bf16.mxu0 0
      %1179 = vmatpush1.bf16.msra.mxu0 0
      %1180 = vmatprep.subr.bf16.mxu0 0
      %1181 = vmatpush1.bf16.msra.mxu0 0
      %1182 = vmatprep.mubr.bf16.mxu0 0
      %1183 = vmatmul.mubr.bf16.gmra.mrb[0].mxu0 %v1148
      %v1184 = vpop.f32.mrb[0].mxu0
      %v1185 = vadd.f32 0.0, %v1184
      %v1186 = vpop.f32.mrb[0].mxu0
      %v1187 = vpop.f32.mrb[0].mxu0
      %v1188 = vadd.f32 0.0, %v1187
      %v1189 = vpop.f32.mrb[0].mxu0
      %1190 = vdwg.mxu0
      %1191 = vrot.lane.b32.xlu0 %v755, 64
      %v1192 = vpop.permute.xlu0 %1191
      %v1195 = vsel %vm957, %v1049, 0
      %1197 = vmatprep.subr.bf16.mxu0 0
      %1198 = vmatpush1.bf16.msra.mxu0 %v1192
      %1199 = vmatprep.subr.bf16.mxu0 0
      %1200 = vmatpush1.bf16.msra.mxu0 0
      %1201 = vmatprep.subr.bf16.mxu0 0
      %1202 = vmatpush1.bf16.msra.mxu0 0
      %1203 = vmatprep.subr.bf16.mxu0 0
      %1204 = vmatpush1.bf16.msra.mxu0 0
      %1205 = vmatprep.subr.bf16.mxu0 0
      %1206 = vmatpush1.bf16.msra.mxu0 0
      %1207 = vmatprep.subr.bf16.mxu0 0
      %1208 = vmatpush1.bf16.msra.mxu0 0
      %1209 = vmatprep.subr.bf16.mxu0 0
      %1210 = vmatpush1.bf16.msra.mxu0 0
      %1211 = vmatprep.subr.bf16.mxu0 0
      %1212 = vmatpush1.bf16.msra.mxu0 0
      %1213 = vmatprep.subr.bf16.mxu0 0
      %1214 = vmatpush1.bf16.msra.mxu0 0
      %1215 = vmatprep.subr.bf16.mxu0 0
      %1216 = vmatpush1.bf16.msra.mxu0 0
      %1217 = vmatprep.subr.bf16.mxu0 0
      %1218 = vmatpush1.bf16.msra.mxu0 0
      %1219 = vmatprep.subr.bf16.mxu0 0
      %1220 = vmatpush1.bf16.msra.mxu0 0
      %1221 = vmatprep.subr.bf16.mxu0 0
      %1222 = vmatpush1.bf16.msra.mxu0 0
      %1223 = vmatprep.subr.bf16.mxu0 0
      %1224 = vmatpush1.bf16.msra.mxu0 0
      %1225 = vmatprep.subr.bf16.mxu0 0
      %1226 = vmatpush1.bf16.msra.mxu0 0
      %1227 = vmatprep.subr.bf16.mxu0 0
      %1228 = vmatpush1.bf16.msra.mxu0 0
      %1229 = vmatprep.mubr.bf16.mxu0 0
      %1230 = vmatmul.mubr.bf16.gmra.mrb[0].mxu0 %v1195
      %v1231 = vpop.f32.mrb[0].mxu0
      %v1232 = vadd.f32 0.0, %v1231
      %v1233 = vpop.f32.mrb[0].mxu0
      %v1234 = vpop.f32.mrb[0].mxu0
      %v1235 = vadd.f32 0.0, %v1234
      %v1236 = vpop.f32.mrb[0].mxu0
      %1237 = vdwg.mxu0
      %1238 = vst.msk [vmem:[#allocation2] sm:$0xff] %vm759, %v1091
      %1239 = vst.msk [vmem:[#allocation2 + $0x8] sm:$0xff] %vm759, %v1094
      %1240 = vst.msk [vmem:[#allocation2 + $0x10] sm:$0xff] %vm759, %v1138
      %1241 = vst.msk [vmem:[#allocation2 + $0x18] sm:$0xff] %vm759, %v1141
      %1242 = vst.msk [vmem:[#allocation2 + $0x20] sm:$0xff] %vm759, %v1185
      %1243 = vst.msk [vmem:[#allocation2 + $0x28] sm:$0xff] %vm759, %v1188
      %1244 = vst.msk [vmem:[#allocation2 + $0x30] sm:$0xff] %vm759, %v1232
      %1245 = vst.msk [vmem:[#allocation2 + $0x38] sm:$0xff] %vm759, %v1235
      %1246 = vrot.lane.b32.xlu0 %v752, 120
      %v1247 = vpop.permute.xlu0 %1246
      %1248 = vrot.lane.b32.xlu0 %v752, 88
      %v1249 = vpop.permute.xlu0 %1248
      %v1251 = vsel %vm759, %v1247, 0
      %v1254 = vsel %vm759, %v1249, 0
      %1256 = vmatprep.subr.bf16.mxu0 0
      %1257 = vmatpush1.bf16.xpose.msra.mxu0 %v1254
      %1258 = vmatprep.subr.bf16.mxu0 0
      %1259 = vmatpush1.bf16.xpose.msra.mxu0 0
      %1260 = vmatprep.subr.bf16.mxu0 0
      %1261 = vmatpush1.bf16.xpose.msra.mxu0 0
      %1262 = vmatprep.subr.bf16.mxu0 0
      %1263 = vmatpush1.bf16.xpose.msra.mxu0 0
      %1264 = vmatprep.subr.bf16.mxu0 0
      %1265 = vmatpush1.bf16.xpose.msra.mxu0 0
      %1266 = vmatprep.subr.bf16.mxu0 0
      %1267 = vmatpush1.bf16.xpose.msra.mxu0 0
      %1268 = vmatprep.subr.bf16.mxu0 0
      %1269 = vmatpush1.bf16.xpose.msra.mxu0 0
      %1270 = vmatprep.subr.bf16.mxu0 0
      %1271 = vmatpush1.bf16.xpose.msra.mxu0 0
      %1272 = vmatprep.subr.bf16.mxu0 0
      %1273 = vmatpush1.bf16.xpose.msra.mxu0 0
      %1274 = vmatprep.subr.bf16.mxu0 0
      %1275 = vmatpush1.bf16.xpose.msra.mxu0 0
      %1276 = vmatprep.subr.bf16.mxu0 0
      %1277 = vmatpush1.bf16.xpose.msra.mxu0 0
      %1278 = vmatprep.subr.bf16.mxu0 0
      %1279 = vmatpush1.bf16.xpose.msra.mxu0 0
      %1280 = vmatprep.subr.bf16.mxu0 0
      %1281 = vmatpush1.bf16.xpose.msra.mxu0 0
      %1282 = vmatprep.subr.bf16.mxu0 0
      %1283 = vmatpush1.bf16.xpose.msra.mxu0 0
      %1284 = vmatprep.subr.bf16.mxu0 0
      %1285 = vmatpush1.bf16.xpose.msra.mxu0 0
      %1286 = vmatprep.subr.bf16.mxu0 0
      %1287 = vmatpush1.bf16.xpose.msra.mxu0 0
      %1288 = vmatprep.mubr.bf16.mxu0 0
      %1289 = vmatmul.mubr.bf16.gmra.mrb[0].mxu0 %v1251
      %v1290 = vpop.f32.mrb[0].mxu0
      %v1291 = vadd.f32 %v722, %v1290
      %v1292 = vpop.f32.mrb[0].mxu0
      %v1293 = vpop.f32.mrb[0].mxu0
      %v1294 = vadd.f32 %v723, %v1293
      %v1295 = vpop.f32.mrb[0].mxu0
      %1296 = vdwg.mxu0
      %1297 = vrot.lane.b32.xlu0 %v753, 120
      %v1298 = vpop.permute.xlu0 %1297
      %1299 = vrot.lane.b32.xlu0 %v753, 88
      %v1300 = vpop.permute.xlu0 %1299
      %v1302 = vsel %vm759, %v1298, 0
      %v1305 = vsel %vm759, %v1300, 0
      %1307 = vmatprep.subr.bf16.mxu0 0
      %1308 = vmatpush1.bf16.xpose.msra.mxu0 %v1305
      %1309 = vmatprep.subr.bf16.mxu0 0
      %1310 = vmatpush1.bf16.xpose.msra.mxu0 0
      %1311 = vmatprep.subr.bf16.mxu0 0
      %1312 = vmatpush1.bf16.xpose.msra.mxu0 0
      %1313 = vmatprep.subr.bf16.mxu0 0
      %1314 = vmatpush1.bf16.xpose.msra.mxu0 0
      %1315 = vmatprep.subr.bf16.mxu0 0
      %1316 = vmatpush1.bf16.xpose.msra.mxu0 0
      %1317 = vmatprep.subr.bf16.mxu0 0
      %1318 = vmatpush1.bf16.xpose.msra.mxu0 0
      %1319 = vmatprep.subr.bf16.mxu0 0
      %1320 = vmatpush1.bf16.xpose.msra.mxu0 0
      %1321 = vmatprep.subr.bf16.mxu0 0
      %1322 = vmatpush1.bf16.xpose.msra.mxu0 0
      %1323 = vmatprep.subr.bf16.mxu0 0
      %1324 = vmatpush1.bf16.xpose.msra.mxu0 0
      %1325 = vmatprep.subr.bf16.mxu0 0
      %1326 = vmatpush1.bf16.xpose.msra.mxu0 0
      %1327 = vmatprep.subr.bf16.mxu0 0
      %1328 = vmatpush1.bf16.xpose.msra.mxu0 0
      %1329 = vmatprep.subr.bf16.mxu0 0
      %1330 = vmatpush1.bf16.xpose.msra.mxu0 0
      %1331 = vmatprep.subr.bf16.mxu0 0
      %1332 = vmatpush1.bf16.xpose.msra.mxu0 0
      %1333 = vmatprep.subr.bf16.mxu0 0
      %1334 = vmatpush1.bf16.xpose.msra.mxu0 0
      %1335 = vmatprep.subr.bf16.mxu0 0
      %1336 = vmatpush1.bf16.xpose.msra.mxu0 0
      %1337 = vmatprep.subr.bf16.mxu0 0
      %1338 = vmatpush1.bf16.xpose.msra.mxu0 0
      %1339 = vmatprep.mubr.bf16.mxu0 0
      %1340 = vmatmul.mubr.bf16.gmra.mrb[0].mxu0 %v1302
      %v1341 = vpop.f32.mrb[0].mxu0
      %v1342 = vadd.f32 %v730, %v1341
      %v1343 = vpop.f32.mrb[0].mxu0
      %v1344 = vpop.f32.mrb[0].mxu0
      %v1345 = vadd.f32 %v731, %v1344
      %v1346 = vpop.f32.mrb[0].mxu0
      %1347 = vdwg.mxu0
      %1348 = vrot.lane.b32.xlu0 %v754, 120
      %v1349 = vpop.permute.xlu0 %1348
      %1350 = vrot.lane.b32.xlu0 %v754, 88
      %v1351 = vpop.permute.xlu0 %1350
      %v1353 = vsel %vm759, %v1349, 0
      %v1356 = vsel %vm759, %v1351, 0
      %1358 = vmatprep.subr.bf16.mxu0 0
      %1359 = vmatpush1.bf16.xpose.msra.mxu0 %v1356
      %1360 = vmatprep.subr.bf16.mxu0 0
      %1361 = vmatpush1.bf16.xpose.msra.mxu0 0
      %1362 = vmatprep.subr.bf16.mxu0 0
      %1363 = vmatpush1.bf16.xpose.msra.mxu0 0
      %1364 = vmatprep.subr.bf16.mxu0 0
      %1365 = vmatpush1.bf16.xpose.msra.mxu0 0
      %1366 = vmatprep.subr.bf16.mxu0 0
      %1367 = vmatpush1.bf16.xpose.msra.mxu0 0
      %1368 = vmatprep.subr.bf16.mxu0 0
      %1369 = vmatpush1.bf16.xpose.msra.mxu0 0
      %1370 = vmatprep.subr.bf16.mxu0 0
      %1371 = vmatpush1.bf16.xpose.msra.mxu0 0
      %1372 = vmatprep.subr.bf16.mxu0 0
      %1373 = vmatpush1.bf16.xpose.msra.mxu0 0
      %1374 = vmatprep.subr.bf16.mxu0 0
      %1375 = vmatpush1.bf16.xpose.msra.mxu0 0
      %1376 = vmatprep.subr.bf16.mxu0 0
      %1377 = vmatpush1.bf16.xpose.msra.mxu0 0
      %1378 = vmatprep.subr.bf16.mxu0 0
      %1379 = vmatpush1.bf16.xpose.msra.mxu0 0
      %1380 = vmatprep.subr.bf16.mxu0 0
      %1381 = vmatpush1.bf16.xpose.msra.mxu0 0
      %1382 = vmatprep.subr.bf16.mxu0 0
      %1383 = vmatpush1.bf16.xpose.msra.mxu0 0
      %1384 = vmatprep.subr.bf16.mxu0 0
      %1385 = vmatpush1.bf16.xpose.msra.mxu0 0
      %1386 = vmatprep.subr.bf16.mxu0 0
      %1387 = vmatpush1.bf16.xpose.msra.mxu0 0
      %1388 = vmatprep.subr.bf16.mxu0 0
      %1389 = vmatpush1.bf16.xpose.msra.mxu0 0
      %1390 = vmatprep.mubr.bf16.mxu0 0
      %1391 = vmatmul.mubr.bf16.gmra.mrb[0].mxu0 %v1353
      %v1392 = vpop.f32.mrb[0].mxu0
      %v1393 = vadd.f32 %v738, %v1392
      %v1394 = vpop.f32.mrb[0].mxu0
      %v1395 = vpop.f32.mrb[0].mxu0
      %v1396 = vadd.f32 %v739, %v1395
      %v1397 = vpop.f32.mrb[0].mxu0
      %1398 = vdwg.mxu0
      %1399 = vrot.lane.b32.xlu0 %v755, 120
      %v1400 = vpop.permute.xlu0 %1399
      %1401 = vrot.lane.b32.xlu0 %v755, 88
      %v1402 = vpop.permute.xlu0 %1401
      %v1404 = vsel %vm759, %v1400, 0
      %v1407 = vsel %vm759, %v1402, 0
      %1409 = vmatprep.subr.bf16.mxu0 0
      %1410 = vmatpush1.bf16.xpose.msra.mxu0 %v1407
      %1411 = vmatprep.subr.bf16.mxu0 0
      %1412 = vmatpush1.bf16.xpose.msra.mxu0 0
      %1413 = vmatprep.subr.bf16.mxu0 0
      %1414 = vmatpush1.bf16.xpose.msra.mxu0 0
      %1415 = vmatprep.subr.bf16.mxu0 0
      %1416 = vmatpush1.bf16.xpose.msra.mxu0 0
      %1417 = vmatprep.subr.bf16.mxu0 0
      %1418 = vmatpush1.bf16.xpose.msra.mxu0 0
      %1419 = vmatprep.subr.bf16.mxu0 0
      %1420 = vmatpush1.bf16.xpose.msra.mxu0 0
      %1421 = vmatprep.subr.bf16.mxu0 0
      %1422 = vmatpush1.bf16.xpose.msra.mxu0 0
      %1423 = vmatprep.subr.bf16.mxu0 0
      %1424 = vmatpush1.bf16.xpose.msra.mxu0 0
      %1425 = vmatprep.subr.bf16.mxu0 0
      %1426 = vmatpush1.bf16.xpose.msra.mxu0 0
      %1427 = vmatprep.subr.bf16.mxu0 0
      %1428 = vmatpush1.bf16.xpose.msra.mxu0 0
      %1429 = vmatprep.subr.bf16.mxu0 0
      %1430 = vmatpush1.bf16.xpose.msra.mxu0 0
      %1431 = vmatprep.subr.bf16.mxu0 0
      %1432 = vmatpush1.bf16.xpose.msra.mxu0 0
      %1433 = vmatprep.subr.bf16.mxu0 0
      %1434 = vmatpush1.bf16.xpose.msra.mxu0 0
      %1435 = vmatprep.subr.bf16.mxu0 0
      %1436 = vmatpush1.bf16.xpose.msra.mxu0 0
      %1437 = vmatprep.subr.bf16.mxu0 0
      %1438 = vmatpush1.bf16.xpose.msra.mxu0 0
      %1439 = vmatprep.subr.bf16.mxu0 0
      %1440 = vmatpush1.bf16.xpose.msra.mxu0 0
      %1441 = vmatprep.mubr.bf16.mxu0 0
      %1442 = vmatmul.mubr.bf16.gmra.mrb[0].mxu0 %v1404
      %v1443 = vpop.f32.mrb[0].mxu0
      %v1444 = vadd.f32 %v746, %v1443
      %v1445 = vpop.f32.mrb[0].mxu0
      %v1446 = vpop.f32.mrb[0].mxu0
      %v1447 = vadd.f32 %v747, %v1446
      %v1448 = vpop.f32.mrb[0].mxu0
      %1449 = vdwg.mxu0
      %v1450 = vsel %vm957, %v1291, -inf
      %1451 = vmax.xlane.f32.xlu0 %v1450
      %v1452 = vpop.xlane.xlu0 %1451
      %v1453 = vsel %vm957, %v1294, -inf
      %1454 = vmax.xlane.f32.xlu0 %v1453
      %v1455 = vpop.xlane.xlu0 %1454
      %v1456 = vsel %vm957, %v1342, -inf
      %1457 = vmax.xlane.f32.xlu0 %v1456
      %v1458 = vpop.xlane.xlu0 %1457
      %v1459 = vsel %vm957, %v1345, -inf
      %1460 = vmax.xlane.f32.xlu0 %v1459
      %v1461 = vpop.xlane.xlu0 %1460
      %v1462 = vsel %vm957, %v1393, -inf
      %1463 = vmax.xlane.f32.xlu0 %v1462
      %v1464 = vpop.xlane.xlu0 %1463
      %v1465 = vsel %vm957, %v1396, -inf
      %1466 = vmax.xlane.f32.xlu0 %v1465
      %v1467 = vpop.xlane.xlu0 %1466
      %v1468 = vsel %vm957, %v1444, -inf
      %1469 = vmax.xlane.f32.xlu0 %v1468
      %v1470 = vpop.xlane.xlu0 %1469
      %v1471 = vsel %vm957, %v1447, -inf
      %1472 = vmax.xlane.f32.xlu0 %v1471
      %v1473 = vpop.xlane.xlu0 %1472
      %v1474 = vsub.f32 %v1291, %v1452
      %v1475 = vsub.f32 %v1294, %v1455
      %v1476 = vsub.f32 %v1342, %v1458
      %v1477 = vsub.f32 %v1345, %v1461
      %v1478 = vsub.f32 %v1393, %v1464
      %v1479 = vsub.f32 %v1396, %v1467
      %v1480 = vsub.f32 %v1444, %v1470
      %v1481 = vsub.f32 %v1447, %v1473
      %v1482 = vmul.f32 %v1474, 1.442695
      %v1483 = vpow.pop %v1482
      %v1484 = vmul.f32 %v1475, 1.442695
      %v1485 = vpow.pop %v1484
      %v1486 = vmul.f32 %v1476, 1.442695
      %v1487 = vpow.pop %v1486
      %v1488 = vmul.f32 %v1477, 1.442695
      %v1489 = vpow.pop %v1488
      %v1490 = vmul.f32 %v1478, 1.442695
      %v1491 = vpow.pop %v1490
      %v1492 = vmul.f32 %v1479, 1.442695
      %v1493 = vpow.pop %v1492
      %v1494 = vmul.f32 %v1480, 1.442695
      %v1495 = vpow.pop %v1494
      %v1496 = vmul.f32 %v1481, 1.442695
      %v1497 = vpow.pop %v1496
      %v1498 = vsel %vm957, %v1483, 0.0
      %1499 = vadd.xlane.f32.xlu0 %v1498
      %v1500 = vpop.xlane.xlu0 %1499
      %v1501 = vsel %vm957, %v1485, 0.0
      %1502 = vadd.xlane.f32.xlu0 %v1501
      %v1503 = vpop.xlane.xlu0 %1502
      %v1504 = vsel %vm957, %v1487, 0.0
      %1505 = vadd.xlane.f32.xlu0 %v1504
      %v1506 = vpop.xlane.xlu0 %1505
      %v1507 = vsel %vm957, %v1489, 0.0
      %1508 = vadd.xlane.f32.xlu0 %v1507
      %v1509 = vpop.xlane.xlu0 %1508
      %v1510 = vsel %vm957, %v1491, 0.0
      %1511 = vadd.xlane.f32.xlu0 %v1510
      %v1512 = vpop.xlane.xlu0 %1511
      %v1513 = vsel %vm957, %v1493, 0.0
      %1514 = vadd.xlane.f32.xlu0 %v1513
      %v1515 = vpop.xlane.xlu0 %1514
      %v1516 = vsel %vm957, %v1495, 0.0
      %1517 = vadd.xlane.f32.xlu0 %v1516
      %v1518 = vpop.xlane.xlu0 %1517
      %v1519 = vsel %vm957, %v1497, 0.0
      %1520 = vadd.xlane.f32.xlu0 %v1519
      %v1521 = vpop.xlane.xlu0 %1520
      %v1522 = vrcp.pop %v1500
      %v1523 = vrcp.pop %v1503
      %v1524 = vrcp.pop %v1506
      %v1525 = vrcp.pop %v1509
      %v1526 = vrcp.pop %v1512
      %v1527 = vrcp.pop %v1515
      %v1528 = vrcp.pop %v1518
      %v1529 = vrcp.pop %v1521
      %v1530 = vmul.f32 %v1483, %v1522
      %v1531 = vmul.f32 %v1485, %v1523
      %v1532 = vmul.f32 %v1487, %v1524
      %v1533 = vmul.f32 %v1489, %v1525
      %v1534 = vmul.f32 %v1491, %v1526
      %v1535 = vmul.f32 %v1493, %v1527
      %v1536 = vmul.f32 %v1495, %v1528
      %v1537 = vmul.f32 %v1497, %v1529
      %v1538 = vpack.c.bf16 %v1531, %v1530
      %v1539 = vpack.c.bf16 %v1533, %v1532
      %v1540 = vpack.c.bf16 %v1535, %v1534
      %v1541 = vpack.c.bf16 %v1537, %v1536
      %1542 = vrot.lane.b32.xlu0 %v752, 56
      %v1543 = vpop.permute.xlu0 %1542
      %v1546 = vsel %vm957, %v1538, 0
      %1548 = vmatprep.subr.bf16.mxu0 0
      %1549 = vmatpush1.bf16.msra.mxu0 %v1543
      %1550 = vmatprep.subr.bf16.mxu0 0
      %1551 = vmatpush1.bf16.msra.mxu0 0
      %1552 = vmatprep.subr.bf16.mxu0 0
      %1553 = vmatpush1.bf16.msra.mxu0 0
      %1554 = vmatprep.subr.bf16.mxu0 0
      %1555 = vmatpush1.bf16.msra.mxu0 0
      %1556 = vmatprep.subr.bf16.mxu0 0
      %1557 = vmatpush1.bf16.msra.mxu0 0
      %1558 = vmatprep.subr.bf16.mxu0 0
      %1559 = vmatpush1.bf16.msra.mxu0 0
      %1560 = vmatprep.subr.bf16.mxu0 0
      %1561 = vmatpush1.bf16.msra.mxu0 0
      %1562 = vmatprep.subr.bf16.mxu0 0
      %1563 = vmatpush1.bf16.msra.mxu0 0
      %1564 = vmatprep.subr.bf16.mxu0 0
      %1565 = vmatpush1.bf16.msra.mxu0 0
      %1566 = vmatprep.subr.bf16.mxu0 0
      %1567 = vmatpush1.bf16.msra.mxu0 0
      %1568 = vmatprep.subr.bf16.mxu0 0
      %1569 = vmatpush1.bf16.msra.mxu0 0
      %1570 = vmatprep.subr.bf16.mxu0 0
      %1571 = vmatpush1.bf16.msra.mxu0 0
      %1572 = vmatprep.subr.bf16.mxu0 0
      %1573 = vmatpush1.bf16.msra.mxu0 0
      %1574 = vmatprep.subr.bf16.mxu0 0
      %1575 = vmatpush1.bf16.msra.mxu0 0
      %1576 = vmatprep.subr.bf16.mxu0 0
      %1577 = vmatpush1.bf16.msra.mxu0 0
      %1578 = vmatprep.subr.bf16.mxu0 0
      %1579 = vmatpush1.bf16.msra.mxu0 0
      %1580 = vmatprep.mubr.bf16.mxu0 0
      %1581 = vmatmul.mubr.bf16.gmra.mrb[0].mxu0 %v1546
      %v1582 = vpop.f32.mrb[0].mxu0
      %v1583 = vadd.f32 0.0, %v1582
      %v1584 = vpop.f32.mrb[0].mxu0
      %v1585 = vpop.f32.mrb[0].mxu0
      %v1586 = vadd.f32 0.0, %v1585
      %v1587 = vpop.f32.mrb[0].mxu0
      %1588 = vdwg.mxu0
      %1589 = vrot.lane.b32.xlu0 %v753, 56
      %v1590 = vpop.permute.xlu0 %1589
      %v1593 = vsel %vm957, %v1539, 0
      %1595 = vmatprep.subr.bf16.mxu0 0
      %1596 = vmatpush1.bf16.msra.mxu0 %v1590
      %1597 = vmatprep.subr.bf16.mxu0 0
      %1598 = vmatpush1.bf16.msra.mxu0 0
      %1599 = vmatprep.subr.bf16.mxu0 0
      %1600 = vmatpush1.bf16.msra.mxu0 0
      %1601 = vmatprep.subr.bf16.mxu0 0
      %1602 = vmatpush1.bf16.msra.mxu0 0
      %1603 = vmatprep.subr.bf16.mxu0 0
      %1604 = vmatpush1.bf16.msra.mxu0 0
      %1605 = vmatprep.subr.bf16.mxu0 0
      %1606 = vmatpush1.bf16.msra.mxu0 0
      %1607 = vmatprep.subr.bf16.mxu0 0
      %1608 = vmatpush1.bf16.msra.mxu0 0
      %1609 = vmatprep.subr.bf16.mxu0 0
      %1610 = vmatpush1.bf16.msra.mxu0 0
      %1611 = vmatprep.subr.bf16.mxu0 0
      %1612 = vmatpush1.bf16.msra.mxu0 0
      %1613 = vmatprep.subr.bf16.mxu0 0
      %1614 = vmatpush1.bf16.msra.mxu0 0
      %1615 = vmatprep.subr.bf16.mxu0 0
      %1616 = vmatpush1.bf16.msra.mxu0 0
      %1617 = vmatprep.subr.bf16.mxu0 0
      %1618 = vmatpush1.bf16.msra.mxu0 0
      %1619 = vmatprep.subr.bf16.mxu0 0
      %1620 = vmatpush1.bf16.msra.mxu0 0
      %1621 = vmatprep.subr.bf16.mxu0 0
      %1622 = vmatpush1.bf16.msra.mxu0 0
      %1623 = vmatprep.subr.bf16.mxu0 0
      %1624 = vmatpush1.bf16.msra.mxu0 0
      %1625 = vmatprep.subr.bf16.mxu0 0
      %1626 = vmatpush1.bf16.msra.mxu0 0
      %1627 = vmatprep.mubr.bf16.mxu0 0
      %1628 = vmatmul.mubr.bf16.gmra.mrb[0].mxu0 %v1593
      %v1629 = vpop.f32.mrb[0].mxu0
      %v1630 = vadd.f32 0.0, %v1629
      %v1631 = vpop.f32.mrb[0].mxu0
      %v1632 = vpop.f32.mrb[0].mxu0
      %v1633 = vadd.f32 0.0, %v1632
      %v1634 = vpop.f32.mrb[0].mxu0
      %1635 = vdwg.mxu0
      %1636 = vrot.lane.b32.xlu0 %v754, 56
      %v1637 = vpop.permute.xlu0 %1636
      %v1640 = vsel %vm957, %v1540, 0
      %1642 = vmatprep.subr.bf16.mxu0 0
      %1643 = vmatpush1.bf16.msra.mxu0 %v1637
      %1644 = vmatprep.subr.bf16.mxu0 0
      %1645 = vmatpush1.bf16.msra.mxu0 0
      %1646 = vmatprep.subr.bf16.mxu0 0
      %1647 = vmatpush1.bf16.msra.mxu0 0
      %1648 = vmatprep.subr.bf16.mxu0 0
      %1649 = vmatpush1.bf16.msra.mxu0 0
      %1650 = vmatprep.subr.bf16.mxu0 0
      %1651 = vmatpush1.bf16.msra.mxu0 0
      %1652 = vmatprep.subr.bf16.mxu0 0
      %1653 = vmatpush1.bf16.msra.mxu0 0
      %1654 = vmatprep.subr.bf16.mxu0 0
      %1655 = vmatpush1.bf16.msra.mxu0 0
      %1656 = vmatprep.subr.bf16.mxu0 0
      %1657 = vmatpush1.bf16.msra.mxu0 0
      %1658 = vmatprep.subr.bf16.mxu0 0
      %1659 = vmatpush1.bf16.msra.mxu0 0
      %1660 = vmatprep.subr.bf16.mxu0 0
      %1661 = vmatpush1.bf16.msra.mxu0 0
      %1662 = vmatprep.subr.bf16.mxu0 0
      %1663 = vmatpush1.bf16.msra.mxu0 0
      %1664 = vmatprep.subr.bf16.mxu0 0
      %1665 = vmatpush1.bf16.msra.mxu0 0
      %1666 = vmatprep.subr.bf16.mxu0 0
      %1667 = vmatpush1.bf16.msra.mxu0 0
      %1668 = vmatprep.subr.bf16.mxu0 0
      %1669 = vmatpush1.bf16.msra.mxu0 0
      %1670 = vmatprep.subr.bf16.mxu0 0
      %1671 = vmatpush1.bf16.msra.mxu0 0
      %1672 = vmatprep.subr.bf16.mxu0 0
      %1673 = vmatpush1.bf16.msra.mxu0 0
      %1674 = vmatprep.mubr.bf16.mxu0 0
      %1675 = vmatmul.mubr.bf16.gmra.mrb[0].mxu0 %v1640
      %v1676 = vpop.f32.mrb[0].mxu0
      %v1677 = vadd.f32 0.0, %v1676
      %v1678 = vpop.f32.mrb[0].mxu0
      %v1679 = vpop.f32.mrb[0].mxu0
      %v1680 = vadd.f32 0.0, %v1679
      %v1681 = vpop.f32.mrb[0].mxu0
      %1682 = vdwg.mxu0
      %1683 = vrot.lane.b32.xlu0 %v755, 56
      %v1684 = vpop.permute.xlu0 %1683
      %v1687 = vsel %vm957, %v1541, 0
      %1689 = vmatprep.subr.bf16.mxu0 0
      %1690 = vmatpush1.bf16.msra.mxu0 %v1684
      %1691 = vmatprep.subr.bf16.mxu0 0
      %1692 = vmatpush1.bf16.msra.mxu0 0
      %1693 = vmatprep.subr.bf16.mxu0 0
      %1694 = vmatpush1.bf16.msra.mxu0 0
      %1695 = vmatprep.subr.bf16.mxu0 0
      %1696 = vmatpush1.bf16.msra.mxu0 0
      %1697 = vmatprep.subr.bf16.mxu0 0
      %1698 = vmatpush1.bf16.msra.mxu0 0
      %1699 = vmatprep.subr.bf16.mxu0 0
      %1700 = vmatpush1.bf16.msra.mxu0 0
      %1701 = vmatprep.subr.bf16.mxu0 0
      %1702 = vmatpush1.bf16.msra.mxu0 0
      %1703 = vmatprep.subr.bf16.mxu0 0
      %1704 = vmatpush1.bf16.msra.mxu0 0
      %1705 = vmatprep.subr.bf16.mxu0 0
      %1706 = vmatpush1.bf16.msra.mxu0 0
      %1707 = vmatprep.subr.bf16.mxu0 0
      %1708 = vmatpush1.bf16.msra.mxu0 0
      %1709 = vmatprep.subr.bf16.mxu0 0
      %1710 = vmatpush1.bf16.msra.mxu0 0
      %1711 = vmatprep.subr.bf16.mxu0 0
      %1712 = vmatpush1.bf16.msra.mxu0 0
      %1713 = vmatprep.subr.bf16.mxu0 0
      %1714 = vmatpush1.bf16.msra.mxu0 0
      %1715 = vmatprep.subr.bf16.mxu0 0
      %1716 = vmatpush1.bf16.msra.mxu0 0
      %1717 = vmatprep.subr.bf16.mxu0 0
      %1718 = vmatpush1.bf16.msra.mxu0 0
      %1719 = vmatprep.subr.bf16.mxu0 0
      %1720 = vmatpush1.bf16.msra.mxu0 0
      %1721 = vmatprep.mubr.bf16.mxu0 0
      %1722 = vmatmul.mubr.bf16.gmra.mrb[0].mxu0 %v1687
      %v1723 = vpop.f32.mrb[0].mxu0
      %v1724 = vadd.f32 0.0, %v1723
      %v1725 = vpop.f32.mrb[0].mxu0
      %v1726 = vpop.f32.mrb[0].mxu0
      %v1727 = vadd.f32 0.0, %v1726
      %v1728 = vpop.f32.mrb[0].mxu0
      %1729 = vdwg.mxu0
      %1738 = vrot.lane.b32.xlu0 %v1583, 8
      %v1739 = vpop.permute.xlu0 %1738
      %1740 = vrot.lane.b32.xlu0 %v1586, 8
      %v1741 = vpop.permute.xlu0 %1740
      %1742 = vrot.lane.b32.xlu0 %v1630, 8
      %v1743 = vpop.permute.xlu0 %1742
      %1744 = vrot.lane.b32.xlu0 %v1633, 8
      %v1745 = vpop.permute.xlu0 %1744
      %1746 = vrot.lane.b32.xlu0 %v1677, 8
      %v1747 = vpop.permute.xlu0 %1746
      %1748 = vrot.lane.b32.xlu0 %v1680, 8
      %v1749 = vpop.permute.xlu0 %1748
      %1750 = vrot.lane.b32.xlu0 %v1724, 8
      %v1751 = vpop.permute.xlu0 %1750
      %1752 = vrot.lane.b32.xlu0 %v1727, 8
      %v1753 = vpop.permute.xlu0 %1752
      %vm1762 = vcmask 130112
      %1763 = vst.msk [vmem:[#allocation2] sm:$0xff] %vm1762, %v1739
      %1764 = vst.msk [vmem:[#allocation2 + $0x8] sm:$0xff] %vm1762, %v1741
      %1765 = vst.msk [vmem:[#allocation2 + $0x10] sm:$0xff] %vm1762, %v1743
      %1766 = vst.msk [vmem:[#allocation2 + $0x18] sm:$0xff] %vm1762, %v1745
      %1767 = vst.msk [vmem:[#allocation2 + $0x20] sm:$0xff] %vm1762, %v1747
      %1768 = vst.msk [vmem:[#allocation2 + $0x28] sm:$0xff] %vm1762, %v1749
      %1769 = vst.msk [vmem:[#allocation2 + $0x30] sm:$0xff] %vm1762, %v1751
      %1770 = vst.msk [vmem:[#allocation2 + $0x38] sm:$0xff] %vm1762, %v1753
      %1771 = vrot.lane.b32.xlu0 %v752, 112
      %v1772 = vpop.permute.xlu0 %1771
      %1773 = vrot.lane.b32.xlu0 %v752, 80
      %v1774 = vpop.permute.xlu0 %1773
      %v1776 = vsel %vm759, %v1772, 0
      %v1779 = vsel %vm759, %v1774, 0
      %1781 = vmatprep.subr.bf16.mxu0 0
      %1782 = vmatpush1.bf16.xpose.msra.mxu0 %v1779
      %1783 = vmatprep.subr.bf16.mxu0 0
      %1784 = vmatpush1.bf16.xpose.msra.mxu0 0
      %1785 = vmatprep.subr.bf16.mxu0 0
      %1786 = vmatpush1.bf16.xpose.msra.mxu0 0
      %1787 = vmatprep.subr.bf16.mxu0 0
      %1788 = vmatpush1.bf16.xpose.msra.mxu0 0
      %1789 = vmatprep.subr.bf16.mxu0 0
      %1790 = vmatpush1.bf16.xpose.msra.mxu0 0
      %1791 = vmatprep.subr.bf16.mxu0 0
      %1792 = vmatpush1.bf16.xpose.msra.mxu0 0
      %1793 = vmatprep.subr.bf16.mxu0 0
      %1794 = vmatpush1.bf16.xpose.msra.mxu0 0
      %1795 = vmatprep.subr.bf16.mxu0 0
      %1796 = vmatpush1.bf16.xpose.msra.mxu0 0
      %1797 = vmatprep.subr.bf16.mxu0 0
      %1798 = vmatpush1.bf16.xpose.msra.mxu0 0
      %1799 = vmatprep.subr.bf16.mxu0 0
      %1800 = vmatpush1.bf16.xpose.msra.mxu0 0
      %1801 = vmatprep.subr.bf16.mxu0 0
      %1802 = vmatpush1.bf16.xpose.msra.mxu0 0
      %1803 = vmatprep.subr.bf16.mxu0 0
      %1804 = vmatpush1.bf16.xpose.msra.mxu0 0
      %1805 = vmatprep.subr.bf16.mxu0 0
      %1806 = vmatpush1.bf16.xpose.msra.mxu0 0
      %1807 = vmatprep.subr.bf16.mxu0 0
      %1808 = vmatpush1.bf16.xpose.msra.mxu0 0
      %1809 = vmatprep.subr.bf16.mxu0 0
      %1810 = vmatpush1.bf16.xpose.msra.mxu0 0
      %1811 = vmatprep.subr.bf16.mxu0 0
      %1812 = vmatpush1.bf16.xpose.msra.mxu0 0
      %1813 = vmatprep.mubr.bf16.mxu0 0
      %1814 = vmatmul.mubr.bf16.gmra.mrb[0].mxu0 %v1776
      %v1815 = vpop.f32.mrb[0].mxu0
      %v1816 = vadd.f32 %v724, %v1815
      %v1817 = vpop.f32.mrb[0].mxu0
      %v1818 = vpop.f32.mrb[0].mxu0
      %v1819 = vadd.f32 %v725, %v1818
      %v1820 = vpop.f32.mrb[0].mxu0
      %1821 = vdwg.mxu0
      %1822 = vrot.lane.b32.xlu0 %v753, 112
      %v1823 = vpop.permute.xlu0 %1822
      %1824 = vrot.lane.b32.xlu0 %v753, 80
      %v1825 = vpop.permute.xlu0 %1824
      %v1827 = vsel %vm759, %v1823, 0
      %v1830 = vsel %vm759, %v1825, 0
      %1832 = vmatprep.subr.bf16.mxu0 0
      %1833 = vmatpush1.bf16.xpose.msra.mxu0 %v1830
      %1834 = vmatprep.subr.bf16.mxu0 0
      %1835 = vmatpush1.bf16.xpose.msra.mxu0 0
      %1836 = vmatprep.subr.bf16.mxu0 0
      %1837 = vmatpush1.bf16.xpose.msra.mxu0 0
      %1838 = vmatprep.subr.bf16.mxu0 0
      %1839 = vmatpush1.bf16.xpose.msra.mxu0 0
      %1840 = vmatprep.subr.bf16.mxu0 0
      %1841 = vmatpush1.bf16.xpose.msra.mxu0 0
      %1842 = vmatprep.subr.bf16.mxu0 0
      %1843 = vmatpush1.bf16.xpose.msra.mxu0 0
      %1844 = vmatprep.subr.bf16.mxu0 0
      %1845 = vmatpush1.bf16.xpose.msra.mxu0 0
      %1846 = vmatprep.subr.bf16.mxu0 0
      %1847 = vmatpush1.bf16.xpose.msra.mxu0 0
      %1848 = vmatprep.subr.bf16.mxu0 0
      %1849 = vmatpush1.bf16.xpose.msra.mxu0 0
      %1850 = vmatprep.subr.bf16.mxu0 0
      %1851 = vmatpush1.bf16.xpose.msra.mxu0 0
      %1852 = vmatprep.subr.bf16.mxu0 0
      %1853 = vmatpush1.bf16.xpose.msra.mxu0 0
      %1854 = vmatprep.subr.bf16.mxu0 0
      %1855 = vmatpush1.bf16.xpose.msra.mxu0 0
      %1856 = vmatprep.subr.bf16.mxu0 0
      %1857 = vmatpush1.bf16.xpose.msra.mxu0 0
      %1858 = vmatprep.subr.bf16.mxu0 0
      %1859 = vmatpush1.bf16.xpose.msra.mxu0 0
      %1860 = vmatprep.subr.bf16.mxu0 0
      %1861 = vmatpush1.bf16.xpose.msra.mxu0 0
      %1862 = vmatprep.subr.bf16.mxu0 0
      %1863 = vmatpush1.bf16.xpose.msra.mxu0 0
      %1864 = vmatprep.mubr.bf16.mxu0 0
      %1865 = vmatmul.mubr.bf16.gmra.mrb[0].mxu0 %v1827
      %v1866 = vpop.f32.mrb[0].mxu0
      %v1867 = vadd.f32 %v732, %v1866
      %v1868 = vpop.f32.mrb[0].mxu0
      %v1869 = vpop.f32.mrb[0].mxu0
      %v1870 = vadd.f32 %v733, %v1869
      %v1871 = vpop.f32.mrb[0].mxu0
      %1872 = vdwg.mxu0
      %1873 = vrot.lane.b32.xlu0 %v754, 112
      %v1874 = vpop.permute.xlu0 %1873
      %1875 = vrot.lane.b32.xlu0 %v754, 80
      %v1876 = vpop.permute.xlu0 %1875
      %v1878 = vsel %vm759, %v1874, 0
      %v1881 = vsel %vm759, %v1876, 0
      %1883 = vmatprep.subr.bf16.mxu0 0
      %1884 = vmatpush1.bf16.xpose.msra.mxu0 %v1881
      %1885 = vmatprep.subr.bf16.mxu0 0
      %1886 = vmatpush1.bf16.xpose.msra.mxu0 0
      %1887 = vmatprep.subr.bf16.mxu0 0
      %1888 = vmatpush1.bf16.xpose.msra.mxu0 0
      %1889 = vmatprep.subr.bf16.mxu0 0
      %1890 = vmatpush1.bf16.xpose.msra.mxu0 0
      %1891 = vmatprep.subr.bf16.mxu0 0
      %1892 = vmatpush1.bf16.xpose.msra.mxu0 0
      %1893 = vmatprep.subr.bf16.mxu0 0
      %1894 = vmatpush1.bf16.xpose.msra.mxu0 0
      %1895 = vmatprep.subr.bf16.mxu0 0
      %1896 = vmatpush1.bf16.xpose.msra.mxu0 0
      %1897 = vmatprep.subr.bf16.mxu0 0
      %1898 = vmatpush1.bf16.xpose.msra.mxu0 0
      %1899 = vmatprep.subr.bf16.mxu0 0
      %1900 = vmatpush1.bf16.xpose.msra.mxu0 0
      %1901 = vmatprep.subr.bf16.mxu0 0
      %1902 = vmatpush1.bf16.xpose.msra.mxu0 0
      %1903 = vmatprep.subr.bf16.mxu0 0
      %1904 = vmatpush1.bf16.xpose.msra.mxu0 0
      %1905 = vmatprep.subr.bf16.mxu0 0
      %1906 = vmatpush1.bf16.xpose.msra.mxu0 0
      %1907 = vmatprep.subr.bf16.mxu0 0
      %1908 = vmatpush1.bf16.xpose.msra.mxu0 0
      %1909 = vmatprep.subr.bf16.mxu0 0
      %1910 = vmatpush1.bf16.xpose.msra.mxu0 0
      %1911 = vmatprep.subr.bf16.mxu0 0
      %1912 = vmatpush1.bf16.xpose.msra.mxu0 0
      %1913 = vmatprep.subr.bf16.mxu0 0
      %1914 = vmatpush1.bf16.xpose.msra.mxu0 0
      %1915 = vmatprep.mubr.bf16.mxu0 0
      %1916 = vmatmul.mubr.bf16.gmra.mrb[0].mxu0 %v1878
      %v1917 = vpop.f32.mrb[0].mxu0
      %v1918 = vadd.f32 %v740, %v1917
      %v1919 = vpop.f32.mrb[0].mxu0
      %v1920 = vpop.f32.mrb[0].mxu0
      %v1921 = vadd.f32 %v741, %v1920
      %v1922 = vpop.f32.mrb[0].mxu0
      %1923 = vdwg.mxu0
      %1924 = vrot.lane.b32.xlu0 %v755, 112
      %v1925 = vpop.permute.xlu0 %1924
      %1926 = vrot.lane.b32.xlu0 %v755, 80
      %v1927 = vpop.permute.xlu0 %1926
      %v1929 = vsel %vm759, %v1925, 0
      %v1932 = vsel %vm759, %v1927, 0
      %1934 = vmatprep.subr.bf16.mxu0 0
      %1935 = vmatpush1.bf16.xpose.msra.mxu0 %v1932
      %1936 = vmatprep.subr.bf16.mxu0 0
      %1937 = vmatpush1.bf16.xpose.msra.mxu0 0
      %1938 = vmatprep.subr.bf16.mxu0 0
      %1939 = vmatpush1.bf16.xpose.msra.mxu0 0
      %1940 = vmatprep.subr.bf16.mxu0 0
      %1941 = vmatpush1.bf16.xpose.msra.mxu0 0
      %1942 = vmatprep.subr.bf16.mxu0 0
      %1943 = vmatpush1.bf16.xpose.msra.mxu0 0
      %1944 = vmatprep.subr.bf16.mxu0 0
      %1945 = vmatpush1.bf16.xpose.msra.mxu0 0
      %1946 = vmatprep.subr.bf16.mxu0 0
      %1947 = vmatpush1.bf16.xpose.msra.mxu0 0
      %1948 = vmatprep.subr.bf16.mxu0 0
      %1949 = vmatpush1.bf16.xpose.msra.mxu0 0
      %1950 = vmatprep.subr.bf16.mxu0 0
      %1951 = vmatpush1.bf16.xpose.msra.mxu0 0
      %1952 = vmatprep.subr.bf16.mxu0 0
      %1953 = vmatpush1.bf16.xpose.msra.mxu0 0
      %1954 = vmatprep.subr.bf16.mxu0 0
      %1955 = vmatpush1.bf16.xpose.msra.mxu0 0
      %1956 = vmatprep.subr.bf16.mxu0 0
      %1957 = vmatpush1.bf16.xpose.msra.mxu0 0
      %1958 = vmatprep.subr.bf16.mxu0 0
      %1959 = vmatpush1.bf16.xpose.msra.mxu0 0
      %1960 = vmatprep.subr.bf16.mxu0 0
      %1961 = vmatpush1.bf16.xpose.msra.mxu0 0
      %1962 = vmatprep.subr.bf16.mxu0 0
      %1963 = vmatpush1.bf16.xpose.msra.mxu0 0
      %1964 = vmatprep.subr.bf16.mxu0 0
      %1965 = vmatpush1.bf16.xpose.msra.mxu0 0
      %1966 = vmatprep.mubr.bf16.mxu0 0
      %1967 = vmatmul.mubr.bf16.gmra.mrb[0].mxu0 %v1929
      %v1968 = vpop.f32.mrb[0].mxu0
      %v1969 = vadd.f32 %v748, %v1968
      %v1970 = vpop.f32.mrb[0].mxu0
      %v1971 = vpop.f32.mrb[0].mxu0
      %v1972 = vadd.f32 %v749, %v1971
      %v1973 = vpop.f32.mrb[0].mxu0
      %1974 = vdwg.mxu0
      %v1975 = vsel %vm957, %v1816, -inf
      %1976 = vmax.xlane.f32.xlu0 %v1975
      %v1977 = vpop.xlane.xlu0 %1976
      %v1978 = vsel %vm957, %v1819, -inf
      %1979 = vmax.xlane.f32.xlu0 %v1978
      %v1980 = vpop.xlane.xlu0 %1979
      %v1981 = vsel %vm957, %v1867, -inf
      %1982 = vmax.xlane.f32.xlu0 %v1981
      %v1983 = vpop.xlane.xlu0 %1982
      %v1984 = vsel %vm957, %v1870, -inf
      %1985 = vmax.xlane.f32.xlu0 %v1984
      %v1986 = vpop.xlane.xlu0 %1985
      %v1987 = vsel %vm957, %v1918, -inf
      %1988 = vmax.xlane.f32.xlu0 %v1987
      %v1989 = vpop.xlane.xlu0 %1988
      %v1990 = vsel %vm957, %v1921, -inf
      %1991 = vmax.xlane.f32.xlu0 %v1990
      %v1992 = vpop.xlane.xlu0 %1991
      %v1993 = vsel %vm957, %v1969, -inf
      %1994 = vmax.xlane.f32.xlu0 %v1993
      %v1995 = vpop.xlane.xlu0 %1994
      %v1996 = vsel %vm957, %v1972, -inf
      %1997 = vmax.xlane.f32.xlu0 %v1996
      %v1998 = vpop.xlane.xlu0 %1997
      %v1999 = vsub.f32 %v1816, %v1977
      %v2000 = vsub.f32 %v1819, %v1980
      %v2001 = vsub.f32 %v1867, %v1983
      %v2002 = vsub.f32 %v1870, %v1986
      %v2003 = vsub.f32 %v1918, %v1989
      %v2004 = vsub.f32 %v1921, %v1992
      %v2005 = vsub.f32 %v1969, %v1995
      %v2006 = vsub.f32 %v1972, %v1998
      %v2007 = vmul.f32 %v1999, 1.442695
      %v2008 = vpow.pop %v2007
      %v2009 = vmul.f32 %v2000, 1.442695
      %v2010 = vpow.pop %v2009
      %v2011 = vmul.f32 %v2001, 1.442695
      %v2012 = vpow.pop %v2011
      %v2013 = vmul.f32 %v2002, 1.442695
      %v2014 = vpow.pop %v2013
      %v2015 = vmul.f32 %v2003, 1.442695
      %v2016 = vpow.pop %v2015
      %v2017 = vmul.f32 %v2004, 1.442695
      %v2018 = vpow.pop %v2017
      %v2019 = vmul.f32 %v2005, 1.442695
      %v2020 = vpow.pop %v2019
      %v2021 = vmul.f32 %v2006, 1.442695
      %v2022 = vpow.pop %v2021
      %v2023 = vsel %vm957, %v2008, 0.0
      %2024 = vadd.xlane.f32.xlu0 %v2023
      %v2025 = vpop.xlane.xlu0 %2024
      %v2026 = vsel %vm957, %v2010, 0.0
      %2027 = vadd.xlane.f32.xlu0 %v2026
      %v2028 = vpop.xlane.xlu0 %2027
      %v2029 = vsel %vm957, %v2012, 0.0
      %2030 = vadd.xlane.f32.xlu0 %v2029
      %v2031 = vpop.xlane.xlu0 %2030
      %v2032 = vsel %vm957, %v2014, 0.0
      %2033 = vadd.xlane.f32.xlu0 %v2032
      %v2034 = vpop.xlane.xlu0 %2033
      %v2035 = vsel %vm957, %v2016, 0.0
      %2036 = vadd.xlane.f32.xlu0 %v2035
      %v2037 = vpop.xlane.xlu0 %2036
      %v2038 = vsel %vm957, %v2018, 0.0
      %2039 = vadd.xlane.f32.xlu0 %v2038
      %v2040 = vpop.xlane.xlu0 %2039
      %v2041 = vsel %vm957, %v2020, 0.0
      %2042 = vadd.xlane.f32.xlu0 %v2041
      %v2043 = vpop.xlane.xlu0 %2042
      %v2044 = vsel %vm957, %v2022, 0.0
      %2045 = vadd.xlane.f32.xlu0 %v2044
      %v2046 = vpop.xlane.xlu0 %2045
      %v2047 = vrcp.pop %v2025
      %v2048 = vrcp.pop %v2028
      %v2049 = vrcp.pop %v2031
      %v2050 = vrcp.pop %v2034
      %v2051 = vrcp.pop %v2037
      %v2052 = vrcp.pop %v2040
      %v2053 = vrcp.pop %v2043
      %v2054 = vrcp.pop %v2046
      %v2055 = vmul.f32 %v2008, %v2047
      %v2056 = vmul.f32 %v2010, %v2048
      %v2057 = vmul.f32 %v2012, %v2049
      %v2058 = vmul.f32 %v2014, %v2050
      %v2059 = vmul.f32 %v2016, %v2051
      %v2060 = vmul.f32 %v2018, %v2052
      %v2061 = vmul.f32 %v2020, %v2053
      %v2062 = vmul.f32 %v2022, %v2054
      %v2063 = vpack.c.bf16 %v2056, %v2055
      %v2064 = vpack.c.bf16 %v2058, %v2057
      %v2065 = vpack.c.bf16 %v2060, %v2059
      %v2066 = vpack.c.bf16 %v2062, %v2061
      %2067 = vrot.lane.b32.xlu0 %v752, 48
      %v2068 = vpop.permute.xlu0 %2067
      %v2071 = vsel %vm957, %v2063, 0
      %2073 = vmatprep.subr.bf16.mxu0 0
      %2074 = vmatpush1.bf16.msra.mxu0 %v2068
      %2075 = vmatprep.subr.bf16.mxu0 0
      %2076 = vmatpush1.bf16.msra.mxu0 0
      %2077 = vmatprep.subr.bf16.mxu0 0
      %2078 = vmatpush1.bf16.msra.mxu0 0
      %2079 = vmatprep.subr.bf16.mxu0 0
      %2080 = vmatpush1.bf16.msra.mxu0 0
      %2081 = vmatprep.subr.bf16.mxu0 0
      %2082 = vmatpush1.bf16.msra.mxu0 0
      %2083 = vmatprep.subr.bf16.mxu0 0
      %2084 = vmatpush1.bf16.msra.mxu0 0
      %2085 = vmatprep.subr.bf16.mxu0 0
      %2086 = vmatpush1.bf16.msra.mxu0 0
      %2087 = vmatprep.subr.bf16.mxu0 0
      %2088 = vmatpush1.bf16.msra.mxu0 0
      %2089 = vmatprep.subr.bf16.mxu0 0
      %2090 = vmatpush1.bf16.msra.mxu0 0
      %2091 = vmatprep.subr.bf16.mxu0 0
      %2092 = vmatpush1.bf16.msra.mxu0 0
      %2093 = vmatprep.subr.bf16.mxu0 0
      %2094 = vmatpush1.bf16.msra.mxu0 0
      %2095 = vmatprep.subr.bf16.mxu0 0
      %2096 = vmatpush1.bf16.msra.mxu0 0
      %2097 = vmatprep.subr.bf16.mxu0 0
      %2098 = vmatpush1.bf16.msra.mxu0 0
      %2099 = vmatprep.subr.bf16.mxu0 0
      %2100 = vmatpush1.bf16.msra.mxu0 0
      %2101 = vmatprep.subr.bf16.mxu0 0
      %2102 = vmatpush1.bf16.msra.mxu0 0
      %2103 = vmatprep.subr.bf16.mxu0 0
      %2104 = vmatpush1.bf16.msra.mxu0 0
      %2105 = vmatprep.mubr.bf16.mxu0 0
      %2106 = vmatmul.mubr.bf16.gmra.mrb[0].mxu0 %v2071
      %v2107 = vpop.f32.mrb[0].mxu0
      %v2108 = vadd.f32 0.0, %v2107
      %v2109 = vpop.f32.mrb[0].mxu0
      %v2110 = vpop.f32.mrb[0].mxu0
      %v2111 = vadd.f32 0.0, %v2110
      %v2112 = vpop.f32.mrb[0].mxu0
      %2113 = vdwg.mxu0
      %2114 = vrot.lane.b32.xlu0 %v753, 48
      %v2115 = vpop.permute.xlu0 %2114
      %v2118 = vsel %vm957, %v2064, 0
      %2120 = vmatprep.subr.bf16.mxu0 0
      %2121 = vmatpush1.bf16.msra.mxu0 %v2115
      %2122 = vmatprep.subr.bf16.mxu0 0
      %2123 = vmatpush1.bf16.msra.mxu0 0
      %2124 = vmatprep.subr.bf16.mxu0 0
      %2125 = vmatpush1.bf16.msra.mxu0 0
      %2126 = vmatprep.subr.bf16.mxu0 0
      %2127 = vmatpush1.bf16.msra.mxu0 0
      %2128 = vmatprep.subr.bf16.mxu0 0
      %2129 = vmatpush1.bf16.msra.mxu0 0
      %2130 = vmatprep.subr.bf16.mxu0 0
      %2131 = vmatpush1.bf16.msra.mxu0 0
      %2132 = vmatprep.subr.bf16.mxu0 0
      %2133 = vmatpush1.bf16.msra.mxu0 0
      %2134 = vmatprep.subr.bf16.mxu0 0
      %2135 = vmatpush1.bf16.msra.mxu0 0
      %2136 = vmatprep.subr.bf16.mxu0 0
      %2137 = vmatpush1.bf16.msra.mxu0 0
      %2138 = vmatprep.subr.bf16.mxu0 0
      %2139 = vmatpush1.bf16.msra.mxu0 0
      %2140 = vmatprep.subr.bf16.mxu0 0
      %2141 = vmatpush1.bf16.msra.mxu0 0
      %2142 = vmatprep.subr.bf16.mxu0 0
      %2143 = vmatpush1.bf16.msra.mxu0 0
      %2144 = vmatprep.subr.bf16.mxu0 0
      %2145 = vmatpush1.bf16.msra.mxu0 0
      %2146 = vmatprep.subr.bf16.mxu0 0
      %2147 = vmatpush1.bf16.msra.mxu0 0
      %2148 = vmatprep.subr.bf16.mxu0 0
      %2149 = vmatpush1.bf16.msra.mxu0 0
      %2150 = vmatprep.subr.bf16.mxu0 0
      %2151 = vmatpush1.bf16.msra.mxu0 0
      %2152 = vmatprep.mubr.bf16.mxu0 0
      %2153 = vmatmul.mubr.bf16.gmra.mrb[0].mxu0 %v2118
      %v2154 = vpop.f32.mrb[0].mxu0
      %v2155 = vadd.f32 0.0, %v2154
      %v2156 = vpop.f32.mrb[0].mxu0
      %v2157 = vpop.f32.mrb[0].mxu0
      %v2158 = vadd.f32 0.0, %v2157
      %v2159 = vpop.f32.mrb[0].mxu0
      %2160 = vdwg.mxu0
      %2161 = vrot.lane.b32.xlu0 %v754, 48
      %v2162 = vpop.permute.xlu0 %2161
      %v2165 = vsel %vm957, %v2065, 0
      %2167 = vmatprep.subr.bf16.mxu0 0
      %2168 = vmatpush1.bf16.msra.mxu0 %v2162
      %2169 = vmatprep.subr.bf16.mxu0 0
      %2170 = vmatpush1.bf16.msra.mxu0 0
      %2171 = vmatprep.subr.bf16.mxu0 0
      %2172 = vmatpush1.bf16.msra.mxu0 0
      %2173 = vmatprep.subr.bf16.mxu0 0
      %2174 = vmatpush1.bf16.msra.mxu0 0
      %2175 = vmatprep.subr.bf16.mxu0 0
      %2176 = vmatpush1.bf16.msra.mxu0 0
      %2177 = vmatprep.subr.bf16.mxu0 0
      %2178 = vmatpush1.bf16.msra.mxu0 0
      %2179 = vmatprep.subr.bf16.mxu0 0
      %2180 = vmatpush1.bf16.msra.mxu0 0
      %2181 = vmatprep.subr.bf16.mxu0 0
      %2182 = vmatpush1.bf16.msra.mxu0 0
      %2183 = vmatprep.subr.bf16.mxu0 0
      %2184 = vmatpush1.bf16.msra.mxu0 0
      %2185 = vmatprep.subr.bf16.mxu0 0
      %2186 = vmatpush1.bf16.msra.mxu0 0
      %2187 = vmatprep.subr.bf16.mxu0 0
      %2188 = vmatpush1.bf16.msra.mxu0 0
      %2189 = vmatprep.subr.bf16.mxu0 0
      %2190 = vmatpush1.bf16.msra.mxu0 0
      %2191 = vmatprep.subr.bf16.mxu0 0
      %2192 = vmatpush1.bf16.msra.mxu0 0
      %2193 = vmatprep.subr.bf16.mxu0 0
      %2194 = vmatpush1.bf16.msra.mxu0 0
      %2195 = vmatprep.subr.bf16.mxu0 0
      %2196 = vmatpush1.bf16.msra.mxu0 0
      %2197 = vmatprep.subr.bf16.mxu0 0
      %2198 = vmatpush1.bf16.msra.mxu0 0
      %2199 = vmatprep.mubr.bf16.mxu0 0
      %2200 = vmatmul.mubr.bf16.gmra.mrb[0].mxu0 %v2165
      %v2201 = vpop.f32.mrb[0].mxu0
      %v2202 = vadd.f32 0.0, %v2201
      %v2203 = vpop.f32.mrb[0].mxu0
      %v2204 = vpop.f32.mrb[0].mxu0
      %v2205 = vadd.f32 0.0, %v2204
      %v2206 = vpop.f32.mrb[0].mxu0
      %2207 = vdwg.mxu0
      %2208 = vrot.lane.b32.xlu0 %v755, 48
      %v2209 = vpop.permute.xlu0 %2208
      %v2212 = vsel %vm957, %v2066, 0
      %2214 = vmatprep.subr.bf16.mxu0 0
      %2215 = vmatpush1.bf16.msra.mxu0 %v2209
      %2216 = vmatprep.subr.bf16.mxu0 0
      %2217 = vmatpush1.bf16.msra.mxu0 0
      %2218 = vmatprep.subr.bf16.mxu0 0
      %2219 = vmatpush1.bf16.msra.mxu0 0
      %2220 = vmatprep.subr.bf16.mxu0 0
      %2221 = vmatpush1.bf16.msra.mxu0 0
      %2222 = vmatprep.subr.bf16.mxu0 0
      %2223 = vmatpush1.bf16.msra.mxu0 0
      %2224 = vmatprep.subr.bf16.mxu0 0
      %2225 = vmatpush1.bf16.msra.mxu0 0
      %2226 = vmatprep.subr.bf16.mxu0 0
      %2227 = vmatpush1.bf16.msra.mxu0 0
      %2228 = vmatprep.subr.bf16.mxu0 0
      %2229 = vmatpush1.bf16.msra.mxu0 0
      %2230 = vmatprep.subr.bf16.mxu0 0
      %2231 = vmatpush1.bf16.msra.mxu0 0
      %2232 = vmatprep.subr.bf16.mxu0 0
      %2233 = vmatpush1.bf16.msra.mxu0 0
      %2234 = vmatprep.subr.bf16.mxu0 0
      %2235 = vmatpush1.bf16.msra.mxu0 0
      %2236 = vmatprep.subr.bf16.mxu0 0
      %2237 = vmatpush1.bf16.msra.mxu0 0
      %2238 = vmatprep.subr.bf16.mxu0 0
      %2239 = vmatpush1.bf16.msra.mxu0 0
      %2240 = vmatprep.subr.bf16.mxu0 0
      %2241 = vmatpush1.bf16.msra.mxu0 0
      %2242 = vmatprep.subr.bf16.mxu0 0
      %2243 = vmatpush1.bf16.msra.mxu0 0
      %2244 = vmatprep.subr.bf16.mxu0 0
      %2245 = vmatpush1.bf16.msra.mxu0 0
      %2246 = vmatprep.mubr.bf16.mxu0 0
      %2247 = vmatmul.mubr.bf16.gmra.mrb[0].mxu0 %v2212
      %v2248 = vpop.f32.mrb[0].mxu0
      %v2249 = vadd.f32 0.0, %v2248
      %v2250 = vpop.f32.mrb[0].mxu0
      %v2251 = vpop.f32.mrb[0].mxu0
      %v2252 = vadd.f32 0.0, %v2251
      %v2253 = vpop.f32.mrb[0].mxu0
      %2254 = vdwg.mxu0
      %2263 = vrot.lane.b32.xlu0 %v2108, 16
      %v2264 = vpop.permute.xlu0 %2263
      %2265 = vrot.lane.b32.xlu0 %v2111, 16
      %v2266 = vpop.permute.xlu0 %2265
      %2267 = vrot.lane.b32.xlu0 %v2155, 16
      %v2268 = vpop.permute.xlu0 %2267
      %2269 = vrot.lane.b32.xlu0 %v2158, 16
      %v2270 = vpop.permute.xlu0 %2269
      %2271 = vrot.lane.b32.xlu0 %v2202, 16
      %v2272 = vpop.permute.xlu0 %2271
      %2273 = vrot.lane.b32.xlu0 %v2205, 16
      %v2274 = vpop.permute.xlu0 %2273
      %2275 = vrot.lane.b32.xlu0 %v2249, 16
      %v2276 = vpop.permute.xlu0 %2275
      %2277 = vrot.lane.b32.xlu0 %v2252, 16
      %v2278 = vpop.permute.xlu0 %2277
      %vm2287 = vcmask 195712
      %2288 = vst.msk [vmem:[#allocation2] sm:$0xff] %vm2287, %v2264
      %2289 = vst.msk [vmem:[#allocation2 + $0x8] sm:$0xff] %vm2287, %v2266
      %2290 = vst.msk [vmem:[#allocation2 + $0x10] sm:$0xff] %vm2287, %v2268
      %2291 = vst.msk [vmem:[#allocation2 + $0x18] sm:$0xff] %vm2287, %v2270
      %2292 = vst.msk [vmem:[#allocation2 + $0x20] sm:$0xff] %vm2287, %v2272
      %2293 = vst.msk [vmem:[#allocation2 + $0x28] sm:$0xff] %vm2287, %v2274
      %2294 = vst.msk [vmem:[#allocation2 + $0x30] sm:$0xff] %vm2287, %v2276
      %2295 = vst.msk [vmem:[#allocation2 + $0x38] sm:$0xff] %vm2287, %v2278
      %2296 = vrot.lane.b32.xlu0 %v752, 104
      %v2297 = vpop.permute.xlu0 %2296
      %2298 = vrot.lane.b32.xlu0 %v752, 72
      %v2299 = vpop.permute.xlu0 %2298
      %v2301 = vsel %vm759, %v2297, 0
      %v2304 = vsel %vm759, %v2299, 0
      %2306 = vmatprep.subr.bf16.mxu0 0
      %2307 = vmatpush1.bf16.xpose.msra.mxu0 %v2304
      %2308 = vmatprep.subr.bf16.mxu0 0
      %2309 = vmatpush1.bf16.xpose.msra.mxu0 0
      %2310 = vmatprep.subr.bf16.mxu0 0
      %2311 = vmatpush1.bf16.xpose.msra.mxu0 0
      %2312 = vmatprep.subr.bf16.mxu0 0
      %2313 = vmatpush1.bf16.xpose.msra.mxu0 0
      %2314 = vmatprep.subr.bf16.mxu0 0
      %2315 = vmatpush1.bf16.xpose.msra.mxu0 0
      %2316 = vmatprep.subr.bf16.mxu0 0
      %2317 = vmatpush1.bf16.xpose.msra.mxu0 0
      %2318 = vmatprep.subr.bf16.mxu0 0
      %2319 = vmatpush1.bf16.xpose.msra.mxu0 0
      %2320 = vmatprep.subr.bf16.mxu0 0
      %2321 = vmatpush1.bf16.xpose.msra.mxu0 0
      %2322 = vmatprep.subr.bf16.mxu0 0
      %2323 = vmatpush1.bf16.xpose.msra.mxu0 0
      %2324 = vmatprep.subr.bf16.mxu0 0
      %2325 = vmatpush1.bf16.xpose.msra.mxu0 0
      %2326 = vmatprep.subr.bf16.mxu0 0
      %2327 = vmatpush1.bf16.xpose.msra.mxu0 0
      %2328 = vmatprep.subr.bf16.mxu0 0
      %2329 = vmatpush1.bf16.xpose.msra.mxu0 0
      %2330 = vmatprep.subr.bf16.mxu0 0
      %2331 = vmatpush1.bf16.xpose.msra.mxu0 0
      %2332 = vmatprep.subr.bf16.mxu0 0
      %2333 = vmatpush1.bf16.xpose.msra.mxu0 0
      %2334 = vmatprep.subr.bf16.mxu0 0
      %2335 = vmatpush1.bf16.xpose.msra.mxu0 0
      %2336 = vmatprep.subr.bf16.mxu0 0
      %2337 = vmatpush1.bf16.xpose.msra.mxu0 0
      %2338 = vmatprep.mubr.bf16.mxu0 0
      %2339 = vmatmul.mubr.bf16.gmra.mrb[0].mxu0 %v2301
      %v2340 = vpop.f32.mrb[0].mxu0
      %v2341 = vadd.f32 %v726, %v2340
      %v2342 = vpop.f32.mrb[0].mxu0
      %v2343 = vpop.f32.mrb[0].mxu0
      %v2344 = vadd.f32 %v727, %v2343
      %v2345 = vpop.f32.mrb[0].mxu0
      %2346 = vdwg.mxu0
      %2347 = vrot.lane.b32.xlu0 %v753, 104
      %v2348 = vpop.permute.xlu0 %2347
      %2349 = vrot.lane.b32.xlu0 %v753, 72
      %v2350 = vpop.permute.xlu0 %2349
      %v2352 = vsel %vm759, %v2348, 0
      %v2355 = vsel %vm759, %v2350, 0
      %2357 = vmatprep.subr.bf16.mxu0 0
      %2358 = vmatpush1.bf16.xpose.msra.mxu0 %v2355
      %2359 = vmatprep.subr.bf16.mxu0 0
      %2360 = vmatpush1.bf16.xpose.msra.mxu0 0
      %2361 = vmatprep.subr.bf16.mxu0 0
      %2362 = vmatpush1.bf16.xpose.msra.mxu0 0
      %2363 = vmatprep.subr.bf16.mxu0 0
      %2364 = vmatpush1.bf16.xpose.msra.mxu0 0
      %2365 = vmatprep.subr.bf16.mxu0 0
      %2366 = vmatpush1.bf16.xpose.msra.mxu0 0
      %2367 = vmatprep.subr.bf16.mxu0 0
      %2368 = vmatpush1.bf16.xpose.msra.mxu0 0
      %2369 = vmatprep.subr.bf16.mxu0 0
      %2370 = vmatpush1.bf16.xpose.msra.mxu0 0
      %2371 = vmatprep.subr.bf16.mxu0 0
      %2372 = vmatpush1.bf16.xpose.msra.mxu0 0
      %2373 = vmatprep.subr.bf16.mxu0 0
      %2374 = vmatpush1.bf16.xpose.msra.mxu0 0
      %2375 = vmatprep.subr.bf16.mxu0 0
      %2376 = vmatpush1.bf16.xpose.msra.mxu0 0
      %2377 = vmatprep.subr.bf16.mxu0 0
      %2378 = vmatpush1.bf16.xpose.msra.mxu0 0
      %2379 = vmatprep.subr.bf16.mxu0 0
      %2380 = vmatpush1.bf16.xpose.msra.mxu0 0
      %2381 = vmatprep.subr.bf16.mxu0 0
      %2382 = vmatpush1.bf16.xpose.msra.mxu0 0
      %2383 = vmatprep.subr.bf16.mxu0 0
      %2384 = vmatpush1.bf16.xpose.msra.mxu0 0
      %2385 = vmatprep.subr.bf16.mxu0 0
      %2386 = vmatpush1.bf16.xpose.msra.mxu0 0
      %2387 = vmatprep.subr.bf16.mxu0 0
      %2388 = vmatpush1.bf16.xpose.msra.mxu0 0
      %2389 = vmatprep.mubr.bf16.mxu0 0
      %2390 = vmatmul.mubr.bf16.gmra.mrb[0].mxu0 %v2352
      %v2391 = vpop.f32.mrb[0].mxu0
      %v2392 = vadd.f32 %v734, %v2391
      %v2393 = vpop.f32.mrb[0].mxu0
      %v2394 = vpop.f32.mrb[0].mxu0
      %v2395 = vadd.f32 %v735, %v2394
      %v2396 = vpop.f32.mrb[0].mxu0
      %2397 = vdwg.mxu0
      %2398 = vrot.lane.b32.xlu0 %v754, 104
      %v2399 = vpop.permute.xlu0 %2398
      %2400 = vrot.lane.b32.xlu0 %v754, 72
      %v2401 = vpop.permute.xlu0 %2400
      %v2403 = vsel %vm759, %v2399, 0
      %v2406 = vsel %vm759, %v2401, 0
      %2408 = vmatprep.subr.bf16.mxu0 0
      %2409 = vmatpush1.bf16.xpose.msra.mxu0 %v2406
      %2410 = vmatprep.subr.bf16.mxu0 0
      %2411 = vmatpush1.bf16.xpose.msra.mxu0 0
      %2412 = vmatprep.subr.bf16.mxu0 0
      %2413 = vmatpush1.bf16.xpose.msra.mxu0 0
      %2414 = vmatprep.subr.bf16.mxu0 0
      %2415 = vmatpush1.bf16.xpose.msra.mxu0 0
      %2416 = vmatprep.subr.bf16.mxu0 0
      %2417 = vmatpush1.bf16.xpose.msra.mxu0 0
      %2418 = vmatprep.subr.bf16.mxu0 0
      %2419 = vmatpush1.bf16.xpose.msra.mxu0 0
      %2420 = vmatprep.subr.bf16.mxu0 0
      %2421 = vmatpush1.bf16.xpose.msra.mxu0 0
      %2422 = vmatprep.subr.bf16.mxu0 0
      %2423 = vmatpush1.bf16.xpose.msra.mxu0 0
      %2424 = vmatprep.subr.bf16.mxu0 0
      %2425 = vmatpush1.bf16.xpose.msra.mxu0 0
      %2426 = vmatprep.subr.bf16.mxu0 0
      %2427 = vmatpush1.bf16.xpose.msra.mxu0 0
      %2428 = vmatprep.subr.bf16.mxu0 0
      %2429 = vmatpush1.bf16.xpose.msra.mxu0 0
      %2430 = vmatprep.subr.bf16.mxu0 0
      %2431 = vmatpush1.bf16.xpose.msra.mxu0 0
      %2432 = vmatprep.subr.bf16.mxu0 0
      %2433 = vmatpush1.bf16.xpose.msra.mxu0 0
      %2434 = vmatprep.subr.bf16.mxu0 0
      %2435 = vmatpush1.bf16.xpose.msra.mxu0 0
      %2436 = vmatprep.subr.bf16.mxu0 0
      %2437 = vmatpush1.bf16.xpose.msra.mxu0 0
      %2438 = vmatprep.subr.bf16.mxu0 0
      %2439 = vmatpush1.bf16.xpose.msra.mxu0 0
      %2440 = vmatprep.mubr.bf16.mxu0 0
      %2441 = vmatmul.mubr.bf16.gmra.mrb[0].mxu0 %v2403
      %v2442 = vpop.f32.mrb[0].mxu0
      %v2443 = vadd.f32 %v742, %v2442
      %v2444 = vpop.f32.mrb[0].mxu0
      %v2445 = vpop.f32.mrb[0].mxu0
      %v2446 = vadd.f32 %v743, %v2445
      %v2447 = vpop.f32.mrb[0].mxu0
      %2448 = vdwg.mxu0
      %2449 = vrot.lane.b32.xlu0 %v755, 104
      %v2450 = vpop.permute.xlu0 %2449
      %2451 = vrot.lane.b32.xlu0 %v755, 72
      %v2452 = vpop.permute.xlu0 %2451
      %v2454 = vsel %vm759, %v2450, 0
      %v2457 = vsel %vm759, %v2452, 0
      %2459 = vmatprep.subr.bf16.mxu0 0
      %2460 = vmatpush1.bf16.xpose.msra.mxu0 %v2457
      %2461 = vmatprep.subr.bf16.mxu0 0
      %2462 = vmatpush1.bf16.xpose.msra.mxu0 0
      %2463 = vmatprep.subr.bf16.mxu0 0
      %2464 = vmatpush1.bf16.xpose.msra.mxu0 0
      %2465 = vmatprep.subr.bf16.mxu0 0
      %2466 = vmatpush1.bf16.xpose.msra.mxu0 0
      %2467 = vmatprep.subr.bf16.mxu0 0
      %2468 = vmatpush1.bf16.xpose.msra.mxu0 0
      %2469 = vmatprep.subr.bf16.mxu0 0
      %2470 = vmatpush1.bf16.xpose.msra.mxu0 0
      %2471 = vmatprep.subr.bf16.mxu0 0
      %2472 = vmatpush1.bf16.xpose.msra.mxu0 0
      %2473 = vmatprep.subr.bf16.mxu0 0
      %2474 = vmatpush1.bf16.xpose.msra.mxu0 0
      %2475 = vmatprep.subr.bf16.mxu0 0
      %2476 = vmatpush1.bf16.xpose.msra.mxu0 0
      %2477 = vmatprep.subr.bf16.mxu0 0
      %2478 = vmatpush1.bf16.xpose.msra.mxu0 0
      %2479 = vmatprep.subr.bf16.mxu0 0
      %2480 = vmatpush1.bf16.xpose.msra.mxu0 0
      %2481 = vmatprep.subr.bf16.mxu0 0
      %2482 = vmatpush1.bf16.xpose.msra.mxu0 0
      %2483 = vmatprep.subr.bf16.mxu0 0
      %2484 = vmatpush1.bf16.xpose.msra.mxu0 0
      %2485 = vmatprep.subr.bf16.mxu0 0
      %2486 = vmatpush1.bf16.xpose.msra.mxu0 0
      %2487 = vmatprep.subr.bf16.mxu0 0
      %2488 = vmatpush1.bf16.xpose.msra.mxu0 0
      %2489 = vmatprep.subr.bf16.mxu0 0
      %2490 = vmatpush1.bf16.xpose.msra.mxu0 0
      %2491 = vmatprep.mubr.bf16.mxu0 0
      %2492 = vmatmul.mubr.bf16.gmra.mrb[0].mxu0 %v2454
      %v2493 = vpop.f32.mrb[0].mxu0
      %v2494 = vadd.f32 %v750, %v2493
      %v2495 = vpop.f32.mrb[0].mxu0
      %v2496 = vpop.f32.mrb[0].mxu0
      %v2497 = vadd.f32 %v751, %v2496
      %v2498 = vpop.f32.mrb[0].mxu0
      %2499 = vdwg.mxu0
      %v2500 = vsel %vm957, %v2341, -inf
      %2501 = vmax.xlane.f32.xlu0 %v2500
      %v2502 = vpop.xlane.xlu0 %2501
      %v2503 = vsel %vm957, %v2344, -inf
      %2504 = vmax.xlane.f32.xlu0 %v2503
      %v2505 = vpop.xlane.xlu0 %2504
      %v2506 = vsel %vm957, %v2392, -inf
      %2507 = vmax.xlane.f32.xlu0 %v2506
      %v2508 = vpop.xlane.xlu0 %2507
      %v2509 = vsel %vm957, %v2395, -inf
      %2510 = vmax.xlane.f32.xlu0 %v2509
      %v2511 = vpop.xlane.xlu0 %2510
      %v2512 = vsel %vm957, %v2443, -inf
      %2513 = vmax.xlane.f32.xlu0 %v2512
      %v2514 = vpop.xlane.xlu0 %2513
      %v2515 = vsel %vm957, %v2446, -inf
      %2516 = vmax.xlane.f32.xlu0 %v2515
      %v2517 = vpop.xlane.xlu0 %2516
      %v2518 = vsel %vm957, %v2494, -inf
      %2519 = vmax.xlane.f32.xlu0 %v2518
      %v2520 = vpop.xlane.xlu0 %2519
      %v2521 = vsel %vm957, %v2497, -inf
      %2522 = vmax.xlane.f32.xlu0 %v2521
      %v2523 = vpop.xlane.xlu0 %2522
      %v2524 = vsub.f32 %v2341, %v2502
      %v2525 = vsub.f32 %v2344, %v2505
      %v2526 = vsub.f32 %v2392, %v2508
      %v2527 = vsub.f32 %v2395, %v2511
      %v2528 = vsub.f32 %v2443, %v2514
      %v2529 = vsub.f32 %v2446, %v2517
      %v2530 = vsub.f32 %v2494, %v2520
      %v2531 = vsub.f32 %v2497, %v2523
      %v2532 = vmul.f32 %v2524, 1.442695
      %v2533 = vpow.pop %v2532
      %v2534 = vmul.f32 %v2525, 1.442695
      %v2535 = vpow.pop %v2534
      %v2536 = vmul.f32 %v2526, 1.442695
      %v2537 = vpow.pop %v2536
      %v2538 = vmul.f32 %v2527, 1.442695
      %v2539 = vpow.pop %v2538
      %v2540 = vmul.f32 %v2528, 1.442695
      %v2541 = vpow.pop %v2540
      %v2542 = vmul.f32 %v2529, 1.442695
      %v2543 = vpow.pop %v2542
      %v2544 = vmul.f32 %v2530, 1.442695
      %v2545 = vpow.pop %v2544
      %v2546 = vmul.f32 %v2531, 1.442695
      %v2547 = vpow.pop %v2546
      %v2548 = vsel %vm957, %v2533, 0.0
      %2549 = vadd.xlane.f32.xlu0 %v2548
      %v2550 = vpop.xlane.xlu0 %2549
      %v2551 = vsel %vm957, %v2535, 0.0
      %2552 = vadd.xlane.f32.xlu0 %v2551
      %v2553 = vpop.xlane.xlu0 %2552
      %v2554 = vsel %vm957, %v2537, 0.0
      %2555 = vadd.xlane.f32.xlu0 %v2554
      %v2556 = vpop.xlane.xlu0 %2555
      %v2557 = vsel %vm957, %v2539, 0.0
      %2558 = vadd.xlane.f32.xlu0 %v2557
      %v2559 = vpop.xlane.xlu0 %2558
      %v2560 = vsel %vm957, %v2541, 0.0
      %2561 = vadd.xlane.f32.xlu0 %v2560
      %v2562 = vpop.xlane.xlu0 %2561
      %v2563 = vsel %vm957, %v2543, 0.0
      %2564 = vadd.xlane.f32.xlu0 %v2563
      %v2565 = vpop.xlane.xlu0 %2564
      %v2566 = vsel %vm957, %v2545, 0.0
      %2567 = vadd.xlane.f32.xlu0 %v2566
      %v2568 = vpop.xlane.xlu0 %2567
      %v2569 = vsel %vm957, %v2547, 0.0
      %2570 = vadd.xlane.f32.xlu0 %v2569
      %v2571 = vpop.xlane.xlu0 %2570
      %v2572 = vrcp.pop %v2550
      %v2573 = vrcp.pop %v2553
      %v2574 = vrcp.pop %v2556
      %v2575 = vrcp.pop %v2559
      %v2576 = vrcp.pop %v2562
      %v2577 = vrcp.pop %v2565
      %v2578 = vrcp.pop %v2568
      %v2579 = vrcp.pop %v2571
      %v2580 = vmul.f32 %v2533, %v2572
      %v2581 = vmul.f32 %v2535, %v2573
      %v2582 = vmul.f32 %v2537, %v2574
      %v2583 = vmul.f32 %v2539, %v2575
      %v2584 = vmul.f32 %v2541, %v2576
      %v2585 = vmul.f32 %v2543, %v2577
      %v2586 = vmul.f32 %v2545, %v2578
      %v2587 = vmul.f32 %v2547, %v2579
      %v2588 = vpack.c.bf16 %v2581, %v2580
      %v2589 = vpack.c.bf16 %v2583, %v2582
      %v2590 = vpack.c.bf16 %v2585, %v2584
      %v2591 = vpack.c.bf16 %v2587, %v2586
      %2592 = vrot.lane.b32.xlu0 %v752, 40
      %v2593 = vpop.permute.xlu0 %2592
      %v2596 = vsel %vm957, %v2588, 0
      %2598 = vmatprep.subr.bf16.mxu0 0
      %2599 = vmatpush1.bf16.msra.mxu0 %v2593
      %2600 = vmatprep.subr.bf16.mxu0 0
      %2601 = vmatpush1.bf16.msra.mxu0 0
      %2602 = vmatprep.subr.bf16.mxu0 0
      %2603 = vmatpush1.bf16.msra.mxu0 0
      %2604 = vmatprep.subr.bf16.mxu0 0
      %2605 = vmatpush1.bf16.msra.mxu0 0
      %2606 = vmatprep.subr.bf16.mxu0 0
      %2607 = vmatpush1.bf16.msra.mxu0 0
      %2608 = vmatprep.subr.bf16.mxu0 0
      %2609 = vmatpush1.bf16.msra.mxu0 0
      %2610 = vmatprep.subr.bf16.mxu0 0
      %2611 = vmatpush1.bf16.msra.mxu0 0
      %2612 = vmatprep.subr.bf16.mxu0 0
      %2613 = vmatpush1.bf16.msra.mxu0 0
      %2614 = vmatprep.subr.bf16.mxu0 0
      %2615 = vmatpush1.bf16.msra.mxu0 0
      %2616 = vmatprep.subr.bf16.mxu0 0
      %2617 = vmatpush1.bf16.msra.mxu0 0
      %2618 = vmatprep.subr.bf16.mxu0 0
      %2619 = vmatpush1.bf16.msra.mxu0 0
      %2620 = vmatprep.subr.bf16.mxu0 0
      %2621 = vmatpush1.bf16.msra.mxu0 0
      %2622 = vmatprep.subr.bf16.mxu0 0
      %2623 = vmatpush1.bf16.msra.mxu0 0
      %2624 = vmatprep.subr.bf16.mxu0 0
      %2625 = vmatpush1.bf16.msra.mxu0 0
      %2626 = vmatprep.subr.bf16.mxu0 0
      %2627 = vmatpush1.bf16.msra.mxu0 0
      %2628 = vmatprep.subr.bf16.mxu0 0
      %2629 = vmatpush1.bf16.msra.mxu0 0
      %2630 = vmatprep.mubr.bf16.mxu0 0
      %2631 = vmatmul.mubr.bf16.gmra.mrb[0].mxu0 %v2596
      %v2632 = vpop.f32.mrb[0].mxu0
      %v2633 = vadd.f32 0.0, %v2632
      %v2634 = vpop.f32.mrb[0].mxu0
      %v2635 = vpop.f32.mrb[0].mxu0
      %v2636 = vadd.f32 0.0, %v2635
      %v2637 = vpop.f32.mrb[0].mxu0
      %2638 = vdwg.mxu0
      %2639 = vrot.lane.b32.xlu0 %v753, 40
      %v2640 = vpop.permute.xlu0 %2639
      %v2643 = vsel %vm957, %v2589, 0
      %2645 = vmatprep.subr.bf16.mxu0 0
      %2646 = vmatpush1.bf16.msra.mxu0 %v2640
      %2647 = vmatprep.subr.bf16.mxu0 0
      %2648 = vmatpush1.bf16.msra.mxu0 0
      %2649 = vmatprep.subr.bf16.mxu0 0
      %2650 = vmatpush1.bf16.msra.mxu0 0
      %2651 = vmatprep.subr.bf16.mxu0 0
      %2652 = vmatpush1.bf16.msra.mxu0 0
      %2653 = vmatprep.subr.bf16.mxu0 0
      %2654 = vmatpush1.bf16.msra.mxu0 0
      %2655 = vmatprep.subr.bf16.mxu0 0
      %2656 = vmatpush1.bf16.msra.mxu0 0
      %2657 = vmatprep.subr.bf16.mxu0 0
      %2658 = vmatpush1.bf16.msra.mxu0 0
      %2659 = vmatprep.subr.bf16.mxu0 0
      %2660 = vmatpush1.bf16.msra.mxu0 0
      %2661 = vmatprep.subr.bf16.mxu0 0
      %2662 = vmatpush1.bf16.msra.mxu0 0
      %2663 = vmatprep.subr.bf16.mxu0 0
      %2664 = vmatpush1.bf16.msra.mxu0 0
      %2665 = vmatprep.subr.bf16.mxu0 0
      %2666 = vmatpush1.bf16.msra.mxu0 0
      %2667 = vmatprep.subr.bf16.mxu0 0
      %2668 = vmatpush1.bf16.msra.mxu0 0
      %2669 = vmatprep.subr.bf16.mxu0 0
      %2670 = vmatpush1.bf16.msra.mxu0 0
      %2671 = vmatprep.subr.bf16.mxu0 0
      %2672 = vmatpush1.bf16.msra.mxu0 0
      %2673 = vmatprep.subr.bf16.mxu0 0
      %2674 = vmatpush1.bf16.msra.mxu0 0
      %2675 = vmatprep.subr.bf16.mxu0 0
      %2676 = vmatpush1.bf16.msra.mxu0 0
      %2677 = vmatprep.mubr.bf16.mxu0 0
      %2678 = vmatmul.mubr.bf16.gmra.mrb[0].mxu0 %v2643
      %v2679 = vpop.f32.mrb[0].mxu0
      %v2680 = vadd.f32 0.0, %v2679
      %v2681 = vpop.f32.mrb[0].mxu0
      %v2682 = vpop.f32.mrb[0].mxu0
      %v2683 = vadd.f32 0.0, %v2682
      %v2684 = vpop.f32.mrb[0].mxu0
      %2685 = vdwg.mxu0
      %2686 = vrot.lane.b32.xlu0 %v754, 40
      %v2687 = vpop.permute.xlu0 %2686
      %v2690 = vsel %vm957, %v2590, 0
      %2692 = vmatprep.subr.bf16.mxu0 0
      %2693 = vmatpush1.bf16.msra.mxu0 %v2687
      %2694 = vmatprep.subr.bf16.mxu0 0
      %2695 = vmatpush1.bf16.msra.mxu0 0
      %2696 = vmatprep.subr.bf16.mxu0 0
      %2697 = vmatpush1.bf16.msra.mxu0 0
      %2698 = vmatprep.subr.bf16.mxu0 0
      %2699 = vmatpush1.bf16.msra.mxu0 0
      %2700 = vmatprep.subr.bf16.mxu0 0
      %2701 = vmatpush1.bf16.msra.mxu0 0
      %2702 = vmatprep.subr.bf16.mxu0 0
      %2703 = vmatpush1.bf16.msra.mxu0 0
      %2704 = vmatprep.subr.bf16.mxu0 0
      %2705 = vmatpush1.bf16.msra.mxu0 0
      %2706 = vmatprep.subr.bf16.mxu0 0
      %2707 = vmatpush1.bf16.msra.mxu0 0
      %2708 = vmatprep.subr.bf16.mxu0 0
      %2709 = vmatpush1.bf16.msra.mxu0 0
      %2710 = vmatprep.subr.bf16.mxu0 0
      %2711 = vmatpush1.bf16.msra.mxu0 0
      %2712 = vmatprep.subr.bf16.mxu0 0
      %2713 = vmatpush1.bf16.msra.mxu0 0
      %2714 = vmatprep.subr.bf16.mxu0 0
      %2715 = vmatpush1.bf16.msra.mxu0 0
      %2716 = vmatprep.subr.bf16.mxu0 0
      %2717 = vmatpush1.bf16.msra.mxu0 0
      %2718 = vmatprep.subr.bf16.mxu0 0
      %2719 = vmatpush1.bf16.msra.mxu0 0
      %2720 = vmatprep.subr.bf16.mxu0 0
      %2721 = vmatpush1.bf16.msra.mxu0 0
      %2722 = vmatprep.subr.bf16.mxu0 0
      %2723 = vmatpush1.bf16.msra.mxu0 0
      %2724 = vmatprep.mubr.bf16.mxu0 0
      %2725 = vmatmul.mubr.bf16.gmra.mrb[0].mxu0 %v2690
      %v2726 = vpop.f32.mrb[0].mxu0
      %v2727 = vadd.f32 0.0, %v2726
      %v2728 = vpop.f32.mrb[0].mxu0
      %v2729 = vpop.f32.mrb[0].mxu0
      %v2730 = vadd.f32 0.0, %v2729
      %v2731 = vpop.f32.mrb[0].mxu0
      %2732 = vdwg.mxu0
      %2733 = vrot.lane.b32.xlu0 %v755, 40
      %v2734 = vpop.permute.xlu0 %2733
      %v2737 = vsel %vm957, %v2591, 0
      %2739 = vmatprep.subr.bf16.mxu0 0
      %2740 = vmatpush1.bf16.msra.mxu0 %v2734
      %2741 = vmatprep.subr.bf16.mxu0 0
      %2742 = vmatpush1.bf16.msra.mxu0 0
      %2743 = vmatprep.subr.bf16.mxu0 0
      %2744 = vmatpush1.bf16.msra.mxu0 0
      %2745 = vmatprep.subr.bf16.mxu0 0
      %2746 = vmatpush1.bf16.msra.mxu0 0
      %2747 = vmatprep.subr.bf16.mxu0 0
      %2748 = vmatpush1.bf16.msra.mxu0 0
      %2749 = vmatprep.subr.bf16.mxu0 0
      %2750 = vmatpush1.bf16.msra.mxu0 0
      %2751 = vmatprep.subr.bf16.mxu0 0
      %2752 = vmatpush1.bf16.msra.mxu0 0
      %2753 = vmatprep.subr.bf16.mxu0 0
      %2754 = vmatpush1.bf16.msra.mxu0 0
      %2755 = vmatprep.subr.bf16.mxu0 0
      %2756 = vmatpush1.bf16.msra.mxu0 0
      %2757 = vmatprep.subr.bf16.mxu0 0
      %2758 = vmatpush1.bf16.msra.mxu0 0
      %2759 = vmatprep.subr.bf16.mxu0 0
      %2760 = vmatpush1.bf16.msra.mxu0 0
      %2761 = vmatprep.subr.bf16.mxu0 0
      %2762 = vmatpush1.bf16.msra.mxu0 0
      %2763 = vmatprep.subr.bf16.mxu0 0
      %2764 = vmatpush1.bf16.msra.mxu0 0
      %2765 = vmatprep.subr.bf16.mxu0 0
      %2766 = vmatpush1.bf16.msra.mxu0 0
      %2767 = vmatprep.subr.bf16.mxu0 0
      %2768 = vmatpush1.bf16.msra.mxu0 0
      %2769 = vmatprep.subr.bf16.mxu0 0
      %2770 = vmatpush1.bf16.msra.mxu0 0
      %2771 = vmatprep.mubr.bf16.mxu0 0
      %2772 = vmatmul.mubr.bf16.gmra.mrb[0].mxu0 %v2737
      %v2773 = vpop.f32.mrb[0].mxu0
      %v2774 = vadd.f32 0.0, %v2773
      %v2775 = vpop.f32.mrb[0].mxu0
      %v2776 = vpop.f32.mrb[0].mxu0
      %v2777 = vadd.f32 0.0, %v2776
      %v2778 = vpop.f32.mrb[0].mxu0
      %2779 = vdwg.mxu0
      %2788 = vrot.lane.b32.xlu0 %v2633, 24
      %v2789 = vpop.permute.xlu0 %2788
      %2790 = vrot.lane.b32.xlu0 %v2636, 24
      %v2791 = vpop.permute.xlu0 %2790
      %2792 = vrot.lane.b32.xlu0 %v2680, 24
      %v2793 = vpop.permute.xlu0 %2792
      %2794 = vrot.lane.b32.xlu0 %v2683, 24
      %v2795 = vpop.permute.xlu0 %2794
      %2796 = vrot.lane.b32.xlu0 %v2727, 24
      %v2797 = vpop.permute.xlu0 %2796
      %2798 = vrot.lane.b32.xlu0 %v2730, 24
      %v2799 = vpop.permute.xlu0 %2798
      %2800 = vrot.lane.b32.xlu0 %v2774, 24
      %v2801 = vpop.permute.xlu0 %2800
      %2802 = vrot.lane.b32.xlu0 %v2777, 24
      %v2803 = vpop.permute.xlu0 %2802
      %vm2812 = vcmask 261312
      %2813 = vst.msk [vmem:[#allocation2] sm:$0xff] %vm2812, %v2789
      %2814 = vst.msk [vmem:[#allocation2 + $0x8] sm:$0xff] %vm2812, %v2791
      %2815 = vst.msk [vmem:[#allocation2 + $0x10] sm:$0xff] %vm2812, %v2793
      %2816 = vst.msk [vmem:[#allocation2 + $0x18] sm:$0xff] %vm2812, %v2795
      %2817 = vst.msk [vmem:[#allocation2 + $0x20] sm:$0xff] %vm2812, %v2797
      %2818 = vst.msk [vmem:[#allocation2 + $0x28] sm:$0xff] %vm2812, %v2799
      %2819 = vst.msk [vmem:[#allocation2 + $0x30] sm:$0xff] %vm2812, %v2801
      %2820 = vst.msk [vmem:[#allocation2 + $0x38] sm:$0xff] %vm2812, %v2803
      %v2821 = vld [vmem:[#allocation2] sm:$0xff]
      %v2822 = vld [vmem:[#allocation2 + $0x8] sm:$0xff]
      %v2823 = vld [vmem:[#allocation2 + $0x10] sm:$0xff]
      %v2824 = vld [vmem:[#allocation2 + $0x18] sm:$0xff]
      %v2825 = vld [vmem:[#allocation2 + $0x20] sm:$0xff]
      %v2826 = vld [vmem:[#allocation2 + $0x28] sm:$0xff]
      %v2827 = vld [vmem:[#allocation2 + $0x30] sm:$0xff]
      %v2828 = vld [vmem:[#allocation2 + $0x38] sm:$0xff]
      %v2829 = vpack.c.bf16 %v2822, %v2821
      %v2830 = vpack.c.bf16 %v2824, %v2823
      %v2831 = vpack.c.bf16 %v2826, %v2825
      %v2832 = vpack.c.bf16 %v2828, %v2827
      %v2833 = vld [vmem:[%s6] sm:$0xf]
      %v2834 = vld [vmem:[%s6 + $0x4] sm:$0xf]
      %v2835 = vld [vmem:[%s6 + $0x8] sm:$0xf]
      %v2836 = vld [vmem:[%s6 + $0xc] sm:$0xf]
      %v2837 = vld [vmem:[%s7] sm:$0x1]
      %v2839 = vlaneseq
      %v2840 = vshrl.u32 %v2839, 7
      %v2841 = vsub.s32 0, %v2840
      %v2842 = vrot.slane %v2837, %v2841
      %v2848 = vunpack.c.l.b16 %v2833
      %v2849 = vunpack.c.l.b16 %v2834
      %v2850 = vunpack.c.l.b16 %v2835
      %v2851 = vunpack.c.l.b16 %v2836
      %v2852 = vpack.c.b16 %v2849, %v2848
      %v2853 = vpack.c.b16 %v2851, %v2850
      %v2857 = vsel %vm480, %v2829, 0
      %v2860 = vsel %vm480, %v2830, 0
      %v2863 = vsel %vm480, %v2831, 0
      %v2866 = vsel %vm480, %v2832, 0
      %2868 = vmatprep.subr.bf16.mxu0 0
      %2869 = vmatpush1.bf16.msra.mxu0 %v2852
      %2870 = vmatprep.subr.bf16.mxu0 0
      %2871 = vmatpush1.bf16.msra.mxu0 %v2853
      %2872 = vmatprep.subr.bf16.mxu0 0
      %2873 = vmatpush1.bf16.msra.mxu0 0
      %2874 = vmatprep.subr.bf16.mxu0 0
      %2875 = vmatpush1.bf16.msra.mxu0 0
      %2876 = vmatprep.subr.bf16.mxu0 0
      %2877 = vmatpush1.bf16.msra.mxu0 0
      %2878 = vmatprep.subr.bf16.mxu0 0
      %2879 = vmatpush1.bf16.msra.mxu0 0
      %2880 = vmatprep.subr.bf16.mxu0 0
      %2881 = vmatpush1.bf16.msra.mxu0 0
      %2882 = vmatprep.subr.bf16.mxu0 0
      %2883 = vmatpush1.bf16.msra.mxu0 0
      %2884 = vmatprep.subr.bf16.mxu0 0
      %2885 = vmatpush1.bf16.msra.mxu0 0
      %2886 = vmatprep.subr.bf16.mxu0 0
      %2887 = vmatpush1.bf16.msra.mxu0 0
      %2888 = vmatprep.subr.bf16.mxu0 0
      %2889 = vmatpush1.bf16.msra.mxu0 0
      %2890 = vmatprep.subr.bf16.mxu0 0
      %2891 = vmatpush1.bf16.msra.mxu0 0
      %2892 = vmatprep.subr.bf16.mxu0 0
      %2893 = vmatpush1.bf16.msra.mxu0 0
      %2894 = vmatprep.subr.bf16.mxu0 0
      %2895 = vmatpush1.bf16.msra.mxu0 0
      %2896 = vmatprep.subr.bf16.mxu0 0
      %2897 = vmatpush1.bf16.msra.mxu0 0
      %2898 = vmatprep.subr.bf16.mxu0 0
      %2899 = vmatpush1.bf16.msra.mxu0 0
      %2900 = vmatprep.mubr.bf16.mxu0 0
      %2901 = vmatmul.mubr.bf16.gmra.mrb[0].mxu0 %v2857
      %v2902 = vpop.f32.mrb[0].mxu0
      %v2903 = vadd.f32 %v2842, %v2902
      %v2904 = vpop.f32.mrb[0].mxu0
      %v2905 = vpop.f32.mrb[0].mxu0
      %v2906 = vadd.f32 %v2842, %v2905
      %v2907 = vpop.f32.mrb[0].mxu0
      %2908 = vmatprep.mubr.bf16.mxu0 0
      %2909 = vmatmul.mubr.bf16.gmra.mrb[0].mxu0 %v2860
      %v2910 = vpop.f32.mrb[0].mxu0
      %v2911 = vadd.f32 %v2842, %v2910
      %v2912 = vpop.f32.mrb[0].mxu0
      %v2913 = vpop.f32.mrb[0].mxu0
      %v2914 = vadd.f32 %v2842, %v2913
      %v2915 = vpop.f32.mrb[0].mxu0
      %2916 = vmatprep.mubr.bf16.mxu0 0
      %2917 = vmatmul.mubr.bf16.gmra.mrb[0].mxu0 %v2863
      %v2918 = vpop.f32.mrb[0].mxu0
      %v2919 = vadd.f32 %v2842, %v2918
      %v2920 = vpop.f32.mrb[0].mxu0
      %v2921 = vpop.f32.mrb[0].mxu0
      %v2922 = vadd.f32 %v2842, %v2921
      %v2923 = vpop.f32.mrb[0].mxu0
      %2924 = vmatprep.mubr.bf16.mxu0 0
      %2925 = vmatmul.mubr.bf16.gmra.mrb[0].mxu0 %v2866
      %v2926 = vpop.f32.mrb[0].mxu0
      %v2927 = vadd.f32 %v2842, %v2926
      %v2928 = vpop.f32.mrb[0].mxu0
      %v2929 = vpop.f32.mrb[0].mxu0
      %v2930 = vadd.f32 %v2842, %v2929
      %v2931 = vpop.f32.mrb[0].mxu0
      %2932 = vdwg.mxu0
      %v2933 = vadd.f32 %v472, %v2903
      %v2934 = vadd.f32 %v473, %v2906
      %v2935 = vadd.f32 %v474, %v2911
      %v2936 = vadd.f32 %v475, %v2914
      %v2937 = vadd.f32 %v476, %v2919
      %v2938 = vadd.f32 %v477, %v2922
      %v2939 = vadd.f32 %v478, %v2927
      %v2940 = vadd.f32 %v479, %v2930
      %v2941 = vsel %vm480, %v2933, 0.0
      %2942 = vadd.xlane.f32.xlu0 %v2941
      %v2943 = vpop.xlane.xlu0 %2942
      %v2944 = vsel %vm480, %v2934, 0.0
      %2945 = vadd.xlane.f32.xlu0 %v2944
      %v2946 = vpop.xlane.xlu0 %2945
      %v2947 = vsel %vm480, %v2935, 0.0
      %2948 = vadd.xlane.f32.xlu0 %v2947
      %v2949 = vpop.xlane.xlu0 %2948
      %v2950 = vsel %vm480, %v2936, 0.0
      %2951 = vadd.xlane.f32.xlu0 %v2950
      %v2952 = vpop.xlane.xlu0 %2951
      %v2953 = vsel %vm480, %v2937, 0.0
      %2954 = vadd.xlane.f32.xlu0 %v2953
      %v2955 = vpop.xlane.xlu0 %2954
      %v2956 = vsel %vm480, %v2938, 0.0
      %2957 = vadd.xlane.f32.xlu0 %v2956
      %v2958 = vpop.xlane.xlu0 %2957
      %v2959 = vsel %vm480, %v2939, 0.0
      %2960 = vadd.xlane.f32.xlu0 %v2959
      %v2961 = vpop.xlane.xlu0 %2960
      %v2962 = vsel %vm480, %v2940, 0.0
      %2963 = vadd.xlane.f32.xlu0 %v2962
      %v2964 = vpop.xlane.xlu0 %2963
      %v2965 = vmul.f32 %v2943, %v505
      %v2966 = vmul.f32 %v2946, %v505
      %v2967 = vmul.f32 %v2949, %v505
      %v2968 = vmul.f32 %v2952, %v505
      %v2969 = vmul.f32 %v2955, %v505
      %v2970 = vmul.f32 %v2958, %v505
      %v2971 = vmul.f32 %v2961, %v505
      %v2972 = vmul.f32 %v2964, %v505
      %v2973 = vsub.f32 %v2933, %v2965
      %v2974 = vsub.f32 %v2934, %v2966
      %v2975 = vsub.f32 %v2935, %v2967
      %v2976 = vsub.f32 %v2936, %v2968
      %v2977 = vsub.f32 %v2937, %v2969
      %v2978 = vsub.f32 %v2938, %v2970
      %v2979 = vsub.f32 %v2939, %v2971
      %v2980 = vsub.f32 %v2940, %v2972
      %v2981 = vmul.f32 %v2973, %v2973
      %v2982 = vmul.f32 %v2974, %v2974
      %v2983 = vmul.f32 %v2975, %v2975
      %v2984 = vmul.f32 %v2976, %v2976
      %v2985 = vmul.f32 %v2977, %v2977
      %v2986 = vmul.f32 %v2978, %v2978
      %v2987 = vmul.f32 %v2979, %v2979
      %v2988 = vmul.f32 %v2980, %v2980
      %v2989 = vsel %vm480, %v2981, 0.0
      %2990 = vadd.xlane.f32.xlu0 %v2989
      %v2991 = vpop.xlane.xlu0 %2990
      %v2992 = vsel %vm480, %v2982, 0.0
      %2993 = vadd.xlane.f32.xlu0 %v2992
      %v2994 = vpop.xlane.xlu0 %2993
      %v2995 = vsel %vm480, %v2983, 0.0
      %2996 = vadd.xlane.f32.xlu0 %v2995
      %v2997 = vpop.xlane.xlu0 %2996
      %v2998 = vsel %vm480, %v2984, 0.0
      %2999 = vadd.xlane.f32.xlu0 %v2998
      %v3000 = vpop.xlane.xlu0 %2999
      %v3001 = vsel %vm480, %v2985, 0.0
      %3002 = vadd.xlane.f32.xlu0 %v3001
      %v3003 = vpop.xlane.xlu0 %3002
      %v3004 = vsel %vm480, %v2986, 0.0
      %3005 = vadd.xlane.f32.xlu0 %v3004
      %v3006 = vpop.xlane.xlu0 %3005
      %v3007 = vsel %vm480, %v2987, 0.0
      %3008 = vadd.xlane.f32.xlu0 %v3007
      %v3009 = vpop.xlane.xlu0 %3008
      %v3010 = vsel %vm480, %v2988, 0.0
      %3011 = vadd.xlane.f32.xlu0 %v3010
      %v3012 = vpop.xlane.xlu0 %3011
      %v3013 = vmul.f32 %v2991, %v505
      %v3014 = vmul.f32 %v2994, %v505
      %v3015 = vmul.f32 %v2997, %v505
      %v3016 = vmul.f32 %v3000, %v505
      %v3017 = vmul.f32 %v3003, %v505
      %v3018 = vmul.f32 %v3006, %v505
      %v3019 = vmul.f32 %v3009, %v505
      %v3020 = vmul.f32 %v3012, %v505
      %v3021 = vadd.f32 %v3013, 1e-05
      %v3022 = vadd.f32 %v3014, 1e-05
      %v3023 = vadd.f32 %v3015, 1e-05
      %v3024 = vadd.f32 %v3016, 1e-05
      %v3025 = vadd.f32 %v3017, 1e-05
      %v3026 = vadd.f32 %v3018, 1e-05
      %v3027 = vadd.f32 %v3019, 1e-05
      %v3028 = vadd.f32 %v3020, 1e-05
      %v3029 = vrsqrt.pop %v3021
      %v3030 = vrsqrt.pop %v3022
      %v3031 = vrsqrt.pop %v3023
      %v3032 = vrsqrt.pop %v3024
      %v3033 = vrsqrt.pop %v3025
      %v3034 = vrsqrt.pop %v3026
      %v3035 = vrsqrt.pop %v3027
      %v3036 = vrsqrt.pop %v3028
      %v3037 = vmul.f32 %v2973, %v3029
      %v3038 = vmul.f32 %v2974, %v3030
      %v3039 = vmul.f32 %v2975, %v3031
      %v3040 = vmul.f32 %v2976, %v3032
      %v3041 = vmul.f32 %v2977, %v3033
      %v3042 = vmul.f32 %v2978, %v3034
      %v3043 = vmul.f32 %v2979, %v3035
      %v3044 = vmul.f32 %v2980, %v3036
      %v3045 = vld [vmem:[%s8] sm:$0x1]
      %v3047 = vlaneseq
      %v3048 = vshrl.u32 %v3047, 7
      %v3049 = vsub.s32 0, %v3048
      %v3050 = vrot.slane %v3045, %v3049
      %v3052 = vmul.f32 %v3037, %v3050
      %v3053 = vmul.f32 %v3038, %v3050
      %v3054 = vmul.f32 %v3039, %v3050
      %v3055 = vmul.f32 %v3040, %v3050
      %v3056 = vmul.f32 %v3041, %v3050
      %v3057 = vmul.f32 %v3042, %v3050
      %v3058 = vmul.f32 %v3043, %v3050
      %v3059 = vmul.f32 %v3044, %v3050
      %v3060 = vld [vmem:[%s9] sm:$0x1]
      %v3062 = vlaneseq
      %v3063 = vshrl.u32 %v3062, 7
      %v3064 = vsub.s32 0, %v3063
      %v3065 = vrot.slane %v3060, %v3064
      %v3067 = vadd.f32 %v3052, %v3065
      %v3068 = vadd.f32 %v3053, %v3065
      %v3069 = vadd.f32 %v3054, %v3065
      %v3070 = vadd.f32 %v3055, %v3065
      %v3071 = vadd.f32 %v3056, %v3065
      %v3072 = vadd.f32 %v3057, %v3065
      %v3073 = vadd.f32 %v3058, %v3065
      %v3074 = vadd.f32 %v3059, %v3065
      %v3075 = vpack.c.bf16 %v3068, %v3067
      %v3076 = vpack.c.bf16 %v3070, %v3069
      %v3077 = vpack.c.bf16 %v3072, %v3071
      %v3078 = vpack.c.bf16 %v3074, %v3073
      %v3079 = vld [vmem:[%s10] sm:$0xf]
      %v3080 = vld [vmem:[%s10 + $0x4] sm:$0xf]
      %v3081 = vld [vmem:[%s10 + $0x8] sm:$0xf]
      %v3082 = vld [vmem:[%s10 + $0xc] sm:$0xf]
      %v3083 = vld [vmem:[%s11] sm:$0x1]
      %v3085 = vlaneseq
      %v3086 = vshrl.u32 %v3085, 7
      %v3087 = vsub.s32 0, %v3086
      %v3088 = vrot.slane %v3083, %v3087
      %v3094 = vunpack.c.l.b16 %v3079
      %v3095 = vunpack.c.l.b16 %v3080
      %v3096 = vunpack.c.l.b16 %v3081
      %v3097 = vunpack.c.l.b16 %v3082
      %v3098 = vpack.c.b16 %v3095, %v3094
      %v3099 = vpack.c.b16 %v3097, %v3096
      %v3103 = vsel %vm480, %v3075, 0
      %v3106 = vsel %vm480, %v3076, 0
      %v3109 = vsel %vm480, %v3077, 0
      %v3112 = vsel %vm480, %v3078, 0
      %3114 = vmatprep.subr.bf16.mxu0 0
      %3115 = vmatpush1.bf16.msra.mxu0 %v3098
      %3116 = vmatprep.subr.bf16.mxu0 0
      %3117 = vmatpush1.bf16.msra.mxu0 %v3099
      %3118 = vmatprep.subr.bf16.mxu0 0
      %3119 = vmatpush1.bf16.msra.mxu0 0
      %3120 = vmatprep.subr.bf16.mxu0 0
      %3121 = vmatpush1.bf16.msra.mxu0 0
      %3122 = vmatprep.subr.bf16.mxu0 0
      %3123 = vmatpush1.bf16.msra.mxu0 0
      %3124 = vmatprep.subr.bf16.mxu0 0
      %3125 = vmatpush1.bf16.msra.mxu0 0
      %3126 = vmatprep.subr.bf16.mxu0 0
      %3127 = vmatpush1.bf16.msra.mxu0 0
      %3128 = vmatprep.subr.bf16.mxu0 0
      %3129 = vmatpush1.bf16.msra.mxu0 0
      %3130 = vmatprep.subr.bf16.mxu0 0
      %3131 = vmatpush1.bf16.msra.mxu0 0
      %3132 = vmatprep.subr.bf16.mxu0 0
      %3133 = vmatpush1.bf16.msra.mxu0 0
      %3134 = vmatprep.subr.bf16.mxu0 0
      %3135 = vmatpush1.bf16.msra.mxu0 0
      %3136 = vmatprep.subr.bf16.mxu0 0
      %3137 = vmatpush1.bf16.msra.mxu0 0
      %3138 = vmatprep.subr.bf16.mxu0 0
      %3139 = vmatpush1.bf16.msra.mxu0 0
      %3140 = vmatprep.subr.bf16.mxu0 0
      %3141 = vmatpush1.bf16.msra.mxu0 0
      %3142 = vmatprep.subr.bf16.mxu0 0
      %3143 = vmatpush1.bf16.msra.mxu0 0
      %3144 = vmatprep.subr.bf16.mxu0 0
      %3145 = vmatpush1.bf16.msra.mxu0 0
      %3146 = vmatprep.mubr.bf16.mxu0 0
      %3147 = vmatmul.mubr.bf16.gmra.mrb[0].mxu0 %v3103
      %v3148 = vpop.f32.mrb[0].mxu0
      %v3149 = vadd.f32 %v3088, %v3148
      %v3150 = vpop.f32.mrb[0].mxu0
      %v3151 = vpop.f32.mrb[0].mxu0
      %v3152 = vadd.f32 %v3088, %v3151
      %v3153 = vpop.f32.mrb[0].mxu0
      %3154 = vmatprep.mubr.bf16.mxu0 0
      %3155 = vmatmul.mubr.bf16.gmra.mrb[0].mxu0 %v3106
      %v3156 = vpop.f32.mrb[0].mxu0
      %v3157 = vadd.f32 %v3088, %v3156
      %v3158 = vpop.f32.mrb[0].mxu0
      %v3159 = vpop.f32.mrb[0].mxu0
      %v3160 = vadd.f32 %v3088, %v3159
      %v3161 = vpop.f32.mrb[0].mxu0
      %3162 = vmatprep.mubr.bf16.mxu0 0
      %3163 = vmatmul.mubr.bf16.gmra.mrb[0].mxu0 %v3109
      %v3164 = vpop.f32.mrb[0].mxu0
      %v3165 = vadd.f32 %v3088, %v3164
      %v3166 = vpop.f32.mrb[0].mxu0
      %v3167 = vpop.f32.mrb[0].mxu0
      %v3168 = vadd.f32 %v3088, %v3167
      %v3169 = vpop.f32.mrb[0].mxu0
      %3170 = vmatprep.mubr.bf16.mxu0 0
      %3171 = vmatmul.mubr.bf16.gmra.mrb[0].mxu0 %v3112
      %v3172 = vpop.f32.mrb[0].mxu0
      %v3173 = vadd.f32 %v3088, %v3172
      %v3174 = vpop.f32.mrb[0].mxu0
      %v3175 = vpop.f32.mrb[0].mxu0
      %v3176 = vadd.f32 %v3088, %v3175
      %v3177 = vpop.f32.mrb[0].mxu0
      %3178 = vdwg.mxu0
      %v3179 = vmul.f32 %v3149, 0.5
      %v3180 = vmul.f32 %v3152, 0.5
      %v3181 = vmul.f32 %v3157, 0.5
      %v3182 = vmul.f32 %v3160, 0.5
      %v3183 = vmul.f32 %v3165, 0.5
      %v3184 = vmul.f32 %v3168, 0.5
      %v3185 = vmul.f32 %v3173, 0.5
      %v3186 = vmul.f32 %v3176, 0.5
      %v3187 = vmul.f32 %v3149, 0.70710677
      %v3188 = vmul.f32 %v3152, 0.70710677
      %v3189 = vmul.f32 %v3157, 0.70710677
      %v3190 = vmul.f32 %v3160, 0.70710677
      %v3191 = vmul.f32 %v3165, 0.70710677
      %v3192 = vmul.f32 %v3168, 0.70710677
      %v3193 = vmul.f32 %v3173, 0.70710677
      %v3194 = vmul.f32 %v3176, 0.70710677
      %v3195 = verf.f32.pop %v3187
      %v3196 = verf.f32.pop %v3188
      %v3197 = verf.f32.pop %v3189
      %v3198 = verf.f32.pop %v3190
      %v3199 = verf.f32.pop %v3191
      %v3200 = verf.f32.pop %v3192
      %v3201 = verf.f32.pop %v3193
      %v3202 = verf.f32.pop %v3194
      %v3203 = vadd.f32 %v3195, 1.0
      %v3204 = vadd.f32 %v3196, 1.0
      %v3205 = vadd.f32 %v3197, 1.0
      %v3206 = vadd.f32 %v3198, 1.0
      %v3207 = vadd.f32 %v3199, 1.0
      %v3208 = vadd.f32 %v3200, 1.0
      %v3209 = vadd.f32 %v3201, 1.0
      %v3210 = vadd.f32 %v3202, 1.0
      %v3211 = vmul.f32 %v3179, %v3203
      %v3212 = vmul.f32 %v3180, %v3204
      %v3213 = vmul.f32 %v3181, %v3205
      %v3214 = vmul.f32 %v3182, %v3206
      %v3215 = vmul.f32 %v3183, %v3207
      %v3216 = vmul.f32 %v3184, %v3208
      %v3217 = vmul.f32 %v3185, %v3209
      %v3218 = vmul.f32 %v3186, %v3210
      %v3219 = vpack.c.bf16 %v3212, %v3211
      %v3220 = vpack.c.bf16 %v3214, %v3213
      %v3221 = vpack.c.bf16 %v3216, %v3215
      %v3222 = vpack.c.bf16 %v3218, %v3217
      %v3223 = vld [vmem:[%s12] sm:$0xf]
      %v3224 = vld [vmem:[%s12 + $0x4] sm:$0xf]
      %v3225 = vld [vmem:[%s12 + $0x8] sm:$0xf]
      %v3226 = vld [vmem:[%s12 + $0xc] sm:$0xf]
      %v3227 = vld [vmem:[%s12 + $0x10] sm:$0xf]
      %v3228 = vld [vmem:[%s12 + $0x14] sm:$0xf]
      %v3229 = vld [vmem:[%s12 + $0x18] sm:$0xf]
      %v3230 = vld [vmem:[%s12 + $0x1c] sm:$0xf]
      %v3231 = vld [vmem:[%s12 + $0x20] sm:$0xf]
      %v3232 = vld [vmem:[%s12 + $0x24] sm:$0xf]
      %v3233 = vld [vmem:[%s12 + $0x28] sm:$0xf]
      %v3234 = vld [vmem:[%s12 + $0x2c] sm:$0xf]
      %v3235 = vld [vmem:[%s12 + $0x30] sm:$0xf]
      %v3236 = vld [vmem:[%s12 + $0x34] sm:$0xf]
      %v3237 = vld [vmem:[%s12 + $0x38] sm:$0xf]
      %v3238 = vld [vmem:[%s12 + $0x3c] sm:$0xf]
      %v3239 = vld [vmem:[%s13] sm:$0x1]
      %v3241 = vlaneseq
      %v3242 = vshrl.u32 %v3241, 7
      %v3243 = vsub.s32 0, %v3242
      %v3244 = vrot.slane %v3239, %v3243
      %v3262 = vunpack.c.l.b16 %v3223
      %v3263 = vunpack.c.l.b16 %v3224
      %v3264 = vunpack.c.l.b16 %v3225
      %v3265 = vunpack.c.l.b16 %v3226
      %v3266 = vunpack.c.l.b16 %v3227
      %v3267 = vunpack.c.l.b16 %v3228
      %v3268 = vunpack.c.l.b16 %v3229
      %v3269 = vunpack.c.l.b16 %v3230
      %v3270 = vunpack.c.l.b16 %v3231
      %v3271 = vunpack.c.l.b16 %v3232
      %v3272 = vunpack.c.l.b16 %v3233
      %v3273 = vunpack.c.l.b16 %v3234
      %v3274 = vunpack.c.l.b16 %v3235
      %v3275 = vunpack.c.l.b16 %v3236
      %v3276 = vunpack.c.l.b16 %v3237
      %v3277 = vunpack.c.l.b16 %v3238
      %v3278 = vpack.c.b16 %v3263, %v3262
      %v3279 = vpack.c.b16 %v3265, %v3264
      %v3280 = vpack.c.b16 %v3267, %v3266
      %v3281 = vpack.c.b16 %v3269, %v3268
      %v3282 = vpack.c.b16 %v3271, %v3270
      %v3283 = vpack.c.b16 %v3273, %v3272
      %v3284 = vpack.c.b16 %v3275, %v3274
      %v3285 = vpack.c.b16 %v3277, %v3276
      %3294 = vmatprep.subr.bf16.mxu0 0
      %3295 = vmatpush1.bf16.msra.mxu0 %v3278
      %3296 = vmatprep.subr.bf16.mxu0 0
      %3297 = vmatpush1.bf16.msra.mxu0 %v3279
      %3298 = vmatprep.subr.bf16.mxu0 0
      %3299 = vmatpush1.bf16.msra.mxu0 %v3280
      %3300 = vmatprep.subr.bf16.mxu0 0
      %3301 = vmatpush1.bf16.msra.mxu0 %v3281
      %3302 = vmatprep.subr.bf16.mxu0 0
      %3303 = vmatpush1.bf16.msra.mxu0 %v3282
      %3304 = vmatprep.subr.bf16.mxu0 0
      %3305 = vmatpush1.bf16.msra.mxu0 %v3283
      %3306 = vmatprep.subr.bf16.mxu0 0
      %3307 = vmatpush1.bf16.msra.mxu0 %v3284
      %3308 = vmatprep.subr.bf16.mxu0 0
      %3309 = vmatpush1.bf16.msra.mxu0 %v3285
      %3310 = vmatprep.subr.bf16.mxu0 0
      %3311 = vmatpush1.bf16.msra.mxu0 0
      %3312 = vmatprep.subr.bf16.mxu0 0
      %3313 = vmatpush1.bf16.msra.mxu0 0
      %3314 = vmatprep.subr.bf16.mxu0 0
      %3315 = vmatpush1.bf16.msra.mxu0 0
      %3316 = vmatprep.subr.bf16.mxu0 0
      %3317 = vmatpush1.bf16.msra.mxu0 0
      %3318 = vmatprep.subr.bf16.mxu0 0
      %3319 = vmatpush1.bf16.msra.mxu0 0
      %3320 = vmatprep.subr.bf16.mxu0 0
      %3321 = vmatpush1.bf16.msra.mxu0 0
      %3322 = vmatprep.subr.bf16.mxu0 0
      %3323 = vmatpush1.bf16.msra.mxu0 0
      %3324 = vmatprep.subr.bf16.mxu0 0
      %3325 = vmatpush1.bf16.msra.mxu0 0
      %3326 = vmatprep.mubr.bf16.mxu0 0
      %3327 = vmatmul.mubr.bf16.gmra.mrb[0].mxu0 %v3219
      %v3328 = vpop.f32.mrb[0].mxu0
      %v3329 = vadd.f32 %v3244, %v3328
      %v3330 = vpop.f32.mrb[0].mxu0
      %v3331 = vpop.f32.mrb[0].mxu0
      %v3332 = vadd.f32 %v3244, %v3331
      %v3333 = vpop.f32.mrb[0].mxu0
      %3334 = vmatprep.mubr.bf16.mxu0 0
      %3335 = vmatmul.mubr.bf16.gmra.mrb[0].mxu0 %v3220
      %v3336 = vpop.f32.mrb[0].mxu0
      %v3337 = vadd.f32 %v3244, %v3336
      %v3338 = vpop.f32.mrb[0].mxu0
      %v3339 = vpop.f32.mrb[0].mxu0
      %v3340 = vadd.f32 %v3244, %v3339
      %v3341 = vpop.f32.mrb[0].mxu0
      %3342 = vmatprep.mubr.bf16.mxu0 0
      %3343 = vmatmul.mubr.bf16.gmra.mrb[0].mxu0 %v3221
      %v3344 = vpop.f32.mrb[0].mxu0
      %v3345 = vadd.f32 %v3244, %v3344
      %v3346 = vpop.f32.mrb[0].mxu0
      %v3347 = vpop.f32.mrb[0].mxu0
      %v3348 = vadd.f32 %v3244, %v3347
      %v3349 = vpop.f32.mrb[0].mxu0
      %3350 = vmatprep.mubr.bf16.mxu0 0
      %3351 = vmatmul.mubr.bf16.gmra.mrb[0].mxu0 %v3222
      %v3352 = vpop.f32.mrb[0].mxu0
      %v3353 = vadd.f32 %v3244, %v3352
      %v3354 = vpop.f32.mrb[0].mxu0
      %v3355 = vpop.f32.mrb[0].mxu0
      %v3356 = vadd.f32 %v3244, %v3355
      %v3357 = vpop.f32.mrb[0].mxu0
      %3358 = vdwg.mxu0
      %v3359 = vadd.f32 %v2933, %v3329
      %v3360 = vadd.f32 %v2934, %v3332
      %v3361 = vadd.f32 %v2935, %v3337
      %v3362 = vadd.f32 %v2936, %v3340
      %v3363 = vadd.f32 %v2937, %v3345
      %v3364 = vadd.f32 %v2938, %v3348
      %v3365 = vadd.f32 %v2939, %v3353
      %v3366 = vadd.f32 %v2940, %v3356
      %3367 = vst.msk [vmem:[%s469] sm:$0xff] %vm480, %v3359
      %3368 = vst.msk [vmem:[%s469 + $0x8] sm:$0xff] %vm480, %v3360
      %3369 = vst.msk [vmem:[%s469 + $0x10] sm:$0xff] %vm480, %v3361
      %3370 = vst.msk [vmem:[%s469 + $0x18] sm:$0xff] %vm480, %v3362
      %3371 = vst.msk [vmem:[%s469 + $0x20] sm:$0xff] %vm480, %v3363
      %3372 = vst.msk [vmem:[%s469 + $0x28] sm:$0xff] %vm480, %v3364
      %3373 = vst.msk [vmem:[%s469 + $0x30] sm:$0xff] %vm480, %v3365
      %3374 = vst.msk [vmem:[%s469 + $0x38] sm:$0xff] %vm480, %v3366
      %s3375 = smul.u32 8, %s25
      %p3376 = scmp.lt.s32.totalorder %s3375, 15
      %s3377 = scalar_select %p3376, %s3375, 15
      %s3378 = smul.addr %s3377, 8
      %s3379 = scalar_lea.vmem %s14, %s3378
      // Predicated region
      $region77: #{basic_layer_forward.3} parent=75 // pred_check
        %p3380 = pneg %p342
      $region78: #{basic_layer_forward.3} parent=75 // pred_check_branch
        %3382 = sbr.rel (%p3380) target = $region80
      $region79: #{basic_layer_forward.3} parent=75 // pred_region
        %s3383 = smul.u32 8, %s25
      $region80: #{basic_layer_forward.3} parent=75 // pred_fallthru
        _
    $region76: #{basic_layer_forward.3} parent=5 // pred_fallthru
      _
    %p3384 = scmp.le.s32.totalorder 2, %s20
    // Predicated region
    $region81: #{basic_layer_forward.3} parent=5 // pred_check
      %p3385 = pneg %p3384
    $region82: #{basic_layer_forward.3} parent=5 // pred_check_branch
      %3387 = sbr.rel (%p3385) target = $region84
    $region83: #{basic_layer_forward.3} parent=5 // pred_region
      %s3388 = ssub.s32 %s20, 2
      // Predicated region
      $region85: #{basic_layer_forward.3} parent=83 // pred_check
        %p3389 = pneg %p348
      $region86: #{basic_layer_forward.3} parent=83 // pred_check_branch
        %3391 = sbr.rel (%p3389) target = $region88
      $region87: #{basic_layer_forward.3} parent=83 // pred_region
        %s3392 = smul.u32 8, %s26
        %p3393 = scmp.lt.s32.totalorder %s3392, 15
        %s3394 = scalar_select %p3393, %s3392, 15
        %s3395 = smul.addr %s3394, 8
        %s3396 = scalar_lea.vmem %s14, %s3395
      $region88: #{basic_layer_forward.3} parent=83 // pred_fallthru
        _
    $region84: #{basic_layer_forward.3} parent=5 // pred_fallthru
      _
  $region6: #{basic_layer_forward.3} parent=0 // loop_footer
    %s24 = sadd.s32 1, %s20
  $region7: #{basic_layer_forward.3} parent=0 // loop_footer_branch
    %19 = sbr.rel target = $region3
  $region8: #{basic_layer_forward.3} parent=0 // loop_exit
    _

</llo_original>
